<compile_context>
chip_gen: v7x
topology: tpu7x:2x2x1
jax: 0.10.0
libtpu: 0.0.40
codegen_flags: <defaults>
</compile_context>

<pallas_src>
import functools
import math

import jax
import jax.numpy as jnp
from jax import lax
from jax.experimental import pallas as pl
from jax.experimental.pallas import tpu as pltpu


# ----------------------------------------------------------------------------
# Fused kernel
# ----------------------------------------------------------------------------
def _fused_attention_lstm_kernel(*refs, B, Le, Ld, num_heads, e_layers, d_layers):
    # Ref order:
    #   x_enc (Le*B, enc_in), x_dec (Ld*B, dec_in)              [time-major flat]
    #   [W_ih^T, W_hh^T, bias] * e_layers
    #   [W_ih^T, W_hh^T, bias] * d_layers
    #   wq_h (nh,E,dh), bq_h (nh,1,dh), wk_h, bk_h, wv_h, bv_h,
    #   wo_h (nh,dh,E), bo (1,E), wfc (E,c_out), bfc (1,c_out)
    #   out (Ld*B, c_out)
    #   enc_buf (Le*B, H), dec_buf (Ld*B, H), xg_enc (Le*B, 4H), xg_dec (Ld*B, 4H)
    pos = 0
    x_enc_ref, x_dec_ref = refs[0], refs[1]
    pos = 2
    enc_layer_refs = [refs[pos + 3 * i: pos + 3 * i + 3] for i in range(e_layers)]
    pos += 3 * e_layers
    dec_layer_refs = [refs[pos + 3 * i: pos + 3 * i + 3] for i in range(d_layers)]
    pos += 3 * d_layers
    (wq_ref, bq_ref, wk_ref, bk_ref, wv_ref, bv_ref,
     wo_ref, bo_ref, wfc_ref, bfc_ref) = refs[pos:pos + 10]
    pos += 10
    out_ref = refs[pos]
    pos += 1
    enc_buf, dec_buf, xg_enc, xg_dec = refs[pos:pos + 4]

    H = enc_buf.shape[1]

    # ---------------- LSTM building blocks -----------------------------------
    def lstm_cell(gates, c_prev):
        # One full-tile sigmoid pass (i,f,o come from slices of it); tanh only on
        # the g quarter — removes a redundant full-tile EUP pass per step.
        sg = jax.nn.sigmoid(gates)                       # (B, 4H)
        i_g = sg[:, 0 * H:1 * H]
        f_g = sg[:, 1 * H:2 * H]
        o_g = sg[:, 3 * H:4 * H]
        g_g = jnp.tanh(gates[:, 2 * H:3 * H])            # (B, H)
        c_new = f_g * c_prev + i_g * g_g
        h_new = o_g * jnp.tanh(c_new)
        return h_new, c_new

    def hoist_proj(src_ref, wih_ref, b_ref, xg_buf):
        # Whole-sequence input projection (one big MXU matmul), biases folded in.
        xg_buf[...] = (jnp.dot(src_ref[...], wih_ref[...],
                               preferred_element_type=jnp.float32) + b_ref[...])

    def make_step(xg_buf, whh, out_buf):
        # h/c travel in the fori_loop carry (vregs), never through VMEM.
        def step(t, carry):
            h, c = carry
            base = t * B
            gates = xg_buf[pl.ds(base, B), :] + jnp.dot(
                h, whh, preferred_element_type=jnp.float32)       # (B, 4H)
            h2, c2 = lstm_cell(gates, c)
            out_buf[pl.ds(base, B), :] = h2
            return (h2, c2)
        return step

    zero_state = (jnp.zeros((B, H), jnp.float32),
                  jnp.zeros((B, H), jnp.float32))

    # ---------------- stacked LSTMs, encoder/decoder interleaved -------------
    for l in range(max(e_layers, d_layers)):
        enc_on = l < e_layers
        dec_on = l < d_layers

        step_e = step_d = None
        if enc_on:
            wih_e, whh_e_ref, b_e = enc_layer_refs[l]
            hoist_proj(x_enc_ref if l == 0 else enc_buf, wih_e, b_e, xg_enc)
            step_e = make_step(xg_enc, whh_e_ref[...], enc_buf)
        if dec_on:
            wih_d, whh_d_ref, b_d = dec_layer_refs[l]
            hoist_proj(x_dec_ref if l == 0 else dec_buf, wih_d, b_d, xg_dec)
            step_d = make_step(xg_dec, whh_d_ref[...], dec_buf)

        if enc_on and dec_on:
            # Interleave the two independent recurrences: both advance in the same
            # unrolled loop so their MXU/EUP/VPU latencies hide each other.
            Tc = min(Le, Ld)

            def both_step(t, carry, step_e=step_e, step_d=step_d):
                ec, dc = carry
                return (step_e(t, ec), step_d(t, dc))

            ec, dc = lax.fori_loop(0, Tc, both_step, (zero_state, zero_state),
                                   unroll=True)
            if Le > Ld:
                lax.fori_loop(Tc, Le, step_e, ec, unroll=True)
            elif Ld > Le:
                lax.fori_loop(Tc, Ld, step_d, dc, unroll=True)
        elif enc_on:
            lax.fori_loop(0, Le, step_e, zero_state, unroll=True)
        elif dec_on:
            lax.fori_loop(0, Ld, step_d, zero_state, unroll=True)

    # ---------------- multi-head attention + fc (flattened over batch) -------
    E = H
    dh = E // num_heads
    scale = 1.0 / math.sqrt(dh)

    dec_all = dec_buf[...]                      # (Ld*B, E)  row = t*B + b
    enc_all = enc_buf[...]                      # (Le*B, E)

    # Cross-batch mask: flat rows are time-major, so batch id of row r is r % B.
    q_batch = lax.broadcasted_iota(jnp.int32, (Ld * B, Le * B), 0) % B
    k_batch = lax.broadcasted_iota(jnp.int32, (Ld * B, Le * B), 1) % B
    same_batch = q_batch == k_batch

    attn = None
    for head in range(num_heads):
        # Per-head weights were pre-split wrapper-side: no 8-lane sub-slicing of
        # q/k/v inside the kernel — each head's projections are their own matmuls.
        q_h = jnp.dot(dec_all, wq_ref[head],
                      preferred_element_type=jnp.float32) + bq_ref[head]
        k_h = jnp.dot(enc_all, wk_ref[head],
                      preferred_element_type=jnp.float32) + bk_ref[head]
        v_h = jnp.dot(enc_all, wv_ref[head],
                      preferred_element_type=jnp.float32) + bv_ref[head]

        s = jnp.dot(q_h, k_h.T, preferred_element_type=jnp.float32) * scale
        # Keep -1e30 (not -inf): masked entries underflow to exactly 0 after the
        # row-max subtraction; every row has >=1 unmasked key so no NaN risk.
        s = jnp.where(same_batch, s, -1e30)
        s = s - jnp.max(s, axis=-1, keepdims=True)
        e = jnp.exp(s)
        p = e * pl.reciprocal(jnp.sum(e, axis=-1, keepdims=True), approx=True)
        ctx_h = jnp.dot(p, v_h, preferred_element_type=jnp.float32)   # (Ld*B, dh)
        # Fold the head concat into the out-projection accumulation.
        contrib = jnp.dot(ctx_h, wo_ref[head], preferred_element_type=jnp.float32)
        attn = contrib if attn is None else attn + contrib
    attn = attn + bo_ref[...]                   # (Ld*B, E)

    out_ref[...] = (jnp.dot(attn, wfc_ref[...],
                            preferred_element_type=jnp.float32) + bfc_ref[...])


# ----------------------------------------------------------------------------
# One-time parameter preparation (hoisted out of the per-call jitted path).
# ----------------------------------------------------------------------------
def prepare_params(params, n_heads):
    E = params["encoder"][0][1].shape[1]       # W_hh: (4H, H) -> H == d_model
    dh = E // n_heads

    def prep_lstm(layers):
        out = []
        for (w_ih, w_hh, b_ih, b_hh) in layers:
            out.append((w_ih.T, w_hh.T, (b_ih + b_hh).reshape(1, -1)))
        return tuple(out)

    ipw = params["attn_in_proj_w"]              # (3E, E)
    ipb = params["attn_in_proj_b"]              # (3E,)

    def split_w(w):                             # torch (out,in) -> (nh, E_in, dh)
        return w.T.reshape(E, n_heads, dh).transpose(1, 0, 2)

    def split_b(b):                             # (E,) -> (nh, 1, dh)
        return b.reshape(n_heads, 1, dh)

    prepared = {
        "enc": prep_lstm(params["encoder"]),
        "dec": prep_lstm(params["decoder"]),
        "wq_h": split_w(ipw[0 * E:1 * E]),
        "wk_h": split_w(ipw[1 * E:2 * E]),
        "wv_h": split_w(ipw[2 * E:3 * E]),
        "bq_h": split_b(ipb[0 * E:1 * E]),
        "bk_h": split_b(ipb[1 * E:2 * E]),
        "bv_h": split_b(ipb[2 * E:3 * E]),
        "wo_h": params["attn_out_proj_w"].T.reshape(n_heads, dh, E),
        "bo": params["attn_out_proj_b"].reshape(1, E),
        "wfc": params["fc_w"].T,
        "bfc": params["fc_b"].reshape(1, -1),
    }
    # Materialize once so the jitted forward sees plain device arrays.
    return jax.tree_util.tree_map(jnp.asarray, prepared)


# ----------------------------------------------------------------------------
# Jitted forward: one pallas_call, no per-call weight re-layout.
# ----------------------------------------------------------------------------
@jax.jit
def attention_lstm_forward(prepared, input_seq, output_seq):
    B, Le, enc_in = input_seq.shape
    _, Ld, dec_in = output_seq.shape
    enc_layers = prepared["enc"]
    dec_layers = prepared["dec"]
    H = enc_layers[0][1].shape[0]               # W_hh^T: (H, 4H)
    n_heads = prepared["wq_h"].shape[0]
    c_out = prepared["wfc"].shape[1]

    # Tiny time-major flattening of the raw inputs (row = t*B + b); kept in the
    # same jit (sub-KiB tensors) so the kernel only sees 2D VMEM-friendly slabs.
    x_enc = jnp.transpose(input_seq, (1, 0, 2)).reshape(Le * B, enc_in)
    x_dec = jnp.transpose(output_seq, (1, 0, 2)).reshape(Ld * B, dec_in)

    inputs = [x_enc, x_dec]
    for (wih, whh, b) in enc_layers:
        inputs += [wih, whh, b]
    for (wih, whh, b) in dec_layers:
        inputs += [wih, whh, b]
    inputs += [prepared["wq_h"], prepared["bq_h"],
               prepared["wk_h"], prepared["bk_h"],
               prepared["wv_h"], prepared["bv_h"],
               prepared["wo_h"], prepared["bo"],
               prepared["wfc"], prepared["bfc"]]

    kernel = functools.partial(
        _fused_attention_lstm_kernel,
        B=B, Le=Le, Ld=Ld, num_heads=int(n_heads),
        e_layers=len(enc_layers), d_layers=len(dec_layers))

    out_flat = pl.pallas_call(
        kernel,
        out_shape=jax.ShapeDtypeStruct((Ld * B, c_out), jnp.float32),
        in_specs=[pl.BlockSpec(memory_space=pltpu.MemorySpace.VMEM)] * len(inputs),
        out_specs=pl.BlockSpec(memory_space=pltpu.MemorySpace.VMEM),
        scratch_shapes=[
            pltpu.VMEM((Le * B, H), jnp.float32),        # encoder activations
            pltpu.VMEM((Ld * B, H), jnp.float32),        # decoder activations
            pltpu.VMEM((Le * B, 4 * H), jnp.float32),    # hoisted encoder gates
            pltpu.VMEM((Ld * B, 4 * H), jnp.float32),    # hoisted decoder gates
        ],
    )(*inputs)

    return jnp.transpose(out_flat.reshape(Ld, B, c_out), (1, 0, 2))  # (B, Ld, c_out)


# ----------------------------------------------------------------------------
# Parameter construction (deterministic, PyTorch-like uniform init).
# ----------------------------------------------------------------------------
def _uniform(key, shape, k):
    return jax.random.uniform(key, shape, jnp.float32, minval=-k, maxval=k)


def make_params(key, enc_in, dec_in, d_model, e_layers, d_layers, c_out):
    params = {}
    k = 1.0 / math.sqrt(d_model)

    def lstm_stack(key, in_dim, n_layers):
        layers = []
        for layer in range(n_layers):
            din = in_dim if layer == 0 else d_model
            key, k1, k2, k3, k4 = jax.random.split(key, 5)
            layers.append((
                _uniform(k1, (4 * d_model, din), k),       # W_ih
                _uniform(k2, (4 * d_model, d_model), k),   # W_hh
                _uniform(k3, (4 * d_model,), k),           # b_ih
                _uniform(k4, (4 * d_model,), k),           # b_hh
            ))
        return key, layers

    key, params["encoder"] = lstm_stack(key, enc_in, e_layers)
    key, params["decoder"] = lstm_stack(key, dec_in, d_layers)

    key, k1, k2, k3, k4, k5, k6 = jax.random.split(key, 7)
    params["attn_in_proj_w"] = _uniform(k1, (3 * d_model, d_model), k)
    params["attn_in_proj_b"] = _uniform(k5, (3 * d_model,), k)
    params["attn_out_proj_w"] = _uniform(k2, (d_model, d_model), k)
    params["attn_out_proj_b"] = _uniform(k6, (d_model,), k)
    params["fc_w"] = _uniform(k3, (c_out, d_model), k)
    params["fc_b"] = _uniform(k4, (c_out,), k)
    return params


# ----------------------------------------------------------------------------
# Pure-JAX reference (same math as the PyTorch module) for a sanity check.
# ----------------------------------------------------------------------------
def _reference_forward(params, input_seq, output_seq, n_heads):
    P = jax.lax.Precision.HIGHEST

    def lstm_stack(x, layers):
        for (w_ih, w_hh, b_ih, b_hh) in layers:
            Bb = x.shape[0]
            H = w_hh.shape[1]

            def step(carry, x_t, w_ih=w_ih, w_hh=w_hh, b_ih=b_ih, b_hh=b_hh, H=H):
                h, c = carry
                g = (jnp.dot(x_t, w_ih.T, precision=P) + b_ih
                     + jnp.dot(h, w_hh.T, precision=P) + b_hh)
                i = jax.nn.sigmoid(g[:, 0 * H:1 * H])
                f = jax.nn.sigmoid(g[:, 1 * H:2 * H])
                gg = jnp.tanh(g[:, 2 * H:3 * H])
                o = jax.nn.sigmoid(g[:, 3 * H:4 * H])
                c = f * c + i * gg
                h = o * jnp.tanh(c)
                return (h, c), h

            init = (jnp.zeros((Bb, H), jnp.float32), jnp.zeros((Bb, H), jnp.float32))
            _, ys = lax.scan(step, init, jnp.swapaxes(x, 0, 1))
            x = jnp.swapaxes(ys, 0, 1)
        return x

    enc = lstm_stack(input_seq, params["encoder"])   # (B, Le, E)
    dec = lstm_stack(output_seq, params["decoder"])  # (B, Ld, E)

    E = enc.shape[-1]
    dh = E // n_heads
    ipw, ipb = params["attn_in_proj_w"], params["attn_in_proj_b"]
    q = jnp.dot(dec, ipw[0 * E:1 * E].T, precision=P) + ipb[0 * E:1 * E]
    k = jnp.dot(enc, ipw[1 * E:2 * E].T, precision=P) + ipb[1 * E:2 * E]
    v = jnp.dot(enc, ipw[2 * E:3 * E].T, precision=P) + ipb[2 * E:3 * E]
    B, Ld, _ = q.shape
    Le = k.shape[1]
    q = q.reshape(B, Ld, n_heads, dh)
    k = k.reshape(B, Le, n_heads, dh)
    v = v.reshape(B, Le, n_heads, dh)
    s = jnp.einsum("bqhd,bkhd->bhqk", q, k, precision=P) / math.sqrt(dh)
    p = jax.nn.softmax(s, axis=-1)
    ctx = jnp.einsum("bhqk,bkhd->bqhd", p, v, precision=P).reshape(B, Ld, E)
    attn = (jnp.dot(ctx, params["attn_out_proj_w"].T, precision=P)
            + params["attn_out_proj_b"])
    return jnp.dot(attn, params["fc_w"].T, precision=P) + params["fc_b"]


if __name__ == "__main__":
    # Small config consistent with the module's forward.
    enc_in, dec_in = 8, 8
    d_model, e_layers, d_layers, n_heads, c_out = 32, 2, 1, 4, 4
    B, Le, Ld = 2, 10, 6

    key = jax.random.PRNGKey(0)
    key, kx, ky, kp = jax.random.split(key, 4)
    input_seq = jax.random.normal(kx, (B, Le, enc_in), jnp.float32)
    output_seq = jax.random.normal(ky, (B, Ld, dec_in), jnp.float32)
    params = make_params(kp, enc_in, dec_in, d_model, e_layers, d_layers, c_out)

    # One-time weight re-layout (outside the hot path).
    prepared = prepare_params(params, n_heads)

    out = attention_lstm_forward(prepared, input_seq, output_seq)
    out = jax.block_until_ready(out)
    assert out.shape == (B, Ld, c_out), out.shape

    ref = _reference_forward(params, input_seq, output_seq, n_heads)
    max_err = float(jnp.max(jnp.abs(out - ref)))
    assert jnp.allclose(out, ref, rtol=2e-2, atol=2e-3), max_err

    print("KERNEL_OK")
</pallas_src>

<mosaic_0001>
module attributes {stable_mosaic.version = 11 : i64} {
  func.func @_fused_attention_lstm_kernel(%arg0: memref<20x8xf32, #tpu.memory_space<vmem>>, %arg1: memref<12x8xf32, #tpu.memory_space<vmem>>, %arg2: memref<8x128xf32, #tpu.memory_space<vmem>>, %arg3: memref<32x128xf32, #tpu.memory_space<vmem>>, %arg4: memref<1x128xf32, #tpu.memory_space<vmem>>, %arg5: memref<32x128xf32, #tpu.memory_space<vmem>>, %arg6: memref<32x128xf32, #tpu.memory_space<vmem>>, %arg7: memref<1x128xf32, #tpu.memory_space<vmem>>, %arg8: memref<8x128xf32, #tpu.memory_space<vmem>>, %arg9: memref<32x128xf32, #tpu.memory_space<vmem>>, %arg10: memref<1x128xf32, #tpu.memory_space<vmem>>, %arg11: memref<4x32x8xf32, #tpu.memory_space<vmem>>, %arg12: memref<4x1x8xf32, #tpu.memory_space<vmem>>, %arg13: memref<4x32x8xf32, #tpu.memory_space<vmem>>, %arg14: memref<4x1x8xf32, #tpu.memory_space<vmem>>, %arg15: memref<4x32x8xf32, #tpu.memory_space<vmem>>, %arg16: memref<4x1x8xf32, #tpu.memory_space<vmem>>, %arg17: memref<4x8x32xf32, #tpu.memory_space<vmem>>, %arg18: memref<1x32xf32, #tpu.memory_space<vmem>>, %arg19: memref<32x4xf32, #tpu.memory_space<vmem>>, %arg20: memref<1x4xf32, #tpu.memory_space<vmem>>, %arg21: memref<12x4xf32, #tpu.memory_space<vmem>>, %arg22: memref<20x32xf32, #tpu.memory_space<vmem>>, %arg23: memref<12x32xf32, #tpu.memory_space<vmem>>, %arg24: memref<20x128xf32, #tpu.memory_space<vmem>>, %arg25: memref<12x128xf32, #tpu.memory_space<vmem>>) attributes {dimension_semantics = [], scalar_prefetch = 0 : i64, scratch_operands = 4 : i64, tpu.core_type = #tpu.core_type<tc>} {
    %cst = arith.constant 0.000000e+00 : f32
    %0 = vector.broadcast %cst : f32 to vector<2x32xf32>
    %cst_0 = arith.constant 0.000000e+00 : f32
    %1 = vector.broadcast %cst_0 : f32 to vector<2x32xf32>
    %c0 = arith.constant 0 : index
    %c0_1 = arith.constant 0 : index
    %2 = vector.load %arg0[%c0, %c0_1] : memref<20x8xf32, #tpu.memory_space<vmem>>, vector<20x8xf32>
    %c0_2 = arith.constant 0 : index
    %c0_3 = arith.constant 0 : index
    %3 = vector.load %arg2[%c0_2, %c0_3] : memref<8x128xf32, #tpu.memory_space<vmem>>, vector<8x128xf32>
    %cst_4 = arith.constant dense<0.000000e+00> : vector<20x128xf32>
    %4 = tpu.matmul %2, %3, %cst_4 {dimension_numbers = #tpu.dot_dimension_numbers<[1], [0], [0], [1], [0, 0, 1, 1], [], []>} : vector<20x8xf32>, vector<8x128xf32>, vector<20x128xf32> -> vector<20x128xf32>
    %c0_5 = arith.constant 0 : index
    %c0_6 = arith.constant 0 : index
    %5 = vector.load %arg4[%c0_5, %c0_6] : memref<1x128xf32, #tpu.memory_space<vmem>>, vector<1x128xf32>
    %6 = vector.broadcast %5 : vector<1x128xf32> to vector<20x128xf32>
    %7 = arith.addf %4, %6 : vector<20x128xf32>
    %c0_7 = arith.constant 0 : index
    %c0_8 = arith.constant 0 : index
    %8 = vector.load %arg24[%c0_7, %c0_8] : memref<20x128xf32, #tpu.memory_space<vmem>>, vector<20x128xf32>
    tpu.vector_store %arg24[%c0_7, %c0_8], %7 {strides = array<i32>} : memref<20x128xf32, #tpu.memory_space<vmem>>, vector<20x128xf32>,
    %c0_9 = arith.constant 0 : index
    %c0_10 = arith.constant 0 : index
    %9 = vector.load %arg3[%c0_9, %c0_10] : memref<32x128xf32, #tpu.memory_space<vmem>>, vector<32x128xf32>
    %c0_11 = arith.constant 0 : index
    %c0_12 = arith.constant 0 : index
    %10 = vector.load %arg1[%c0_11, %c0_12] : memref<12x8xf32, #tpu.memory_space<vmem>>, vector<12x8xf32>
    %c0_13 = arith.constant 0 : index
    %c0_14 = arith.constant 0 : index
    %11 = vector.load %arg8[%c0_13, %c0_14] : memref<8x128xf32, #tpu.memory_space<vmem>>, vector<8x128xf32>
    %cst_15 = arith.constant dense<0.000000e+00> : vector<12x128xf32>
    %12 = tpu.matmul %10, %11, %cst_15 {dimension_numbers = #tpu.dot_dimension_numbers<[1], [0], [0], [1], [0, 0, 1, 1], [], []>} : vector<12x8xf32>, vector<8x128xf32>, vector<12x128xf32> -> vector<12x128xf32>
    %c0_16 = arith.constant 0 : index
    %c0_17 = arith.constant 0 : index
    %13 = vector.load %arg10[%c0_16, %c0_17] : memref<1x128xf32, #tpu.memory_space<vmem>>, vector<1x128xf32>
    %14 = vector.broadcast %13 : vector<1x128xf32> to vector<12x128xf32>
    %15 = arith.addf %12, %14 : vector<12x128xf32>
    %c0_18 = arith.constant 0 : index
    %c0_19 = arith.constant 0 : index
    %16 = vector.load %arg25[%c0_18, %c0_19] : memref<12x128xf32, #tpu.memory_space<vmem>>, vector<12x128xf32>
    tpu.vector_store %arg25[%c0_18, %c0_19], %15 {strides = array<i32>} : memref<12x128xf32, #tpu.memory_space<vmem>>, vector<12x128xf32>,
    %c0_20 = arith.constant 0 : index
    %c0_21 = arith.constant 0 : index
    %17 = vector.load %arg9[%c0_20, %c0_21] : memref<32x128xf32, #tpu.memory_space<vmem>>, vector<32x128xf32>
    %c0_i32 = arith.constant 0 : i32
    %c2_i32 = arith.constant 2 : i32
    %18 = arith.muli %c0_i32, %c2_i32 : i32
    %19 = arith.index_cast %18 : i32 to index
    %c0_22 = arith.constant 0 : index
    %20 = vector.load %arg24[%19, %c0_22] : memref<20x128xf32, #tpu.memory_space<vmem>>, vector<2x128xf32>
    %cst_23 = arith.constant dense<0.000000e+00> : vector<2x128xf32>
    %21 = tpu.matmul %0, %9, %cst_23 {dimension_numbers = #tpu.dot_dimension_numbers<[1], [0], [0], [1], [0, 0, 1, 1], [], []>} : vector<2x32xf32>, vector<32x128xf32>, vector<2x128xf32> -> vector<2x128xf32>
    %22 = arith.addf %20, %21 : vector<2x128xf32>
    %23 = arith.negf %22 : vector<2x128xf32>
    %24 = math.exp %23 : vector<2x128xf32>
    %cst_24 = arith.constant 1.000000e+00 : f32
    %25 = vector.broadcast %cst_24 : f32 to vector<2x128xf32>
    %26 = arith.addf %25, %24 : vector<2x128xf32>
    %27 = arith.divf %25, %26 : vector<2x128xf32>
    %28 = vector.extract_strided_slice %27 {offsets = [0, 0], sizes = [2, 32], strides = [1, 1]} : vector<2x128xf32> to vector<2x32xf32>
    %29 = vector.extract_strided_slice %27 {offsets = [0, 32], sizes = [2, 32], strides = [1, 1]} : vector<2x128xf32> to vector<2x32xf32>
    %30 = vector.extract_strided_slice %27 {offsets = [0, 96], sizes = [2, 32], strides = [1, 1]} : vector<2x128xf32> to vector<2x32xf32>
    %31 = vector.extract_strided_slice %22 {offsets = [0, 64], sizes = [2, 32], strides = [1, 1]} : vector<2x128xf32> to vector<2x32xf32>
    %32 = math.tanh %31 : vector<2x32xf32>
    %33 = arith.mulf %29, %1 : vector<2x32xf32>
    %34 = arith.mulf %28, %32 : vector<2x32xf32>
    %35 = arith.addf %33, %34 : vector<2x32xf32>
    %36 = math.tanh %35 : vector<2x32xf32>
    %37 = arith.mulf %30, %36 : vector<2x32xf32>
    %38 = arith.index_cast %18 : i32 to index
    %c0_25 = arith.constant 0 : index
    %39 = vector.load %arg22[%38, %c0_25] : memref<20x32xf32, #tpu.memory_space<vmem>>, vector<2x32xf32>
    tpu.vector_store %arg22[%38, %c0_25], %37 {strides = array<i32>} : memref<20x32xf32, #tpu.memory_space<vmem>>, vector<2x32xf32>,
    %c2_i32_26 = arith.constant 2 : i32
    %40 = arith.muli %c0_i32, %c2_i32_26 : i32
    %41 = arith.index_cast %40 : i32 to index
    %c0_27 = arith.constant 0 : index
    %42 = vector.load %arg25[%41, %c0_27] : memref<12x128xf32, #tpu.memory_space<vmem>>, vector<2x128xf32>
    %cst_28 = arith.constant dense<0.000000e+00> : vector<2x128xf32>
    %43 = tpu.matmul %0, %17, %cst_28 {dimension_numbers = #tpu.dot_dimension_numbers<[1], [0], [0], [1], [0, 0, 1, 1], [], []>} : vector<2x32xf32>, vector<32x128xf32>, vector<2x128xf32> -> vector<2x128xf32>
    %44 = arith.addf %42, %43 : vector<2x128xf32>
    %45 = arith.negf %44 : vector<2x128xf32>
    %46 = math.exp %45 : vector<2x128xf32>
    %cst_29 = arith.constant 1.000000e+00 : f32
    %47 = vector.broadcast %cst_29 : f32 to vector<2x128xf32>
    %48 = arith.addf %47, %46 : vector<2x128xf32>
    %49 = arith.divf %47, %48 : vector<2x128xf32>
    %50 = vector.extract_strided_slice %49 {offsets = [0, 0], sizes = [2, 32], strides = [1, 1]} : vector<2x128xf32> to vector<2x32xf32>
    %51 = vector.extract_strided_slice %49 {offsets = [0, 32], sizes = [2, 32], strides = [1, 1]} : vector<2x128xf32> to vector<2x32xf32>
    %52 = vector.extract_strided_slice %49 {offsets = [0, 96], sizes = [2, 32], strides = [1, 1]} : vector<2x128xf32> to vector<2x32xf32>
    %53 = vector.extract_strided_slice %44 {offsets = [0, 64], sizes = [2, 32], strides = [1, 1]} : vector<2x128xf32> to vector<2x32xf32>
    %54 = math.tanh %53 : vector<2x32xf32>
    %55 = arith.mulf %51, %1 : vector<2x32xf32>
    %56 = arith.mulf %50, %54 : vector<2x32xf32>
    %57 = arith.addf %55, %56 : vector<2x32xf32>
    %58 = math.tanh %57 : vector<2x32xf32>
    %59 = arith.mulf %52, %58 : vector<2x32xf32>
    %60 = arith.index_cast %40 : i32 to index
    %c0_30 = arith.constant 0 : index
    %61 = vector.load %arg23[%60, %c0_30] : memref<12x32xf32, #tpu.memory_space<vmem>>, vector<2x32xf32>
    tpu.vector_store %arg23[%60, %c0_30], %59 {strides = array<i32>} : memref<12x32xf32, #tpu.memory_space<vmem>>, vector<2x32xf32>,
    %c1_i32 = arith.constant 1 : i32
    %c2_i32_31 = arith.constant 2 : i32
    %62 = arith.muli %c1_i32, %c2_i32_31 : i32
    %63 = arith.index_cast %62 : i32 to index
    %c0_32 = arith.constant 0 : index
    %64 = vector.load %arg24[%63, %c0_32] : memref<20x128xf32, #tpu.memory_space<vmem>>, vector<2x128xf32>
    %cst_33 = arith.constant dense<0.000000e+00> : vector<2x128xf32>
    %65 = tpu.matmul %37, %9, %cst_33 {dimension_numbers = #tpu.dot_dimension_numbers<[1], [0], [0], [1], [0, 0, 1, 1], [], []>} : vector<2x32xf32>, vector<32x128xf32>, vector<2x128xf32> -> vector<2x128xf32>
    %66 = arith.addf %64, %65 : vector<2x128xf32>
    %67 = arith.negf %66 : vector<2x128xf32>
    %68 = math.exp %67 : vector<2x128xf32>
    %cst_34 = arith.constant 1.000000e+00 : f32
    %69 = vector.broadcast %cst_34 : f32 to vector<2x128xf32>
    %70 = arith.addf %69, %68 : vector<2x128xf32>
    %71 = arith.divf %69, %70 : vector<2x128xf32>
    %72 = vector.extract_strided_slice %71 {offsets = [0, 0], sizes = [2, 32], strides = [1, 1]} : vector<2x128xf32> to vector<2x32xf32>
    %73 = vector.extract_strided_slice %71 {offsets = [0, 32], sizes = [2, 32], strides = [1, 1]} : vector<2x128xf32> to vector<2x32xf32>
    %74 = vector.extract_strided_slice %71 {offsets = [0, 96], sizes = [2, 32], strides = [1, 1]} : vector<2x128xf32> to vector<2x32xf32>
    %75 = vector.extract_strided_slice %66 {offsets = [0, 64], sizes = [2, 32], strides = [1, 1]} : vector<2x128xf32> to vector<2x32xf32>
    %76 = math.tanh %75 : vector<2x32xf32>
    %77 = arith.mulf %73, %35 : vector<2x32xf32>
    %78 = arith.mulf %72, %76 : vector<2x32xf32>
    %79 = arith.addf %77, %78 : vector<2x32xf32>
    %80 = math.tanh %79 : vector<2x32xf32>
    %81 = arith.mulf %74, %80 : vector<2x32xf32>
    %82 = arith.index_cast %62 : i32 to index
    %c0_35 = arith.constant 0 : index
    %83 = vector.load %arg22[%82, %c0_35] : memref<20x32xf32, #tpu.memory_space<vmem>>, vector<2x32xf32>
    tpu.vector_store %arg22[%82, %c0_35], %81 {strides = array<i32>} : memref<20x32xf32, #tpu.memory_space<vmem>>, vector<2x32xf32>,
    %c2_i32_36 = arith.constant 2 : i32
    %84 = arith.muli %c1_i32, %c2_i32_36 : i32
    %85 = arith.index_cast %84 : i32 to index
    %c0_37 = arith.constant 0 : index
    %86 = vector.load %arg25[%85, %c0_37] : memref<12x128xf32, #tpu.memory_space<vmem>>, vector<2x128xf32>
    %cst_38 = arith.constant dense<0.000000e+00> : vector<2x128xf32>
    %87 = tpu.matmul %59, %17, %cst_38 {dimension_numbers = #tpu.dot_dimension_numbers<[1], [0], [0], [1], [0, 0, 1, 1], [], []>} : vector<2x32xf32>, vector<32x128xf32>, vector<2x128xf32> -> vector<2x128xf32>
    %88 = arith.addf %86, %87 : vector<2x128xf32>
    %89 = arith.negf %88 : vector<2x128xf32>
    %90 = math.exp %89 : vector<2x128xf32>
    %cst_39 = arith.constant 1.000000e+00 : f32
    %91 = vector.broadcast %cst_39 : f32 to vector<2x128xf32>
    %92 = arith.addf %91, %90 : vector<2x128xf32>
    %93 = arith.divf %91, %92 : vector<2x128xf32>
    %94 = vector.extract_strided_slice %93 {offsets = [0, 0], sizes = [2, 32], strides = [1, 1]} : vector<2x128xf32> to vector<2x32xf32>
    %95 = vector.extract_strided_slice %93 {offsets = [0, 32], sizes = [2, 32], strides = [1, 1]} : vector<2x128xf32> to vector<2x32xf32>
    %96 = vector.extract_strided_slice %93 {offsets = [0, 96], sizes = [2, 32], strides = [1, 1]} : vector<2x128xf32> to vector<2x32xf32>
    %97 = vector.extract_strided_slice %88 {offsets = [0, 64], sizes = [2, 32], strides = [1, 1]} : vector<2x128xf32> to vector<2x32xf32>
    %98 = math.tanh %97 : vector<2x32xf32>
    %99 = arith.mulf %95, %57 : vector<2x32xf32>
    %100 = arith.mulf %94, %98 : vector<2x32xf32>
    %101 = arith.addf %99, %100 : vector<2x32xf32>
    %102 = math.tanh %101 : vector<2x32xf32>
    %103 = arith.mulf %96, %102 : vector<2x32xf32>
    %104 = arith.index_cast %84 : i32 to index
    %c0_40 = arith.constant 0 : index
    %105 = vector.load %arg23[%104, %c0_40] : memref<12x32xf32, #tpu.memory_space<vmem>>, vector<2x32xf32>
    tpu.vector_store %arg23[%104, %c0_40], %103 {strides = array<i32>} : memref<12x32xf32, #tpu.memory_space<vmem>>, vector<2x32xf32>,
    %c2_i32_41 = arith.constant 2 : i32
    %c2_i32_42 = arith.constant 2 : i32
    %106 = arith.muli %c2_i32_41, %c2_i32_42 : i32
    %107 = arith.index_cast %106 : i32 to index
    %c0_43 = arith.constant 0 : index
    %108 = vector.load %arg24[%107, %c0_43] : memref<20x128xf32, #tpu.memory_space<vmem>>, vector<2x128xf32>
    %cst_44 = arith.constant dense<0.000000e+00> : vector<2x128xf32>
    %109 = tpu.matmul %81, %9, %cst_44 {dimension_numbers = #tpu.dot_dimension_numbers<[1], [0], [0], [1], [0, 0, 1, 1], [], []>} : vector<2x32xf32>, vector<32x128xf32>, vector<2x128xf32> -> vector<2x128xf32>
    %110 = arith.addf %108, %109 : vector<2x128xf32>
    %111 = arith.negf %110 : vector<2x128xf32>
    %112 = math.exp %111 : vector<2x128xf32>
    %cst_45 = arith.constant 1.000000e+00 : f32
    %113 = vector.broadcast %cst_45 : f32 to vector<2x128xf32>
    %114 = arith.addf %113, %112 : vector<2x128xf32>
    %115 = arith.divf %113, %114 : vector<2x128xf32>
    %116 = vector.extract_strided_slice %115 {offsets = [0, 0], sizes = [2, 32], strides = [1, 1]} : vector<2x128xf32> to vector<2x32xf32>
    %117 = vector.extract_strided_slice %115 {offsets = [0, 32], sizes = [2, 32], strides = [1, 1]} : vector<2x128xf32> to vector<2x32xf32>
    %118 = vector.extract_strided_slice %115 {offsets = [0, 96], sizes = [2, 32], strides = [1, 1]} : vector<2x128xf32> to vector<2x32xf32>
    %119 = vector.extract_strided_slice %110 {offsets = [0, 64], sizes = [2, 32], strides = [1, 1]} : vector<2x128xf32> to vector<2x32xf32>
    %120 = math.tanh %119 : vector<2x32xf32>
    %121 = arith.mulf %117, %79 : vector<2x32xf32>
    %122 = arith.mulf %116, %120 : vector<2x32xf32>
    %123 = arith.addf %121, %122 : vector<2x32xf32>
    %124 = math.tanh %123 : vector<2x32xf32>
    %125 = arith.mulf %118, %124 : vector<2x32xf32>
    %126 = arith.index_cast %106 : i32 to index
    %c0_46 = arith.constant 0 : index
    %127 = vector.load %arg22[%126, %c0_46] : memref<20x32xf32, #tpu.memory_space<vmem>>, vector<2x32xf32>
    tpu.vector_store %arg22[%126, %c0_46], %125 {strides = array<i32>} : memref<20x32xf32, #tpu.memory_space<vmem>>, vector<2x32xf32>,
    %c2_i32_47 = arith.constant 2 : i32
    %128 = arith.muli %c2_i32_41, %c2_i32_47 : i32
    %129 = arith.index_cast %128 : i32 to index
    %c0_48 = arith.constant 0 : index
    %130 = vector.load %arg25[%129, %c0_48] : memref<12x128xf32, #tpu.memory_space<vmem>>, vector<2x128xf32>
    %cst_49 = arith.constant dense<0.000000e+00> : vector<2x128xf32>
    %131 = tpu.matmul %103, %17, %cst_49 {dimension_numbers = #tpu.dot_dimension_numbers<[1], [0], [0], [1], [0, 0, 1, 1], [], []>} : vector<2x32xf32>, vector<32x128xf32>, vector<2x128xf32> -> vector<2x128xf32>
    %132 = arith.addf %130, %131 : vector<2x128xf32>
    %133 = arith.negf %132 : vector<2x128xf32>
    %134 = math.exp %133 : vector<2x128xf32>
    %cst_50 = arith.constant 1.000000e+00 : f32
    %135 = vector.broadcast %cst_50 : f32 to vector<2x128xf32>
    %136 = arith.addf %135, %134 : vector<2x128xf32>
    %137 = arith.divf %135, %136 : vector<2x128xf32>
    %138 = vector.extract_strided_slice %137 {offsets = [0, 0], sizes = [2, 32], strides = [1, 1]} : vector<2x128xf32> to vector<2x32xf32>
    %139 = vector.extract_strided_slice %137 {offsets = [0, 32], sizes = [2, 32], strides = [1, 1]} : vector<2x128xf32> to vector<2x32xf32>
    %140 = vector.extract_strided_slice %137 {offsets = [0, 96], sizes = [2, 32], strides = [1, 1]} : vector<2x128xf32> to vector<2x32xf32>
    %141 = vector.extract_strided_slice %132 {offsets = [0, 64], sizes = [2, 32], strides = [1, 1]} : vector<2x128xf32> to vector<2x32xf32>
    %142 = math.tanh %141 : vector<2x32xf32>
    %143 = arith.mulf %139, %101 : vector<2x32xf32>
    %144 = arith.mulf %138, %142 : vector<2x32xf32>
    %145 = arith.addf %143, %144 : vector<2x32xf32>
    %146 = math.tanh %145 : vector<2x32xf32>
    %147 = arith.mulf %140, %146 : vector<2x32xf32>
    %148 = arith.index_cast %128 : i32 to index
    %c0_51 = arith.constant 0 : index
    %149 = vector.load %arg23[%148, %c0_51] : memref<12x32xf32, #tpu.memory_space<vmem>>, vector<2x32xf32>
    tpu.vector_store %arg23[%148, %c0_51], %147 {strides = array<i32>} : memref<12x32xf32, #tpu.memory_space<vmem>>, vector<2x32xf32>,
    %c3_i32 = arith.constant 3 : i32
    %c2_i32_52 = arith.constant 2 : i32
    %150 = arith.muli %c3_i32, %c2_i32_52 : i32
    %151 = arith.index_cast %150 : i32 to index
    %c0_53 = arith.constant 0 : index
    %152 = vector.load %arg24[%151, %c0_53] : memref<20x128xf32, #tpu.memory_space<vmem>>, vector<2x128xf32>
    %cst_54 = arith.constant dense<0.000000e+00> : vector<2x128xf32>
    %153 = tpu.matmul %125, %9, %cst_54 {dimension_numbers = #tpu.dot_dimension_numbers<[1], [0], [0], [1], [0, 0, 1, 1], [], []>} : vector<2x32xf32>, vector<32x128xf32>, vector<2x128xf32> -> vector<2x128xf32>
    %154 = arith.addf %152, %153 : vector<2x128xf32>
    %155 = arith.negf %154 : vector<2x128xf32>
    %156 = math.exp %155 : vector<2x128xf32>
    %cst_55 = arith.constant 1.000000e+00 : f32
    %157 = vector.broadcast %cst_55 : f32 to vector<2x128xf32>
    %158 = arith.addf %157, %156 : vector<2x128xf32>
    %159 = arith.divf %157, %158 : vector<2x128xf32>
    %160 = vector.extract_strided_slice %159 {offsets = [0, 0], sizes = [2, 32], strides = [1, 1]} : vector<2x128xf32> to vector<2x32xf32>
    %161 = vector.extract_strided_slice %159 {offsets = [0, 32], sizes = [2, 32], strides = [1, 1]} : vector<2x128xf32> to vector<2x32xf32>
    %162 = vector.extract_strided_slice %159 {offsets = [0, 96], sizes = [2, 32], strides = [1, 1]} : vector<2x128xf32> to vector<2x32xf32>
    %163 = vector.extract_strided_slice %154 {offsets = [0, 64], sizes = [2, 32], strides = [1, 1]} : vector<2x128xf32> to vector<2x32xf32>
    %164 = math.tanh %163 : vector<2x32xf32>
    %165 = arith.mulf %161, %123 : vector<2x32xf32>
    %166 = arith.mulf %160, %164 : vector<2x32xf32>
    %167 = arith.addf %165, %166 : vector<2x32xf32>
    %168 = math.tanh %167 : vector<2x32xf32>
    %169 = arith.mulf %162, %168 : vector<2x32xf32>
    %170 = arith.index_cast %150 : i32 to index
    %c0_56 = arith.constant 0 : index
    %171 = vector.load %arg22[%170, %c0_56] : memref<20x32xf32, #tpu.memory_space<vmem>>, vector<2x32xf32>
    tpu.vector_store %arg22[%170, %c0_56], %169 {strides = array<i32>} : memref<20x32xf32, #tpu.memory_space<vmem>>, vector<2x32xf32>,
    %c2_i32_57 = arith.constant 2 : i32
    %172 = arith.muli %c3_i32, %c2_i32_57 : i32
    %173 = arith.index_cast %172 : i32 to index
    %c0_58 = arith.constant 0 : index
    %174 = vector.load %arg25[%173, %c0_58] : memref<12x128xf32, #tpu.memory_space<vmem>>, vector<2x128xf32>
    %cst_59 = arith.constant dense<0.000000e+00> : vector<2x128xf32>
    %175 = tpu.matmul %147, %17, %cst_59 {dimension_numbers = #tpu.dot_dimension_numbers<[1], [0], [0], [1], [0, 0, 1, 1], [], []>} : vector<2x32xf32>, vector<32x128xf32>, vector<2x128xf32> -> vector<2x128xf32>
    %176 = arith.addf %174, %175 : vector<2x128xf32>
    %177 = arith.negf %176 : vector<2x128xf32>
    %178 = math.exp %177 : vector<2x128xf32>
    %cst_60 = arith.constant 1.000000e+00 : f32
    %179 = vector.broadcast %cst_60 : f32 to vector<2x128xf32>
    %180 = arith.addf %179, %178 : vector<2x128xf32>
    %181 = arith.divf %179, %180 : vector<2x128xf32>
    %182 = vector.extract_strided_slice %181 {offsets = [0, 0], sizes = [2, 32], strides = [1, 1]} : vector<2x128xf32> to vector<2x32xf32>
    %183 = vector.extract_strided_slice %181 {offsets = [0, 32], sizes = [2, 32], strides = [1, 1]} : vector<2x128xf32> to vector<2x32xf32>
    %184 = vector.extract_strided_slice %181 {offsets = [0, 96], sizes = [2, 32], strides = [1, 1]} : vector<2x128xf32> to vector<2x32xf32>
    %185 = vector.extract_strided_slice %176 {offsets = [0, 64], sizes = [2, 32], strides = [1, 1]} : vector<2x128xf32> to vector<2x32xf32>
    %186 = math.tanh %185 : vector<2x32xf32>
    %187 = arith.mulf %183, %145 : vector<2x32xf32>
    %188 = arith.mulf %182, %186 : vector<2x32xf32>
    %189 = arith.addf %187, %188 : vector<2x32xf32>
    %190 = math.tanh %189 : vector<2x32xf32>
    %191 = arith.mulf %184, %190 : vector<2x32xf32>
    %192 = arith.index_cast %172 : i32 to index
    %c0_61 = arith.constant 0 : index
    %193 = vector.load %arg23[%192, %c0_61] : memref<12x32xf32, #tpu.memory_space<vmem>>, vector<2x32xf32>
    tpu.vector_store %arg23[%192, %c0_61], %191 {strides = array<i32>} : memref<12x32xf32, #tpu.memory_space<vmem>>, vector<2x32xf32>,
    %c4_i32 = arith.constant 4 : i32
    %c2_i32_62 = arith.constant 2 : i32
    %194 = arith.muli %c4_i32, %c2_i32_62 : i32
    %195 = arith.index_cast %194 : i32 to index
    %c0_63 = arith.constant 0 : index
    %196 = vector.load %arg24[%195, %c0_63] : memref<20x128xf32, #tpu.memory_space<vmem>>, vector<2x128xf32>
    %cst_64 = arith.constant dense<0.000000e+00> : vector<2x128xf32>
    %197 = tpu.matmul %169, %9, %cst_64 {dimension_numbers = #tpu.dot_dimension_numbers<[1], [0], [0], [1], [0, 0, 1, 1], [], []>} : vector<2x32xf32>, vector<32x128xf32>, vector<2x128xf32> -> vector<2x128xf32>
    %198 = arith.addf %196, %197 : vector<2x128xf32>
    %199 = arith.negf %198 : vector<2x128xf32>
    %200 = math.exp %199 : vector<2x128xf32>
    %cst_65 = arith.constant 1.000000e+00 : f32
    %201 = vector.broadcast %cst_65 : f32 to vector<2x128xf32>
    %202 = arith.addf %201, %200 : vector<2x128xf32>
    %203 = arith.divf %201, %202 : vector<2x128xf32>
    %204 = vector.extract_strided_slice %203 {offsets = [0, 0], sizes = [2, 32], strides = [1, 1]} : vector<2x128xf32> to vector<2x32xf32>
    %205 = vector.extract_strided_slice %203 {offsets = [0, 32], sizes = [2, 32], strides = [1, 1]} : vector<2x128xf32> to vector<2x32xf32>
    %206 = vector.extract_strided_slice %203 {offsets = [0, 96], sizes = [2, 32], strides = [1, 1]} : vector<2x128xf32> to vector<2x32xf32>
    %207 = vector.extract_strided_slice %198 {offsets = [0, 64], sizes = [2, 32], strides = [1, 1]} : vector<2x128xf32> to vector<2x32xf32>
    %208 = math.tanh %207 : vector<2x32xf32>
    %209 = arith.mulf %205, %167 : vector<2x32xf32>
    %210 = arith.mulf %204, %208 : vector<2x32xf32>
    %211 = arith.addf %209, %210 : vector<2x32xf32>
    %212 = math.tanh %211 : vector<2x32xf32>
    %213 = arith.mulf %206, %212 : vector<2x32xf32>
    %214 = arith.index_cast %194 : i32 to index
    %c0_66 = arith.constant 0 : index
    %215 = vector.load %arg22[%214, %c0_66] : memref<20x32xf32, #tpu.memory_space<vmem>>, vector<2x32xf32>
    tpu.vector_store %arg22[%214, %c0_66], %213 {strides = array<i32>} : memref<20x32xf32, #tpu.memory_space<vmem>>, vector<2x32xf32>,
    %c2_i32_67 = arith.constant 2 : i32
    %216 = arith.muli %c4_i32, %c2_i32_67 : i32
    %217 = arith.index_cast %216 : i32 to index
    %c0_68 = arith.constant 0 : index
    %218 = vector.load %arg25[%217, %c0_68] : memref<12x128xf32, #tpu.memory_space<vmem>>, vector<2x128xf32>
    %cst_69 = arith.constant dense<0.000000e+00> : vector<2x128xf32>
    %219 = tpu.matmul %191, %17, %cst_69 {dimension_numbers = #tpu.dot_dimension_numbers<[1], [0], [0], [1], [0, 0, 1, 1], [], []>} : vector<2x32xf32>, vector<32x128xf32>, vector<2x128xf32> -> vector<2x128xf32>
    %220 = arith.addf %218, %219 : vector<2x128xf32>
    %221 = arith.negf %220 : vector<2x128xf32>
    %222 = math.exp %221 : vector<2x128xf32>
    %cst_70 = arith.constant 1.000000e+00 : f32
    %223 = vector.broadcast %cst_70 : f32 to vector<2x128xf32>
    %224 = arith.addf %223, %222 : vector<2x128xf32>
    %225 = arith.divf %223, %224 : vector<2x128xf32>
    %226 = vector.extract_strided_slice %225 {offsets = [0, 0], sizes = [2, 32], strides = [1, 1]} : vector<2x128xf32> to vector<2x32xf32>
    %227 = vector.extract_strided_slice %225 {offsets = [0, 32], sizes = [2, 32], strides = [1, 1]} : vector<2x128xf32> to vector<2x32xf32>
    %228 = vector.extract_strided_slice %225 {offsets = [0, 96], sizes = [2, 32], strides = [1, 1]} : vector<2x128xf32> to vector<2x32xf32>
    %229 = vector.extract_strided_slice %220 {offsets = [0, 64], sizes = [2, 32], strides = [1, 1]} : vector<2x128xf32> to vector<2x32xf32>
    %230 = math.tanh %229 : vector<2x32xf32>
    %231 = arith.mulf %227, %189 : vector<2x32xf32>
    %232 = arith.mulf %226, %230 : vector<2x32xf32>
    %233 = arith.addf %231, %232 : vector<2x32xf32>
    %234 = math.tanh %233 : vector<2x32xf32>
    %235 = arith.mulf %228, %234 : vector<2x32xf32>
    %236 = arith.index_cast %216 : i32 to index
    %c0_71 = arith.constant 0 : index
    %237 = vector.load %arg23[%236, %c0_71] : memref<12x32xf32, #tpu.memory_space<vmem>>, vector<2x32xf32>
    tpu.vector_store %arg23[%236, %c0_71], %235 {strides = array<i32>} : memref<12x32xf32, #tpu.memory_space<vmem>>, vector<2x32xf32>,
    %c5_i32 = arith.constant 5 : i32
    %c2_i32_72 = arith.constant 2 : i32
    %238 = arith.muli %c5_i32, %c2_i32_72 : i32
    %239 = arith.index_cast %238 : i32 to index
    %c0_73 = arith.constant 0 : index
    %240 = vector.load %arg24[%239, %c0_73] : memref<20x128xf32, #tpu.memory_space<vmem>>, vector<2x128xf32>
    %cst_74 = arith.constant dense<0.000000e+00> : vector<2x128xf32>
    %241 = tpu.matmul %213, %9, %cst_74 {dimension_numbers = #tpu.dot_dimension_numbers<[1], [0], [0], [1], [0, 0, 1, 1], [], []>} : vector<2x32xf32>, vector<32x128xf32>, vector<2x128xf32> -> vector<2x128xf32>
    %242 = arith.addf %240, %241 : vector<2x128xf32>
    %243 = arith.negf %242 : vector<2x128xf32>
    %244 = math.exp %243 : vector<2x128xf32>
    %cst_75 = arith.constant 1.000000e+00 : f32
    %245 = vector.broadcast %cst_75 : f32 to vector<2x128xf32>
    %246 = arith.addf %245, %244 : vector<2x128xf32>
    %247 = arith.divf %245, %246 : vector<2x128xf32>
    %248 = vector.extract_strided_slice %247 {offsets = [0, 0], sizes = [2, 32], strides = [1, 1]} : vector<2x128xf32> to vector<2x32xf32>
    %249 = vector.extract_strided_slice %247 {offsets = [0, 32], sizes = [2, 32], strides = [1, 1]} : vector<2x128xf32> to vector<2x32xf32>
    %250 = vector.extract_strided_slice %247 {offsets = [0, 96], sizes = [2, 32], strides = [1, 1]} : vector<2x128xf32> to vector<2x32xf32>
    %251 = vector.extract_strided_slice %242 {offsets = [0, 64], sizes = [2, 32], strides = [1, 1]} : vector<2x128xf32> to vector<2x32xf32>
    %252 = math.tanh %251 : vector<2x32xf32>
    %253 = arith.mulf %249, %211 : vector<2x32xf32>
    %254 = arith.mulf %248, %252 : vector<2x32xf32>
    %255 = arith.addf %253, %254 : vector<2x32xf32>
    %256 = math.tanh %255 : vector<2x32xf32>
    %257 = arith.mulf %250, %256 : vector<2x32xf32>
    %258 = arith.index_cast %238 : i32 to index
    %c0_76 = arith.constant 0 : index
    %259 = vector.load %arg22[%258, %c0_76] : memref<20x32xf32, #tpu.memory_space<vmem>>, vector<2x32xf32>
    tpu.vector_store %arg22[%258, %c0_76], %257 {strides = array<i32>} : memref<20x32xf32, #tpu.memory_space<vmem>>, vector<2x32xf32>,
    %c2_i32_77 = arith.constant 2 : i32
    %260 = arith.muli %c5_i32, %c2_i32_77 : i32
    %261 = arith.index_cast %260 : i32 to index
    %c0_78 = arith.constant 0 : index
    %262 = vector.load %arg25[%261, %c0_78] : memref<12x128xf32, #tpu.memory_space<vmem>>, vector<2x128xf32>
    %cst_79 = arith.constant dense<0.000000e+00> : vector<2x128xf32>
    %263 = tpu.matmul %235, %17, %cst_79 {dimension_numbers = #tpu.dot_dimension_numbers<[1], [0], [0], [1], [0, 0, 1, 1], [], []>} : vector<2x32xf32>, vector<32x128xf32>, vector<2x128xf32> -> vector<2x128xf32>
    %264 = arith.addf %262, %263 : vector<2x128xf32>
    %265 = arith.negf %264 : vector<2x128xf32>
    %266 = math.exp %265 : vector<2x128xf32>
    %cst_80 = arith.constant 1.000000e+00 : f32
    %267 = vector.broadcast %cst_80 : f32 to vector<2x128xf32>
    %268 = arith.addf %267, %266 : vector<2x128xf32>
    %269 = arith.divf %267, %268 : vector<2x128xf32>
    %270 = vector.extract_strided_slice %269 {offsets = [0, 0], sizes = [2, 32], strides = [1, 1]} : vector<2x128xf32> to vector<2x32xf32>
    %271 = vector.extract_strided_slice %269 {offsets = [0, 32], sizes = [2, 32], strides = [1, 1]} : vector<2x128xf32> to vector<2x32xf32>
    %272 = vector.extract_strided_slice %269 {offsets = [0, 96], sizes = [2, 32], strides = [1, 1]} : vector<2x128xf32> to vector<2x32xf32>
    %273 = vector.extract_strided_slice %264 {offsets = [0, 64], sizes = [2, 32], strides = [1, 1]} : vector<2x128xf32> to vector<2x32xf32>
    %274 = math.tanh %273 : vector<2x32xf32>
    %275 = arith.mulf %271, %233 : vector<2x32xf32>
    %276 = arith.mulf %270, %274 : vector<2x32xf32>
    %277 = arith.addf %275, %276 : vector<2x32xf32>
    %278 = math.tanh %277 : vector<2x32xf32>
    %279 = arith.mulf %272, %278 : vector<2x32xf32>
    %280 = arith.index_cast %260 : i32 to index
    %c0_81 = arith.constant 0 : index
    %281 = vector.load %arg23[%280, %c0_81] : memref<12x32xf32, #tpu.memory_space<vmem>>, vector<2x32xf32>
    tpu.vector_store %arg23[%280, %c0_81], %279 {strides = array<i32>} : memref<12x32xf32, #tpu.memory_space<vmem>>, vector<2x32xf32>,
    %c6_i32 = arith.constant 6 : i32
    %c6_i32_82 = arith.constant 6 : i32
    %c2_i32_83 = arith.constant 2 : i32
    %282 = arith.muli %c6_i32_82, %c2_i32_83 : i32
    %283 = arith.index_cast %282 : i32 to index
    %c0_84 = arith.constant 0 : index
    %284 = vector.load %arg24[%283, %c0_84] : memref<20x128xf32, #tpu.memory_space<vmem>>, vector<2x128xf32>
    %cst_85 = arith.constant dense<0.000000e+00> : vector<2x128xf32>
    %285 = tpu.matmul %257, %9, %cst_85 {dimension_numbers = #tpu.dot_dimension_numbers<[1], [0], [0], [1], [0, 0, 1, 1], [], []>} : vector<2x32xf32>, vector<32x128xf32>, vector<2x128xf32> -> vector<2x128xf32>
    %286 = arith.addf %284, %285 : vector<2x128xf32>
    %287 = arith.negf %286 : vector<2x128xf32>
    %288 = math.exp %287 : vector<2x128xf32>
    %cst_86 = arith.constant 1.000000e+00 : f32
    %289 = vector.broadcast %cst_86 : f32 to vector<2x128xf32>
    %290 = arith.addf %289, %288 : vector<2x128xf32>
    %291 = arith.divf %289, %290 : vector<2x128xf32>
    %292 = vector.extract_strided_slice %291 {offsets = [0, 0], sizes = [2, 32], strides = [1, 1]} : vector<2x128xf32> to vector<2x32xf32>
    %293 = vector.extract_strided_slice %291 {offsets = [0, 32], sizes = [2, 32], strides = [1, 1]} : vector<2x128xf32> to vector<2x32xf32>
    %294 = vector.extract_strided_slice %291 {offsets = [0, 96], sizes = [2, 32], strides = [1, 1]} : vector<2x128xf32> to vector<2x32xf32>
    %295 = vector.extract_strided_slice %286 {offsets = [0, 64], sizes = [2, 32], strides = [1, 1]} : vector<2x128xf32> to vector<2x32xf32>
    %296 = math.tanh %295 : vector<2x32xf32>
    %297 = arith.mulf %293, %255 : vector<2x32xf32>
    %298 = arith.mulf %292, %296 : vector<2x32xf32>
    %299 = arith.addf %297, %298 : vector<2x32xf32>
    %300 = math.tanh %299 : vector<2x32xf32>
    %301 = arith.mulf %294, %300 : vector<2x32xf32>
    %302 = arith.index_cast %282 : i32 to index
    %c0_87 = arith.constant 0 : index
    %303 = vector.load %arg22[%302, %c0_87] : memref<20x32xf32, #tpu.memory_space<vmem>>, vector<2x32xf32>
    tpu.vector_store %arg22[%302, %c0_87], %301 {strides = array<i32>} : memref<20x32xf32, #tpu.memory_space<vmem>>, vector<2x32xf32>,
    %c7_i32 = arith.constant 7 : i32
    %c2_i32_88 = arith.constant 2 : i32
    %304 = arith.muli %c7_i32, %c2_i32_88 : i32
    %305 = arith.index_cast %304 : i32 to index
    %c0_89 = arith.constant 0 : index
    %306 = vector.load %arg24[%305, %c0_89] : memref<20x128xf32, #tpu.memory_space<vmem>>, vector<2x128xf32>
    %cst_90 = arith.constant dense<0.000000e+00> : vector<2x128xf32>
    %307 = tpu.matmul %301, %9, %cst_90 {dimension_numbers = #tpu.dot_dimension_numbers<[1], [0], [0], [1], [0, 0, 1, 1], [], []>} : vector<2x32xf32>, vector<32x128xf32>, vector<2x128xf32> -> vector<2x128xf32>
    %308 = arith.addf %306, %307 : vector<2x128xf32>
    %309 = arith.negf %308 : vector<2x128xf32>
    %310 = math.exp %309 : vector<2x128xf32>
    %cst_91 = arith.constant 1.000000e+00 : f32
    %311 = vector.broadcast %cst_91 : f32 to vector<2x128xf32>
    %312 = arith.addf %311, %310 : vector<2x128xf32>
    %313 = arith.divf %311, %312 : vector<2x128xf32>
    %314 = vector.extract_strided_slice %313 {offsets = [0, 0], sizes = [2, 32], strides = [1, 1]} : vector<2x128xf32> to vector<2x32xf32>
    %315 = vector.extract_strided_slice %313 {offsets = [0, 32], sizes = [2, 32], strides = [1, 1]} : vector<2x128xf32> to vector<2x32xf32>
    %316 = vector.extract_strided_slice %313 {offsets = [0, 96], sizes = [2, 32], strides = [1, 1]} : vector<2x128xf32> to vector<2x32xf32>
    %317 = vector.extract_strided_slice %308 {offsets = [0, 64], sizes = [2, 32], strides = [1, 1]} : vector<2x128xf32> to vector<2x32xf32>
    %318 = math.tanh %317 : vector<2x32xf32>
    %319 = arith.mulf %315, %299 : vector<2x32xf32>
    %320 = arith.mulf %314, %318 : vector<2x32xf32>
    %321 = arith.addf %319, %320 : vector<2x32xf32>
    %322 = math.tanh %321 : vector<2x32xf32>
    %323 = arith.mulf %316, %322 : vector<2x32xf32>
    %324 = arith.index_cast %304 : i32 to index
    %c0_92 = arith.constant 0 : index
    %325 = vector.load %arg22[%324, %c0_92] : memref<20x32xf32, #tpu.memory_space<vmem>>, vector<2x32xf32>
    tpu.vector_store %arg22[%324, %c0_92], %323 {strides = array<i32>} : memref<20x32xf32, #tpu.memory_space<vmem>>, vector<2x32xf32>,
    %c8_i32 = arith.constant 8 : i32
    %c2_i32_93 = arith.constant 2 : i32
    %326 = arith.muli %c8_i32, %c2_i32_93 : i32
    %327 = arith.index_cast %326 : i32 to index
    %c0_94 = arith.constant 0 : index
    %328 = vector.load %arg24[%327, %c0_94] : memref<20x128xf32, #tpu.memory_space<vmem>>, vector<2x128xf32>
    %cst_95 = arith.constant dense<0.000000e+00> : vector<2x128xf32>
    %329 = tpu.matmul %323, %9, %cst_95 {dimension_numbers = #tpu.dot_dimension_numbers<[1], [0], [0], [1], [0, 0, 1, 1], [], []>} : vector<2x32xf32>, vector<32x128xf32>, vector<2x128xf32> -> vector<2x128xf32>
    %330 = arith.addf %328, %329 : vector<2x128xf32>
    %331 = arith.negf %330 : vector<2x128xf32>
    %332 = math.exp %331 : vector<2x128xf32>
    %cst_96 = arith.constant 1.000000e+00 : f32
    %333 = vector.broadcast %cst_96 : f32 to vector<2x128xf32>
    %334 = arith.addf %333, %332 : vector<2x128xf32>
    %335 = arith.divf %333, %334 : vector<2x128xf32>
    %336 = vector.extract_strided_slice %335 {offsets = [0, 0], sizes = [2, 32], strides = [1, 1]} : vector<2x128xf32> to vector<2x32xf32>
    %337 = vector.extract_strided_slice %335 {offsets = [0, 32], sizes = [2, 32], strides = [1, 1]} : vector<2x128xf32> to vector<2x32xf32>
    %338 = vector.extract_strided_slice %335 {offsets = [0, 96], sizes = [2, 32], strides = [1, 1]} : vector<2x128xf32> to vector<2x32xf32>
    %339 = vector.extract_strided_slice %330 {offsets = [0, 64], sizes = [2, 32], strides = [1, 1]} : vector<2x128xf32> to vector<2x32xf32>
    %340 = math.tanh %339 : vector<2x32xf32>
    %341 = arith.mulf %337, %321 : vector<2x32xf32>
    %342 = arith.mulf %336, %340 : vector<2x32xf32>
    %343 = arith.addf %341, %342 : vector<2x32xf32>
    %344 = math.tanh %343 : vector<2x32xf32>
    %345 = arith.mulf %338, %344 : vector<2x32xf32>
    %346 = arith.index_cast %326 : i32 to index
    %c0_97 = arith.constant 0 : index
    %347 = vector.load %arg22[%346, %c0_97] : memref<20x32xf32, #tpu.memory_space<vmem>>, vector<2x32xf32>
    tpu.vector_store %arg22[%346, %c0_97], %345 {strides = array<i32>} : memref<20x32xf32, #tpu.memory_space<vmem>>, vector<2x32xf32>,
    %c9_i32 = arith.constant 9 : i32
    %c2_i32_98 = arith.constant 2 : i32
    %348 = arith.muli %c9_i32, %c2_i32_98 : i32
    %349 = arith.index_cast %348 : i32 to index
    %c0_99 = arith.constant 0 : index
    %350 = vector.load %arg24[%349, %c0_99] : memref<20x128xf32, #tpu.memory_space<vmem>>, vector<2x128xf32>
    %cst_100 = arith.constant dense<0.000000e+00> : vector<2x128xf32>
    %351 = tpu.matmul %345, %9, %cst_100 {dimension_numbers = #tpu.dot_dimension_numbers<[1], [0], [0], [1], [0, 0, 1, 1], [], []>} : vector<2x32xf32>, vector<32x128xf32>, vector<2x128xf32> -> vector<2x128xf32>
    %352 = arith.addf %350, %351 : vector<2x128xf32>
    %353 = arith.negf %352 : vector<2x128xf32>
    %354 = math.exp %353 : vector<2x128xf32>
    %cst_101 = arith.constant 1.000000e+00 : f32
    %355 = vector.broadcast %cst_101 : f32 to vector<2x128xf32>
    %356 = arith.addf %355, %354 : vector<2x128xf32>
    %357 = arith.divf %355, %356 : vector<2x128xf32>
    %358 = vector.extract_strided_slice %357 {offsets = [0, 0], sizes = [2, 32], strides = [1, 1]} : vector<2x128xf32> to vector<2x32xf32>
    %359 = vector.extract_strided_slice %357 {offsets = [0, 32], sizes = [2, 32], strides = [1, 1]} : vector<2x128xf32> to vector<2x32xf32>
    %360 = vector.extract_strided_slice %357 {offsets = [0, 96], sizes = [2, 32], strides = [1, 1]} : vector<2x128xf32> to vector<2x32xf32>
    %361 = vector.extract_strided_slice %352 {offsets = [0, 64], sizes = [2, 32], strides = [1, 1]} : vector<2x128xf32> to vector<2x32xf32>
    %362 = math.tanh %361 : vector<2x32xf32>
    %363 = arith.mulf %359, %343 : vector<2x32xf32>
    %364 = arith.mulf %358, %362 : vector<2x32xf32>
    %365 = arith.addf %363, %364 : vector<2x32xf32>
    %366 = math.tanh %365 : vector<2x32xf32>
    %367 = arith.mulf %360, %366 : vector<2x32xf32>
    %368 = arith.index_cast %348 : i32 to index
    %c0_102 = arith.constant 0 : index
    %369 = vector.load %arg22[%368, %c0_102] : memref<20x32xf32, #tpu.memory_space<vmem>>, vector<2x32xf32>
    tpu.vector_store %arg22[%368, %c0_102], %367 {strides = array<i32>} : memref<20x32xf32, #tpu.memory_space<vmem>>, vector<2x32xf32>,
    %c4_i32_103 = arith.constant 4 : i32
    %c0_104 = arith.constant 0 : index
    %c0_105 = arith.constant 0 : index
    %370 = vector.load %arg22[%c0_104, %c0_105] : memref<20x32xf32, #tpu.memory_space<vmem>>, vector<20x32xf32>
    %c0_106 = arith.constant 0 : index
    %c0_107 = arith.constant 0 : index
    %371 = vector.load %arg5[%c0_106, %c0_107] : memref<32x128xf32, #tpu.memory_space<vmem>>, vector<32x128xf32>
    %cst_108 = arith.constant dense<0.000000e+00> : vector<20x128xf32>
    %372 = tpu.matmul %370, %371, %cst_108 {dimension_numbers = #tpu.dot_dimension_numbers<[1], [0], [0], [1], [0, 0, 1, 1], [], []>} : vector<20x32xf32>, vector<32x128xf32>, vector<20x128xf32> -> vector<20x128xf32>
    %c0_109 = arith.constant 0 : index
    %c0_110 = arith.constant 0 : index
    %373 = vector.load %arg7[%c0_109, %c0_110] : memref<1x128xf32, #tpu.memory_space<vmem>>, vector<1x128xf32>
    %374 = vector.broadcast %373 : vector<1x128xf32> to vector<20x128xf32>
    %375 = arith.addf %372, %374 : vector<20x128xf32>
    %c0_111 = arith.constant 0 : index
    %c0_112 = arith.constant 0 : index
    %376 = vector.load %arg24[%c0_111, %c0_112] : memref<20x128xf32, #tpu.memory_space<vmem>>, vector<20x128xf32>
    tpu.vector_store %arg24[%c0_111, %c0_112], %375 {strides = array<i32>} : memref<20x128xf32, #tpu.memory_space<vmem>>, vector<20x128xf32>,
    %c0_113 = arith.constant 0 : index
    %c0_114 = arith.constant 0 : index
    %377 = vector.load %arg6[%c0_113, %c0_114] : memref<32x128xf32, #tpu.memory_space<vmem>>, vector<32x128xf32>
    %c0_i32_115 = arith.constant 0 : i32
    %c2_i32_116 = arith.constant 2 : i32
    %378 = arith.muli %c0_i32_115, %c2_i32_116 : i32
    %379 = arith.index_cast %378 : i32 to index
    %c0_117 = arith.constant 0 : index
    %380 = vector.load %arg24[%379, %c0_117] : memref<20x128xf32, #tpu.memory_space<vmem>>, vector<2x128xf32>
    %cst_118 = arith.constant dense<0.000000e+00> : vector<2x128xf32>
    %381 = tpu.matmul %0, %377, %cst_118 {dimension_numbers = #tpu.dot_dimension_numbers<[1], [0], [0], [1], [0, 0, 1, 1], [], []>} : vector<2x32xf32>, vector<32x128xf32>, vector<2x128xf32> -> vector<2x128xf32>
    %382 = arith.addf %380, %381 : vector<2x128xf32>
    %383 = arith.negf %382 : vector<2x128xf32>
    %384 = math.exp %383 : vector<2x128xf32>
    %cst_119 = arith.constant 1.000000e+00 : f32
    %385 = vector.broadcast %cst_119 : f32 to vector<2x128xf32>
    %386 = arith.addf %385, %384 : vector<2x128xf32>
    %387 = arith.divf %385, %386 : vector<2x128xf32>
    %388 = vector.extract_strided_slice %387 {offsets = [0, 0], sizes = [2, 32], strides = [1, 1]} : vector<2x128xf32> to vector<2x32xf32>
    %389 = vector.extract_strided_slice %387 {offsets = [0, 32], sizes = [2, 32], strides = [1, 1]} : vector<2x128xf32> to vector<2x32xf32>
    %390 = vector.extract_strided_slice %387 {offsets = [0, 96], sizes = [2, 32], strides = [1, 1]} : vector<2x128xf32> to vector<2x32xf32>
    %391 = vector.extract_strided_slice %382 {offsets = [0, 64], sizes = [2, 32], strides = [1, 1]} : vector<2x128xf32> to vector<2x32xf32>
    %392 = math.tanh %391 : vector<2x32xf32>
    %393 = arith.mulf %389, %1 : vector<2x32xf32>
    %394 = arith.mulf %388, %392 : vector<2x32xf32>
    %395 = arith.addf %393, %394 : vector<2x32xf32>
    %396 = math.tanh %395 : vector<2x32xf32>
    %397 = arith.mulf %390, %396 : vector<2x32xf32>
    %398 = arith.index_cast %378 : i32 to index
    %c0_120 = arith.constant 0 : index
    %399 = vector.load %arg22[%398, %c0_120] : memref<20x32xf32, #tpu.memory_space<vmem>>, vector<2x32xf32>
    tpu.vector_store %arg22[%398, %c0_120], %397 {strides = array<i32>} : memref<20x32xf32, #tpu.memory_space<vmem>>, vector<2x32xf32>,
    %c1_i32_121 = arith.constant 1 : i32
    %c2_i32_122 = arith.constant 2 : i32
    %400 = arith.muli %c1_i32_121, %c2_i32_122 : i32
    %401 = arith.index_cast %400 : i32 to index
    %c0_123 = arith.constant 0 : index
    %402 = vector.load %arg24[%401, %c0_123] : memref<20x128xf32, #tpu.memory_space<vmem>>, vector<2x128xf32>
    %cst_124 = arith.constant dense<0.000000e+00> : vector<2x128xf32>
    %403 = tpu.matmul %397, %377, %cst_124 {dimension_numbers = #tpu.dot_dimension_numbers<[1], [0], [0], [1], [0, 0, 1, 1], [], []>} : vector<2x32xf32>, vector<32x128xf32>, vector<2x128xf32> -> vector<2x128xf32>
    %404 = arith.addf %402, %403 : vector<2x128xf32>
    %405 = arith.negf %404 : vector<2x128xf32>
    %406 = math.exp %405 : vector<2x128xf32>
    %cst_125 = arith.constant 1.000000e+00 : f32
    %407 = vector.broadcast %cst_125 : f32 to vector<2x128xf32>
    %408 = arith.addf %407, %406 : vector<2x128xf32>
    %409 = arith.divf %407, %408 : vector<2x128xf32>
    %410 = vector.extract_strided_slice %409 {offsets = [0, 0], sizes = [2, 32], strides = [1, 1]} : vector<2x128xf32> to vector<2x32xf32>
    %411 = vector.extract_strided_slice %409 {offsets = [0, 32], sizes = [2, 32], strides = [1, 1]} : vector<2x128xf32> to vector<2x32xf32>
    %412 = vector.extract_strided_slice %409 {offsets = [0, 96], sizes = [2, 32], strides = [1, 1]} : vector<2x128xf32> to vector<2x32xf32>
    %413 = vector.extract_strided_slice %404 {offsets = [0, 64], sizes = [2, 32], strides = [1, 1]} : vector<2x128xf32> to vector<2x32xf32>
    %414 = math.tanh %413 : vector<2x32xf32>
    %415 = arith.mulf %411, %395 : vector<2x32xf32>
    %416 = arith.mulf %410, %414 : vector<2x32xf32>
    %417 = arith.addf %415, %416 : vector<2x32xf32>
    %418 = math.tanh %417 : vector<2x32xf32>
    %419 = arith.mulf %412, %418 : vector<2x32xf32>
    %420 = arith.index_cast %400 : i32 to index
    %c0_126 = arith.constant 0 : index
    %421 = vector.load %arg22[%420, %c0_126] : memref<20x32xf32, #tpu.memory_space<vmem>>, vector<2x32xf32>
    tpu.vector_store %arg22[%420, %c0_126], %419 {strides = array<i32>} : memref<20x32xf32, #tpu.memory_space<vmem>>, vector<2x32xf32>,
    %c2_i32_127 = arith.constant 2 : i32
    %c2_i32_128 = arith.constant 2 : i32
    %422 = arith.muli %c2_i32_127, %c2_i32_128 : i32
    %423 = arith.index_cast %422 : i32 to index
    %c0_129 = arith.constant 0 : index
    %424 = vector.load %arg24[%423, %c0_129] : memref<20x128xf32, #tpu.memory_space<vmem>>, vector<2x128xf32>
    %cst_130 = arith.constant dense<0.000000e+00> : vector<2x128xf32>
    %425 = tpu.matmul %419, %377, %cst_130 {dimension_numbers = #tpu.dot_dimension_numbers<[1], [0], [0], [1], [0, 0, 1, 1], [], []>} : vector<2x32xf32>, vector<32x128xf32>, vector<2x128xf32> -> vector<2x128xf32>
    %426 = arith.addf %424, %425 : vector<2x128xf32>
    %427 = arith.negf %426 : vector<2x128xf32>
    %428 = math.exp %427 : vector<2x128xf32>
    %cst_131 = arith.constant 1.000000e+00 : f32
    %429 = vector.broadcast %cst_131 : f32 to vector<2x128xf32>
    %430 = arith.addf %429, %428 : vector<2x128xf32>
    %431 = arith.divf %429, %430 : vector<2x128xf32>
    %432 = vector.extract_strided_slice %431 {offsets = [0, 0], sizes = [2, 32], strides = [1, 1]} : vector<2x128xf32> to vector<2x32xf32>
    %433 = vector.extract_strided_slice %431 {offsets = [0, 32], sizes = [2, 32], strides = [1, 1]} : vector<2x128xf32> to vector<2x32xf32>
    %434 = vector.extract_strided_slice %431 {offsets = [0, 96], sizes = [2, 32], strides = [1, 1]} : vector<2x128xf32> to vector<2x32xf32>
    %435 = vector.extract_strided_slice %426 {offsets = [0, 64], sizes = [2, 32], strides = [1, 1]} : vector<2x128xf32> to vector<2x32xf32>
    %436 = math.tanh %435 : vector<2x32xf32>
    %437 = arith.mulf %433, %417 : vector<2x32xf32>
    %438 = arith.mulf %432, %436 : vector<2x32xf32>
    %439 = arith.addf %437, %438 : vector<2x32xf32>
    %440 = math.tanh %439 : vector<2x32xf32>
    %441 = arith.mulf %434, %440 : vector<2x32xf32>
    %442 = arith.index_cast %422 : i32 to index
    %c0_132 = arith.constant 0 : index
    %443 = vector.load %arg22[%442, %c0_132] : memref<20x32xf32, #tpu.memory_space<vmem>>, vector<2x32xf32>
    tpu.vector_store %arg22[%442, %c0_132], %441 {strides = array<i32>} : memref<20x32xf32, #tpu.memory_space<vmem>>, vector<2x32xf32>,
    %c3_i32_133 = arith.constant 3 : i32
    %c2_i32_134 = arith.constant 2 : i32
    %444 = arith.muli %c3_i32_133, %c2_i32_134 : i32
    %445 = arith.index_cast %444 : i32 to index
    %c0_135 = arith.constant 0 : index
    %446 = vector.load %arg24[%445, %c0_135] : memref<20x128xf32, #tpu.memory_space<vmem>>, vector<2x128xf32>
    %cst_136 = arith.constant dense<0.000000e+00> : vector<2x128xf32>
    %447 = tpu.matmul %441, %377, %cst_136 {dimension_numbers = #tpu.dot_dimension_numbers<[1], [0], [0], [1], [0, 0, 1, 1], [], []>} : vector<2x32xf32>, vector<32x128xf32>, vector<2x128xf32> -> vector<2x128xf32>
    %448 = arith.addf %446, %447 : vector<2x128xf32>
    %449 = arith.negf %448 : vector<2x128xf32>
    %450 = math.exp %449 : vector<2x128xf32>
    %cst_137 = arith.constant 1.000000e+00 : f32
    %451 = vector.broadcast %cst_137 : f32 to vector<2x128xf32>
    %452 = arith.addf %451, %450 : vector<2x128xf32>
    %453 = arith.divf %451, %452 : vector<2x128xf32>
    %454 = vector.extract_strided_slice %453 {offsets = [0, 0], sizes = [2, 32], strides = [1, 1]} : vector<2x128xf32> to vector<2x32xf32>
    %455 = vector.extract_strided_slice %453 {offsets = [0, 32], sizes = [2, 32], strides = [1, 1]} : vector<2x128xf32> to vector<2x32xf32>
    %456 = vector.extract_strided_slice %453 {offsets = [0, 96], sizes = [2, 32], strides = [1, 1]} : vector<2x128xf32> to vector<2x32xf32>
    %457 = vector.extract_strided_slice %448 {offsets = [0, 64], sizes = [2, 32], strides = [1, 1]} : vector<2x128xf32> to vector<2x32xf32>
    %458 = math.tanh %457 : vector<2x32xf32>
    %459 = arith.mulf %455, %439 : vector<2x32xf32>
    %460 = arith.mulf %454, %458 : vector<2x32xf32>
    %461 = arith.addf %459, %460 : vector<2x32xf32>
    %462 = math.tanh %461 : vector<2x32xf32>
    %463 = arith.mulf %456, %462 : vector<2x32xf32>
    %464 = arith.index_cast %444 : i32 to index
    %c0_138 = arith.constant 0 : index
    %465 = vector.load %arg22[%464, %c0_138] : memref<20x32xf32, #tpu.memory_space<vmem>>, vector<2x32xf32>
    tpu.vector_store %arg22[%464, %c0_138], %463 {strides = array<i32>} : memref<20x32xf32, #tpu.memory_space<vmem>>, vector<2x32xf32>,
    %c4_i32_139 = arith.constant 4 : i32
    %c2_i32_140 = arith.constant 2 : i32
    %466 = arith.muli %c4_i32_139, %c2_i32_140 : i32
    %467 = arith.index_cast %466 : i32 to index
    %c0_141 = arith.constant 0 : index
    %468 = vector.load %arg24[%467, %c0_141] : memref<20x128xf32, #tpu.memory_space<vmem>>, vector<2x128xf32>
    %cst_142 = arith.constant dense<0.000000e+00> : vector<2x128xf32>
    %469 = tpu.matmul %463, %377, %cst_142 {dimension_numbers = #tpu.dot_dimension_numbers<[1], [0], [0], [1], [0, 0, 1, 1], [], []>} : vector<2x32xf32>, vector<32x128xf32>, vector<2x128xf32> -> vector<2x128xf32>
    %470 = arith.addf %468, %469 : vector<2x128xf32>
    %471 = arith.negf %470 : vector<2x128xf32>
    %472 = math.exp %471 : vector<2x128xf32>
    %cst_143 = arith.constant 1.000000e+00 : f32
    %473 = vector.broadcast %cst_143 : f32 to vector<2x128xf32>
    %474 = arith.addf %473, %472 : vector<2x128xf32>
    %475 = arith.divf %473, %474 : vector<2x128xf32>
    %476 = vector.extract_strided_slice %475 {offsets = [0, 0], sizes = [2, 32], strides = [1, 1]} : vector<2x128xf32> to vector<2x32xf32>
    %477 = vector.extract_strided_slice %475 {offsets = [0, 32], sizes = [2, 32], strides = [1, 1]} : vector<2x128xf32> to vector<2x32xf32>
    %478 = vector.extract_strided_slice %475 {offsets = [0, 96], sizes = [2, 32], strides = [1, 1]} : vector<2x128xf32> to vector<2x32xf32>
    %479 = vector.extract_strided_slice %470 {offsets = [0, 64], sizes = [2, 32], strides = [1, 1]} : vector<2x128xf32> to vector<2x32xf32>
    %480 = math.tanh %479 : vector<2x32xf32>
    %481 = arith.mulf %477, %461 : vector<2x32xf32>
    %482 = arith.mulf %476, %480 : vector<2x32xf32>
    %483 = arith.addf %481, %482 : vector<2x32xf32>
    %484 = math.tanh %483 : vector<2x32xf32>
    %485 = arith.mulf %478, %484 : vector<2x32xf32>
    %486 = arith.index_cast %466 : i32 to index
    %c0_144 = arith.constant 0 : index
    %487 = vector.load %arg22[%486, %c0_144] : memref<20x32xf32, #tpu.memory_space<vmem>>, vector<2x32xf32>
    tpu.vector_store %arg22[%486, %c0_144], %485 {strides = array<i32>} : memref<20x32xf32, #tpu.memory_space<vmem>>, vector<2x32xf32>,
    %c5_i32_145 = arith.constant 5 : i32
    %c2_i32_146 = arith.constant 2 : i32
    %488 = arith.muli %c5_i32_145, %c2_i32_146 : i32
    %489 = arith.index_cast %488 : i32 to index
    %c0_147 = arith.constant 0 : index
    %490 = vector.load %arg24[%489, %c0_147] : memref<20x128xf32, #tpu.memory_space<vmem>>, vector<2x128xf32>
    %cst_148 = arith.constant dense<0.000000e+00> : vector<2x128xf32>
    %491 = tpu.matmul %485, %377, %cst_148 {dimension_numbers = #tpu.dot_dimension_numbers<[1], [0], [0], [1], [0, 0, 1, 1], [], []>} : vector<2x32xf32>, vector<32x128xf32>, vector<2x128xf32> -> vector<2x128xf32>
    %492 = arith.addf %490, %491 : vector<2x128xf32>
    %493 = arith.negf %492 : vector<2x128xf32>
    %494 = math.exp %493 : vector<2x128xf32>
    %cst_149 = arith.constant 1.000000e+00 : f32
    %495 = vector.broadcast %cst_149 : f32 to vector<2x128xf32>
    %496 = arith.addf %495, %494 : vector<2x128xf32>
    %497 = arith.divf %495, %496 : vector<2x128xf32>
    %498 = vector.extract_strided_slice %497 {offsets = [0, 0], sizes = [2, 32], strides = [1, 1]} : vector<2x128xf32> to vector<2x32xf32>
    %499 = vector.extract_strided_slice %497 {offsets = [0, 32], sizes = [2, 32], strides = [1, 1]} : vector<2x128xf32> to vector<2x32xf32>
    %500 = vector.extract_strided_slice %497 {offsets = [0, 96], sizes = [2, 32], strides = [1, 1]} : vector<2x128xf32> to vector<2x32xf32>
    %501 = vector.extract_strided_slice %492 {offsets = [0, 64], sizes = [2, 32], strides = [1, 1]} : vector<2x128xf32> to vector<2x32xf32>
    %502 = math.tanh %501 : vector<2x32xf32>
    %503 = arith.mulf %499, %483 : vector<2x32xf32>
    %504 = arith.mulf %498, %502 : vector<2x32xf32>
    %505 = arith.addf %503, %504 : vector<2x32xf32>
    %506 = math.tanh %505 : vector<2x32xf32>
    %507 = arith.mulf %500, %506 : vector<2x32xf32>
    %508 = arith.index_cast %488 : i32 to index
    %c0_150 = arith.constant 0 : index
    %509 = vector.load %arg22[%508, %c0_150] : memref<20x32xf32, #tpu.memory_space<vmem>>, vector<2x32xf32>
    tpu.vector_store %arg22[%508, %c0_150], %507 {strides = array<i32>} : memref<20x32xf32, #tpu.memory_space<vmem>>, vector<2x32xf32>,
    %c6_i32_151 = arith.constant 6 : i32
    %c2_i32_152 = arith.constant 2 : i32
    %510 = arith.muli %c6_i32_151, %c2_i32_152 : i32
    %511 = arith.index_cast %510 : i32 to index
    %c0_153 = arith.constant 0 : index
    %512 = vector.load %arg24[%511, %c0_153] : memref<20x128xf32, #tpu.memory_space<vmem>>, vector<2x128xf32>
    %cst_154 = arith.constant dense<0.000000e+00> : vector<2x128xf32>
    %513 = tpu.matmul %507, %377, %cst_154 {dimension_numbers = #tpu.dot_dimension_numbers<[1], [0], [0], [1], [0, 0, 1, 1], [], []>} : vector<2x32xf32>, vector<32x128xf32>, vector<2x128xf32> -> vector<2x128xf32>
    %514 = arith.addf %512, %513 : vector<2x128xf32>
    %515 = arith.negf %514 : vector<2x128xf32>
    %516 = math.exp %515 : vector<2x128xf32>
    %cst_155 = arith.constant 1.000000e+00 : f32
    %517 = vector.broadcast %cst_155 : f32 to vector<2x128xf32>
    %518 = arith.addf %517, %516 : vector<2x128xf32>
    %519 = arith.divf %517, %518 : vector<2x128xf32>
    %520 = vector.extract_strided_slice %519 {offsets = [0, 0], sizes = [2, 32], strides = [1, 1]} : vector<2x128xf32> to vector<2x32xf32>
    %521 = vector.extract_strided_slice %519 {offsets = [0, 32], sizes = [2, 32], strides = [1, 1]} : vector<2x128xf32> to vector<2x32xf32>
    %522 = vector.extract_strided_slice %519 {offsets = [0, 96], sizes = [2, 32], strides = [1, 1]} : vector<2x128xf32> to vector<2x32xf32>
    %523 = vector.extract_strided_slice %514 {offsets = [0, 64], sizes = [2, 32], strides = [1, 1]} : vector<2x128xf32> to vector<2x32xf32>
    %524 = math.tanh %523 : vector<2x32xf32>
    %525 = arith.mulf %521, %505 : vector<2x32xf32>
    %526 = arith.mulf %520, %524 : vector<2x32xf32>
    %527 = arith.addf %525, %526 : vector<2x32xf32>
    %528 = math.tanh %527 : vector<2x32xf32>
    %529 = arith.mulf %522, %528 : vector<2x32xf32>
    %530 = arith.index_cast %510 : i32 to index
    %c0_156 = arith.constant 0 : index
    %531 = vector.load %arg22[%530, %c0_156] : memref<20x32xf32, #tpu.memory_space<vmem>>, vector<2x32xf32>
    tpu.vector_store %arg22[%530, %c0_156], %529 {strides = array<i32>} : memref<20x32xf32, #tpu.memory_space<vmem>>, vector<2x32xf32>,
    %c7_i32_157 = arith.constant 7 : i32
    %c2_i32_158 = arith.constant 2 : i32
    %532 = arith.muli %c7_i32_157, %c2_i32_158 : i32
    %533 = arith.index_cast %532 : i32 to index
    %c0_159 = arith.constant 0 : index
    %534 = vector.load %arg24[%533, %c0_159] : memref<20x128xf32, #tpu.memory_space<vmem>>, vector<2x128xf32>
    %cst_160 = arith.constant dense<0.000000e+00> : vector<2x128xf32>
    %535 = tpu.matmul %529, %377, %cst_160 {dimension_numbers = #tpu.dot_dimension_numbers<[1], [0], [0], [1], [0, 0, 1, 1], [], []>} : vector<2x32xf32>, vector<32x128xf32>, vector<2x128xf32> -> vector<2x128xf32>
    %536 = arith.addf %534, %535 : vector<2x128xf32>
    %537 = arith.negf %536 : vector<2x128xf32>
    %538 = math.exp %537 : vector<2x128xf32>
    %cst_161 = arith.constant 1.000000e+00 : f32
    %539 = vector.broadcast %cst_161 : f32 to vector<2x128xf32>
    %540 = arith.addf %539, %538 : vector<2x128xf32>
    %541 = arith.divf %539, %540 : vector<2x128xf32>
    %542 = vector.extract_strided_slice %541 {offsets = [0, 0], sizes = [2, 32], strides = [1, 1]} : vector<2x128xf32> to vector<2x32xf32>
    %543 = vector.extract_strided_slice %541 {offsets = [0, 32], sizes = [2, 32], strides = [1, 1]} : vector<2x128xf32> to vector<2x32xf32>
    %544 = vector.extract_strided_slice %541 {offsets = [0, 96], sizes = [2, 32], strides = [1, 1]} : vector<2x128xf32> to vector<2x32xf32>
    %545 = vector.extract_strided_slice %536 {offsets = [0, 64], sizes = [2, 32], strides = [1, 1]} : vector<2x128xf32> to vector<2x32xf32>
    %546 = math.tanh %545 : vector<2x32xf32>
    %547 = arith.mulf %543, %527 : vector<2x32xf32>
    %548 = arith.mulf %542, %546 : vector<2x32xf32>
    %549 = arith.addf %547, %548 : vector<2x32xf32>
    %550 = math.tanh %549 : vector<2x32xf32>
    %551 = arith.mulf %544, %550 : vector<2x32xf32>
    %552 = arith.index_cast %532 : i32 to index
    %c0_162 = arith.constant 0 : index
    %553 = vector.load %arg22[%552, %c0_162] : memref<20x32xf32, #tpu.memory_space<vmem>>, vector<2x32xf32>
    tpu.vector_store %arg22[%552, %c0_162], %551 {strides = array<i32>} : memref<20x32xf32, #tpu.memory_space<vmem>>, vector<2x32xf32>,
    %c8_i32_163 = arith.constant 8 : i32
    %c2_i32_164 = arith.constant 2 : i32
    %554 = arith.muli %c8_i32_163, %c2_i32_164 : i32
    %555 = arith.index_cast %554 : i32 to index
    %c0_165 = arith.constant 0 : index
    %556 = vector.load %arg24[%555, %c0_165] : memref<20x128xf32, #tpu.memory_space<vmem>>, vector<2x128xf32>
    %cst_166 = arith.constant dense<0.000000e+00> : vector<2x128xf32>
    %557 = tpu.matmul %551, %377, %cst_166 {dimension_numbers = #tpu.dot_dimension_numbers<[1], [0], [0], [1], [0, 0, 1, 1], [], []>} : vector<2x32xf32>, vector<32x128xf32>, vector<2x128xf32> -> vector<2x128xf32>
    %558 = arith.addf %556, %557 : vector<2x128xf32>
    %559 = arith.negf %558 : vector<2x128xf32>
    %560 = math.exp %559 : vector<2x128xf32>
    %cst_167 = arith.constant 1.000000e+00 : f32
    %561 = vector.broadcast %cst_167 : f32 to vector<2x128xf32>
    %562 = arith.addf %561, %560 : vector<2x128xf32>
    %563 = arith.divf %561, %562 : vector<2x128xf32>
    %564 = vector.extract_strided_slice %563 {offsets = [0, 0], sizes = [2, 32], strides = [1, 1]} : vector<2x128xf32> to vector<2x32xf32>
    %565 = vector.extract_strided_slice %563 {offsets = [0, 32], sizes = [2, 32], strides = [1, 1]} : vector<2x128xf32> to vector<2x32xf32>
    %566 = vector.extract_strided_slice %563 {offsets = [0, 96], sizes = [2, 32], strides = [1, 1]} : vector<2x128xf32> to vector<2x32xf32>
    %567 = vector.extract_strided_slice %558 {offsets = [0, 64], sizes = [2, 32], strides = [1, 1]} : vector<2x128xf32> to vector<2x32xf32>
    %568 = math.tanh %567 : vector<2x32xf32>
    %569 = arith.mulf %565, %549 : vector<2x32xf32>
    %570 = arith.mulf %564, %568 : vector<2x32xf32>
    %571 = arith.addf %569, %570 : vector<2x32xf32>
    %572 = math.tanh %571 : vector<2x32xf32>
    %573 = arith.mulf %566, %572 : vector<2x32xf32>
    %574 = arith.index_cast %554 : i32 to index
    %c0_168 = arith.constant 0 : index
    %575 = vector.load %arg22[%574, %c0_168] : memref<20x32xf32, #tpu.memory_space<vmem>>, vector<2x32xf32>
    tpu.vector_store %arg22[%574, %c0_168], %573 {strides = array<i32>} : memref<20x32xf32, #tpu.memory_space<vmem>>, vector<2x32xf32>,
    %c9_i32_169 = arith.constant 9 : i32
    %c2_i32_170 = arith.constant 2 : i32
    %576 = arith.muli %c9_i32_169, %c2_i32_170 : i32
    %577 = arith.index_cast %576 : i32 to index
    %c0_171 = arith.constant 0 : index
    %578 = vector.load %arg24[%577, %c0_171] : memref<20x128xf32, #tpu.memory_space<vmem>>, vector<2x128xf32>
    %cst_172 = arith.constant dense<0.000000e+00> : vector<2x128xf32>
    %579 = tpu.matmul %573, %377, %cst_172 {dimension_numbers = #tpu.dot_dimension_numbers<[1], [0], [0], [1], [0, 0, 1, 1], [], []>} : vector<2x32xf32>, vector<32x128xf32>, vector<2x128xf32> -> vector<2x128xf32>
    %580 = arith.addf %578, %579 : vector<2x128xf32>
    %581 = arith.negf %580 : vector<2x128xf32>
    %582 = math.exp %581 : vector<2x128xf32>
    %cst_173 = arith.constant 1.000000e+00 : f32
    %583 = vector.broadcast %cst_173 : f32 to vector<2x128xf32>
    %584 = arith.addf %583, %582 : vector<2x128xf32>
    %585 = arith.divf %583, %584 : vector<2x128xf32>
    %586 = vector.extract_strided_slice %585 {offsets = [0, 0], sizes = [2, 32], strides = [1, 1]} : vector<2x128xf32> to vector<2x32xf32>
    %587 = vector.extract_strided_slice %585 {offsets = [0, 32], sizes = [2, 32], strides = [1, 1]} : vector<2x128xf32> to vector<2x32xf32>
    %588 = vector.extract_strided_slice %585 {offsets = [0, 96], sizes = [2, 32], strides = [1, 1]} : vector<2x128xf32> to vector<2x32xf32>
    %589 = vector.extract_strided_slice %580 {offsets = [0, 64], sizes = [2, 32], strides = [1, 1]} : vector<2x128xf32> to vector<2x32xf32>
    %590 = math.tanh %589 : vector<2x32xf32>
    %591 = arith.mulf %587, %571 : vector<2x32xf32>
    %592 = arith.mulf %586, %590 : vector<2x32xf32>
    %593 = arith.addf %591, %592 : vector<2x32xf32>
    %594 = math.tanh %593 : vector<2x32xf32>
    %595 = arith.mulf %588, %594 : vector<2x32xf32>
    %596 = arith.index_cast %576 : i32 to index
    %c0_174 = arith.constant 0 : index
    %597 = vector.load %arg22[%596, %c0_174] : memref<20x32xf32, #tpu.memory_space<vmem>>, vector<2x32xf32>
    tpu.vector_store %arg22[%596, %c0_174], %595 {strides = array<i32>} : memref<20x32xf32, #tpu.memory_space<vmem>>, vector<2x32xf32>,
    %c10_i32 = arith.constant 10 : i32
    %c0_175 = arith.constant 0 : index
    %c0_176 = arith.constant 0 : index
    %598 = vector.load %arg23[%c0_175, %c0_176] : memref<12x32xf32, #tpu.memory_space<vmem>>, vector<12x32xf32>
    %c0_177 = arith.constant 0 : index
    %c0_178 = arith.constant 0 : index
    %599 = vector.load %arg22[%c0_177, %c0_178] : memref<20x32xf32, #tpu.memory_space<vmem>>, vector<20x32xf32>
    %600 = tpu.iota {dimensions = array<i32: 0>} : vector<12x20xi32>
    %c2_i32_179 = arith.constant 2 : i32
    %c0_i32_180 = arith.constant 0 : i32
    %601 = arith.cmpi eq, %c2_i32_179, %c0_i32_180 : i32
    %c1_i32_181 = arith.constant 1 : i32
    %602 = arith.select %601, %c1_i32_181, %c2_i32_179 : i32
    %603 = vector.broadcast %602 : i32 to vector<12x20xi32>
    %604 = arith.remsi %600, %603 : vector<12x20xi32>
    %c0_i32_182 = arith.constant 0 : i32
    %605 = vector.broadcast %c0_i32_182 : i32 to vector<12x20xi32>
    %606 = arith.cmpi ne, %604, %605 : vector<12x20xi32>
    %c0_i32_183 = arith.constant 0 : i32
    %607 = vector.broadcast %c0_i32_183 : i32 to vector<12x20xi32>
    %608 = arith.cmpi slt, %604, %607 : vector<12x20xi32>
    %c0_i32_184 = arith.constant 0 : i32
    %609 = arith.cmpi slt, %602, %c0_i32_184 : i32
    %610 = vector.broadcast %609 : i1 to vector<12x20xi1>
    %611 = vector.broadcast %610 : vector<12x20xi1> to vector<12x20xi1>
    %612 = arith.xori %608, %611 : vector<12x20xi1>
    %613 = arith.andi %612, %606 : vector<12x20xi1>
    %614 = vector.broadcast %602 : i32 to vector<12x20xi32>
    %615 = arith.addi %604, %614 : vector<12x20xi32>
    %616 = arith.select %613, %615, %604 : vector<12x20xi1>, vector<12x20xi32>
    %617 = tpu.iota {dimensions = array<i32: 1>} : vector<12x20xi32>
    %c2_i32_185 = arith.constant 2 : i32
    %c0_i32_186 = arith.constant 0 : i32
    %618 = arith.cmpi eq, %c2_i32_185, %c0_i32_186 : i32
    %c1_i32_187 = arith.constant 1 : i32
    %619 = arith.select %618, %c1_i32_187, %c2_i32_185 : i32
    %620 = vector.broadcast %619 : i32 to vector<12x20xi32>
    %621 = arith.remsi %617, %620 : vector<12x20xi32>
    %c0_i32_188 = arith.constant 0 : i32
    %622 = vector.broadcast %c0_i32_188 : i32 to vector<12x20xi32>
    %623 = arith.cmpi ne, %621, %622 : vector<12x20xi32>
    %c0_i32_189 = arith.constant 0 : i32
    %624 = vector.broadcast %c0_i32_189 : i32 to vector<12x20xi32>
    %625 = arith.cmpi slt, %621, %624 : vector<12x20xi32>
    %c0_i32_190 = arith.constant 0 : i32
    %626 = arith.cmpi slt, %619, %c0_i32_190 : i32
    %627 = vector.broadcast %626 : i1 to vector<12x20xi1>
    %628 = vector.broadcast %627 : vector<12x20xi1> to vector<12x20xi1>
    %629 = arith.xori %625, %628 : vector<12x20xi1>
    %630 = arith.andi %629, %623 : vector<12x20xi1>
    %631 = vector.broadcast %619 : i32 to vector<12x20xi32>
    %632 = arith.addi %621, %631 : vector<12x20xi32>
    %633 = arith.select %630, %632, %621 : vector<12x20xi1>, vector<12x20xi32>
    %634 = arith.cmpi eq, %616, %633 : vector<12x20xi32>
    %c0_191 = arith.constant 0 : index
    %c0_192 = arith.constant 0 : index
    %c0_193 = arith.constant 0 : index
    %635 = vector.load %arg11[%c0_191, %c0_192, %c0_193] : memref<4x32x8xf32, #tpu.memory_space<vmem>>, vector<1x32x8xf32>
    %636 = vector.shape_cast %635 : vector<1x32x8xf32> to vector<32x8xf32>
    %cst_194 = arith.constant dense<0.000000e+00> : vector<12x8xf32>
    %637 = tpu.matmul %598, %636, %cst_194 {dimension_numbers = #tpu.dot_dimension_numbers<[1], [0], [0], [1], [0, 0, 1, 1], [], []>} : vector<12x32xf32>, vector<32x8xf32>, vector<12x8xf32> -> vector<12x8xf32>
    %c0_195 = arith.constant 0 : index
    %c0_196 = arith.constant 0 : index
    %c0_197 = arith.constant 0 : index
    %638 = vector.load %arg12[%c0_195, %c0_196, %c0_197] : memref<4x1x8xf32, #tpu.memory_space<vmem>>, vector<1x1x8xf32>
    %639 = vector.shape_cast %638 : vector<1x1x8xf32> to vector<1x8xf32>
    %640 = vector.broadcast %639 : vector<1x8xf32> to vector<12x8xf32>
    %641 = arith.addf %637, %640 : vector<12x8xf32>
    %c0_198 = arith.constant 0 : index
    %c0_199 = arith.constant 0 : index
    %c0_200 = arith.constant 0 : index
    %642 = vector.load %arg13[%c0_198, %c0_199, %c0_200] : memref<4x32x8xf32, #tpu.memory_space<vmem>>, vector<1x32x8xf32>
    %643 = vector.shape_cast %642 : vector<1x32x8xf32> to vector<32x8xf32>
    %cst_201 = arith.constant dense<0.000000e+00> : vector<20x8xf32>
    %644 = tpu.matmul %599, %643, %cst_201 {dimension_numbers = #tpu.dot_dimension_numbers<[1], [0], [0], [1], [0, 0, 1, 1], [], []>} : vector<20x32xf32>, vector<32x8xf32>, vector<20x8xf32> -> vector<20x8xf32>
    %c0_202 = arith.constant 0 : index
    %c0_203 = arith.constant 0 : index
    %c0_204 = arith.constant 0 : index
    %645 = vector.load %arg14[%c0_202, %c0_203, %c0_204] : memref<4x1x8xf32, #tpu.memory_space<vmem>>, vector<1x1x8xf32>
    %646 = vector.shape_cast %645 : vector<1x1x8xf32> to vector<1x8xf32>
    %647 = vector.broadcast %646 : vector<1x8xf32> to vector<20x8xf32>
    %648 = arith.addf %644, %647 : vector<20x8xf32>
    %c0_205 = arith.constant 0 : index
    %c0_206 = arith.constant 0 : index
    %c0_207 = arith.constant 0 : index
    %649 = vector.load %arg15[%c0_205, %c0_206, %c0_207] : memref<4x32x8xf32, #tpu.memory_space<vmem>>, vector<1x32x8xf32>
    %650 = vector.shape_cast %649 : vector<1x32x8xf32> to vector<32x8xf32>
    %cst_208 = arith.constant dense<0.000000e+00> : vector<20x8xf32>
    %651 = tpu.matmul %599, %650, %cst_208 {dimension_numbers = #tpu.dot_dimension_numbers<[1], [0], [0], [1], [0, 0, 1, 1], [], []>} : vector<20x32xf32>, vector<32x8xf32>, vector<20x8xf32> -> vector<20x8xf32>
    %c0_209 = arith.constant 0 : index
    %c0_210 = arith.constant 0 : index
    %c0_211 = arith.constant 0 : index
    %652 = vector.load %arg16[%c0_209, %c0_210, %c0_211] : memref<4x1x8xf32, #tpu.memory_space<vmem>>, vector<1x1x8xf32>
    %653 = vector.shape_cast %652 : vector<1x1x8xf32> to vector<1x8xf32>
    %654 = vector.broadcast %653 : vector<1x8xf32> to vector<20x8xf32>
    %655 = arith.addf %651, %654 : vector<20x8xf32>
    %656 = tpu.transpose %648, [1, 0] : vector<20x8xf32> -> vector<8x20xf32>
    %cst_212 = arith.constant dense<0.000000e+00> : vector<12x20xf32>
    %657 = tpu.matmul %641, %656, %cst_212 {dimension_numbers = #tpu.dot_dimension_numbers<[1], [0], [0], [1], [0, 0, 1, 1], [], []>} : vector<12x8xf32>, vector<8x20xf32>, vector<12x20xf32> -> vector<12x20xf32>
    %cst_213 = arith.constant 0.353553385 : f32
    %658 = vector.broadcast %cst_213 : f32 to vector<12x20xf32>
    %659 = arith.mulf %657, %658 : vector<12x20xf32>
    %cst_214 = arith.constant -1.000000e+30 : f32
    %660 = vector.broadcast %cst_214 : f32 to vector<12x20xf32>
    %661 = arith.select %634, %659, %660 : vector<12x20xi1>, vector<12x20xf32>
    %cst_215 = arith.constant dense<0xFF800000> : vector<12xf32>
    %662 = vector.multi_reduction <maximumf>, %661, %cst_215 [1] : vector<12x20xf32> to vector<12xf32>
    %663 = vector.shape_cast %662 : vector<12xf32> to vector<12x1xf32>
    %664 = vector.broadcast %663 : vector<12x1xf32> to vector<12x20xf32>
    %665 = arith.subf %661, %664 : vector<12x20xf32>
    %666 = math.exp %665 : vector<12x20xf32>
    %cst_216 = arith.constant dense<0.000000e+00> : vector<12xf32>
    %667 = vector.multi_reduction <add>, %666, %cst_216 [1] : vector<12x20xf32> to vector<12xf32>
    %668 = vector.shape_cast %667 : vector<12xf32> to vector<12x1xf32>
    %669 = tpu.reciprocal %668 {approx = true} : vector<12x1xf32> -> vector<12x1xf32>
    %670 = vector.broadcast %669 : vector<12x1xf32> to vector<12x20xf32>
    %671 = arith.mulf %666, %670 : vector<12x20xf32>
    %cst_217 = arith.constant dense<0.000000e+00> : vector<12x8xf32>
    %672 = tpu.matmul %671, %655, %cst_217 {dimension_numbers = #tpu.dot_dimension_numbers<[1], [0], [0], [1], [0, 0, 1, 1], [], []>} : vector<12x20xf32>, vector<20x8xf32>, vector<12x8xf32> -> vector<12x8xf32>
    %c0_218 = arith.constant 0 : index
    %c0_219 = arith.constant 0 : index
    %c0_220 = arith.constant 0 : index
    %673 = vector.load %arg17[%c0_218, %c0_219, %c0_220] : memref<4x8x32xf32, #tpu.memory_space<vmem>>, vector<1x8x32xf32>
    %674 = vector.shape_cast %673 : vector<1x8x32xf32> to vector<8x32xf32>
    %cst_221 = arith.constant dense<0.000000e+00> : vector<12x32xf32>
    %675 = tpu.matmul %672, %674, %cst_221 {dimension_numbers = #tpu.dot_dimension_numbers<[1], [0], [0], [1], [0, 0, 1, 1], [], []>} : vector<12x8xf32>, vector<8x32xf32>, vector<12x32xf32> -> vector<12x32xf32>
    %c1 = arith.constant 1 : index
    %c0_222 = arith.constant 0 : index
    %c0_223 = arith.constant 0 : index
    %676 = vector.load %arg11[%c1, %c0_222, %c0_223] : memref<4x32x8xf32, #tpu.memory_space<vmem>>, vector<1x32x8xf32>
    %677 = vector.shape_cast %676 : vector<1x32x8xf32> to vector<32x8xf32>
    %cst_224 = arith.constant dense<0.000000e+00> : vector<12x8xf32>
    %678 = tpu.matmul %598, %677, %cst_224 {dimension_numbers = #tpu.dot_dimension_numbers<[1], [0], [0], [1], [0, 0, 1, 1], [], []>} : vector<12x32xf32>, vector<32x8xf32>, vector<12x8xf32> -> vector<12x8xf32>
    %c1_225 = arith.constant 1 : index
    %c0_226 = arith.constant 0 : index
    %c0_227 = arith.constant 0 : index
    %679 = vector.load %arg12[%c1_225, %c0_226, %c0_227] : memref<4x1x8xf32, #tpu.memory_space<vmem>>, vector<1x1x8xf32>
    %680 = vector.shape_cast %679 : vector<1x1x8xf32> to vector<1x8xf32>
    %681 = vector.broadcast %680 : vector<1x8xf32> to vector<12x8xf32>
    %682 = arith.addf %678, %681 : vector<12x8xf32>
    %c1_228 = arith.constant 1 : index
    %c0_229 = arith.constant 0 : index
    %c0_230 = arith.constant 0 : index
    %683 = vector.load %arg13[%c1_228, %c0_229, %c0_230] : memref<4x32x8xf32, #tpu.memory_space<vmem>>, vector<1x32x8xf32>
    %684 = vector.shape_cast %683 : vector<1x32x8xf32> to vector<32x8xf32>
    %cst_231 = arith.constant dense<0.000000e+00> : vector<20x8xf32>
    %685 = tpu.matmul %599, %684, %cst_231 {dimension_numbers = #tpu.dot_dimension_numbers<[1], [0], [0], [1], [0, 0, 1, 1], [], []>} : vector<20x32xf32>, vector<32x8xf32>, vector<20x8xf32> -> vector<20x8xf32>
    %c1_232 = arith.constant 1 : index
    %c0_233 = arith.constant 0 : index
    %c0_234 = arith.constant 0 : index
    %686 = vector.load %arg14[%c1_232, %c0_233, %c0_234] : memref<4x1x8xf32, #tpu.memory_space<vmem>>, vector<1x1x8xf32>
    %687 = vector.shape_cast %686 : vector<1x1x8xf32> to vector<1x8xf32>
    %688 = vector.broadcast %687 : vector<1x8xf32> to vector<20x8xf32>
    %689 = arith.addf %685, %688 : vector<20x8xf32>
    %c1_235 = arith.constant 1 : index
    %c0_236 = arith.constant 0 : index
    %c0_237 = arith.constant 0 : index
    %690 = vector.load %arg15[%c1_235, %c0_236, %c0_237] : memref<4x32x8xf32, #tpu.memory_space<vmem>>, vector<1x32x8xf32>
    %691 = vector.shape_cast %690 : vector<1x32x8xf32> to vector<32x8xf32>
    %cst_238 = arith.constant dense<0.000000e+00> : vector<20x8xf32>
    %692 = tpu.matmul %599, %691, %cst_238 {dimension_numbers = #tpu.dot_dimension_numbers<[1], [0], [0], [1], [0, 0, 1, 1], [], []>} : vector<20x32xf32>, vector<32x8xf32>, vector<20x8xf32> -> vector<20x8xf32>
    %c1_239 = arith.constant 1 : index
    %c0_240 = arith.constant 0 : index
    %c0_241 = arith.constant 0 : index
    %693 = vector.load %arg16[%c1_239, %c0_240, %c0_241] : memref<4x1x8xf32, #tpu.memory_space<vmem>>, vector<1x1x8xf32>
    %694 = vector.shape_cast %693 : vector<1x1x8xf32> to vector<1x8xf32>
    %695 = vector.broadcast %694 : vector<1x8xf32> to vector<20x8xf32>
    %696 = arith.addf %692, %695 : vector<20x8xf32>
    %697 = tpu.transpose %689, [1, 0] : vector<20x8xf32> -> vector<8x20xf32>
    %cst_242 = arith.constant dense<0.000000e+00> : vector<12x20xf32>
    %698 = tpu.matmul %682, %697, %cst_242 {dimension_numbers = #tpu.dot_dimension_numbers<[1], [0], [0], [1], [0, 0, 1, 1], [], []>} : vector<12x8xf32>, vector<8x20xf32>, vector<12x20xf32> -> vector<12x20xf32>
    %cst_243 = arith.constant 0.353553385 : f32
    %699 = vector.broadcast %cst_243 : f32 to vector<12x20xf32>
    %700 = arith.mulf %698, %699 : vector<12x20xf32>
    %cst_244 = arith.constant -1.000000e+30 : f32
    %701 = vector.broadcast %cst_244 : f32 to vector<12x20xf32>
    %702 = arith.select %634, %700, %701 : vector<12x20xi1>, vector<12x20xf32>
    %cst_245 = arith.constant dense<0xFF800000> : vector<12xf32>
    %703 = vector.multi_reduction <maximumf>, %702, %cst_245 [1] : vector<12x20xf32> to vector<12xf32>
    %704 = vector.shape_cast %703 : vector<12xf32> to vector<12x1xf32>
    %705 = vector.broadcast %704 : vector<12x1xf32> to vector<12x20xf32>
    %706 = arith.subf %702, %705 : vector<12x20xf32>
    %707 = math.exp %706 : vector<12x20xf32>
    %cst_246 = arith.constant dense<0.000000e+00> : vector<12xf32>
    %708 = vector.multi_reduction <add>, %707, %cst_246 [1] : vector<12x20xf32> to vector<12xf32>
    %709 = vector.shape_cast %708 : vector<12xf32> to vector<12x1xf32>
    %710 = tpu.reciprocal %709 {approx = true} : vector<12x1xf32> -> vector<12x1xf32>
    %711 = vector.broadcast %710 : vector<12x1xf32> to vector<12x20xf32>
    %712 = arith.mulf %707, %711 : vector<12x20xf32>
    %cst_247 = arith.constant dense<0.000000e+00> : vector<12x8xf32>
    %713 = tpu.matmul %712, %696, %cst_247 {dimension_numbers = #tpu.dot_dimension_numbers<[1], [0], [0], [1], [0, 0, 1, 1], [], []>} : vector<12x20xf32>, vector<20x8xf32>, vector<12x8xf32> -> vector<12x8xf32>
    %c1_248 = arith.constant 1 : index
    %c0_249 = arith.constant 0 : index
    %c0_250 = arith.constant 0 : index
    %714 = vector.load %arg17[%c1_248, %c0_249, %c0_250] : memref<4x8x32xf32, #tpu.memory_space<vmem>>, vector<1x8x32xf32>
    %715 = vector.shape_cast %714 : vector<1x8x32xf32> to vector<8x32xf32>
    %cst_251 = arith.constant dense<0.000000e+00> : vector<12x32xf32>
    %716 = tpu.matmul %713, %715, %cst_251 {dimension_numbers = #tpu.dot_dimension_numbers<[1], [0], [0], [1], [0, 0, 1, 1], [], []>} : vector<12x8xf32>, vector<8x32xf32>, vector<12x32xf32> -> vector<12x32xf32>
    %717 = arith.addf %675, %716 : vector<12x32xf32>
    %c2 = arith.constant 2 : index
    %c0_252 = arith.constant 0 : index
    %c0_253 = arith.constant 0 : index
    %718 = vector.load %arg11[%c2, %c0_252, %c0_253] : memref<4x32x8xf32, #tpu.memory_space<vmem>>, vector<1x32x8xf32>
    %719 = vector.shape_cast %718 : vector<1x32x8xf32> to vector<32x8xf32>
    %cst_254 = arith.constant dense<0.000000e+00> : vector<12x8xf32>
    %720 = tpu.matmul %598, %719, %cst_254 {dimension_numbers = #tpu.dot_dimension_numbers<[1], [0], [0], [1], [0, 0, 1, 1], [], []>} : vector<12x32xf32>, vector<32x8xf32>, vector<12x8xf32> -> vector<12x8xf32>
    %c2_255 = arith.constant 2 : index
    %c0_256 = arith.constant 0 : index
    %c0_257 = arith.constant 0 : index
    %721 = vector.load %arg12[%c2_255, %c0_256, %c0_257] : memref<4x1x8xf32, #tpu.memory_space<vmem>>, vector<1x1x8xf32>
    %722 = vector.shape_cast %721 : vector<1x1x8xf32> to vector<1x8xf32>
    %723 = vector.broadcast %722 : vector<1x8xf32> to vector<12x8xf32>
    %724 = arith.addf %720, %723 : vector<12x8xf32>
    %c2_258 = arith.constant 2 : index
    %c0_259 = arith.constant 0 : index
    %c0_260 = arith.constant 0 : index
    %725 = vector.load %arg13[%c2_258, %c0_259, %c0_260] : memref<4x32x8xf32, #tpu.memory_space<vmem>>, vector<1x32x8xf32>
    %726 = vector.shape_cast %725 : vector<1x32x8xf32> to vector<32x8xf32>
    %cst_261 = arith.constant dense<0.000000e+00> : vector<20x8xf32>
    %727 = tpu.matmul %599, %726, %cst_261 {dimension_numbers = #tpu.dot_dimension_numbers<[1], [0], [0], [1], [0, 0, 1, 1], [], []>} : vector<20x32xf32>, vector<32x8xf32>, vector<20x8xf32> -> vector<20x8xf32>
    %c2_262 = arith.constant 2 : index
    %c0_263 = arith.constant 0 : index
    %c0_264 = arith.constant 0 : index
    %728 = vector.load %arg14[%c2_262, %c0_263, %c0_264] : memref<4x1x8xf32, #tpu.memory_space<vmem>>, vector<1x1x8xf32>
    %729 = vector.shape_cast %728 : vector<1x1x8xf32> to vector<1x8xf32>
    %730 = vector.broadcast %729 : vector<1x8xf32> to vector<20x8xf32>
    %731 = arith.addf %727, %730 : vector<20x8xf32>
    %c2_265 = arith.constant 2 : index
    %c0_266 = arith.constant 0 : index
    %c0_267 = arith.constant 0 : index
    %732 = vector.load %arg15[%c2_265, %c0_266, %c0_267] : memref<4x32x8xf32, #tpu.memory_space<vmem>>, vector<1x32x8xf32>
    %733 = vector.shape_cast %732 : vector<1x32x8xf32> to vector<32x8xf32>
    %cst_268 = arith.constant dense<0.000000e+00> : vector<20x8xf32>
    %734 = tpu.matmul %599, %733, %cst_268 {dimension_numbers = #tpu.dot_dimension_numbers<[1], [0], [0], [1], [0, 0, 1, 1], [], []>} : vector<20x32xf32>, vector<32x8xf32>, vector<20x8xf32> -> vector<20x8xf32>
    %c2_269 = arith.constant 2 : index
    %c0_270 = arith.constant 0 : index
    %c0_271 = arith.constant 0 : index
    %735 = vector.load %arg16[%c2_269, %c0_270, %c0_271] : memref<4x1x8xf32, #tpu.memory_space<vmem>>, vector<1x1x8xf32>
    %736 = vector.shape_cast %735 : vector<1x1x8xf32> to vector<1x8xf32>
    %737 = vector.broadcast %736 : vector<1x8xf32> to vector<20x8xf32>
    %738 = arith.addf %734, %737 : vector<20x8xf32>
    %739 = tpu.transpose %731, [1, 0] : vector<20x8xf32> -> vector<8x20xf32>
    %cst_272 = arith.constant dense<0.000000e+00> : vector<12x20xf32>
    %740 = tpu.matmul %724, %739, %cst_272 {dimension_numbers = #tpu.dot_dimension_numbers<[1], [0], [0], [1], [0, 0, 1, 1], [], []>} : vector<12x8xf32>, vector<8x20xf32>, vector<12x20xf32> -> vector<12x20xf32>
    %cst_273 = arith.constant 0.353553385 : f32
    %741 = vector.broadcast %cst_273 : f32 to vector<12x20xf32>
    %742 = arith.mulf %740, %741 : vector<12x20xf32>
    %cst_274 = arith.constant -1.000000e+30 : f32
    %743 = vector.broadcast %cst_274 : f32 to vector<12x20xf32>
    %744 = arith.select %634, %742, %743 : vector<12x20xi1>, vector<12x20xf32>
    %cst_275 = arith.constant dense<0xFF800000> : vector<12xf32>
    %745 = vector.multi_reduction <maximumf>, %744, %cst_275 [1] : vector<12x20xf32> to vector<12xf32>
    %746 = vector.shape_cast %745 : vector<12xf32> to vector<12x1xf32>
    %747 = vector.broadcast %746 : vector<12x1xf32> to vector<12x20xf32>
    %748 = arith.subf %744, %747 : vector<12x20xf32>
    %749 = math.exp %748 : vector<12x20xf32>
    %cst_276 = arith.constant dense<0.000000e+00> : vector<12xf32>
    %750 = vector.multi_reduction <add>, %749, %cst_276 [1] : vector<12x20xf32> to vector<12xf32>
    %751 = vector.shape_cast %750 : vector<12xf32> to vector<12x1xf32>
    %752 = tpu.reciprocal %751 {approx = true} : vector<12x1xf32> -> vector<12x1xf32>
    %753 = vector.broadcast %752 : vector<12x1xf32> to vector<12x20xf32>
    %754 = arith.mulf %749, %753 : vector<12x20xf32>
    %cst_277 = arith.constant dense<0.000000e+00> : vector<12x8xf32>
    %755 = tpu.matmul %754, %738, %cst_277 {dimension_numbers = #tpu.dot_dimension_numbers<[1], [0], [0], [1], [0, 0, 1, 1], [], []>} : vector<12x20xf32>, vector<20x8xf32>, vector<12x8xf32> -> vector<12x8xf32>
    %c2_278 = arith.constant 2 : index
    %c0_279 = arith.constant 0 : index
    %c0_280 = arith.constant 0 : index
    %756 = vector.load %arg17[%c2_278, %c0_279, %c0_280] : memref<4x8x32xf32, #tpu.memory_space<vmem>>, vector<1x8x32xf32>
    %757 = vector.shape_cast %756 : vector<1x8x32xf32> to vector<8x32xf32>
    %cst_281 = arith.constant dense<0.000000e+00> : vector<12x32xf32>
    %758 = tpu.matmul %755, %757, %cst_281 {dimension_numbers = #tpu.dot_dimension_numbers<[1], [0], [0], [1], [0, 0, 1, 1], [], []>} : vector<12x8xf32>, vector<8x32xf32>, vector<12x32xf32> -> vector<12x32xf32>
    %759 = arith.addf %717, %758 : vector<12x32xf32>
    %c3 = arith.constant 3 : index
    %c0_282 = arith.constant 0 : index
    %c0_283 = arith.constant 0 : index
    %760 = vector.load %arg11[%c3, %c0_282, %c0_283] : memref<4x32x8xf32, #tpu.memory_space<vmem>>, vector<1x32x8xf32>
    %761 = vector.shape_cast %760 : vector<1x32x8xf32> to vector<32x8xf32>
    %cst_284 = arith.constant dense<0.000000e+00> : vector<12x8xf32>
    %762 = tpu.matmul %598, %761, %cst_284 {dimension_numbers = #tpu.dot_dimension_numbers<[1], [0], [0], [1], [0, 0, 1, 1], [], []>} : vector<12x32xf32>, vector<32x8xf32>, vector<12x8xf32> -> vector<12x8xf32>
    %c3_285 = arith.constant 3 : index
    %c0_286 = arith.constant 0 : index
    %c0_287 = arith.constant 0 : index
    %763 = vector.load %arg12[%c3_285, %c0_286, %c0_287] : memref<4x1x8xf32, #tpu.memory_space<vmem>>, vector<1x1x8xf32>
    %764 = vector.shape_cast %763 : vector<1x1x8xf32> to vector<1x8xf32>
    %765 = vector.broadcast %764 : vector<1x8xf32> to vector<12x8xf32>
    %766 = arith.addf %762, %765 : vector<12x8xf32>
    %c3_288 = arith.constant 3 : index
    %c0_289 = arith.constant 0 : index
    %c0_290 = arith.constant 0 : index
    %767 = vector.load %arg13[%c3_288, %c0_289, %c0_290] : memref<4x32x8xf32, #tpu.memory_space<vmem>>, vector<1x32x8xf32>
    %768 = vector.shape_cast %767 : vector<1x32x8xf32> to vector<32x8xf32>
    %cst_291 = arith.constant dense<0.000000e+00> : vector<20x8xf32>
    %769 = tpu.matmul %599, %768, %cst_291 {dimension_numbers = #tpu.dot_dimension_numbers<[1], [0], [0], [1], [0, 0, 1, 1], [], []>} : vector<20x32xf32>, vector<32x8xf32>, vector<20x8xf32> -> vector<20x8xf32>
    %c3_292 = arith.constant 3 : index
    %c0_293 = arith.constant 0 : index
    %c0_294 = arith.constant 0 : index
    %770 = vector.load %arg14[%c3_292, %c0_293, %c0_294] : memref<4x1x8xf32, #tpu.memory_space<vmem>>, vector<1x1x8xf32>
    %771 = vector.shape_cast %770 : vector<1x1x8xf32> to vector<1x8xf32>
    %772 = vector.broadcast %771 : vector<1x8xf32> to vector<20x8xf32>
    %773 = arith.addf %769, %772 : vector<20x8xf32>
    %c3_295 = arith.constant 3 : index
    %c0_296 = arith.constant 0 : index
    %c0_297 = arith.constant 0 : index
    %774 = vector.load %arg15[%c3_295, %c0_296, %c0_297] : memref<4x32x8xf32, #tpu.memory_space<vmem>>, vector<1x32x8xf32>
    %775 = vector.shape_cast %774 : vector<1x32x8xf32> to vector<32x8xf32>
    %cst_298 = arith.constant dense<0.000000e+00> : vector<20x8xf32>
    %776 = tpu.matmul %599, %775, %cst_298 {dimension_numbers = #tpu.dot_dimension_numbers<[1], [0], [0], [1], [0, 0, 1, 1], [], []>} : vector<20x32xf32>, vector<32x8xf32>, vector<20x8xf32> -> vector<20x8xf32>
    %c3_299 = arith.constant 3 : index
    %c0_300 = arith.constant 0 : index
    %c0_301 = arith.constant 0 : index
    %777 = vector.load %arg16[%c3_299, %c0_300, %c0_301] : memref<4x1x8xf32, #tpu.memory_space<vmem>>, vector<1x1x8xf32>
    %778 = vector.shape_cast %777 : vector<1x1x8xf32> to vector<1x8xf32>
    %779 = vector.broadcast %778 : vector<1x8xf32> to vector<20x8xf32>
    %780 = arith.addf %776, %779 : vector<20x8xf32>
    %781 = tpu.transpose %773, [1, 0] : vector<20x8xf32> -> vector<8x20xf32>
    %cst_302 = arith.constant dense<0.000000e+00> : vector<12x20xf32>
    %782 = tpu.matmul %766, %781, %cst_302 {dimension_numbers = #tpu.dot_dimension_numbers<[1], [0], [0], [1], [0, 0, 1, 1], [], []>} : vector<12x8xf32>, vector<8x20xf32>, vector<12x20xf32> -> vector<12x20xf32>
    %cst_303 = arith.constant 0.353553385 : f32
    %783 = vector.broadcast %cst_303 : f32 to vector<12x20xf32>
    %784 = arith.mulf %782, %783 : vector<12x20xf32>
    %cst_304 = arith.constant -1.000000e+30 : f32
    %785 = vector.broadcast %cst_304 : f32 to vector<12x20xf32>
    %786 = arith.select %634, %784, %785 : vector<12x20xi1>, vector<12x20xf32>
    %cst_305 = arith.constant dense<0xFF800000> : vector<12xf32>
    %787 = vector.multi_reduction <maximumf>, %786, %cst_305 [1] : vector<12x20xf32> to vector<12xf32>
    %788 = vector.shape_cast %787 : vector<12xf32> to vector<12x1xf32>
    %789 = vector.broadcast %788 : vector<12x1xf32> to vector<12x20xf32>
    %790 = arith.subf %786, %789 : vector<12x20xf32>
    %791 = math.exp %790 : vector<12x20xf32>
    %cst_306 = arith.constant dense<0.000000e+00> : vector<12xf32>
    %792 = vector.multi_reduction <add>, %791, %cst_306 [1] : vector<12x20xf32> to vector<12xf32>
    %793 = vector.shape_cast %792 : vector<12xf32> to vector<12x1xf32>
    %794 = tpu.reciprocal %793 {approx = true} : vector<12x1xf32> -> vector<12x1xf32>
    %795 = vector.broadcast %794 : vector<12x1xf32> to vector<12x20xf32>
    %796 = arith.mulf %791, %795 : vector<12x20xf32>
    %cst_307 = arith.constant dense<0.000000e+00> : vector<12x8xf32>
    %797 = tpu.matmul %796, %780, %cst_307 {dimension_numbers = #tpu.dot_dimension_numbers<[1], [0], [0], [1], [0, 0, 1, 1], [], []>} : vector<12x20xf32>, vector<20x8xf32>, vector<12x8xf32> -> vector<12x8xf32>
    %c3_308 = arith.constant 3 : index
    %c0_309 = arith.constant 0 : index
    %c0_310 = arith.constant 0 : index
    %798 = vector.load %arg17[%c3_308, %c0_309, %c0_310] : memref<4x8x32xf32, #tpu.memory_space<vmem>>, vector<1x8x32xf32>
    %799 = vector.shape_cast %798 : vector<1x8x32xf32> to vector<8x32xf32>
    %cst_311 = arith.constant dense<0.000000e+00> : vector<12x32xf32>
    %800 = tpu.matmul %797, %799, %cst_311 {dimension_numbers = #tpu.dot_dimension_numbers<[1], [0], [0], [1], [0, 0, 1, 1], [], []>} : vector<12x8xf32>, vector<8x32xf32>, vector<12x32xf32> -> vector<12x32xf32>
    %801 = arith.addf %759, %800 : vector<12x32xf32>
    %c0_312 = arith.constant 0 : index
    %c0_313 = arith.constant 0 : index
    %802 = vector.load %arg18[%c0_312, %c0_313] : memref<1x32xf32, #tpu.memory_space<vmem>>, vector<1x32xf32>
    %803 = vector.broadcast %802 : vector<1x32xf32> to vector<12x32xf32>
    %804 = arith.addf %801, %803 : vector<12x32xf32>
    %c0_314 = arith.constant 0 : index
    %c0_315 = arith.constant 0 : index
    %805 = vector.load %arg19[%c0_314, %c0_315] : memref<32x4xf32, #tpu.memory_space<vmem>>, vector<32x4xf32>
    %cst_316 = arith.constant dense<0.000000e+00> : vector<12x4xf32>
    %806 = tpu.matmul %804, %805, %cst_316 {dimension_numbers = #tpu.dot_dimension_numbers<[1], [0], [0], [1], [0, 0, 1, 1], [], []>} : vector<12x32xf32>, vector<32x4xf32>, vector<12x4xf32> -> vector<12x4xf32>
    %c0_317 = arith.constant 0 : index
    %c0_318 = arith.constant 0 : index
    %807 = vector.load %arg20[%c0_317, %c0_318] : memref<1x4xf32, #tpu.memory_space<vmem>>, vector<1x4xf32>
    %808 = vector.broadcast %807 : vector<1x4xf32> to vector<12x4xf32>
    %809 = arith.addf %806, %808 : vector<12x4xf32>
    %c0_319 = arith.constant 0 : index
    %c0_320 = arith.constant 0 : index
    %810 = vector.load %arg21[%c0_319, %c0_320] : memref<12x4xf32, #tpu.memory_space<vmem>>, vector<12x4xf32>
    tpu.vector_store %arg21[%c0_319, %c0_320], %809 {strides = array<i32>} : memref<12x4xf32, #tpu.memory_space<vmem>>, vector<12x4xf32>,
    return
  }
}

</mosaic_0001>

<llo_original>
// kernel: attention_lstm_forward.1
$region0: #{attention_lstm_forward.1}
  #allocation0 [shape = 'u32[]', space=smem, size = 0x4, offset = 0x4, fixed_abs, tag = 'smem constant byte address 0x4 - core index']
  #allocation1 [shape = 'u32[144,128]{1,0:T(1,128)}', space=vmem, size = 0x12000, scoped, tag = 'internal scratch']
  #allocation2 [shape = 'f32[20,32]{1,0:T(8,128)}', space=vmem, size = 0x3000, scoped, tag = 'scratch operand']
  #allocation3 [shape = 'f32[12,32]{1,0:T(8,128)}', space=vmem, size = 0x2000, scoped, tag = 'scratch operand']
  #allocation4 [shape = 'f32[20,128]{1,0:T(8,128)}', space=vmem, size = 0x3000, scoped, tag = 'scratch operand']
  #allocation5 [shape = 'f32[12,128]{1,0:T(8,128)}', space=vmem, size = 0x2000, scoped, tag = 'scratch operand']
  %s0 = inlined_call_operand.vmem [shape: f32[20,8], index: 0, kind: input, shape index: {}]
  %s1 = inlined_call_operand.vmem [shape: f32[12,8], index: 1, kind: input, shape index: {}]
  %s2 = inlined_call_operand.vmem [shape: f32[8,128], index: 2, kind: input, shape index: {}]
  %s3 = inlined_call_operand.vmem [shape: f32[32,128], index: 3, kind: input, shape index: {}]
  %s4 = inlined_call_operand.vmem [shape: f32[1,128], index: 4, kind: input, shape index: {}]
  %s5 = inlined_call_operand.vmem [shape: f32[32,128], index: 5, kind: input, shape index: {}]
  %s6 = inlined_call_operand.vmem [shape: f32[32,128], index: 6, kind: input, shape index: {}]
  %s7 = inlined_call_operand.vmem [shape: f32[1,128], index: 7, kind: input, shape index: {}]
  %s8 = inlined_call_operand.vmem [shape: f32[8,128], index: 8, kind: input, shape index: {}]
  %s9 = inlined_call_operand.vmem [shape: f32[32,128], index: 9, kind: input, shape index: {}]
  %s10 = inlined_call_operand.vmem [shape: f32[1,128], index: 10, kind: input, shape index: {}]
  %s11 = inlined_call_operand.vmem [shape: f32[4,32,8], index: 11, kind: input, shape index: {}]
  %s12 = inlined_call_operand.vmem [shape: f32[4,1,8], index: 12, kind: input, shape index: {}]
  %s13 = inlined_call_operand.vmem [shape: f32[4,32,8], index: 13, kind: input, shape index: {}]
  %s14 = inlined_call_operand.vmem [shape: f32[4,1,8], index: 14, kind: input, shape index: {}]
  %s15 = inlined_call_operand.vmem [shape: f32[4,32,8], index: 15, kind: input, shape index: {}]
  %s16 = inlined_call_operand.vmem [shape: f32[4,1,8], index: 16, kind: input, shape index: {}]
  %s17 = inlined_call_operand.vmem [shape: f32[4,8,32], index: 17, kind: input, shape index: {}]
  %s18 = inlined_call_operand.vmem [shape: f32[1,32], index: 18, kind: input, shape index: {}]
  %s19 = inlined_call_operand.vmem [shape: f32[32,4], index: 19, kind: input, shape index: {}]
  %s20 = inlined_call_operand.vmem [shape: f32[1,4], index: 20, kind: input, shape index: {}]
  %s21 = inlined_call_operand.vmem [shape: f32[12,4], index: 21, kind: output, shape index: {}]
  %s22 = sld [smem:[#allocation0]]
  $region94: #{attention_lstm_forward.1} parent=0
    _
  %s24 = ssub.s32 1, %s22
  %s25 = scalar_select 0, %s24, %s22
  // Predicated region
  $region2: #{attention_lstm_forward.1} parent=0 // pred_check
    _
  $region3: #{attention_lstm_forward.1} parent=0 // pred_check_branch
    %27 = sbr.rel (0) target = $region5
  $region4: #{attention_lstm_forward.1} parent=0 // pred_region
    _
  $region5: #{attention_lstm_forward.1} parent=0 // pred_fallthru
    _
  // Predicated region
  $region6: #{attention_lstm_forward.1} parent=0 // pred_check
    _
  $region7: #{attention_lstm_forward.1} parent=0 // pred_check_branch
    %29 = sbr.rel (0) target = $region9
  $region8: #{attention_lstm_forward.1} parent=0 // pred_region
    _
  $region9: #{attention_lstm_forward.1} parent=0 // pred_fallthru
    _
  // Predicated region
  $region10: #{attention_lstm_forward.1} parent=0 // pred_check
    _
  $region11: #{attention_lstm_forward.1} parent=0 // pred_check_branch
    %31 = sbr.rel (0) target = $region13
  $region12: #{attention_lstm_forward.1} parent=0 // pred_region
    _
  $region13: #{attention_lstm_forward.1} parent=0 // pred_fallthru
    _
  // Predicated region
  $region14: #{attention_lstm_forward.1} parent=0 // pred_check
    _
  $region15: #{attention_lstm_forward.1} parent=0 // pred_check_branch
    %33 = sbr.rel (0) target = $region17
  $region16: #{attention_lstm_forward.1} parent=0 // pred_region
    _
  $region17: #{attention_lstm_forward.1} parent=0 // pred_fallthru
    _
  // Predicated region
  $region18: #{attention_lstm_forward.1} parent=0 // pred_check
    _
  $region19: #{attention_lstm_forward.1} parent=0 // pred_check_branch
    %35 = sbr.rel (0) target = $region21
  $region20: #{attention_lstm_forward.1} parent=0 // pred_region
    _
  $region21: #{attention_lstm_forward.1} parent=0 // pred_fallthru
    _
  // Predicated region
  $region22: #{attention_lstm_forward.1} parent=0 // pred_check
    _
  $region23: #{attention_lstm_forward.1} parent=0 // pred_check_branch
    %37 = sbr.rel (0) target = $region25
  $region24: #{attention_lstm_forward.1} parent=0 // pred_region
    _
  $region25: #{attention_lstm_forward.1} parent=0 // pred_fallthru
    _
  // Predicated region
  $region26: #{attention_lstm_forward.1} parent=0 // pred_check
    _
  $region27: #{attention_lstm_forward.1} parent=0 // pred_check_branch
    %39 = sbr.rel (0) target = $region29
  $region28: #{attention_lstm_forward.1} parent=0 // pred_region
    _
  $region29: #{attention_lstm_forward.1} parent=0 // pred_fallthru
    _
  // Predicated region
  $region30: #{attention_lstm_forward.1} parent=0 // pred_check
    _
  $region31: #{attention_lstm_forward.1} parent=0 // pred_check_branch
    %41 = sbr.rel (0) target = $region33
  $region32: #{attention_lstm_forward.1} parent=0 // pred_region
    _
  $region33: #{attention_lstm_forward.1} parent=0 // pred_fallthru
    _
  // Predicated region
  $region34: #{attention_lstm_forward.1} parent=0 // pred_check
    _
  $region35: #{attention_lstm_forward.1} parent=0 // pred_check_branch
    %43 = sbr.rel (0) target = $region37
  $region36: #{attention_lstm_forward.1} parent=0 // pred_region
    _
  $region37: #{attention_lstm_forward.1} parent=0 // pred_fallthru
    _
  // Predicated region
  $region38: #{attention_lstm_forward.1} parent=0 // pred_check
    _
  $region39: #{attention_lstm_forward.1} parent=0 // pred_check_branch
    %45 = sbr.rel (0) target = $region41
  $region40: #{attention_lstm_forward.1} parent=0 // pred_region
    _
  $region41: #{attention_lstm_forward.1} parent=0 // pred_fallthru
    _
  // Predicated region
  $region42: #{attention_lstm_forward.1} parent=0 // pred_check
    _
  $region43: #{attention_lstm_forward.1} parent=0 // pred_check_branch
    %47 = sbr.rel (0) target = $region45
  $region44: #{attention_lstm_forward.1} parent=0 // pred_region
    _
  $region45: #{attention_lstm_forward.1} parent=0 // pred_fallthru
    _
  // Predicated region
  $region46: #{attention_lstm_forward.1} parent=0 // pred_check
    _
  $region47: #{attention_lstm_forward.1} parent=0 // pred_check_branch
    %49 = sbr.rel (0) target = $region49
  $region48: #{attention_lstm_forward.1} parent=0 // pred_region
    _
  $region49: #{attention_lstm_forward.1} parent=0 // pred_fallthru
    _
  // Predicated region
  $region50: #{attention_lstm_forward.1} parent=0 // pred_check
    _
  $region51: #{attention_lstm_forward.1} parent=0 // pred_check_branch
    %51 = sbr.rel (0) target = $region53
  $region52: #{attention_lstm_forward.1} parent=0 // pred_region
    _
  $region53: #{attention_lstm_forward.1} parent=0 // pred_fallthru
    _
  // Predicated region
  $region54: #{attention_lstm_forward.1} parent=0 // pred_check
    _
  $region55: #{attention_lstm_forward.1} parent=0 // pred_check_branch
    %53 = sbr.rel (0) target = $region57
  $region56: #{attention_lstm_forward.1} parent=0 // pred_region
    _
  $region57: #{attention_lstm_forward.1} parent=0 // pred_fallthru
    _
  // Predicated region
  $region58: #{attention_lstm_forward.1} parent=0 // pred_check
    _
  $region59: #{attention_lstm_forward.1} parent=0 // pred_check_branch
    %55 = sbr.rel (0) target = $region61
  $region60: #{attention_lstm_forward.1} parent=0 // pred_region
    _
  $region61: #{attention_lstm_forward.1} parent=0 // pred_fallthru
    _
  // Predicated region
  $region62: #{attention_lstm_forward.1} parent=0 // pred_check
    _
  $region63: #{attention_lstm_forward.1} parent=0 // pred_check_branch
    %57 = sbr.rel (0) target = $region65
  $region64: #{attention_lstm_forward.1} parent=0 // pred_region
    _
  $region65: #{attention_lstm_forward.1} parent=0 // pred_fallthru
    _
  // Predicated region
  $region66: #{attention_lstm_forward.1} parent=0 // pred_check
    _
  $region67: #{attention_lstm_forward.1} parent=0 // pred_check_branch
    %59 = sbr.rel (0) target = $region69
  $region68: #{attention_lstm_forward.1} parent=0 // pred_region
    _
  $region69: #{attention_lstm_forward.1} parent=0 // pred_fallthru
    _
  // Predicated region
  $region70: #{attention_lstm_forward.1} parent=0 // pred_check
    _
  $region71: #{attention_lstm_forward.1} parent=0 // pred_check_branch
    %61 = sbr.rel (0) target = $region73
  $region72: #{attention_lstm_forward.1} parent=0 // pred_region
    _
  $region73: #{attention_lstm_forward.1} parent=0 // pred_fallthru
    _
  // Predicated region
  $region74: #{attention_lstm_forward.1} parent=0 // pred_check
    _
  $region75: #{attention_lstm_forward.1} parent=0 // pred_check_branch
    %63 = sbr.rel (0) target = $region77
  $region76: #{attention_lstm_forward.1} parent=0 // pred_region
    _
  $region77: #{attention_lstm_forward.1} parent=0 // pred_fallthru
    _
  // Predicated region
  $region78: #{attention_lstm_forward.1} parent=0 // pred_check
    _
  $region79: #{attention_lstm_forward.1} parent=0 // pred_check_branch
    %65 = sbr.rel (0) target = $region81
  $region80: #{attention_lstm_forward.1} parent=0 // pred_region
    _
  $region81: #{attention_lstm_forward.1} parent=0 // pred_fallthru
    _
  // Predicated region
  $region82: #{attention_lstm_forward.1} parent=0 // pred_check
    _
  $region83: #{attention_lstm_forward.1} parent=0 // pred_check_branch
    %67 = sbr.rel (0) target = $region85
  $region84: #{attention_lstm_forward.1} parent=0 // pred_region
    _
  $region85: #{attention_lstm_forward.1} parent=0 // pred_fallthru
    _
  %v68 = vld [vmem:[%s0] sm:$0xff]
  %v69 = vld [vmem:[%s0 + $0x8] sm:$0xff]
  %v70 = vld [vmem:[%s0 + $0x10] sm:$0xf]
  %v71 = vld [vmem:[%s2] sm:$0xff]
  %v72 = vld [vmem:[%s4] sm:$0x1]
  %v74 = vlaneseq
  %v75 = vshrl.u32 %v74, 7
  %v76 = vsub.s32 0, %v75
  %v77 = vrot.slane %v72, %v76
  %vm79 = vcmask 64512
  %v81 = vsel %vm79, %v68, 0
  %v84 = vsel %vm79, %v69, 0
  %v87 = vsel %vm79, %v70, 0
  %89 = vmatprep.subr.mxu0 0.0
  %90 = vmatpush1.msra.mxu0 %v71
  %91 = vmatprep.subr.mxu0 0.0
  %92 = vmatpush1.msra.mxu0 0.0
  %93 = vmatprep.subr.mxu0 0.0
  %94 = vmatpush1.msra.mxu0 0.0
  %95 = vmatprep.subr.mxu0 0.0
  %96 = vmatpush1.msra.mxu0 0.0
  %97 = vmatprep.subr.mxu0 0.0
  %98 = vmatpush1.msra.mxu0 0.0
  %99 = vmatprep.subr.mxu0 0.0
  %100 = vmatpush1.msra.mxu0 0.0
  %101 = vmatprep.subr.mxu0 0.0
  %102 = vmatpush1.msra.mxu0 0.0
  %103 = vmatprep.subr.mxu0 0.0
  %104 = vmatpush1.msra.mxu0 0.0
  %105 = vmatprep.subr.mxu0 0.0
  %106 = vmatpush1.msra.mxu0 0.0
  %107 = vmatprep.subr.mxu0 0.0
  %108 = vmatpush1.msra.mxu0 0.0
  %109 = vmatprep.subr.mxu0 0.0
  %110 = vmatpush1.msra.mxu0 0.0
  %111 = vmatprep.subr.mxu0 0.0
  %112 = vmatpush1.msra.mxu0 0.0
  %113 = vmatprep.subr.mxu0 0.0
  %114 = vmatpush1.msra.mxu0 0.0
  %115 = vmatprep.subr.mxu0 0.0
  %116 = vmatpush1.msra.mxu0 0.0
  %117 = vmatprep.subr.mxu0 0.0
  %118 = vmatpush1.msra.mxu0 0.0
  %119 = vmatprep.subr.mxu0 0.0
  %120 = vmatpush1.msra.mxu0 0.0
  %121 = vmatprep.subr.mxu0 0.0
  %122 = vmatpush1.msra.mxu0 0.0
  %123 = vmatprep.subr.mxu0 0.0
  %124 = vmatpush1.msra.mxu0 0.0
  %125 = vmatprep.subr.mxu0 0.0
  %126 = vmatpush1.msra.mxu0 0.0
  %127 = vmatprep.subr.mxu0 0.0
  %128 = vmatpush1.msra.mxu0 0.0
  %129 = vmatprep.subr.mxu0 0.0
  %130 = vmatpush1.msra.mxu0 0.0
  %131 = vmatprep.subr.mxu0 0.0
  %132 = vmatpush1.msra.mxu0 0.0
  %133 = vmatprep.subr.mxu0 0.0
  %134 = vmatpush1.msra.mxu0 0.0
  %135 = vmatprep.subr.mxu0 0.0
  %136 = vmatpush1.msra.mxu0 0.0
  %137 = vmatprep.subr.mxu0 0.0
  %138 = vmatpush1.msra.mxu0 0.0
  %139 = vmatprep.subr.mxu0 0.0
  %140 = vmatpush1.msra.mxu0 0.0
  %141 = vmatprep.subr.mxu0 0.0
  %142 = vmatpush1.msra.mxu0 0.0
  %143 = vmatprep.subr.mxu0 0.0
  %144 = vmatpush1.msra.mxu0 0.0
  %145 = vmatprep.subr.mxu0 0.0
  %146 = vmatpush1.msra.mxu0 0.0
  %147 = vmatprep.subr.mxu0 0.0
  %148 = vmatpush1.msra.mxu0 0.0
  %149 = vmatprep.subr.mxu0 0.0
  %150 = vmatpush1.msra.mxu0 0.0
  %151 = vmatprep.subr.mxu0 0.0
  %152 = vmatpush1.msra.mxu0 0.0
  %153 = vmatprep.mubr.f32.mxu0 0.0
  %154 = vmatmul.mubr.f32.gmra.mrb[0].mxu0 %v81
  %v155 = vpop.f32.mrb[0].mxu0
  %v156 = vadd.f32 %v77, %v155
  %v157 = vpop.f32.mrb[0].mxu0
  %158 = vmatprep.mubr.f32.mxu0 0.0
  %159 = vmatmul.mubr.f32.gmra.mrb[0].mxu0 %v84
  %v160 = vpop.f32.mrb[0].mxu0
  %v161 = vadd.f32 %v77, %v160
  %v162 = vpop.f32.mrb[0].mxu0
  %163 = vmatprep.mubr.f32.mxu0 0.0
  %164 = vmatmul.mubr.f32.gmra.mrb[0].mxu0 %v87
  %v165 = vpop.f32.mrb[0].mxu0
  %v166 = vadd.f32 %v77, %v165
  %v167 = vpop.f32.mrb[0].mxu0
  %168 = vdwg.mxu0
  %169 = vst [vmem:[#allocation4] sm:$0xff] %v156
  %170 = vst [vmem:[#allocation4 + $0x8] sm:$0xff] %v161
  %171 = vst [vmem:[#allocation4 + $0x10] sm:$0xf] %v166
  %v172 = vld [vmem:[%s3] sm:$0xff]
  %v173 = vld [vmem:[%s3 + $0x8] sm:$0xff]
  %v174 = vld [vmem:[%s3 + $0x10] sm:$0xff]
  %v175 = vld [vmem:[%s3 + $0x18] sm:$0xff]
  %v176 = vld [vmem:[%s1] sm:$0xff]
  %v177 = vld [vmem:[%s1 + $0x8] sm:$0xf]
  %v178 = vld [vmem:[%s8] sm:$0xff]
  %v179 = vld [vmem:[%s10] sm:$0x1]
  %v181 = vlaneseq
  %v182 = vshrl.u32 %v181, 7
  %v183 = vsub.s32 0, %v182
  %v184 = vrot.slane %v179, %v183
  %v187 = vsel %vm79, %v176, 0
  %v190 = vsel %vm79, %v177, 0
  %192 = vmatprep.subr.mxu0 0.0
  %193 = vmatpush1.msra.mxu0 %v178
  %194 = vmatprep.subr.mxu0 0.0
  %195 = vmatpush1.msra.mxu0 0.0
  %196 = vmatprep.subr.mxu0 0.0
  %197 = vmatpush1.msra.mxu0 0.0
  %198 = vmatprep.subr.mxu0 0.0
  %199 = vmatpush1.msra.mxu0 0.0
  %200 = vmatprep.subr.mxu0 0.0
  %201 = vmatpush1.msra.mxu0 0.0
  %202 = vmatprep.subr.mxu0 0.0
  %203 = vmatpush1.msra.mxu0 0.0
  %204 = vmatprep.subr.mxu0 0.0
  %205 = vmatpush1.msra.mxu0 0.0
  %206 = vmatprep.subr.mxu0 0.0
  %207 = vmatpush1.msra.mxu0 0.0
  %208 = vmatprep.subr.mxu0 0.0
  %209 = vmatpush1.msra.mxu0 0.0
  %210 = vmatprep.subr.mxu0 0.0
  %211 = vmatpush1.msra.mxu0 0.0
  %212 = vmatprep.subr.mxu0 0.0
  %213 = vmatpush1.msra.mxu0 0.0
  %214 = vmatprep.subr.mxu0 0.0
  %215 = vmatpush1.msra.mxu0 0.0
  %216 = vmatprep.subr.mxu0 0.0
  %217 = vmatpush1.msra.mxu0 0.0
  %218 = vmatprep.subr.mxu0 0.0
  %219 = vmatpush1.msra.mxu0 0.0
  %220 = vmatprep.subr.mxu0 0.0
  %221 = vmatpush1.msra.mxu0 0.0
  %222 = vmatprep.subr.mxu0 0.0
  %223 = vmatpush1.msra.mxu0 0.0
  %224 = vmatprep.subr.mxu0 0.0
  %225 = vmatpush1.msra.mxu0 0.0
  %226 = vmatprep.subr.mxu0 0.0
  %227 = vmatpush1.msra.mxu0 0.0
  %228 = vmatprep.subr.mxu0 0.0
  %229 = vmatpush1.msra.mxu0 0.0
  %230 = vmatprep.subr.mxu0 0.0
  %231 = vmatpush1.msra.mxu0 0.0
  %232 = vmatprep.subr.mxu0 0.0
  %233 = vmatpush1.msra.mxu0 0.0
  %234 = vmatprep.subr.mxu0 0.0
  %235 = vmatpush1.msra.mxu0 0.0
  %236 = vmatprep.subr.mxu0 0.0
  %237 = vmatpush1.msra.mxu0 0.0
  %238 = vmatprep.subr.mxu0 0.0
  %239 = vmatpush1.msra.mxu0 0.0
  %240 = vmatprep.subr.mxu0 0.0
  %241 = vmatpush1.msra.mxu0 0.0
  %242 = vmatprep.subr.mxu0 0.0
  %243 = vmatpush1.msra.mxu0 0.0
  %244 = vmatprep.subr.mxu0 0.0
  %245 = vmatpush1.msra.mxu0 0.0
  %246 = vmatprep.subr.mxu0 0.0
  %247 = vmatpush1.msra.mxu0 0.0
  %248 = vmatprep.subr.mxu0 0.0
  %249 = vmatpush1.msra.mxu0 0.0
  %250 = vmatprep.subr.mxu0 0.0
  %251 = vmatpush1.msra.mxu0 0.0
  %252 = vmatprep.subr.mxu0 0.0
  %253 = vmatpush1.msra.mxu0 0.0
  %254 = vmatprep.subr.mxu0 0.0
  %255 = vmatpush1.msra.mxu0 0.0
  %256 = vmatprep.mubr.f32.mxu0 0.0
  %257 = vmatmul.mubr.f32.gmra.mrb[0].mxu0 %v187
  %v258 = vpop.f32.mrb[0].mxu0
  %v259 = vadd.f32 %v184, %v258
  %v260 = vpop.f32.mrb[0].mxu0
  %261 = vmatprep.mubr.f32.mxu0 0.0
  %262 = vmatmul.mubr.f32.gmra.mrb[0].mxu0 %v190
  %v263 = vpop.f32.mrb[0].mxu0
  %v264 = vadd.f32 %v184, %v263
  %v265 = vpop.f32.mrb[0].mxu0
  %266 = vdwg.mxu0
  %267 = vst [vmem:[#allocation5] sm:$0xff] %v259
  %268 = vst [vmem:[#allocation5 + $0x8] sm:$0xf] %v264
  %v269 = vld [vmem:[%s9] sm:$0xff]
  %v270 = vld [vmem:[%s9 + $0x8] sm:$0xff]
  %v271 = vld [vmem:[%s9 + $0x10] sm:$0xff]
  %v272 = vld [vmem:[%s9 + $0x18] sm:$0xff]
  %v273 = vld [vmem:[#allocation4] sm:$0x3]
  %vm274 = vcmask 261120
  %v276 = vsel %vm274, 0.0, 0
  %278 = vmatprep.subr.mxu0 0.0
  %279 = vmatpush1.msra.mxu0 %v172
  %280 = vmatprep.subr.mxu0 0.0
  %281 = vmatpush1.msra.mxu0 %v173
  %282 = vmatprep.subr.mxu0 0.0
  %283 = vmatpush1.msra.mxu0 %v174
  %284 = vmatprep.subr.mxu0 0.0
  %285 = vmatpush1.msra.mxu0 %v175
  %286 = vmatprep.subr.mxu0 0.0
  %287 = vmatpush1.msra.mxu0 0.0
  %288 = vmatprep.subr.mxu0 0.0
  %289 = vmatpush1.msra.mxu0 0.0
  %290 = vmatprep.subr.mxu0 0.0
  %291 = vmatpush1.msra.mxu0 0.0
  %292 = vmatprep.subr.mxu0 0.0
  %293 = vmatpush1.msra.mxu0 0.0
  %294 = vmatprep.subr.mxu0 0.0
  %295 = vmatpush1.msra.mxu0 0.0
  %296 = vmatprep.subr.mxu0 0.0
  %297 = vmatpush1.msra.mxu0 0.0
  %298 = vmatprep.subr.mxu0 0.0
  %299 = vmatpush1.msra.mxu0 0.0
  %300 = vmatprep.subr.mxu0 0.0
  %301 = vmatpush1.msra.mxu0 0.0
  %302 = vmatprep.subr.mxu0 0.0
  %303 = vmatpush1.msra.mxu0 0.0
  %304 = vmatprep.subr.mxu0 0.0
  %305 = vmatpush1.msra.mxu0 0.0
  %306 = vmatprep.subr.mxu0 0.0
  %307 = vmatpush1.msra.mxu0 0.0
  %308 = vmatprep.subr.mxu0 0.0
  %309 = vmatpush1.msra.mxu0 0.0
  %310 = vmatprep.subr.mxu0 0.0
  %311 = vmatpush1.msra.mxu0 0.0
  %312 = vmatprep.subr.mxu0 0.0
  %313 = vmatpush1.msra.mxu0 0.0
  %314 = vmatprep.subr.mxu0 0.0
  %315 = vmatpush1.msra.mxu0 0.0
  %316 = vmatprep.subr.mxu0 0.0
  %317 = vmatpush1.msra.mxu0 0.0
  %318 = vmatprep.subr.mxu0 0.0
  %319 = vmatpush1.msra.mxu0 0.0
  %320 = vmatprep.subr.mxu0 0.0
  %321 = vmatpush1.msra.mxu0 0.0
  %322 = vmatprep.subr.mxu0 0.0
  %323 = vmatpush1.msra.mxu0 0.0
  %324 = vmatprep.subr.mxu0 0.0
  %325 = vmatpush1.msra.mxu0 0.0
  %326 = vmatprep.subr.mxu0 0.0
  %327 = vmatpush1.msra.mxu0 0.0
  %328 = vmatprep.subr.mxu0 0.0
  %329 = vmatpush1.msra.mxu0 0.0
  %330 = vmatprep.subr.mxu0 0.0
  %331 = vmatpush1.msra.mxu0 0.0
  %332 = vmatprep.subr.mxu0 0.0
  %333 = vmatpush1.msra.mxu0 0.0
  %334 = vmatprep.subr.mxu0 0.0
  %335 = vmatpush1.msra.mxu0 0.0
  %336 = vmatprep.subr.mxu0 0.0
  %337 = vmatpush1.msra.mxu0 0.0
  %338 = vmatprep.subr.mxu0 0.0
  %339 = vmatpush1.msra.mxu0 0.0
  %340 = vmatprep.subr.mxu0 0.0
  %341 = vmatpush1.msra.mxu0 0.0
  %342 = vmatprep.mubr.f32.mxu0 0.0
  %343 = vmatmul.mubr.f32.gmra.mrb[0].mxu0 %v276
  %v344 = vpop.f32.mrb[0].mxu0
  %v345 = vadd.f32 0.0, %v344
  %v346 = vpop.f32.mrb[0].mxu0
  %347 = vdwg.mxu0
  %v348 = vadd.f32 %v273, %v345
  %v349 = vxor.u32 %v348, 2147483648
  %v350 = vmul.f32 %v349, 1.442695
  %v351 = vpow.pop %v350
  %v352 = vadd.f32 %v351, 1.0
  %v353 = vrcp.pop %v352
  %v354 = vmul.f32 1.0, %v353
  %v355 = vtanh.pop %v348
  %v356 = vmul.f32 %v354, 0.0
  %358 = vrot.lane.b32.xlu0 %v355, 64
  %v359 = vpop.permute.xlu0 %358
  %v361 = vmul.f32 %v354, %v359
  %363 = vrot.lane.b32.xlu0 %v361, 32
  %v364 = vpop.permute.xlu0 %363
  %v366 = vadd.f32 %v356, %v364
  %v367 = vtanh.pop %v366
  %369 = vrot.lane.b32.xlu0 %v367, 64
  %v370 = vpop.permute.xlu0 %369
  %v372 = vmul.f32 %v354, %v370
  %374 = vrot.lane.b32.xlu0 %v372, 32
  %v375 = vpop.permute.xlu0 %374
  %vm377 = vcmask 254976
  %378 = vst.msk [vmem:[#allocation2] sm:$0x3] %vm377, %v375
  %v379 = vld [vmem:[#allocation5] sm:$0x3]
  %380 = vmatprep.subr.mxu0 0.0
  %381 = vmatpush1.msra.mxu0 %v269
  %382 = vmatprep.subr.mxu0 0.0
  %383 = vmatpush1.msra.mxu0 %v270
  %384 = vmatprep.subr.mxu0 0.0
  %385 = vmatpush1.msra.mxu0 %v271
  %386 = vmatprep.subr.mxu0 0.0
  %387 = vmatpush1.msra.mxu0 %v272
  %388 = vmatprep.subr.mxu0 0.0
  %389 = vmatpush1.msra.mxu0 0.0
  %390 = vmatprep.subr.mxu0 0.0
  %391 = vmatpush1.msra.mxu0 0.0
  %392 = vmatprep.subr.mxu0 0.0
  %393 = vmatpush1.msra.mxu0 0.0
  %394 = vmatprep.subr.mxu0 0.0
  %395 = vmatpush1.msra.mxu0 0.0
  %396 = vmatprep.subr.mxu0 0.0
  %397 = vmatpush1.msra.mxu0 0.0
  %398 = vmatprep.subr.mxu0 0.0
  %399 = vmatpush1.msra.mxu0 0.0
  %400 = vmatprep.subr.mxu0 0.0
  %401 = vmatpush1.msra.mxu0 0.0
  %402 = vmatprep.subr.mxu0 0.0
  %403 = vmatpush1.msra.mxu0 0.0
  %404 = vmatprep.subr.mxu0 0.0
  %405 = vmatpush1.msra.mxu0 0.0
  %406 = vmatprep.subr.mxu0 0.0
  %407 = vmatpush1.msra.mxu0 0.0
  %408 = vmatprep.subr.mxu0 0.0
  %409 = vmatpush1.msra.mxu0 0.0
  %410 = vmatprep.subr.mxu0 0.0
  %411 = vmatpush1.msra.mxu0 0.0
  %412 = vmatprep.subr.mxu0 0.0
  %413 = vmatpush1.msra.mxu0 0.0
  %414 = vmatprep.subr.mxu0 0.0
  %415 = vmatpush1.msra.mxu0 0.0
  %416 = vmatprep.subr.mxu0 0.0
  %417 = vmatpush1.msra.mxu0 0.0
  %418 = vmatprep.subr.mxu0 0.0
  %419 = vmatpush1.msra.mxu0 0.0
  %420 = vmatprep.subr.mxu0 0.0
  %421 = vmatpush1.msra.mxu0 0.0
  %422 = vmatprep.subr.mxu0 0.0
  %423 = vmatpush1.msra.mxu0 0.0
  %424 = vmatprep.subr.mxu0 0.0
  %425 = vmatpush1.msra.mxu0 0.0
  %426 = vmatprep.subr.mxu0 0.0
  %427 = vmatpush1.msra.mxu0 0.0
  %428 = vmatprep.subr.mxu0 0.0
  %429 = vmatpush1.msra.mxu0 0.0
  %430 = vmatprep.subr.mxu0 0.0
  %431 = vmatpush1.msra.mxu0 0.0
  %432 = vmatprep.subr.mxu0 0.0
  %433 = vmatpush1.msra.mxu0 0.0
  %434 = vmatprep.subr.mxu0 0.0
  %435 = vmatpush1.msra.mxu0 0.0
  %436 = vmatprep.subr.mxu0 0.0
  %437 = vmatpush1.msra.mxu0 0.0
  %438 = vmatprep.subr.mxu0 0.0
  %439 = vmatpush1.msra.mxu0 0.0
  %440 = vmatprep.subr.mxu0 0.0
  %441 = vmatpush1.msra.mxu0 0.0
  %442 = vmatprep.subr.mxu0 0.0
  %443 = vmatpush1.msra.mxu0 0.0
  %444 = vmatprep.mubr.f32.mxu0 0.0
  %445 = vmatmul.mubr.f32.gmra.mrb[0].mxu0 %v276
  %v446 = vpop.f32.mrb[0].mxu0
  %v447 = vadd.f32 0.0, %v446
  %v448 = vpop.f32.mrb[0].mxu0
  %449 = vdwg.mxu0
  %v450 = vadd.f32 %v379, %v447
  %v451 = vxor.u32 %v450, 2147483648
  %v452 = vmul.f32 %v451, 1.442695
  %v453 = vpow.pop %v452
  %v454 = vadd.f32 %v453, 1.0
  %v455 = vrcp.pop %v454
  %v456 = vmul.f32 1.0, %v455
  %v457 = vtanh.pop %v450
  %v458 = vmul.f32 %v456, 0.0
  %460 = vrot.lane.b32.xlu0 %v457, 64
  %v461 = vpop.permute.xlu0 %460
  %v463 = vmul.f32 %v456, %v461
  %465 = vrot.lane.b32.xlu0 %v463, 32
  %v466 = vpop.permute.xlu0 %465
  %v468 = vadd.f32 %v458, %v466
  %v469 = vtanh.pop %v468
  %471 = vrot.lane.b32.xlu0 %v469, 64
  %v472 = vpop.permute.xlu0 %471
  %v474 = vmul.f32 %v456, %v472
  %476 = vrot.lane.b32.xlu0 %v474, 32
  %v477 = vpop.permute.xlu0 %476
  %479 = vst.msk [vmem:[#allocation3] sm:$0x3] %vm377, %v477
  %v480 = vld [vmem:[#allocation4 + $0x2] sm:$0x3]
  %v481 = vsel %vm274, %v375, 0
  %483 = vmatprep.subr.mxu0 0.0
  %484 = vmatpush1.msra.mxu0 %v172
  %485 = vmatprep.subr.mxu0 0.0
  %486 = vmatpush1.msra.mxu0 %v173
  %487 = vmatprep.subr.mxu0 0.0
  %488 = vmatpush1.msra.mxu0 %v174
  %489 = vmatprep.subr.mxu0 0.0
  %490 = vmatpush1.msra.mxu0 %v175
  %491 = vmatprep.subr.mxu0 0.0
  %492 = vmatpush1.msra.mxu0 0.0
  %493 = vmatprep.subr.mxu0 0.0
  %494 = vmatpush1.msra.mxu0 0.0
  %495 = vmatprep.subr.mxu0 0.0
  %496 = vmatpush1.msra.mxu0 0.0
  %497 = vmatprep.subr.mxu0 0.0
  %498 = vmatpush1.msra.mxu0 0.0
  %499 = vmatprep.subr.mxu0 0.0
  %500 = vmatpush1.msra.mxu0 0.0
  %501 = vmatprep.subr.mxu0 0.0
  %502 = vmatpush1.msra.mxu0 0.0
  %503 = vmatprep.subr.mxu0 0.0
  %504 = vmatpush1.msra.mxu0 0.0
  %505 = vmatprep.subr.mxu0 0.0
  %506 = vmatpush1.msra.mxu0 0.0
  %507 = vmatprep.subr.mxu0 0.0
  %508 = vmatpush1.msra.mxu0 0.0
  %509 = vmatprep.subr.mxu0 0.0
  %510 = vmatpush1.msra.mxu0 0.0
  %511 = vmatprep.subr.mxu0 0.0
  %512 = vmatpush1.msra.mxu0 0.0
  %513 = vmatprep.subr.mxu0 0.0
  %514 = vmatpush1.msra.mxu0 0.0
  %515 = vmatprep.subr.mxu0 0.0
  %516 = vmatpush1.msra.mxu0 0.0
  %517 = vmatprep.subr.mxu0 0.0
  %518 = vmatpush1.msra.mxu0 0.0
  %519 = vmatprep.subr.mxu0 0.0
  %520 = vmatpush1.msra.mxu0 0.0
  %521 = vmatprep.subr.mxu0 0.0
  %522 = vmatpush1.msra.mxu0 0.0
  %523 = vmatprep.subr.mxu0 0.0
  %524 = vmatpush1.msra.mxu0 0.0
  %525 = vmatprep.subr.mxu0 0.0
  %526 = vmatpush1.msra.mxu0 0.0
  %527 = vmatprep.subr.mxu0 0.0
  %528 = vmatpush1.msra.mxu0 0.0
  %529 = vmatprep.subr.mxu0 0.0
  %530 = vmatpush1.msra.mxu0 0.0
  %531 = vmatprep.subr.mxu0 0.0
  %532 = vmatpush1.msra.mxu0 0.0
  %533 = vmatprep.subr.mxu0 0.0
  %534 = vmatpush1.msra.mxu0 0.0
  %535 = vmatprep.subr.mxu0 0.0
  %536 = vmatpush1.msra.mxu0 0.0
  %537 = vmatprep.subr.mxu0 0.0
  %538 = vmatpush1.msra.mxu0 0.0
  %539 = vmatprep.subr.mxu0 0.0
  %540 = vmatpush1.msra.mxu0 0.0
  %541 = vmatprep.subr.mxu0 0.0
  %542 = vmatpush1.msra.mxu0 0.0
  %543 = vmatprep.subr.mxu0 0.0
  %544 = vmatpush1.msra.mxu0 0.0
  %545 = vmatprep.subr.mxu0 0.0
  %546 = vmatpush1.msra.mxu0 0.0
  %547 = vmatprep.mubr.f32.mxu0 0.0
  %548 = vmatmul.mubr.f32.gmra.mrb[0].mxu0 %v481
  %v549 = vpop.f32.mrb[0].mxu0
  %v550 = vadd.f32 0.0, %v549
  %v551 = vpop.f32.mrb[0].mxu0
  %552 = vdwg.mxu0
  %v553 = vadd.f32 %v480, %v550
  %v554 = vxor.u32 %v553, 2147483648
  %v555 = vmul.f32 %v554, 1.442695
  %v556 = vpow.pop %v555
  %v557 = vadd.f32 %v556, 1.0
  %v558 = vrcp.pop %v557
  %v559 = vmul.f32 1.0, %v558
  %v560 = vtanh.pop %v553
  %v561 = vmul.f32 %v559, %v366
  %563 = vrot.lane.b32.xlu0 %v560, 64
  %v564 = vpop.permute.xlu0 %563
  %v566 = vmul.f32 %v559, %v564
  %568 = vrot.lane.b32.xlu0 %v566, 32
  %v569 = vpop.permute.xlu0 %568
  %v571 = vadd.f32 %v561, %v569
  %v572 = vtanh.pop %v571
  %574 = vrot.lane.b32.xlu0 %v572, 64
  %v575 = vpop.permute.xlu0 %574
  %v577 = vmul.f32 %v559, %v575
  %579 = vrot.lane.b32.xlu0 %v577, 32
  %v580 = vpop.permute.xlu0 %579
  %582 = vst.msk [vmem:[#allocation2 + $0x2] sm:$0x3] %vm377, %v580
  %v583 = vld [vmem:[#allocation5 + $0x2] sm:$0x3]
  %v584 = vsel %vm274, %v477, 0
  %586 = vmatprep.subr.mxu0 0.0
  %587 = vmatpush1.msra.mxu0 %v269
  %588 = vmatprep.subr.mxu0 0.0
  %589 = vmatpush1.msra.mxu0 %v270
  %590 = vmatprep.subr.mxu0 0.0
  %591 = vmatpush1.msra.mxu0 %v271
  %592 = vmatprep.subr.mxu0 0.0
  %593 = vmatpush1.msra.mxu0 %v272
  %594 = vmatprep.subr.mxu0 0.0
  %595 = vmatpush1.msra.mxu0 0.0
  %596 = vmatprep.subr.mxu0 0.0
  %597 = vmatpush1.msra.mxu0 0.0
  %598 = vmatprep.subr.mxu0 0.0
  %599 = vmatpush1.msra.mxu0 0.0
  %600 = vmatprep.subr.mxu0 0.0
  %601 = vmatpush1.msra.mxu0 0.0
  %602 = vmatprep.subr.mxu0 0.0
  %603 = vmatpush1.msra.mxu0 0.0
  %604 = vmatprep.subr.mxu0 0.0
  %605 = vmatpush1.msra.mxu0 0.0
  %606 = vmatprep.subr.mxu0 0.0
  %607 = vmatpush1.msra.mxu0 0.0
  %608 = vmatprep.subr.mxu0 0.0
  %609 = vmatpush1.msra.mxu0 0.0
  %610 = vmatprep.subr.mxu0 0.0
  %611 = vmatpush1.msra.mxu0 0.0
  %612 = vmatprep.subr.mxu0 0.0
  %613 = vmatpush1.msra.mxu0 0.0
  %614 = vmatprep.subr.mxu0 0.0
  %615 = vmatpush1.msra.mxu0 0.0
  %616 = vmatprep.subr.mxu0 0.0
  %617 = vmatpush1.msra.mxu0 0.0
  %618 = vmatprep.subr.mxu0 0.0
  %619 = vmatpush1.msra.mxu0 0.0
  %620 = vmatprep.subr.mxu0 0.0
  %621 = vmatpush1.msra.mxu0 0.0
  %622 = vmatprep.subr.mxu0 0.0
  %623 = vmatpush1.msra.mxu0 0.0
  %624 = vmatprep.subr.mxu0 0.0
  %625 = vmatpush1.msra.mxu0 0.0
  %626 = vmatprep.subr.mxu0 0.0
  %627 = vmatpush1.msra.mxu0 0.0
  %628 = vmatprep.subr.mxu0 0.0
  %629 = vmatpush1.msra.mxu0 0.0
  %630 = vmatprep.subr.mxu0 0.0
  %631 = vmatpush1.msra.mxu0 0.0
  %632 = vmatprep.subr.mxu0 0.0
  %633 = vmatpush1.msra.mxu0 0.0
  %634 = vmatprep.subr.mxu0 0.0
  %635 = vmatpush1.msra.mxu0 0.0
  %636 = vmatprep.subr.mxu0 0.0
  %637 = vmatpush1.msra.mxu0 0.0
  %638 = vmatprep.subr.mxu0 0.0
  %639 = vmatpush1.msra.mxu0 0.0
  %640 = vmatprep.subr.mxu0 0.0
  %641 = vmatpush1.msra.mxu0 0.0
  %642 = vmatprep.subr.mxu0 0.0
  %643 = vmatpush1.msra.mxu0 0.0
  %644 = vmatprep.subr.mxu0 0.0
  %645 = vmatpush1.msra.mxu0 0.0
  %646 = vmatprep.subr.mxu0 0.0
  %647 = vmatpush1.msra.mxu0 0.0
  %648 = vmatprep.subr.mxu0 0.0
  %649 = vmatpush1.msra.mxu0 0.0
  %650 = vmatprep.mubr.f32.mxu0 0.0
  %651 = vmatmul.mubr.f32.gmra.mrb[0].mxu0 %v584
  %v652 = vpop.f32.mrb[0].mxu0
  %v653 = vadd.f32 0.0, %v652
  %v654 = vpop.f32.mrb[0].mxu0
  %655 = vdwg.mxu0
  %v656 = vadd.f32 %v583, %v653
  %v657 = vxor.u32 %v656, 2147483648
  %v658 = vmul.f32 %v657, 1.442695
  %v659 = vpow.pop %v658
  %v660 = vadd.f32 %v659, 1.0
  %v661 = vrcp.pop %v660
  %v662 = vmul.f32 1.0, %v661
  %v663 = vtanh.pop %v656
  %v664 = vmul.f32 %v662, %v468
  %666 = vrot.lane.b32.xlu0 %v663, 64
  %v667 = vpop.permute.xlu0 %666
  %v669 = vmul.f32 %v662, %v667
  %671 = vrot.lane.b32.xlu0 %v669, 32
  %v672 = vpop.permute.xlu0 %671
  %v674 = vadd.f32 %v664, %v672
  %v675 = vtanh.pop %v674
  %677 = vrot.lane.b32.xlu0 %v675, 64
  %v678 = vpop.permute.xlu0 %677
  %v680 = vmul.f32 %v662, %v678
  %682 = vrot.lane.b32.xlu0 %v680, 32
  %v683 = vpop.permute.xlu0 %682
  %685 = vst.msk [vmem:[#allocation3 + $0x2] sm:$0x3] %vm377, %v683
  %v686 = vld [vmem:[#allocation4 + $0x4] sm:$0x3]
  %v687 = vsel %vm274, %v580, 0
  %689 = vmatprep.subr.mxu0 0.0
  %690 = vmatpush1.msra.mxu0 %v172
  %691 = vmatprep.subr.mxu0 0.0
  %692 = vmatpush1.msra.mxu0 %v173
  %693 = vmatprep.subr.mxu0 0.0
  %694 = vmatpush1.msra.mxu0 %v174
  %695 = vmatprep.subr.mxu0 0.0
  %696 = vmatpush1.msra.mxu0 %v175
  %697 = vmatprep.subr.mxu0 0.0
  %698 = vmatpush1.msra.mxu0 0.0
  %699 = vmatprep.subr.mxu0 0.0
  %700 = vmatpush1.msra.mxu0 0.0
  %701 = vmatprep.subr.mxu0 0.0
  %702 = vmatpush1.msra.mxu0 0.0
  %703 = vmatprep.subr.mxu0 0.0
  %704 = vmatpush1.msra.mxu0 0.0
  %705 = vmatprep.subr.mxu0 0.0
  %706 = vmatpush1.msra.mxu0 0.0
  %707 = vmatprep.subr.mxu0 0.0
  %708 = vmatpush1.msra.mxu0 0.0
  %709 = vmatprep.subr.mxu0 0.0
  %710 = vmatpush1.msra.mxu0 0.0
  %711 = vmatprep.subr.mxu0 0.0
  %712 = vmatpush1.msra.mxu0 0.0
  %713 = vmatprep.subr.mxu0 0.0
  %714 = vmatpush1.msra.mxu0 0.0
  %715 = vmatprep.subr.mxu0 0.0
  %716 = vmatpush1.msra.mxu0 0.0
  %717 = vmatprep.subr.mxu0 0.0
  %718 = vmatpush1.msra.mxu0 0.0
  %719 = vmatprep.subr.mxu0 0.0
  %720 = vmatpush1.msra.mxu0 0.0
  %721 = vmatprep.subr.mxu0 0.0
  %722 = vmatpush1.msra.mxu0 0.0
  %723 = vmatprep.subr.mxu0 0.0
  %724 = vmatpush1.msra.mxu0 0.0
  %725 = vmatprep.subr.mxu0 0.0
  %726 = vmatpush1.msra.mxu0 0.0
  %727 = vmatprep.subr.mxu0 0.0
  %728 = vmatpush1.msra.mxu0 0.0
  %729 = vmatprep.subr.mxu0 0.0
  %730 = vmatpush1.msra.mxu0 0.0
  %731 = vmatprep.subr.mxu0 0.0
  %732 = vmatpush1.msra.mxu0 0.0
  %733 = vmatprep.subr.mxu0 0.0
  %734 = vmatpush1.msra.mxu0 0.0
  %735 = vmatprep.subr.mxu0 0.0
  %736 = vmatpush1.msra.mxu0 0.0
  %737 = vmatprep.subr.mxu0 0.0
  %738 = vmatpush1.msra.mxu0 0.0
  %739 = vmatprep.subr.mxu0 0.0
  %740 = vmatpush1.msra.mxu0 0.0
  %741 = vmatprep.subr.mxu0 0.0
  %742 = vmatpush1.msra.mxu0 0.0
  %743 = vmatprep.subr.mxu0 0.0
  %744 = vmatpush1.msra.mxu0 0.0
  %745 = vmatprep.subr.mxu0 0.0
  %746 = vmatpush1.msra.mxu0 0.0
  %747 = vmatprep.subr.mxu0 0.0
  %748 = vmatpush1.msra.mxu0 0.0
  %749 = vmatprep.subr.mxu0 0.0
  %750 = vmatpush1.msra.mxu0 0.0
  %751 = vmatprep.subr.mxu0 0.0
  %752 = vmatpush1.msra.mxu0 0.0
  %753 = vmatprep.mubr.f32.mxu0 0.0
  %754 = vmatmul.mubr.f32.gmra.mrb[0].mxu0 %v687
  %v755 = vpop.f32.mrb[0].mxu0
  %v756 = vadd.f32 0.0, %v755
  %v757 = vpop.f32.mrb[0].mxu0
  %758 = vdwg.mxu0
  %v759 = vadd.f32 %v686, %v756
  %v760 = vxor.u32 %v759, 2147483648
  %v761 = vmul.f32 %v760, 1.442695
  %v762 = vpow.pop %v761
  %v763 = vadd.f32 %v762, 1.0
  %v764 = vrcp.pop %v763
  %v765 = vmul.f32 1.0, %v764
  %v766 = vtanh.pop %v759
  %v767 = vmul.f32 %v765, %v571
  %769 = vrot.lane.b32.xlu0 %v766, 64
  %v770 = vpop.permute.xlu0 %769
  %v772 = vmul.f32 %v765, %v770
  %774 = vrot.lane.b32.xlu0 %v772, 32
  %v775 = vpop.permute.xlu0 %774
  %v777 = vadd.f32 %v767, %v775
  %v778 = vtanh.pop %v777
  %780 = vrot.lane.b32.xlu0 %v778, 64
  %v781 = vpop.permute.xlu0 %780
  %v783 = vmul.f32 %v765, %v781
  %785 = vrot.lane.b32.xlu0 %v783, 32
  %v786 = vpop.permute.xlu0 %785
  %788 = vst.msk [vmem:[#allocation2 + $0x4] sm:$0x3] %vm377, %v786
  %v789 = vld [vmem:[#allocation5 + $0x4] sm:$0x3]
  %v790 = vsel %vm274, %v683, 0
  %792 = vmatprep.subr.mxu0 0.0
  %793 = vmatpush1.msra.mxu0 %v269
  %794 = vmatprep.subr.mxu0 0.0
  %795 = vmatpush1.msra.mxu0 %v270
  %796 = vmatprep.subr.mxu0 0.0
  %797 = vmatpush1.msra.mxu0 %v271
  %798 = vmatprep.subr.mxu0 0.0
  %799 = vmatpush1.msra.mxu0 %v272
  %800 = vmatprep.subr.mxu0 0.0
  %801 = vmatpush1.msra.mxu0 0.0
  %802 = vmatprep.subr.mxu0 0.0
  %803 = vmatpush1.msra.mxu0 0.0
  %804 = vmatprep.subr.mxu0 0.0
  %805 = vmatpush1.msra.mxu0 0.0
  %806 = vmatprep.subr.mxu0 0.0
  %807 = vmatpush1.msra.mxu0 0.0
  %808 = vmatprep.subr.mxu0 0.0
  %809 = vmatpush1.msra.mxu0 0.0
  %810 = vmatprep.subr.mxu0 0.0
  %811 = vmatpush1.msra.mxu0 0.0
  %812 = vmatprep.subr.mxu0 0.0
  %813 = vmatpush1.msra.mxu0 0.0
  %814 = vmatprep.subr.mxu0 0.0
  %815 = vmatpush1.msra.mxu0 0.0
  %816 = vmatprep.subr.mxu0 0.0
  %817 = vmatpush1.msra.mxu0 0.0
  %818 = vmatprep.subr.mxu0 0.0
  %819 = vmatpush1.msra.mxu0 0.0
  %820 = vmatprep.subr.mxu0 0.0
  %821 = vmatpush1.msra.mxu0 0.0
  %822 = vmatprep.subr.mxu0 0.0
  %823 = vmatpush1.msra.mxu0 0.0
  %824 = vmatprep.subr.mxu0 0.0
  %825 = vmatpush1.msra.mxu0 0.0
  %826 = vmatprep.subr.mxu0 0.0
  %827 = vmatpush1.msra.mxu0 0.0
  %828 = vmatprep.subr.mxu0 0.0
  %829 = vmatpush1.msra.mxu0 0.0
  %830 = vmatprep.subr.mxu0 0.0
  %831 = vmatpush1.msra.mxu0 0.0
  %832 = vmatprep.subr.mxu0 0.0
  %833 = vmatpush1.msra.mxu0 0.0
  %834 = vmatprep.subr.mxu0 0.0
  %835 = vmatpush1.msra.mxu0 0.0
  %836 = vmatprep.subr.mxu0 0.0
  %837 = vmatpush1.msra.mxu0 0.0
  %838 = vmatprep.subr.mxu0 0.0
  %839 = vmatpush1.msra.mxu0 0.0
  %840 = vmatprep.subr.mxu0 0.0
  %841 = vmatpush1.msra.mxu0 0.0
  %842 = vmatprep.subr.mxu0 0.0
  %843 = vmatpush1.msra.mxu0 0.0
  %844 = vmatprep.subr.mxu0 0.0
  %845 = vmatpush1.msra.mxu0 0.0
  %846 = vmatprep.subr.mxu0 0.0
  %847 = vmatpush1.msra.mxu0 0.0
  %848 = vmatprep.subr.mxu0 0.0
  %849 = vmatpush1.msra.mxu0 0.0
  %850 = vmatprep.subr.mxu0 0.0
  %851 = vmatpush1.msra.mxu0 0.0
  %852 = vmatprep.subr.mxu0 0.0
  %853 = vmatpush1.msra.mxu0 0.0
  %854 = vmatprep.subr.mxu0 0.0
  %855 = vmatpush1.msra.mxu0 0.0
  %856 = vmatprep.mubr.f32.mxu0 0.0
  %857 = vmatmul.mubr.f32.gmra.mrb[0].mxu0 %v790
  %v858 = vpop.f32.mrb[0].mxu0
  %v859 = vadd.f32 0.0, %v858
  %v860 = vpop.f32.mrb[0].mxu0
  %861 = vdwg.mxu0
  %v862 = vadd.f32 %v789, %v859
  %v863 = vxor.u32 %v862, 2147483648
  %v864 = vmul.f32 %v863, 1.442695
  %v865 = vpow.pop %v864
  %v866 = vadd.f32 %v865, 1.0
  %v867 = vrcp.pop %v866
  %v868 = vmul.f32 1.0, %v867
  %v869 = vtanh.pop %v862
  %v870 = vmul.f32 %v868, %v674
  %872 = vrot.lane.b32.xlu0 %v869, 64
  %v873 = vpop.permute.xlu0 %872
  %v875 = vmul.f32 %v868, %v873
  %877 = vrot.lane.b32.xlu0 %v875, 32
  %v878 = vpop.permute.xlu0 %877
  %v880 = vadd.f32 %v870, %v878
  %v881 = vtanh.pop %v880
  %883 = vrot.lane.b32.xlu0 %v881, 64
  %v884 = vpop.permute.xlu0 %883
  %v886 = vmul.f32 %v868, %v884
  %888 = vrot.lane.b32.xlu0 %v886, 32
  %v889 = vpop.permute.xlu0 %888
  %891 = vst.msk [vmem:[#allocation3 + $0x4] sm:$0x3] %vm377, %v889
  %v892 = vld [vmem:[#allocation4 + $0x6] sm:$0x3]
  %v893 = vsel %vm274, %v786, 0
  %895 = vmatprep.subr.mxu0 0.0
  %896 = vmatpush1.msra.mxu0 %v172
  %897 = vmatprep.subr.mxu0 0.0
  %898 = vmatpush1.msra.mxu0 %v173
  %899 = vmatprep.subr.mxu0 0.0
  %900 = vmatpush1.msra.mxu0 %v174
  %901 = vmatprep.subr.mxu0 0.0
  %902 = vmatpush1.msra.mxu0 %v175
  %903 = vmatprep.subr.mxu0 0.0
  %904 = vmatpush1.msra.mxu0 0.0
  %905 = vmatprep.subr.mxu0 0.0
  %906 = vmatpush1.msra.mxu0 0.0
  %907 = vmatprep.subr.mxu0 0.0
  %908 = vmatpush1.msra.mxu0 0.0
  %909 = vmatprep.subr.mxu0 0.0
  %910 = vmatpush1.msra.mxu0 0.0
  %911 = vmatprep.subr.mxu0 0.0
  %912 = vmatpush1.msra.mxu0 0.0
  %913 = vmatprep.subr.mxu0 0.0
  %914 = vmatpush1.msra.mxu0 0.0
  %915 = vmatprep.subr.mxu0 0.0
  %916 = vmatpush1.msra.mxu0 0.0
  %917 = vmatprep.subr.mxu0 0.0
  %918 = vmatpush1.msra.mxu0 0.0
  %919 = vmatprep.subr.mxu0 0.0
  %920 = vmatpush1.msra.mxu0 0.0
  %921 = vmatprep.subr.mxu0 0.0
  %922 = vmatpush1.msra.mxu0 0.0
  %923 = vmatprep.subr.mxu0 0.0
  %924 = vmatpush1.msra.mxu0 0.0
  %925 = vmatprep.subr.mxu0 0.0
  %926 = vmatpush1.msra.mxu0 0.0
  %927 = vmatprep.subr.mxu0 0.0
  %928 = vmatpush1.msra.mxu0 0.0
  %929 = vmatprep.subr.mxu0 0.0
  %930 = vmatpush1.msra.mxu0 0.0
  %931 = vmatprep.subr.mxu0 0.0
  %932 = vmatpush1.msra.mxu0 0.0
  %933 = vmatprep.subr.mxu0 0.0
  %934 = vmatpush1.msra.mxu0 0.0
  %935 = vmatprep.subr.mxu0 0.0
  %936 = vmatpush1.msra.mxu0 0.0
  %937 = vmatprep.subr.mxu0 0.0
  %938 = vmatpush1.msra.mxu0 0.0
  %939 = vmatprep.subr.mxu0 0.0
  %940 = vmatpush1.msra.mxu0 0.0
  %941 = vmatprep.subr.mxu0 0.0
  %942 = vmatpush1.msra.mxu0 0.0
  %943 = vmatprep.subr.mxu0 0.0
  %944 = vmatpush1.msra.mxu0 0.0
  %945 = vmatprep.subr.mxu0 0.0
  %946 = vmatpush1.msra.mxu0 0.0
  %947 = vmatprep.subr.mxu0 0.0
  %948 = vmatpush1.msra.mxu0 0.0
  %949 = vmatprep.subr.mxu0 0.0
  %950 = vmatpush1.msra.mxu0 0.0
  %951 = vmatprep.subr.mxu0 0.0
  %952 = vmatpush1.msra.mxu0 0.0
  %953 = vmatprep.subr.mxu0 0.0
  %954 = vmatpush1.msra.mxu0 0.0
  %955 = vmatprep.subr.mxu0 0.0
  %956 = vmatpush1.msra.mxu0 0.0
  %957 = vmatprep.subr.mxu0 0.0
  %958 = vmatpush1.msra.mxu0 0.0
  %959 = vmatprep.mubr.f32.mxu0 0.0
  %960 = vmatmul.mubr.f32.gmra.mrb[0].mxu0 %v893
  %v961 = vpop.f32.mrb[0].mxu0
  %v962 = vadd.f32 0.0, %v961
  %v963 = vpop.f32.mrb[0].mxu0
  %964 = vdwg.mxu0
  %v965 = vadd.f32 %v892, %v962
  %v966 = vxor.u32 %v965, 2147483648
  %v967 = vmul.f32 %v966, 1.442695
  %v968 = vpow.pop %v967
  %v969 = vadd.f32 %v968, 1.0
  %v970 = vrcp.pop %v969
  %v971 = vmul.f32 1.0, %v970
  %v972 = vtanh.pop %v965
  %v973 = vmul.f32 %v971, %v777
  %975 = vrot.lane.b32.xlu0 %v972, 64
  %v976 = vpop.permute.xlu0 %975
  %v978 = vmul.f32 %v971, %v976
  %980 = vrot.lane.b32.xlu0 %v978, 32
  %v981 = vpop.permute.xlu0 %980
  %v983 = vadd.f32 %v973, %v981
  %v984 = vtanh.pop %v983
  %986 = vrot.lane.b32.xlu0 %v984, 64
  %v987 = vpop.permute.xlu0 %986
  %v989 = vmul.f32 %v971, %v987
  %991 = vrot.lane.b32.xlu0 %v989, 32
  %v992 = vpop.permute.xlu0 %991
  %994 = vst.msk [vmem:[#allocation2 + $0x6] sm:$0x3] %vm377, %v992
  %v995 = vld [vmem:[#allocation5 + $0x6] sm:$0x3]
  %v996 = vsel %vm274, %v889, 0
  %998 = vmatprep.subr.mxu0 0.0
  %999 = vmatpush1.msra.mxu0 %v269
  %1000 = vmatprep.subr.mxu0 0.0
  %1001 = vmatpush1.msra.mxu0 %v270
  %1002 = vmatprep.subr.mxu0 0.0
  %1003 = vmatpush1.msra.mxu0 %v271
  %1004 = vmatprep.subr.mxu0 0.0
  %1005 = vmatpush1.msra.mxu0 %v272
  %1006 = vmatprep.subr.mxu0 0.0
  %1007 = vmatpush1.msra.mxu0 0.0
  %1008 = vmatprep.subr.mxu0 0.0
  %1009 = vmatpush1.msra.mxu0 0.0
  %1010 = vmatprep.subr.mxu0 0.0
  %1011 = vmatpush1.msra.mxu0 0.0
  %1012 = vmatprep.subr.mxu0 0.0
  %1013 = vmatpush1.msra.mxu0 0.0
  %1014 = vmatprep.subr.mxu0 0.0
  %1015 = vmatpush1.msra.mxu0 0.0
  %1016 = vmatprep.subr.mxu0 0.0
  %1017 = vmatpush1.msra.mxu0 0.0
  %1018 = vmatprep.subr.mxu0 0.0
  %1019 = vmatpush1.msra.mxu0 0.0
  %1020 = vmatprep.subr.mxu0 0.0
  %1021 = vmatpush1.msra.mxu0 0.0
  %1022 = vmatprep.subr.mxu0 0.0
  %1023 = vmatpush1.msra.mxu0 0.0
  %1024 = vmatprep.subr.mxu0 0.0
  %1025 = vmatpush1.msra.mxu0 0.0
  %1026 = vmatprep.subr.mxu0 0.0
  %1027 = vmatpush1.msra.mxu0 0.0
  %1028 = vmatprep.subr.mxu0 0.0
  %1029 = vmatpush1.msra.mxu0 0.0
  %1030 = vmatprep.subr.mxu0 0.0
  %1031 = vmatpush1.msra.mxu0 0.0
  %1032 = vmatprep.subr.mxu0 0.0
  %1033 = vmatpush1.msra.mxu0 0.0
  %1034 = vmatprep.subr.mxu0 0.0
  %1035 = vmatpush1.msra.mxu0 0.0
  %1036 = vmatprep.subr.mxu0 0.0
  %1037 = vmatpush1.msra.mxu0 0.0
  %1038 = vmatprep.subr.mxu0 0.0
  %1039 = vmatpush1.msra.mxu0 0.0
  %1040 = vmatprep.subr.mxu0 0.0
  %1041 = vmatpush1.msra.mxu0 0.0
  %1042 = vmatprep.subr.mxu0 0.0
  %1043 = vmatpush1.msra.mxu0 0.0
  %1044 = vmatprep.subr.mxu0 0.0
  %1045 = vmatpush1.msra.mxu0 0.0
  %1046 = vmatprep.subr.mxu0 0.0
  %1047 = vmatpush1.msra.mxu0 0.0
  %1048 = vmatprep.subr.mxu0 0.0
  %1049 = vmatpush1.msra.mxu0 0.0
  %1050 = vmatprep.subr.mxu0 0.0
  %1051 = vmatpush1.msra.mxu0 0.0
  %1052 = vmatprep.subr.mxu0 0.0
  %1053 = vmatpush1.msra.mxu0 0.0
  %1054 = vmatprep.subr.mxu0 0.0
  %1055 = vmatpush1.msra.mxu0 0.0
  %1056 = vmatprep.subr.mxu0 0.0
  %1057 = vmatpush1.msra.mxu0 0.0
  %1058 = vmatprep.subr.mxu0 0.0
  %1059 = vmatpush1.msra.mxu0 0.0
  %1060 = vmatprep.subr.mxu0 0.0
  %1061 = vmatpush1.msra.mxu0 0.0
  %1062 = vmatprep.mubr.f32.mxu0 0.0
  %1063 = vmatmul.mubr.f32.gmra.mrb[0].mxu0 %v996
  %v1064 = vpop.f32.mrb[0].mxu0
  %v1065 = vadd.f32 0.0, %v1064
  %v1066 = vpop.f32.mrb[0].mxu0
  %1067 = vdwg.mxu0
  %v1068 = vadd.f32 %v995, %v1065
  %v1069 = vxor.u32 %v1068, 2147483648
  %v1070 = vmul.f32 %v1069, 1.442695
  %v1071 = vpow.pop %v1070
  %v1072 = vadd.f32 %v1071, 1.0
  %v1073 = vrcp.pop %v1072
  %v1074 = vmul.f32 1.0, %v1073
  %v1075 = vtanh.pop %v1068
  %v1076 = vmul.f32 %v1074, %v880
  %1078 = vrot.lane.b32.xlu0 %v1075, 64
  %v1079 = vpop.permute.xlu0 %1078
  %v1081 = vmul.f32 %v1074, %v1079
  %1083 = vrot.lane.b32.xlu0 %v1081, 32
  %v1084 = vpop.permute.xlu0 %1083
  %v1086 = vadd.f32 %v1076, %v1084
  %v1087 = vtanh.pop %v1086
  %1089 = vrot.lane.b32.xlu0 %v1087, 64
  %v1090 = vpop.permute.xlu0 %1089
  %v1092 = vmul.f32 %v1074, %v1090
  %1094 = vrot.lane.b32.xlu0 %v1092, 32
  %v1095 = vpop.permute.xlu0 %1094
  %1097 = vst.msk [vmem:[#allocation3 + $0x6] sm:$0x3] %vm377, %v1095
  %v1098 = vld [vmem:[#allocation4 + $0x8] sm:$0x3]
  %v1099 = vsel %vm274, %v992, 0
  %1101 = vmatprep.subr.mxu0 0.0
  %1102 = vmatpush1.msra.mxu0 %v172
  %1103 = vmatprep.subr.mxu0 0.0
  %1104 = vmatpush1.msra.mxu0 %v173
  %1105 = vmatprep.subr.mxu0 0.0
  %1106 = vmatpush1.msra.mxu0 %v174
  %1107 = vmatprep.subr.mxu0 0.0
  %1108 = vmatpush1.msra.mxu0 %v175
  %1109 = vmatprep.subr.mxu0 0.0
  %1110 = vmatpush1.msra.mxu0 0.0
  %1111 = vmatprep.subr.mxu0 0.0
  %1112 = vmatpush1.msra.mxu0 0.0
  %1113 = vmatprep.subr.mxu0 0.0
  %1114 = vmatpush1.msra.mxu0 0.0
  %1115 = vmatprep.subr.mxu0 0.0
  %1116 = vmatpush1.msra.mxu0 0.0
  %1117 = vmatprep.subr.mxu0 0.0
  %1118 = vmatpush1.msra.mxu0 0.0
  %1119 = vmatprep.subr.mxu0 0.0
  %1120 = vmatpush1.msra.mxu0 0.0
  %1121 = vmatprep.subr.mxu0 0.0
  %1122 = vmatpush1.msra.mxu0 0.0
  %1123 = vmatprep.subr.mxu0 0.0
  %1124 = vmatpush1.msra.mxu0 0.0
  %1125 = vmatprep.subr.mxu0 0.0
  %1126 = vmatpush1.msra.mxu0 0.0
  %1127 = vmatprep.subr.mxu0 0.0
  %1128 = vmatpush1.msra.mxu0 0.0
  %1129 = vmatprep.subr.mxu0 0.0
  %1130 = vmatpush1.msra.mxu0 0.0
  %1131 = vmatprep.subr.mxu0 0.0
  %1132 = vmatpush1.msra.mxu0 0.0
  %1133 = vmatprep.subr.mxu0 0.0
  %1134 = vmatpush1.msra.mxu0 0.0
  %1135 = vmatprep.subr.mxu0 0.0
  %1136 = vmatpush1.msra.mxu0 0.0
  %1137 = vmatprep.subr.mxu0 0.0
  %1138 = vmatpush1.msra.mxu0 0.0
  %1139 = vmatprep.subr.mxu0 0.0
  %1140 = vmatpush1.msra.mxu0 0.0
  %1141 = vmatprep.subr.mxu0 0.0
  %1142 = vmatpush1.msra.mxu0 0.0
  %1143 = vmatprep.subr.mxu0 0.0
  %1144 = vmatpush1.msra.mxu0 0.0
  %1145 = vmatprep.subr.mxu0 0.0
  %1146 = vmatpush1.msra.mxu0 0.0
  %1147 = vmatprep.subr.mxu0 0.0
  %1148 = vmatpush1.msra.mxu0 0.0
  %1149 = vmatprep.subr.mxu0 0.0
  %1150 = vmatpush1.msra.mxu0 0.0
  %1151 = vmatprep.subr.mxu0 0.0
  %1152 = vmatpush1.msra.mxu0 0.0
  %1153 = vmatprep.subr.mxu0 0.0
  %1154 = vmatpush1.msra.mxu0 0.0
  %1155 = vmatprep.subr.mxu0 0.0
  %1156 = vmatpush1.msra.mxu0 0.0
  %1157 = vmatprep.subr.mxu0 0.0
  %1158 = vmatpush1.msra.mxu0 0.0
  %1159 = vmatprep.subr.mxu0 0.0
  %1160 = vmatpush1.msra.mxu0 0.0
  %1161 = vmatprep.subr.mxu0 0.0
  %1162 = vmatpush1.msra.mxu0 0.0
  %1163 = vmatprep.subr.mxu0 0.0
  %1164 = vmatpush1.msra.mxu0 0.0
  %1165 = vmatprep.mubr.f32.mxu0 0.0
  %1166 = vmatmul.mubr.f32.gmra.mrb[0].mxu0 %v1099
  %v1167 = vpop.f32.mrb[0].mxu0
  %v1168 = vadd.f32 0.0, %v1167
  %v1169 = vpop.f32.mrb[0].mxu0
  %1170 = vdwg.mxu0
  %v1171 = vadd.f32 %v1098, %v1168
  %v1172 = vxor.u32 %v1171, 2147483648
  %v1173 = vmul.f32 %v1172, 1.442695
  %v1174 = vpow.pop %v1173
  %v1175 = vadd.f32 %v1174, 1.0
  %v1176 = vrcp.pop %v1175
  %v1177 = vmul.f32 1.0, %v1176
  %v1178 = vtanh.pop %v1171
  %v1179 = vmul.f32 %v1177, %v983
  %1181 = vrot.lane.b32.xlu0 %v1178, 64
  %v1182 = vpop.permute.xlu0 %1181
  %v1184 = vmul.f32 %v1177, %v1182
  %1186 = vrot.lane.b32.xlu0 %v1184, 32
  %v1187 = vpop.permute.xlu0 %1186
  %v1189 = vadd.f32 %v1179, %v1187
  %v1190 = vtanh.pop %v1189
  %1192 = vrot.lane.b32.xlu0 %v1190, 64
  %v1193 = vpop.permute.xlu0 %1192
  %v1195 = vmul.f32 %v1177, %v1193
  %1197 = vrot.lane.b32.xlu0 %v1195, 32
  %v1198 = vpop.permute.xlu0 %1197
  %1200 = vst.msk [vmem:[#allocation2 + $0x8] sm:$0x3] %vm377, %v1198
  %v1201 = vld [vmem:[#allocation5 + $0x8] sm:$0x3]
  %v1202 = vsel %vm274, %v1095, 0
  %1204 = vmatprep.subr.mxu0 0.0
  %1205 = vmatpush1.msra.mxu0 %v269
  %1206 = vmatprep.subr.mxu0 0.0
  %1207 = vmatpush1.msra.mxu0 %v270
  %1208 = vmatprep.subr.mxu0 0.0
  %1209 = vmatpush1.msra.mxu0 %v271
  %1210 = vmatprep.subr.mxu0 0.0
  %1211 = vmatpush1.msra.mxu0 %v272
  %1212 = vmatprep.subr.mxu0 0.0
  %1213 = vmatpush1.msra.mxu0 0.0
  %1214 = vmatprep.subr.mxu0 0.0
  %1215 = vmatpush1.msra.mxu0 0.0
  %1216 = vmatprep.subr.mxu0 0.0
  %1217 = vmatpush1.msra.mxu0 0.0
  %1218 = vmatprep.subr.mxu0 0.0
  %1219 = vmatpush1.msra.mxu0 0.0
  %1220 = vmatprep.subr.mxu0 0.0
  %1221 = vmatpush1.msra.mxu0 0.0
  %1222 = vmatprep.subr.mxu0 0.0
  %1223 = vmatpush1.msra.mxu0 0.0
  %1224 = vmatprep.subr.mxu0 0.0
  %1225 = vmatpush1.msra.mxu0 0.0
  %1226 = vmatprep.subr.mxu0 0.0
  %1227 = vmatpush1.msra.mxu0 0.0
  %1228 = vmatprep.subr.mxu0 0.0
  %1229 = vmatpush1.msra.mxu0 0.0
  %1230 = vmatprep.subr.mxu0 0.0
  %1231 = vmatpush1.msra.mxu0 0.0
  %1232 = vmatprep.subr.mxu0 0.0
  %1233 = vmatpush1.msra.mxu0 0.0
  %1234 = vmatprep.subr.mxu0 0.0
  %1235 = vmatpush1.msra.mxu0 0.0
  %1236 = vmatprep.subr.mxu0 0.0
  %1237 = vmatpush1.msra.mxu0 0.0
  %1238 = vmatprep.subr.mxu0 0.0
  %1239 = vmatpush1.msra.mxu0 0.0
  %1240 = vmatprep.subr.mxu0 0.0
  %1241 = vmatpush1.msra.mxu0 0.0
  %1242 = vmatprep.subr.mxu0 0.0
  %1243 = vmatpush1.msra.mxu0 0.0
  %1244 = vmatprep.subr.mxu0 0.0
  %1245 = vmatpush1.msra.mxu0 0.0
  %1246 = vmatprep.subr.mxu0 0.0
  %1247 = vmatpush1.msra.mxu0 0.0
  %1248 = vmatprep.subr.mxu0 0.0
  %1249 = vmatpush1.msra.mxu0 0.0
  %1250 = vmatprep.subr.mxu0 0.0
  %1251 = vmatpush1.msra.mxu0 0.0
  %1252 = vmatprep.subr.mxu0 0.0
  %1253 = vmatpush1.msra.mxu0 0.0
  %1254 = vmatprep.subr.mxu0 0.0
  %1255 = vmatpush1.msra.mxu0 0.0
  %1256 = vmatprep.subr.mxu0 0.0
  %1257 = vmatpush1.msra.mxu0 0.0
  %1258 = vmatprep.subr.mxu0 0.0
  %1259 = vmatpush1.msra.mxu0 0.0
  %1260 = vmatprep.subr.mxu0 0.0
  %1261 = vmatpush1.msra.mxu0 0.0
  %1262 = vmatprep.subr.mxu0 0.0
  %1263 = vmatpush1.msra.mxu0 0.0
  %1264 = vmatprep.subr.mxu0 0.0
  %1265 = vmatpush1.msra.mxu0 0.0
  %1266 = vmatprep.subr.mxu0 0.0
  %1267 = vmatpush1.msra.mxu0 0.0
  %1268 = vmatprep.mubr.f32.mxu0 0.0
  %1269 = vmatmul.mubr.f32.gmra.mrb[0].mxu0 %v1202
  %v1270 = vpop.f32.mrb[0].mxu0
  %v1271 = vadd.f32 0.0, %v1270
  %v1272 = vpop.f32.mrb[0].mxu0
  %1273 = vdwg.mxu0
  %v1274 = vadd.f32 %v1201, %v1271
  %v1275 = vxor.u32 %v1274, 2147483648
  %v1276 = vmul.f32 %v1275, 1.442695
  %v1277 = vpow.pop %v1276
  %v1278 = vadd.f32 %v1277, 1.0
  %v1279 = vrcp.pop %v1278
  %v1280 = vmul.f32 1.0, %v1279
  %v1281 = vtanh.pop %v1274
  %v1282 = vmul.f32 %v1280, %v1086
  %1284 = vrot.lane.b32.xlu0 %v1281, 64
  %v1285 = vpop.permute.xlu0 %1284
  %v1287 = vmul.f32 %v1280, %v1285
  %1289 = vrot.lane.b32.xlu0 %v1287, 32
  %v1290 = vpop.permute.xlu0 %1289
  %v1292 = vadd.f32 %v1282, %v1290
  %v1293 = vtanh.pop %v1292
  %1295 = vrot.lane.b32.xlu0 %v1293, 64
  %v1296 = vpop.permute.xlu0 %1295
  %v1298 = vmul.f32 %v1280, %v1296
  %1300 = vrot.lane.b32.xlu0 %v1298, 32
  %v1301 = vpop.permute.xlu0 %1300
  %1303 = vst.msk [vmem:[#allocation3 + $0x8] sm:$0x3] %vm377, %v1301
  %v1304 = vld [vmem:[#allocation4 + $0xa] sm:$0x3]
  %v1305 = vsel %vm274, %v1198, 0
  %1307 = vmatprep.subr.mxu0 0.0
  %1308 = vmatpush1.msra.mxu0 %v172
  %1309 = vmatprep.subr.mxu0 0.0
  %1310 = vmatpush1.msra.mxu0 %v173
  %1311 = vmatprep.subr.mxu0 0.0
  %1312 = vmatpush1.msra.mxu0 %v174
  %1313 = vmatprep.subr.mxu0 0.0
  %1314 = vmatpush1.msra.mxu0 %v175
  %1315 = vmatprep.subr.mxu0 0.0
  %1316 = vmatpush1.msra.mxu0 0.0
  %1317 = vmatprep.subr.mxu0 0.0
  %1318 = vmatpush1.msra.mxu0 0.0
  %1319 = vmatprep.subr.mxu0 0.0
  %1320 = vmatpush1.msra.mxu0 0.0
  %1321 = vmatprep.subr.mxu0 0.0
  %1322 = vmatpush1.msra.mxu0 0.0
  %1323 = vmatprep.subr.mxu0 0.0
  %1324 = vmatpush1.msra.mxu0 0.0
  %1325 = vmatprep.subr.mxu0 0.0
  %1326 = vmatpush1.msra.mxu0 0.0
  %1327 = vmatprep.subr.mxu0 0.0
  %1328 = vmatpush1.msra.mxu0 0.0
  %1329 = vmatprep.subr.mxu0 0.0
  %1330 = vmatpush1.msra.mxu0 0.0
  %1331 = vmatprep.subr.mxu0 0.0
  %1332 = vmatpush1.msra.mxu0 0.0
  %1333 = vmatprep.subr.mxu0 0.0
  %1334 = vmatpush1.msra.mxu0 0.0
  %1335 = vmatprep.subr.mxu0 0.0
  %1336 = vmatpush1.msra.mxu0 0.0
  %1337 = vmatprep.subr.mxu0 0.0
  %1338 = vmatpush1.msra.mxu0 0.0
  %1339 = vmatprep.subr.mxu0 0.0
  %1340 = vmatpush1.msra.mxu0 0.0
  %1341 = vmatprep.subr.mxu0 0.0
  %1342 = vmatpush1.msra.mxu0 0.0
  %1343 = vmatprep.subr.mxu0 0.0
  %1344 = vmatpush1.msra.mxu0 0.0
  %1345 = vmatprep.subr.mxu0 0.0
  %1346 = vmatpush1.msra.mxu0 0.0
  %1347 = vmatprep.subr.mxu0 0.0
  %1348 = vmatpush1.msra.mxu0 0.0
  %1349 = vmatprep.subr.mxu0 0.0
  %1350 = vmatpush1.msra.mxu0 0.0
  %1351 = vmatprep.subr.mxu0 0.0
  %1352 = vmatpush1.msra.mxu0 0.0
  %1353 = vmatprep.subr.mxu0 0.0
  %1354 = vmatpush1.msra.mxu0 0.0
  %1355 = vmatprep.subr.mxu0 0.0
  %1356 = vmatpush1.msra.mxu0 0.0
  %1357 = vmatprep.subr.mxu0 0.0
  %1358 = vmatpush1.msra.mxu0 0.0
  %1359 = vmatprep.subr.mxu0 0.0
  %1360 = vmatpush1.msra.mxu0 0.0
  %1361 = vmatprep.subr.mxu0 0.0
  %1362 = vmatpush1.msra.mxu0 0.0
  %1363 = vmatprep.subr.mxu0 0.0
  %1364 = vmatpush1.msra.mxu0 0.0
  %1365 = vmatprep.subr.mxu0 0.0
  %1366 = vmatpush1.msra.mxu0 0.0
  %1367 = vmatprep.subr.mxu0 0.0
  %1368 = vmatpush1.msra.mxu0 0.0
  %1369 = vmatprep.subr.mxu0 0.0
  %1370 = vmatpush1.msra.mxu0 0.0
  %1371 = vmatprep.mubr.f32.mxu0 0.0
  %1372 = vmatmul.mubr.f32.gmra.mrb[0].mxu0 %v1305
  %v1373 = vpop.f32.mrb[0].mxu0
  %v1374 = vadd.f32 0.0, %v1373
  %v1375 = vpop.f32.mrb[0].mxu0
  %1376 = vdwg.mxu0
  %v1377 = vadd.f32 %v1304, %v1374
  %v1378 = vxor.u32 %v1377, 2147483648
  %v1379 = vmul.f32 %v1378, 1.442695
  %v1380 = vpow.pop %v1379
  %v1381 = vadd.f32 %v1380, 1.0
  %v1382 = vrcp.pop %v1381
  %v1383 = vmul.f32 1.0, %v1382
  %v1384 = vtanh.pop %v1377
  %v1385 = vmul.f32 %v1383, %v1189
  %1387 = vrot.lane.b32.xlu0 %v1384, 64
  %v1388 = vpop.permute.xlu0 %1387
  %v1390 = vmul.f32 %v1383, %v1388
  %1392 = vrot.lane.b32.xlu0 %v1390, 32
  %v1393 = vpop.permute.xlu0 %1392
  %v1395 = vadd.f32 %v1385, %v1393
  %v1396 = vtanh.pop %v1395
  %1398 = vrot.lane.b32.xlu0 %v1396, 64
  %v1399 = vpop.permute.xlu0 %1398
  %v1401 = vmul.f32 %v1383, %v1399
  %1403 = vrot.lane.b32.xlu0 %v1401, 32
  %v1404 = vpop.permute.xlu0 %1403
  %1406 = vst.msk [vmem:[#allocation2 + $0xa] sm:$0x3] %vm377, %v1404
  %v1407 = vld [vmem:[#allocation5 + $0xa] sm:$0x3]
  %v1408 = vsel %vm274, %v1301, 0
  %1410 = vmatprep.subr.mxu0 0.0
  %1411 = vmatpush1.msra.mxu0 %v269
  %1412 = vmatprep.subr.mxu0 0.0
  %1413 = vmatpush1.msra.mxu0 %v270
  %1414 = vmatprep.subr.mxu0 0.0
  %1415 = vmatpush1.msra.mxu0 %v271
  %1416 = vmatprep.subr.mxu0 0.0
  %1417 = vmatpush1.msra.mxu0 %v272
  %1418 = vmatprep.subr.mxu0 0.0
  %1419 = vmatpush1.msra.mxu0 0.0
  %1420 = vmatprep.subr.mxu0 0.0
  %1421 = vmatpush1.msra.mxu0 0.0
  %1422 = vmatprep.subr.mxu0 0.0
  %1423 = vmatpush1.msra.mxu0 0.0
  %1424 = vmatprep.subr.mxu0 0.0
  %1425 = vmatpush1.msra.mxu0 0.0
  %1426 = vmatprep.subr.mxu0 0.0
  %1427 = vmatpush1.msra.mxu0 0.0
  %1428 = vmatprep.subr.mxu0 0.0
  %1429 = vmatpush1.msra.mxu0 0.0
  %1430 = vmatprep.subr.mxu0 0.0
  %1431 = vmatpush1.msra.mxu0 0.0
  %1432 = vmatprep.subr.mxu0 0.0
  %1433 = vmatpush1.msra.mxu0 0.0
  %1434 = vmatprep.subr.mxu0 0.0
  %1435 = vmatpush1.msra.mxu0 0.0
  %1436 = vmatprep.subr.mxu0 0.0
  %1437 = vmatpush1.msra.mxu0 0.0
  %1438 = vmatprep.subr.mxu0 0.0
  %1439 = vmatpush1.msra.mxu0 0.0
  %1440 = vmatprep.subr.mxu0 0.0
  %1441 = vmatpush1.msra.mxu0 0.0
  %1442 = vmatprep.subr.mxu0 0.0
  %1443 = vmatpush1.msra.mxu0 0.0
  %1444 = vmatprep.subr.mxu0 0.0
  %1445 = vmatpush1.msra.mxu0 0.0
  %1446 = vmatprep.subr.mxu0 0.0
  %1447 = vmatpush1.msra.mxu0 0.0
  %1448 = vmatprep.subr.mxu0 0.0
  %1449 = vmatpush1.msra.mxu0 0.0
  %1450 = vmatprep.subr.mxu0 0.0
  %1451 = vmatpush1.msra.mxu0 0.0
  %1452 = vmatprep.subr.mxu0 0.0
  %1453 = vmatpush1.msra.mxu0 0.0
  %1454 = vmatprep.subr.mxu0 0.0
  %1455 = vmatpush1.msra.mxu0 0.0
  %1456 = vmatprep.subr.mxu0 0.0
  %1457 = vmatpush1.msra.mxu0 0.0
  %1458 = vmatprep.subr.mxu0 0.0
  %1459 = vmatpush1.msra.mxu0 0.0
  %1460 = vmatprep.subr.mxu0 0.0
  %1461 = vmatpush1.msra.mxu0 0.0
  %1462 = vmatprep.subr.mxu0 0.0
  %1463 = vmatpush1.msra.mxu0 0.0
  %1464 = vmatprep.subr.mxu0 0.0
  %1465 = vmatpush1.msra.mxu0 0.0
  %1466 = vmatprep.subr.mxu0 0.0
  %1467 = vmatpush1.msra.mxu0 0.0
  %1468 = vmatprep.subr.mxu0 0.0
  %1469 = vmatpush1.msra.mxu0 0.0
  %1470 = vmatprep.subr.mxu0 0.0
  %1471 = vmatpush1.msra.mxu0 0.0
  %1472 = vmatprep.subr.mxu0 0.0
  %1473 = vmatpush1.msra.mxu0 0.0
  %1474 = vmatprep.mubr.f32.mxu0 0.0
  %1475 = vmatmul.mubr.f32.gmra.mrb[0].mxu0 %v1408
  %v1476 = vpop.f32.mrb[0].mxu0
  %v1477 = vadd.f32 0.0, %v1476
  %v1478 = vpop.f32.mrb[0].mxu0
  %1479 = vdwg.mxu0
  %v1480 = vadd.f32 %v1407, %v1477
  %v1481 = vxor.u32 %v1480, 2147483648
  %v1482 = vmul.f32 %v1481, 1.442695
  %v1483 = vpow.pop %v1482
  %v1484 = vadd.f32 %v1483, 1.0
  %v1485 = vrcp.pop %v1484
  %v1486 = vmul.f32 1.0, %v1485
  %v1487 = vtanh.pop %v1480
  %v1488 = vmul.f32 %v1486, %v1292
  %1490 = vrot.lane.b32.xlu0 %v1487, 64
  %v1491 = vpop.permute.xlu0 %1490
  %v1493 = vmul.f32 %v1486, %v1491
  %1495 = vrot.lane.b32.xlu0 %v1493, 32
  %v1496 = vpop.permute.xlu0 %1495
  %v1498 = vadd.f32 %v1488, %v1496
  %v1499 = vtanh.pop %v1498
  %1501 = vrot.lane.b32.xlu0 %v1499, 64
  %v1502 = vpop.permute.xlu0 %1501
  %v1504 = vmul.f32 %v1486, %v1502
  %1506 = vrot.lane.b32.xlu0 %v1504, 32
  %v1507 = vpop.permute.xlu0 %1506
  %1509 = vst.msk [vmem:[#allocation3 + $0xa] sm:$0x3] %vm377, %v1507
  %v1510 = vld [vmem:[#allocation4 + $0xc] sm:$0x3]
  %v1511 = vsel %vm274, %v1404, 0
  %1513 = vmatprep.subr.mxu0 0.0
  %1514 = vmatpush1.msra.mxu0 %v172
  %1515 = vmatprep.subr.mxu0 0.0
  %1516 = vmatpush1.msra.mxu0 %v173
  %1517 = vmatprep.subr.mxu0 0.0
  %1518 = vmatpush1.msra.mxu0 %v174
  %1519 = vmatprep.subr.mxu0 0.0
  %1520 = vmatpush1.msra.mxu0 %v175
  %1521 = vmatprep.subr.mxu0 0.0
  %1522 = vmatpush1.msra.mxu0 0.0
  %1523 = vmatprep.subr.mxu0 0.0
  %1524 = vmatpush1.msra.mxu0 0.0
  %1525 = vmatprep.subr.mxu0 0.0
  %1526 = vmatpush1.msra.mxu0 0.0
  %1527 = vmatprep.subr.mxu0 0.0
  %1528 = vmatpush1.msra.mxu0 0.0
  %1529 = vmatprep.subr.mxu0 0.0
  %1530 = vmatpush1.msra.mxu0 0.0
  %1531 = vmatprep.subr.mxu0 0.0
  %1532 = vmatpush1.msra.mxu0 0.0
  %1533 = vmatprep.subr.mxu0 0.0
  %1534 = vmatpush1.msra.mxu0 0.0
  %1535 = vmatprep.subr.mxu0 0.0
  %1536 = vmatpush1.msra.mxu0 0.0
  %1537 = vmatprep.subr.mxu0 0.0
  %1538 = vmatpush1.msra.mxu0 0.0
  %1539 = vmatprep.subr.mxu0 0.0
  %1540 = vmatpush1.msra.mxu0 0.0
  %1541 = vmatprep.subr.mxu0 0.0
  %1542 = vmatpush1.msra.mxu0 0.0
  %1543 = vmatprep.subr.mxu0 0.0
  %1544 = vmatpush1.msra.mxu0 0.0
  %1545 = vmatprep.subr.mxu0 0.0
  %1546 = vmatpush1.msra.mxu0 0.0
  %1547 = vmatprep.subr.mxu0 0.0
  %1548 = vmatpush1.msra.mxu0 0.0
  %1549 = vmatprep.subr.mxu0 0.0
  %1550 = vmatpush1.msra.mxu0 0.0
  %1551 = vmatprep.subr.mxu0 0.0
  %1552 = vmatpush1.msra.mxu0 0.0
  %1553 = vmatprep.subr.mxu0 0.0
  %1554 = vmatpush1.msra.mxu0 0.0
  %1555 = vmatprep.subr.mxu0 0.0
  %1556 = vmatpush1.msra.mxu0 0.0
  %1557 = vmatprep.subr.mxu0 0.0
  %1558 = vmatpush1.msra.mxu0 0.0
  %1559 = vmatprep.subr.mxu0 0.0
  %1560 = vmatpush1.msra.mxu0 0.0
  %1561 = vmatprep.subr.mxu0 0.0
  %1562 = vmatpush1.msra.mxu0 0.0
  %1563 = vmatprep.subr.mxu0 0.0
  %1564 = vmatpush1.msra.mxu0 0.0
  %1565 = vmatprep.subr.mxu0 0.0
  %1566 = vmatpush1.msra.mxu0 0.0
  %1567 = vmatprep.subr.mxu0 0.0
  %1568 = vmatpush1.msra.mxu0 0.0
  %1569 = vmatprep.subr.mxu0 0.0
  %1570 = vmatpush1.msra.mxu0 0.0
  %1571 = vmatprep.subr.mxu0 0.0
  %1572 = vmatpush1.msra.mxu0 0.0
  %1573 = vmatprep.subr.mxu0 0.0
  %1574 = vmatpush1.msra.mxu0 0.0
  %1575 = vmatprep.subr.mxu0 0.0
  %1576 = vmatpush1.msra.mxu0 0.0
  %1577 = vmatprep.mubr.f32.mxu0 0.0
  %1578 = vmatmul.mubr.f32.gmra.mrb[0].mxu0 %v1511
  %v1579 = vpop.f32.mrb[0].mxu0
  %v1580 = vadd.f32 0.0, %v1579
  %v1581 = vpop.f32.mrb[0].mxu0
  %1582 = vdwg.mxu0
  %v1583 = vadd.f32 %v1510, %v1580
  %v1584 = vxor.u32 %v1583, 2147483648
  %v1585 = vmul.f32 %v1584, 1.442695
  %v1586 = vpow.pop %v1585
  %v1587 = vadd.f32 %v1586, 1.0
  %v1588 = vrcp.pop %v1587
  %v1589 = vmul.f32 1.0, %v1588
  %v1590 = vtanh.pop %v1583
  %v1591 = vmul.f32 %v1589, %v1395
  %1593 = vrot.lane.b32.xlu0 %v1590, 64
  %v1594 = vpop.permute.xlu0 %1593
  %v1596 = vmul.f32 %v1589, %v1594
  %1598 = vrot.lane.b32.xlu0 %v1596, 32
  %v1599 = vpop.permute.xlu0 %1598
  %v1601 = vadd.f32 %v1591, %v1599
  %v1602 = vtanh.pop %v1601
  %1604 = vrot.lane.b32.xlu0 %v1602, 64
  %v1605 = vpop.permute.xlu0 %1604
  %v1607 = vmul.f32 %v1589, %v1605
  %1609 = vrot.lane.b32.xlu0 %v1607, 32
  %v1610 = vpop.permute.xlu0 %1609
  %1612 = vst.msk [vmem:[#allocation2 + $0xc] sm:$0x3] %vm377, %v1610
  %v1613 = vld [vmem:[#allocation4 + $0xe] sm:$0x3]
  %v1614 = vsel %vm274, %v1610, 0
  %1616 = vmatprep.subr.mxu0 0.0
  %1617 = vmatpush1.msra.mxu0 %v172
  %1618 = vmatprep.subr.mxu0 0.0
  %1619 = vmatpush1.msra.mxu0 %v173
  %1620 = vmatprep.subr.mxu0 0.0
  %1621 = vmatpush1.msra.mxu0 %v174
  %1622 = vmatprep.subr.mxu0 0.0
  %1623 = vmatpush1.msra.mxu0 %v175
  %1624 = vmatprep.subr.mxu0 0.0
  %1625 = vmatpush1.msra.mxu0 0.0
  %1626 = vmatprep.subr.mxu0 0.0
  %1627 = vmatpush1.msra.mxu0 0.0
  %1628 = vmatprep.subr.mxu0 0.0
  %1629 = vmatpush1.msra.mxu0 0.0
  %1630 = vmatprep.subr.mxu0 0.0
  %1631 = vmatpush1.msra.mxu0 0.0
  %1632 = vmatprep.subr.mxu0 0.0
  %1633 = vmatpush1.msra.mxu0 0.0
  %1634 = vmatprep.subr.mxu0 0.0
  %1635 = vmatpush1.msra.mxu0 0.0
  %1636 = vmatprep.subr.mxu0 0.0
  %1637 = vmatpush1.msra.mxu0 0.0
  %1638 = vmatprep.subr.mxu0 0.0
  %1639 = vmatpush1.msra.mxu0 0.0
  %1640 = vmatprep.subr.mxu0 0.0
  %1641 = vmatpush1.msra.mxu0 0.0
  %1642 = vmatprep.subr.mxu0 0.0
  %1643 = vmatpush1.msra.mxu0 0.0
  %1644 = vmatprep.subr.mxu0 0.0
  %1645 = vmatpush1.msra.mxu0 0.0
  %1646 = vmatprep.subr.mxu0 0.0
  %1647 = vmatpush1.msra.mxu0 0.0
  %1648 = vmatprep.subr.mxu0 0.0
  %1649 = vmatpush1.msra.mxu0 0.0
  %1650 = vmatprep.subr.mxu0 0.0
  %1651 = vmatpush1.msra.mxu0 0.0
  %1652 = vmatprep.subr.mxu0 0.0
  %1653 = vmatpush1.msra.mxu0 0.0
  %1654 = vmatprep.subr.mxu0 0.0
  %1655 = vmatpush1.msra.mxu0 0.0
  %1656 = vmatprep.subr.mxu0 0.0
  %1657 = vmatpush1.msra.mxu0 0.0
  %1658 = vmatprep.subr.mxu0 0.0
  %1659 = vmatpush1.msra.mxu0 0.0
  %1660 = vmatprep.subr.mxu0 0.0
  %1661 = vmatpush1.msra.mxu0 0.0
  %1662 = vmatprep.subr.mxu0 0.0
  %1663 = vmatpush1.msra.mxu0 0.0
  %1664 = vmatprep.subr.mxu0 0.0
  %1665 = vmatpush1.msra.mxu0 0.0
  %1666 = vmatprep.subr.mxu0 0.0
  %1667 = vmatpush1.msra.mxu0 0.0
  %1668 = vmatprep.subr.mxu0 0.0
  %1669 = vmatpush1.msra.mxu0 0.0
  %1670 = vmatprep.subr.mxu0 0.0
  %1671 = vmatpush1.msra.mxu0 0.0
  %1672 = vmatprep.subr.mxu0 0.0
  %1673 = vmatpush1.msra.mxu0 0.0
  %1674 = vmatprep.subr.mxu0 0.0
  %1675 = vmatpush1.msra.mxu0 0.0
  %1676 = vmatprep.subr.mxu0 0.0
  %1677 = vmatpush1.msra.mxu0 0.0
  %1678 = vmatprep.subr.mxu0 0.0
  %1679 = vmatpush1.msra.mxu0 0.0
  %1680 = vmatprep.mubr.f32.mxu0 0.0
  %1681 = vmatmul.mubr.f32.gmra.mrb[0].mxu0 %v1614
  %v1682 = vpop.f32.mrb[0].mxu0
  %v1683 = vadd.f32 0.0, %v1682
  %v1684 = vpop.f32.mrb[0].mxu0
  %1685 = vdwg.mxu0
  %v1686 = vadd.f32 %v1613, %v1683
  %v1687 = vxor.u32 %v1686, 2147483648
  %v1688 = vmul.f32 %v1687, 1.442695
  %v1689 = vpow.pop %v1688
  %v1690 = vadd.f32 %v1689, 1.0
  %v1691 = vrcp.pop %v1690
  %v1692 = vmul.f32 1.0, %v1691
  %v1693 = vtanh.pop %v1686
  %v1694 = vmul.f32 %v1692, %v1601
  %1696 = vrot.lane.b32.xlu0 %v1693, 64
  %v1697 = vpop.permute.xlu0 %1696
  %v1699 = vmul.f32 %v1692, %v1697
  %1701 = vrot.lane.b32.xlu0 %v1699, 32
  %v1702 = vpop.permute.xlu0 %1701
  %v1704 = vadd.f32 %v1694, %v1702
  %v1705 = vtanh.pop %v1704
  %1707 = vrot.lane.b32.xlu0 %v1705, 64
  %v1708 = vpop.permute.xlu0 %1707
  %v1710 = vmul.f32 %v1692, %v1708
  %1712 = vrot.lane.b32.xlu0 %v1710, 32
  %v1713 = vpop.permute.xlu0 %1712
  %1715 = vst.msk [vmem:[#allocation2 + $0xe] sm:$0x3] %vm377, %v1713
  %v1716 = vld [vmem:[#allocation4 + $0x10] sm:$0x3]
  %v1717 = vsel %vm274, %v1713, 0
  %1719 = vmatprep.subr.mxu0 0.0
  %1720 = vmatpush1.msra.mxu0 %v172
  %1721 = vmatprep.subr.mxu0 0.0
  %1722 = vmatpush1.msra.mxu0 %v173
  %1723 = vmatprep.subr.mxu0 0.0
  %1724 = vmatpush1.msra.mxu0 %v174
  %1725 = vmatprep.subr.mxu0 0.0
  %1726 = vmatpush1.msra.mxu0 %v175
  %1727 = vmatprep.subr.mxu0 0.0
  %1728 = vmatpush1.msra.mxu0 0.0
  %1729 = vmatprep.subr.mxu0 0.0
  %1730 = vmatpush1.msra.mxu0 0.0
  %1731 = vmatprep.subr.mxu0 0.0
  %1732 = vmatpush1.msra.mxu0 0.0
  %1733 = vmatprep.subr.mxu0 0.0
  %1734 = vmatpush1.msra.mxu0 0.0
  %1735 = vmatprep.subr.mxu0 0.0
  %1736 = vmatpush1.msra.mxu0 0.0
  %1737 = vmatprep.subr.mxu0 0.0
  %1738 = vmatpush1.msra.mxu0 0.0
  %1739 = vmatprep.subr.mxu0 0.0
  %1740 = vmatpush1.msra.mxu0 0.0
  %1741 = vmatprep.subr.mxu0 0.0
  %1742 = vmatpush1.msra.mxu0 0.0
  %1743 = vmatprep.subr.mxu0 0.0
  %1744 = vmatpush1.msra.mxu0 0.0
  %1745 = vmatprep.subr.mxu0 0.0
  %1746 = vmatpush1.msra.mxu0 0.0
  %1747 = vmatprep.subr.mxu0 0.0
  %1748 = vmatpush1.msra.mxu0 0.0
  %1749 = vmatprep.subr.mxu0 0.0
  %1750 = vmatpush1.msra.mxu0 0.0
  %1751 = vmatprep.subr.mxu0 0.0
  %1752 = vmatpush1.msra.mxu0 0.0
  %1753 = vmatprep.subr.mxu0 0.0
  %1754 = vmatpush1.msra.mxu0 0.0
  %1755 = vmatprep.subr.mxu0 0.0
  %1756 = vmatpush1.msra.mxu0 0.0
  %1757 = vmatprep.subr.mxu0 0.0
  %1758 = vmatpush1.msra.mxu0 0.0
  %1759 = vmatprep.subr.mxu0 0.0
  %1760 = vmatpush1.msra.mxu0 0.0
  %1761 = vmatprep.subr.mxu0 0.0
  %1762 = vmatpush1.msra.mxu0 0.0
  %1763 = vmatprep.subr.mxu0 0.0
  %1764 = vmatpush1.msra.mxu0 0.0
  %1765 = vmatprep.subr.mxu0 0.0
  %1766 = vmatpush1.msra.mxu0 0.0
  %1767 = vmatprep.subr.mxu0 0.0
  %1768 = vmatpush1.msra.mxu0 0.0
  %1769 = vmatprep.subr.mxu0 0.0
  %1770 = vmatpush1.msra.mxu0 0.0
  %1771 = vmatprep.subr.mxu0 0.0
  %1772 = vmatpush1.msra.mxu0 0.0
  %1773 = vmatprep.subr.mxu0 0.0
  %1774 = vmatpush1.msra.mxu0 0.0
  %1775 = vmatprep.subr.mxu0 0.0
  %1776 = vmatpush1.msra.mxu0 0.0
  %1777 = vmatprep.subr.mxu0 0.0
  %1778 = vmatpush1.msra.mxu0 0.0
  %1779 = vmatprep.subr.mxu0 0.0
  %1780 = vmatpush1.msra.mxu0 0.0
  %1781 = vmatprep.subr.mxu0 0.0
  %1782 = vmatpush1.msra.mxu0 0.0
  %1783 = vmatprep.mubr.f32.mxu0 0.0
  %1784 = vmatmul.mubr.f32.gmra.mrb[0].mxu0 %v1717
  %v1785 = vpop.f32.mrb[0].mxu0
  %v1786 = vadd.f32 0.0, %v1785
  %v1787 = vpop.f32.mrb[0].mxu0
  %1788 = vdwg.mxu0
  %v1789 = vadd.f32 %v1716, %v1786
  %v1790 = vxor.u32 %v1789, 2147483648
  %v1791 = vmul.f32 %v1790, 1.442695
  %v1792 = vpow.pop %v1791
  %v1793 = vadd.f32 %v1792, 1.0
  %v1794 = vrcp.pop %v1793
  %v1795 = vmul.f32 1.0, %v1794
  %v1796 = vtanh.pop %v1789
  %v1797 = vmul.f32 %v1795, %v1704
  %1799 = vrot.lane.b32.xlu0 %v1796, 64
  %v1800 = vpop.permute.xlu0 %1799
  %v1802 = vmul.f32 %v1795, %v1800
  %1804 = vrot.lane.b32.xlu0 %v1802, 32
  %v1805 = vpop.permute.xlu0 %1804
  %v1807 = vadd.f32 %v1797, %v1805
  %v1808 = vtanh.pop %v1807
  %1810 = vrot.lane.b32.xlu0 %v1808, 64
  %v1811 = vpop.permute.xlu0 %1810
  %v1813 = vmul.f32 %v1795, %v1811
  %1815 = vrot.lane.b32.xlu0 %v1813, 32
  %v1816 = vpop.permute.xlu0 %1815
  %1818 = vst.msk [vmem:[#allocation2 + $0x10] sm:$0x3] %vm377, %v1816
  %v1819 = vld [vmem:[#allocation4 + $0x12] sm:$0x3]
  %v1820 = vsel %vm274, %v1816, 0
  %1822 = vmatprep.subr.mxu0 0.0
  %1823 = vmatpush1.msra.mxu0 %v172
  %1824 = vmatprep.subr.mxu0 0.0
  %1825 = vmatpush1.msra.mxu0 %v173
  %1826 = vmatprep.subr.mxu0 0.0
  %1827 = vmatpush1.msra.mxu0 %v174
  %1828 = vmatprep.subr.mxu0 0.0
  %1829 = vmatpush1.msra.mxu0 %v175
  %1830 = vmatprep.subr.mxu0 0.0
  %1831 = vmatpush1.msra.mxu0 0.0
  %1832 = vmatprep.subr.mxu0 0.0
  %1833 = vmatpush1.msra.mxu0 0.0
  %1834 = vmatprep.subr.mxu0 0.0
  %1835 = vmatpush1.msra.mxu0 0.0
  %1836 = vmatprep.subr.mxu0 0.0
  %1837 = vmatpush1.msra.mxu0 0.0
  %1838 = vmatprep.subr.mxu0 0.0
  %1839 = vmatpush1.msra.mxu0 0.0
  %1840 = vmatprep.subr.mxu0 0.0
  %1841 = vmatpush1.msra.mxu0 0.0
  %1842 = vmatprep.subr.mxu0 0.0
  %1843 = vmatpush1.msra.mxu0 0.0
  %1844 = vmatprep.subr.mxu0 0.0
  %1845 = vmatpush1.msra.mxu0 0.0
  %1846 = vmatprep.subr.mxu0 0.0
  %1847 = vmatpush1.msra.mxu0 0.0
  %1848 = vmatprep.subr.mxu0 0.0
  %1849 = vmatpush1.msra.mxu0 0.0
  %1850 = vmatprep.subr.mxu0 0.0
  %1851 = vmatpush1.msra.mxu0 0.0
  %1852 = vmatprep.subr.mxu0 0.0
  %1853 = vmatpush1.msra.mxu0 0.0
  %1854 = vmatprep.subr.mxu0 0.0
  %1855 = vmatpush1.msra.mxu0 0.0
  %1856 = vmatprep.subr.mxu0 0.0
  %1857 = vmatpush1.msra.mxu0 0.0
  %1858 = vmatprep.subr.mxu0 0.0
  %1859 = vmatpush1.msra.mxu0 0.0
  %1860 = vmatprep.subr.mxu0 0.0
  %1861 = vmatpush1.msra.mxu0 0.0
  %1862 = vmatprep.subr.mxu0 0.0
  %1863 = vmatpush1.msra.mxu0 0.0
  %1864 = vmatprep.subr.mxu0 0.0
  %1865 = vmatpush1.msra.mxu0 0.0
  %1866 = vmatprep.subr.mxu0 0.0
  %1867 = vmatpush1.msra.mxu0 0.0
  %1868 = vmatprep.subr.mxu0 0.0
  %1869 = vmatpush1.msra.mxu0 0.0
  %1870 = vmatprep.subr.mxu0 0.0
  %1871 = vmatpush1.msra.mxu0 0.0
  %1872 = vmatprep.subr.mxu0 0.0
  %1873 = vmatpush1.msra.mxu0 0.0
  %1874 = vmatprep.subr.mxu0 0.0
  %1875 = vmatpush1.msra.mxu0 0.0
  %1876 = vmatprep.subr.mxu0 0.0
  %1877 = vmatpush1.msra.mxu0 0.0
  %1878 = vmatprep.subr.mxu0 0.0
  %1879 = vmatpush1.msra.mxu0 0.0
  %1880 = vmatprep.subr.mxu0 0.0
  %1881 = vmatpush1.msra.mxu0 0.0
  %1882 = vmatprep.subr.mxu0 0.0
  %1883 = vmatpush1.msra.mxu0 0.0
  %1884 = vmatprep.subr.mxu0 0.0
  %1885 = vmatpush1.msra.mxu0 0.0
  %1886 = vmatprep.mubr.f32.mxu0 0.0
  %1887 = vmatmul.mubr.f32.gmra.mrb[0].mxu0 %v1820
  %v1888 = vpop.f32.mrb[0].mxu0
  %v1889 = vadd.f32 0.0, %v1888
  %v1890 = vpop.f32.mrb[0].mxu0
  %1891 = vdwg.mxu0
  %v1892 = vadd.f32 %v1819, %v1889
  %v1893 = vxor.u32 %v1892, 2147483648
  %v1894 = vmul.f32 %v1893, 1.442695
  %v1895 = vpow.pop %v1894
  %v1896 = vadd.f32 %v1895, 1.0
  %v1897 = vrcp.pop %v1896
  %v1898 = vmul.f32 1.0, %v1897
  %v1899 = vtanh.pop %v1892
  %v1900 = vmul.f32 %v1898, %v1807
  %1902 = vrot.lane.b32.xlu0 %v1899, 64
  %v1903 = vpop.permute.xlu0 %1902
  %v1905 = vmul.f32 %v1898, %v1903
  %1907 = vrot.lane.b32.xlu0 %v1905, 32
  %v1908 = vpop.permute.xlu0 %1907
  %v1910 = vadd.f32 %v1900, %v1908
  %v1911 = vtanh.pop %v1910
  %1913 = vrot.lane.b32.xlu0 %v1911, 64
  %v1914 = vpop.permute.xlu0 %1913
  %v1916 = vmul.f32 %v1898, %v1914
  %1918 = vrot.lane.b32.xlu0 %v1916, 32
  %v1919 = vpop.permute.xlu0 %1918
  %1921 = vst.msk [vmem:[#allocation2 + $0x12] sm:$0x3] %vm377, %v1919
  %v1922 = vld [vmem:[#allocation2] sm:$0xff]
  %v1923 = vld [vmem:[#allocation2 + $0x8] sm:$0xff]
  %v1924 = vld [vmem:[#allocation2 + $0x10] sm:$0xf]
  %v1925 = vld [vmem:[%s5] sm:$0xff]
  %v1926 = vld [vmem:[%s5 + $0x8] sm:$0xff]
  %v1927 = vld [vmem:[%s5 + $0x10] sm:$0xff]
  %v1928 = vld [vmem:[%s5 + $0x18] sm:$0xff]
  %v1929 = vld [vmem:[%s7] sm:$0x1]
  %v1931 = vlaneseq
  %v1932 = vshrl.u32 %v1931, 7
  %v1933 = vsub.s32 0, %v1932
  %v1934 = vrot.slane %v1929, %v1933
  %v1937 = vsel %vm274, %v1922, 0
  %v1940 = vsel %vm274, %v1923, 0
  %v1943 = vsel %vm274, %v1924, 0
  %1945 = vmatprep.subr.mxu0 0.0
  %1946 = vmatpush1.msra.mxu0 %v1925
  %1947 = vmatprep.subr.mxu0 0.0
  %1948 = vmatpush1.msra.mxu0 %v1926
  %1949 = vmatprep.subr.mxu0 0.0
  %1950 = vmatpush1.msra.mxu0 %v1927
  %1951 = vmatprep.subr.mxu0 0.0
  %1952 = vmatpush1.msra.mxu0 %v1928
  %1953 = vmatprep.subr.mxu0 0.0
  %1954 = vmatpush1.msra.mxu0 0.0
  %1955 = vmatprep.subr.mxu0 0.0
  %1956 = vmatpush1.msra.mxu0 0.0
  %1957 = vmatprep.subr.mxu0 0.0
  %1958 = vmatpush1.msra.mxu0 0.0
  %1959 = vmatprep.subr.mxu0 0.0
  %1960 = vmatpush1.msra.mxu0 0.0
  %1961 = vmatprep.subr.mxu0 0.0
  %1962 = vmatpush1.msra.mxu0 0.0
  %1963 = vmatprep.subr.mxu0 0.0
  %1964 = vmatpush1.msra.mxu0 0.0
  %1965 = vmatprep.subr.mxu0 0.0
  %1966 = vmatpush1.msra.mxu0 0.0
  %1967 = vmatprep.subr.mxu0 0.0
  %1968 = vmatpush1.msra.mxu0 0.0
  %1969 = vmatprep.subr.mxu0 0.0
  %1970 = vmatpush1.msra.mxu0 0.0
  %1971 = vmatprep.subr.mxu0 0.0
  %1972 = vmatpush1.msra.mxu0 0.0
  %1973 = vmatprep.subr.mxu0 0.0
  %1974 = vmatpush1.msra.mxu0 0.0
  %1975 = vmatprep.subr.mxu0 0.0
  %1976 = vmatpush1.msra.mxu0 0.0
  %1977 = vmatprep.subr.mxu0 0.0
  %1978 = vmatpush1.msra.mxu0 0.0
  %1979 = vmatprep.subr.mxu0 0.0
  %1980 = vmatpush1.msra.mxu0 0.0
  %1981 = vmatprep.subr.mxu0 0.0
  %1982 = vmatpush1.msra.mxu0 0.0
  %1983 = vmatprep.subr.mxu0 0.0
  %1984 = vmatpush1.msra.mxu0 0.0
  %1985 = vmatprep.subr.mxu0 0.0
  %1986 = vmatpush1.msra.mxu0 0.0
  %1987 = vmatprep.subr.mxu0 0.0
  %1988 = vmatpush1.msra.mxu0 0.0
  %1989 = vmatprep.subr.mxu0 0.0
  %1990 = vmatpush1.msra.mxu0 0.0
  %1991 = vmatprep.subr.mxu0 0.0
  %1992 = vmatpush1.msra.mxu0 0.0
  %1993 = vmatprep.subr.mxu0 0.0
  %1994 = vmatpush1.msra.mxu0 0.0
  %1995 = vmatprep.subr.mxu0 0.0
  %1996 = vmatpush1.msra.mxu0 0.0
  %1997 = vmatprep.subr.mxu0 0.0
  %1998 = vmatpush1.msra.mxu0 0.0
  %1999 = vmatprep.subr.mxu0 0.0
  %2000 = vmatpush1.msra.mxu0 0.0
  %2001 = vmatprep.subr.mxu0 0.0
  %2002 = vmatpush1.msra.mxu0 0.0
  %2003 = vmatprep.subr.mxu0 0.0
  %2004 = vmatpush1.msra.mxu0 0.0
  %2005 = vmatprep.subr.mxu0 0.0
  %2006 = vmatpush1.msra.mxu0 0.0
  %2007 = vmatprep.subr.mxu0 0.0
  %2008 = vmatpush1.msra.mxu0 0.0
  %2009 = vmatprep.mubr.f32.mxu0 0.0
  %2010 = vmatmul.mubr.f32.gmra.mrb[0].mxu0 %v1937
  %v2011 = vpop.f32.mrb[0].mxu0
  %v2012 = vadd.f32 %v1934, %v2011
  %v2013 = vpop.f32.mrb[0].mxu0
  %2014 = vmatprep.mubr.f32.mxu0 0.0
  %2015 = vmatmul.mubr.f32.gmra.mrb[0].mxu0 %v1940
  %v2016 = vpop.f32.mrb[0].mxu0
  %v2017 = vadd.f32 %v1934, %v2016
  %v2018 = vpop.f32.mrb[0].mxu0
  %2019 = vmatprep.mubr.f32.mxu0 0.0
  %2020 = vmatmul.mubr.f32.gmra.mrb[0].mxu0 %v1943
  %v2021 = vpop.f32.mrb[0].mxu0
  %v2022 = vadd.f32 %v1934, %v2021
  %v2023 = vpop.f32.mrb[0].mxu0
  %2024 = vdwg.mxu0
  %2025 = vst [vmem:[#allocation4] sm:$0xff] %v2012
  %2026 = vst [vmem:[#allocation4 + $0x8] sm:$0xff] %v2017
  %2027 = vst [vmem:[#allocation4 + $0x10] sm:$0xf] %v2022
  %v2028 = vld [vmem:[%s6] sm:$0xff]
  %v2029 = vld [vmem:[%s6 + $0x8] sm:$0xff]
  %v2030 = vld [vmem:[%s6 + $0x10] sm:$0xff]
  %v2031 = vld [vmem:[%s6 + $0x18] sm:$0xff]
  %v2032 = vld [vmem:[#allocation4] sm:$0x3]
  %2033 = vmatprep.subr.mxu0 0.0
  %2034 = vmatpush1.msra.mxu0 %v2028
  %2035 = vmatprep.subr.mxu0 0.0
  %2036 = vmatpush1.msra.mxu0 %v2029
  %2037 = vmatprep.subr.mxu0 0.0
  %2038 = vmatpush1.msra.mxu0 %v2030
  %2039 = vmatprep.subr.mxu0 0.0
  %2040 = vmatpush1.msra.mxu0 %v2031
  %2041 = vmatprep.subr.mxu0 0.0
  %2042 = vmatpush1.msra.mxu0 0.0
  %2043 = vmatprep.subr.mxu0 0.0
  %2044 = vmatpush1.msra.mxu0 0.0
  %2045 = vmatprep.subr.mxu0 0.0
  %2046 = vmatpush1.msra.mxu0 0.0
  %2047 = vmatprep.subr.mxu0 0.0
  %2048 = vmatpush1.msra.mxu0 0.0
  %2049 = vmatprep.subr.mxu0 0.0
  %2050 = vmatpush1.msra.mxu0 0.0
  %2051 = vmatprep.subr.mxu0 0.0
  %2052 = vmatpush1.msra.mxu0 0.0
  %2053 = vmatprep.subr.mxu0 0.0
  %2054 = vmatpush1.msra.mxu0 0.0
  %2055 = vmatprep.subr.mxu0 0.0
  %2056 = vmatpush1.msra.mxu0 0.0
  %2057 = vmatprep.subr.mxu0 0.0
  %2058 = vmatpush1.msra.mxu0 0.0
  %2059 = vmatprep.subr.mxu0 0.0
  %2060 = vmatpush1.msra.mxu0 0.0
  %2061 = vmatprep.subr.mxu0 0.0
  %2062 = vmatpush1.msra.mxu0 0.0
  %2063 = vmatprep.subr.mxu0 0.0
  %2064 = vmatpush1.msra.mxu0 0.0
  %2065 = vmatprep.subr.mxu0 0.0
  %2066 = vmatpush1.msra.mxu0 0.0
  %2067 = vmatprep.subr.mxu0 0.0
  %2068 = vmatpush1.msra.mxu0 0.0
  %2069 = vmatprep.subr.mxu0 0.0
  %2070 = vmatpush1.msra.mxu0 0.0
  %2071 = vmatprep.subr.mxu0 0.0
  %2072 = vmatpush1.msra.mxu0 0.0
  %2073 = vmatprep.subr.mxu0 0.0
  %2074 = vmatpush1.msra.mxu0 0.0
  %2075 = vmatprep.subr.mxu0 0.0
  %2076 = vmatpush1.msra.mxu0 0.0
  %2077 = vmatprep.subr.mxu0 0.0
  %2078 = vmatpush1.msra.mxu0 0.0
  %2079 = vmatprep.subr.mxu0 0.0
  %2080 = vmatpush1.msra.mxu0 0.0
  %2081 = vmatprep.subr.mxu0 0.0
  %2082 = vmatpush1.msra.mxu0 0.0
  %2083 = vmatprep.subr.mxu0 0.0
  %2084 = vmatpush1.msra.mxu0 0.0
  %2085 = vmatprep.subr.mxu0 0.0
  %2086 = vmatpush1.msra.mxu0 0.0
  %2087 = vmatprep.subr.mxu0 0.0
  %2088 = vmatpush1.msra.mxu0 0.0
  %2089 = vmatprep.subr.mxu0 0.0
  %2090 = vmatpush1.msra.mxu0 0.0
  %2091 = vmatprep.subr.mxu0 0.0
  %2092 = vmatpush1.msra.mxu0 0.0
  %2093 = vmatprep.subr.mxu0 0.0
  %2094 = vmatpush1.msra.mxu0 0.0
  %2095 = vmatprep.subr.mxu0 0.0
  %2096 = vmatpush1.msra.mxu0 0.0
  %2097 = vmatprep.mubr.f32.mxu0 0.0
  %2098 = vmatmul.mubr.f32.gmra.mrb[0].mxu0 %v276
  %v2099 = vpop.f32.mrb[0].mxu0
  %v2100 = vadd.f32 0.0, %v2099
  %v2101 = vpop.f32.mrb[0].mxu0
  %2102 = vdwg.mxu0
  %v2103 = vadd.f32 %v2032, %v2100
  %v2104 = vxor.u32 %v2103, 2147483648
  %v2105 = vmul.f32 %v2104, 1.442695
  %v2106 = vpow.pop %v2105
  %v2107 = vadd.f32 %v2106, 1.0
  %v2108 = vrcp.pop %v2107
  %v2109 = vmul.f32 1.0, %v2108
  %v2110 = vtanh.pop %v2103
  %v2111 = vmul.f32 %v2109, 0.0
  %2113 = vrot.lane.b32.xlu0 %v2110, 64
  %v2114 = vpop.permute.xlu0 %2113
  %v2116 = vmul.f32 %v2109, %v2114
  %2118 = vrot.lane.b32.xlu0 %v2116, 32
  %v2119 = vpop.permute.xlu0 %2118
  %v2121 = vadd.f32 %v2111, %v2119
  %v2122 = vtanh.pop %v2121
  %2124 = vrot.lane.b32.xlu0 %v2122, 64
  %v2125 = vpop.permute.xlu0 %2124
  %v2127 = vmul.f32 %v2109, %v2125
  %2129 = vrot.lane.b32.xlu0 %v2127, 32
  %v2130 = vpop.permute.xlu0 %2129
  %2132 = vst.msk [vmem:[#allocation2] sm:$0x3] %vm377, %v2130
  %v2133 = vld [vmem:[#allocation4 + $0x2] sm:$0x3]
  %v2134 = vsel %vm274, %v2130, 0
  %2136 = vmatprep.subr.mxu0 0.0
  %2137 = vmatpush1.msra.mxu0 %v2028
  %2138 = vmatprep.subr.mxu0 0.0
  %2139 = vmatpush1.msra.mxu0 %v2029
  %2140 = vmatprep.subr.mxu0 0.0
  %2141 = vmatpush1.msra.mxu0 %v2030
  %2142 = vmatprep.subr.mxu0 0.0
  %2143 = vmatpush1.msra.mxu0 %v2031
  %2144 = vmatprep.subr.mxu0 0.0
  %2145 = vmatpush1.msra.mxu0 0.0
  %2146 = vmatprep.subr.mxu0 0.0
  %2147 = vmatpush1.msra.mxu0 0.0
  %2148 = vmatprep.subr.mxu0 0.0
  %2149 = vmatpush1.msra.mxu0 0.0
  %2150 = vmatprep.subr.mxu0 0.0
  %2151 = vmatpush1.msra.mxu0 0.0
  %2152 = vmatprep.subr.mxu0 0.0
  %2153 = vmatpush1.msra.mxu0 0.0
  %2154 = vmatprep.subr.mxu0 0.0
  %2155 = vmatpush1.msra.mxu0 0.0
  %2156 = vmatprep.subr.mxu0 0.0
  %2157 = vmatpush1.msra.mxu0 0.0
  %2158 = vmatprep.subr.mxu0 0.0
  %2159 = vmatpush1.msra.mxu0 0.0
  %2160 = vmatprep.subr.mxu0 0.0
  %2161 = vmatpush1.msra.mxu0 0.0
  %2162 = vmatprep.subr.mxu0 0.0
  %2163 = vmatpush1.msra.mxu0 0.0
  %2164 = vmatprep.subr.mxu0 0.0
  %2165 = vmatpush1.msra.mxu0 0.0
  %2166 = vmatprep.subr.mxu0 0.0
  %2167 = vmatpush1.msra.mxu0 0.0
  %2168 = vmatprep.subr.mxu0 0.0
  %2169 = vmatpush1.msra.mxu0 0.0
  %2170 = vmatprep.subr.mxu0 0.0
  %2171 = vmatpush1.msra.mxu0 0.0
  %2172 = vmatprep.subr.mxu0 0.0
  %2173 = vmatpush1.msra.mxu0 0.0
  %2174 = vmatprep.subr.mxu0 0.0
  %2175 = vmatpush1.msra.mxu0 0.0
  %2176 = vmatprep.subr.mxu0 0.0
  %2177 = vmatpush1.msra.mxu0 0.0
  %2178 = vmatprep.subr.mxu0 0.0
  %2179 = vmatpush1.msra.mxu0 0.0
  %2180 = vmatprep.subr.mxu0 0.0
  %2181 = vmatpush1.msra.mxu0 0.0
  %2182 = vmatprep.subr.mxu0 0.0
  %2183 = vmatpush1.msra.mxu0 0.0
  %2184 = vmatprep.subr.mxu0 0.0
  %2185 = vmatpush1.msra.mxu0 0.0
  %2186 = vmatprep.subr.mxu0 0.0
  %2187 = vmatpush1.msra.mxu0 0.0
  %2188 = vmatprep.subr.mxu0 0.0
  %2189 = vmatpush1.msra.mxu0 0.0
  %2190 = vmatprep.subr.mxu0 0.0
  %2191 = vmatpush1.msra.mxu0 0.0
  %2192 = vmatprep.subr.mxu0 0.0
  %2193 = vmatpush1.msra.mxu0 0.0
  %2194 = vmatprep.subr.mxu0 0.0
  %2195 = vmatpush1.msra.mxu0 0.0
  %2196 = vmatprep.subr.mxu0 0.0
  %2197 = vmatpush1.msra.mxu0 0.0
  %2198 = vmatprep.subr.mxu0 0.0
  %2199 = vmatpush1.msra.mxu0 0.0
  %2200 = vmatprep.mubr.f32.mxu0 0.0
  %2201 = vmatmul.mubr.f32.gmra.mrb[0].mxu0 %v2134
  %v2202 = vpop.f32.mrb[0].mxu0
  %v2203 = vadd.f32 0.0, %v2202
  %v2204 = vpop.f32.mrb[0].mxu0
  %2205 = vdwg.mxu0
  %v2206 = vadd.f32 %v2133, %v2203
  %v2207 = vxor.u32 %v2206, 2147483648
  %v2208 = vmul.f32 %v2207, 1.442695
  %v2209 = vpow.pop %v2208
  %v2210 = vadd.f32 %v2209, 1.0
  %v2211 = vrcp.pop %v2210
  %v2212 = vmul.f32 1.0, %v2211
  %v2213 = vtanh.pop %v2206
  %v2214 = vmul.f32 %v2212, %v2121
  %2216 = vrot.lane.b32.xlu0 %v2213, 64
  %v2217 = vpop.permute.xlu0 %2216
  %v2219 = vmul.f32 %v2212, %v2217
  %2221 = vrot.lane.b32.xlu0 %v2219, 32
  %v2222 = vpop.permute.xlu0 %2221
  %v2224 = vadd.f32 %v2214, %v2222
  %v2225 = vtanh.pop %v2224
  %2227 = vrot.lane.b32.xlu0 %v2225, 64
  %v2228 = vpop.permute.xlu0 %2227
  %v2230 = vmul.f32 %v2212, %v2228
  %2232 = vrot.lane.b32.xlu0 %v2230, 32
  %v2233 = vpop.permute.xlu0 %2232
  %2235 = vst.msk [vmem:[#allocation2 + $0x2] sm:$0x3] %vm377, %v2233
  %v2236 = vld [vmem:[#allocation4 + $0x4] sm:$0x3]
  %v2237 = vsel %vm274, %v2233, 0
  %2239 = vmatprep.subr.mxu0 0.0
  %2240 = vmatpush1.msra.mxu0 %v2028
  %2241 = vmatprep.subr.mxu0 0.0
  %2242 = vmatpush1.msra.mxu0 %v2029
  %2243 = vmatprep.subr.mxu0 0.0
  %2244 = vmatpush1.msra.mxu0 %v2030
  %2245 = vmatprep.subr.mxu0 0.0
  %2246 = vmatpush1.msra.mxu0 %v2031
  %2247 = vmatprep.subr.mxu0 0.0
  %2248 = vmatpush1.msra.mxu0 0.0
  %2249 = vmatprep.subr.mxu0 0.0
  %2250 = vmatpush1.msra.mxu0 0.0
  %2251 = vmatprep.subr.mxu0 0.0
  %2252 = vmatpush1.msra.mxu0 0.0
  %2253 = vmatprep.subr.mxu0 0.0
  %2254 = vmatpush1.msra.mxu0 0.0
  %2255 = vmatprep.subr.mxu0 0.0
  %2256 = vmatpush1.msra.mxu0 0.0
  %2257 = vmatprep.subr.mxu0 0.0
  %2258 = vmatpush1.msra.mxu0 0.0
  %2259 = vmatprep.subr.mxu0 0.0
  %2260 = vmatpush1.msra.mxu0 0.0
  %2261 = vmatprep.subr.mxu0 0.0
  %2262 = vmatpush1.msra.mxu0 0.0
  %2263 = vmatprep.subr.mxu0 0.0
  %2264 = vmatpush1.msra.mxu0 0.0
  %2265 = vmatprep.subr.mxu0 0.0
  %2266 = vmatpush1.msra.mxu0 0.0
  %2267 = vmatprep.subr.mxu0 0.0
  %2268 = vmatpush1.msra.mxu0 0.0
  %2269 = vmatprep.subr.mxu0 0.0
  %2270 = vmatpush1.msra.mxu0 0.0
  %2271 = vmatprep.subr.mxu0 0.0
  %2272 = vmatpush1.msra.mxu0 0.0
  %2273 = vmatprep.subr.mxu0 0.0
  %2274 = vmatpush1.msra.mxu0 0.0
  %2275 = vmatprep.subr.mxu0 0.0
  %2276 = vmatpush1.msra.mxu0 0.0
  %2277 = vmatprep.subr.mxu0 0.0
  %2278 = vmatpush1.msra.mxu0 0.0
  %2279 = vmatprep.subr.mxu0 0.0
  %2280 = vmatpush1.msra.mxu0 0.0
  %2281 = vmatprep.subr.mxu0 0.0
  %2282 = vmatpush1.msra.mxu0 0.0
  %2283 = vmatprep.subr.mxu0 0.0
  %2284 = vmatpush1.msra.mxu0 0.0
  %2285 = vmatprep.subr.mxu0 0.0
  %2286 = vmatpush1.msra.mxu0 0.0
  %2287 = vmatprep.subr.mxu0 0.0
  %2288 = vmatpush1.msra.mxu0 0.0
  %2289 = vmatprep.subr.mxu0 0.0
  %2290 = vmatpush1.msra.mxu0 0.0
  %2291 = vmatprep.subr.mxu0 0.0
  %2292 = vmatpush1.msra.mxu0 0.0
  %2293 = vmatprep.subr.mxu0 0.0
  %2294 = vmatpush1.msra.mxu0 0.0
  %2295 = vmatprep.subr.mxu0 0.0
  %2296 = vmatpush1.msra.mxu0 0.0
  %2297 = vmatprep.subr.mxu0 0.0
  %2298 = vmatpush1.msra.mxu0 0.0
  %2299 = vmatprep.subr.mxu0 0.0
  %2300 = vmatpush1.msra.mxu0 0.0
  %2301 = vmatprep.subr.mxu0 0.0
  %2302 = vmatpush1.msra.mxu0 0.0
  %2303 = vmatprep.mubr.f32.mxu0 0.0
  %2304 = vmatmul.mubr.f32.gmra.mrb[0].mxu0 %v2237
  %v2305 = vpop.f32.mrb[0].mxu0
  %v2306 = vadd.f32 0.0, %v2305
  %v2307 = vpop.f32.mrb[0].mxu0
  %2308 = vdwg.mxu0
  %v2309 = vadd.f32 %v2236, %v2306
  %v2310 = vxor.u32 %v2309, 2147483648
  %v2311 = vmul.f32 %v2310, 1.442695
  %v2312 = vpow.pop %v2311
  %v2313 = vadd.f32 %v2312, 1.0
  %v2314 = vrcp.pop %v2313
  %v2315 = vmul.f32 1.0, %v2314
  %v2316 = vtanh.pop %v2309
  %v2317 = vmul.f32 %v2315, %v2224
  %2319 = vrot.lane.b32.xlu0 %v2316, 64
  %v2320 = vpop.permute.xlu0 %2319
  %v2322 = vmul.f32 %v2315, %v2320
  %2324 = vrot.lane.b32.xlu0 %v2322, 32
  %v2325 = vpop.permute.xlu0 %2324
  %v2327 = vadd.f32 %v2317, %v2325
  %v2328 = vtanh.pop %v2327
  %2330 = vrot.lane.b32.xlu0 %v2328, 64
  %v2331 = vpop.permute.xlu0 %2330
  %v2333 = vmul.f32 %v2315, %v2331
  %2335 = vrot.lane.b32.xlu0 %v2333, 32
  %v2336 = vpop.permute.xlu0 %2335
  %2338 = vst.msk [vmem:[#allocation2 + $0x4] sm:$0x3] %vm377, %v2336
  %v2339 = vld [vmem:[#allocation4 + $0x6] sm:$0x3]
  %v2340 = vsel %vm274, %v2336, 0
  %2342 = vmatprep.subr.mxu0 0.0
  %2343 = vmatpush1.msra.mxu0 %v2028
  %2344 = vmatprep.subr.mxu0 0.0
  %2345 = vmatpush1.msra.mxu0 %v2029
  %2346 = vmatprep.subr.mxu0 0.0
  %2347 = vmatpush1.msra.mxu0 %v2030
  %2348 = vmatprep.subr.mxu0 0.0
  %2349 = vmatpush1.msra.mxu0 %v2031
  %2350 = vmatprep.subr.mxu0 0.0
  %2351 = vmatpush1.msra.mxu0 0.0
  %2352 = vmatprep.subr.mxu0 0.0
  %2353 = vmatpush1.msra.mxu0 0.0
  %2354 = vmatprep.subr.mxu0 0.0
  %2355 = vmatpush1.msra.mxu0 0.0
  %2356 = vmatprep.subr.mxu0 0.0
  %2357 = vmatpush1.msra.mxu0 0.0
  %2358 = vmatprep.subr.mxu0 0.0
  %2359 = vmatpush1.msra.mxu0 0.0
  %2360 = vmatprep.subr.mxu0 0.0
  %2361 = vmatpush1.msra.mxu0 0.0
  %2362 = vmatprep.subr.mxu0 0.0
  %2363 = vmatpush1.msra.mxu0 0.0
  %2364 = vmatprep.subr.mxu0 0.0
  %2365 = vmatpush1.msra.mxu0 0.0
  %2366 = vmatprep.subr.mxu0 0.0
  %2367 = vmatpush1.msra.mxu0 0.0
  %2368 = vmatprep.subr.mxu0 0.0
  %2369 = vmatpush1.msra.mxu0 0.0
  %2370 = vmatprep.subr.mxu0 0.0
  %2371 = vmatpush1.msra.mxu0 0.0
  %2372 = vmatprep.subr.mxu0 0.0
  %2373 = vmatpush1.msra.mxu0 0.0
  %2374 = vmatprep.subr.mxu0 0.0
  %2375 = vmatpush1.msra.mxu0 0.0
  %2376 = vmatprep.subr.mxu0 0.0
  %2377 = vmatpush1.msra.mxu0 0.0
  %2378 = vmatprep.subr.mxu0 0.0
  %2379 = vmatpush1.msra.mxu0 0.0
  %2380 = vmatprep.subr.mxu0 0.0
  %2381 = vmatpush1.msra.mxu0 0.0
  %2382 = vmatprep.subr.mxu0 0.0
  %2383 = vmatpush1.msra.mxu0 0.0
  %2384 = vmatprep.subr.mxu0 0.0
  %2385 = vmatpush1.msra.mxu0 0.0
  %2386 = vmatprep.subr.mxu0 0.0
  %2387 = vmatpush1.msra.mxu0 0.0
  %2388 = vmatprep.subr.mxu0 0.0
  %2389 = vmatpush1.msra.mxu0 0.0
  %2390 = vmatprep.subr.mxu0 0.0
  %2391 = vmatpush1.msra.mxu0 0.0
  %2392 = vmatprep.subr.mxu0 0.0
  %2393 = vmatpush1.msra.mxu0 0.0
  %2394 = vmatprep.subr.mxu0 0.0
  %2395 = vmatpush1.msra.mxu0 0.0
  %2396 = vmatprep.subr.mxu0 0.0
  %2397 = vmatpush1.msra.mxu0 0.0
  %2398 = vmatprep.subr.mxu0 0.0
  %2399 = vmatpush1.msra.mxu0 0.0
  %2400 = vmatprep.subr.mxu0 0.0
  %2401 = vmatpush1.msra.mxu0 0.0
  %2402 = vmatprep.subr.mxu0 0.0
  %2403 = vmatpush1.msra.mxu0 0.0
  %2404 = vmatprep.subr.mxu0 0.0
  %2405 = vmatpush1.msra.mxu0 0.0
  %2406 = vmatprep.mubr.f32.mxu0 0.0
  %2407 = vmatmul.mubr.f32.gmra.mrb[0].mxu0 %v2340
  %v2408 = vpop.f32.mrb[0].mxu0
  %v2409 = vadd.f32 0.0, %v2408
  %v2410 = vpop.f32.mrb[0].mxu0
  %2411 = vdwg.mxu0
  %v2412 = vadd.f32 %v2339, %v2409
  %v2413 = vxor.u32 %v2412, 2147483648
  %v2414 = vmul.f32 %v2413, 1.442695
  %v2415 = vpow.pop %v2414
  %v2416 = vadd.f32 %v2415, 1.0
  %v2417 = vrcp.pop %v2416
  %v2418 = vmul.f32 1.0, %v2417
  %v2419 = vtanh.pop %v2412
  %v2420 = vmul.f32 %v2418, %v2327
  %2422 = vrot.lane.b32.xlu0 %v2419, 64
  %v2423 = vpop.permute.xlu0 %2422
  %v2425 = vmul.f32 %v2418, %v2423
  %2427 = vrot.lane.b32.xlu0 %v2425, 32
  %v2428 = vpop.permute.xlu0 %2427
  %v2430 = vadd.f32 %v2420, %v2428
  %v2431 = vtanh.pop %v2430
  %2433 = vrot.lane.b32.xlu0 %v2431, 64
  %v2434 = vpop.permute.xlu0 %2433
  %v2436 = vmul.f32 %v2418, %v2434
  %2438 = vrot.lane.b32.xlu0 %v2436, 32
  %v2439 = vpop.permute.xlu0 %2438
  %2441 = vst.msk [vmem:[#allocation2 + $0x6] sm:$0x3] %vm377, %v2439
  %v2442 = vld [vmem:[#allocation4 + $0x8] sm:$0x3]
  %v2443 = vsel %vm274, %v2439, 0
  %2445 = vmatprep.subr.mxu0 0.0
  %2446 = vmatpush1.msra.mxu0 %v2028
  %2447 = vmatprep.subr.mxu0 0.0
  %2448 = vmatpush1.msra.mxu0 %v2029
  %2449 = vmatprep.subr.mxu0 0.0
  %2450 = vmatpush1.msra.mxu0 %v2030
  %2451 = vmatprep.subr.mxu0 0.0
  %2452 = vmatpush1.msra.mxu0 %v2031
  %2453 = vmatprep.subr.mxu0 0.0
  %2454 = vmatpush1.msra.mxu0 0.0
  %2455 = vmatprep.subr.mxu0 0.0
  %2456 = vmatpush1.msra.mxu0 0.0
  %2457 = vmatprep.subr.mxu0 0.0
  %2458 = vmatpush1.msra.mxu0 0.0
  %2459 = vmatprep.subr.mxu0 0.0
  %2460 = vmatpush1.msra.mxu0 0.0
  %2461 = vmatprep.subr.mxu0 0.0
  %2462 = vmatpush1.msra.mxu0 0.0
  %2463 = vmatprep.subr.mxu0 0.0
  %2464 = vmatpush1.msra.mxu0 0.0
  %2465 = vmatprep.subr.mxu0 0.0
  %2466 = vmatpush1.msra.mxu0 0.0
  %2467 = vmatprep.subr.mxu0 0.0
  %2468 = vmatpush1.msra.mxu0 0.0
  %2469 = vmatprep.subr.mxu0 0.0
  %2470 = vmatpush1.msra.mxu0 0.0
  %2471 = vmatprep.subr.mxu0 0.0
  %2472 = vmatpush1.msra.mxu0 0.0
  %2473 = vmatprep.subr.mxu0 0.0
  %2474 = vmatpush1.msra.mxu0 0.0
  %2475 = vmatprep.subr.mxu0 0.0
  %2476 = vmatpush1.msra.mxu0 0.0
  %2477 = vmatprep.subr.mxu0 0.0
  %2478 = vmatpush1.msra.mxu0 0.0
  %2479 = vmatprep.subr.mxu0 0.0
  %2480 = vmatpush1.msra.mxu0 0.0
  %2481 = vmatprep.subr.mxu0 0.0
  %2482 = vmatpush1.msra.mxu0 0.0
  %2483 = vmatprep.subr.mxu0 0.0
  %2484 = vmatpush1.msra.mxu0 0.0
  %2485 = vmatprep.subr.mxu0 0.0
  %2486 = vmatpush1.msra.mxu0 0.0
  %2487 = vmatprep.subr.mxu0 0.0
  %2488 = vmatpush1.msra.mxu0 0.0
  %2489 = vmatprep.subr.mxu0 0.0
  %2490 = vmatpush1.msra.mxu0 0.0
  %2491 = vmatprep.subr.mxu0 0.0
  %2492 = vmatpush1.msra.mxu0 0.0
  %2493 = vmatprep.subr.mxu0 0.0
  %2494 = vmatpush1.msra.mxu0 0.0
  %2495 = vmatprep.subr.mxu0 0.0
  %2496 = vmatpush1.msra.mxu0 0.0
  %2497 = vmatprep.subr.mxu0 0.0
  %2498 = vmatpush1.msra.mxu0 0.0
  %2499 = vmatprep.subr.mxu0 0.0
  %2500 = vmatpush1.msra.mxu0 0.0
  %2501 = vmatprep.subr.mxu0 0.0
  %2502 = vmatpush1.msra.mxu0 0.0
  %2503 = vmatprep.subr.mxu0 0.0
  %2504 = vmatpush1.msra.mxu0 0.0
  %2505 = vmatprep.subr.mxu0 0.0
  %2506 = vmatpush1.msra.mxu0 0.0
  %2507 = vmatprep.subr.mxu0 0.0
  %2508 = vmatpush1.msra.mxu0 0.0
  %2509 = vmatprep.mubr.f32.mxu0 0.0
  %2510 = vmatmul.mubr.f32.gmra.mrb[0].mxu0 %v2443
  %v2511 = vpop.f32.mrb[0].mxu0
  %v2512 = vadd.f32 0.0, %v2511
  %v2513 = vpop.f32.mrb[0].mxu0
  %2514 = vdwg.mxu0
  %v2515 = vadd.f32 %v2442, %v2512
  %v2516 = vxor.u32 %v2515, 2147483648
  %v2517 = vmul.f32 %v2516, 1.442695
  %v2518 = vpow.pop %v2517
  %v2519 = vadd.f32 %v2518, 1.0
  %v2520 = vrcp.pop %v2519
  %v2521 = vmul.f32 1.0, %v2520
  %v2522 = vtanh.pop %v2515
  %v2523 = vmul.f32 %v2521, %v2430
  %2525 = vrot.lane.b32.xlu0 %v2522, 64
  %v2526 = vpop.permute.xlu0 %2525
  %v2528 = vmul.f32 %v2521, %v2526
  %2530 = vrot.lane.b32.xlu0 %v2528, 32
  %v2531 = vpop.permute.xlu0 %2530
  %v2533 = vadd.f32 %v2523, %v2531
  %v2534 = vtanh.pop %v2533
  %2536 = vrot.lane.b32.xlu0 %v2534, 64
  %v2537 = vpop.permute.xlu0 %2536
  %v2539 = vmul.f32 %v2521, %v2537
  %2541 = vrot.lane.b32.xlu0 %v2539, 32
  %v2542 = vpop.permute.xlu0 %2541
  %2544 = vst.msk [vmem:[#allocation2 + $0x8] sm:$0x3] %vm377, %v2542
  %v2545 = vld [vmem:[#allocation4 + $0xa] sm:$0x3]
  %v2546 = vsel %vm274, %v2542, 0
  %2548 = vmatprep.subr.mxu0 0.0
  %2549 = vmatpush1.msra.mxu0 %v2028
  %2550 = vmatprep.subr.mxu0 0.0
  %2551 = vmatpush1.msra.mxu0 %v2029
  %2552 = vmatprep.subr.mxu0 0.0
  %2553 = vmatpush1.msra.mxu0 %v2030
  %2554 = vmatprep.subr.mxu0 0.0
  %2555 = vmatpush1.msra.mxu0 %v2031
  %2556 = vmatprep.subr.mxu0 0.0
  %2557 = vmatpush1.msra.mxu0 0.0
  %2558 = vmatprep.subr.mxu0 0.0
  %2559 = vmatpush1.msra.mxu0 0.0
  %2560 = vmatprep.subr.mxu0 0.0
  %2561 = vmatpush1.msra.mxu0 0.0
  %2562 = vmatprep.subr.mxu0 0.0
  %2563 = vmatpush1.msra.mxu0 0.0
  %2564 = vmatprep.subr.mxu0 0.0
  %2565 = vmatpush1.msra.mxu0 0.0
  %2566 = vmatprep.subr.mxu0 0.0
  %2567 = vmatpush1.msra.mxu0 0.0
  %2568 = vmatprep.subr.mxu0 0.0
  %2569 = vmatpush1.msra.mxu0 0.0
  %2570 = vmatprep.subr.mxu0 0.0
  %2571 = vmatpush1.msra.mxu0 0.0
  %2572 = vmatprep.subr.mxu0 0.0
  %2573 = vmatpush1.msra.mxu0 0.0
  %2574 = vmatprep.subr.mxu0 0.0
  %2575 = vmatpush1.msra.mxu0 0.0
  %2576 = vmatprep.subr.mxu0 0.0
  %2577 = vmatpush1.msra.mxu0 0.0
  %2578 = vmatprep.subr.mxu0 0.0
  %2579 = vmatpush1.msra.mxu0 0.0
  %2580 = vmatprep.subr.mxu0 0.0
  %2581 = vmatpush1.msra.mxu0 0.0
  %2582 = vmatprep.subr.mxu0 0.0
  %2583 = vmatpush1.msra.mxu0 0.0
  %2584 = vmatprep.subr.mxu0 0.0
  %2585 = vmatpush1.msra.mxu0 0.0
  %2586 = vmatprep.subr.mxu0 0.0
  %2587 = vmatpush1.msra.mxu0 0.0
  %2588 = vmatprep.subr.mxu0 0.0
  %2589 = vmatpush1.msra.mxu0 0.0
  %2590 = vmatprep.subr.mxu0 0.0
  %2591 = vmatpush1.msra.mxu0 0.0
  %2592 = vmatprep.subr.mxu0 0.0
  %2593 = vmatpush1.msra.mxu0 0.0
  %2594 = vmatprep.subr.mxu0 0.0
  %2595 = vmatpush1.msra.mxu0 0.0
  %2596 = vmatprep.subr.mxu0 0.0
  %2597 = vmatpush1.msra.mxu0 0.0
  %2598 = vmatprep.subr.mxu0 0.0
  %2599 = vmatpush1.msra.mxu0 0.0
  %2600 = vmatprep.subr.mxu0 0.0
  %2601 = vmatpush1.msra.mxu0 0.0
  %2602 = vmatprep.subr.mxu0 0.0
  %2603 = vmatpush1.msra.mxu0 0.0
  %2604 = vmatprep.subr.mxu0 0.0
  %2605 = vmatpush1.msra.mxu0 0.0
  %2606 = vmatprep.subr.mxu0 0.0
  %2607 = vmatpush1.msra.mxu0 0.0
  %2608 = vmatprep.subr.mxu0 0.0
  %2609 = vmatpush1.msra.mxu0 0.0
  %2610 = vmatprep.subr.mxu0 0.0
  %2611 = vmatpush1.msra.mxu0 0.0
  %2612 = vmatprep.mubr.f32.mxu0 0.0
  %2613 = vmatmul.mubr.f32.gmra.mrb[0].mxu0 %v2546
  %v2614 = vpop.f32.mrb[0].mxu0
  %v2615 = vadd.f32 0.0, %v2614
  %v2616 = vpop.f32.mrb[0].mxu0
  %2617 = vdwg.mxu0
  %v2618 = vadd.f32 %v2545, %v2615
  %v2619 = vxor.u32 %v2618, 2147483648
  %v2620 = vmul.f32 %v2619, 1.442695
  %v2621 = vpow.pop %v2620
  %v2622 = vadd.f32 %v2621, 1.0
  %v2623 = vrcp.pop %v2622
  %v2624 = vmul.f32 1.0, %v2623
  %v2625 = vtanh.pop %v2618
  %v2626 = vmul.f32 %v2624, %v2533
  %2628 = vrot.lane.b32.xlu0 %v2625, 64
  %v2629 = vpop.permute.xlu0 %2628
  %v2631 = vmul.f32 %v2624, %v2629
  %2633 = vrot.lane.b32.xlu0 %v2631, 32
  %v2634 = vpop.permute.xlu0 %2633
  %v2636 = vadd.f32 %v2626, %v2634
  %v2637 = vtanh.pop %v2636
  %2639 = vrot.lane.b32.xlu0 %v2637, 64
  %v2640 = vpop.permute.xlu0 %2639
  %v2642 = vmul.f32 %v2624, %v2640
  %2644 = vrot.lane.b32.xlu0 %v2642, 32
  %v2645 = vpop.permute.xlu0 %2644
  %2647 = vst.msk [vmem:[#allocation2 + $0xa] sm:$0x3] %vm377, %v2645
  %v2648 = vld [vmem:[#allocation4 + $0xc] sm:$0x3]
  %v2649 = vsel %vm274, %v2645, 0
  %2651 = vmatprep.subr.mxu0 0.0
  %2652 = vmatpush1.msra.mxu0 %v2028
  %2653 = vmatprep.subr.mxu0 0.0
  %2654 = vmatpush1.msra.mxu0 %v2029
  %2655 = vmatprep.subr.mxu0 0.0
  %2656 = vmatpush1.msra.mxu0 %v2030
  %2657 = vmatprep.subr.mxu0 0.0
  %2658 = vmatpush1.msra.mxu0 %v2031
  %2659 = vmatprep.subr.mxu0 0.0
  %2660 = vmatpush1.msra.mxu0 0.0
  %2661 = vmatprep.subr.mxu0 0.0
  %2662 = vmatpush1.msra.mxu0 0.0
  %2663 = vmatprep.subr.mxu0 0.0
  %2664 = vmatpush1.msra.mxu0 0.0
  %2665 = vmatprep.subr.mxu0 0.0
  %2666 = vmatpush1.msra.mxu0 0.0
  %2667 = vmatprep.subr.mxu0 0.0
  %2668 = vmatpush1.msra.mxu0 0.0
  %2669 = vmatprep.subr.mxu0 0.0
  %2670 = vmatpush1.msra.mxu0 0.0
  %2671 = vmatprep.subr.mxu0 0.0
  %2672 = vmatpush1.msra.mxu0 0.0
  %2673 = vmatprep.subr.mxu0 0.0
  %2674 = vmatpush1.msra.mxu0 0.0
  %2675 = vmatprep.subr.mxu0 0.0
  %2676 = vmatpush1.msra.mxu0 0.0
  %2677 = vmatprep.subr.mxu0 0.0
  %2678 = vmatpush1.msra.mxu0 0.0
  %2679 = vmatprep.subr.mxu0 0.0
  %2680 = vmatpush1.msra.mxu0 0.0
  %2681 = vmatprep.subr.mxu0 0.0
  %2682 = vmatpush1.msra.mxu0 0.0
  %2683 = vmatprep.subr.mxu0 0.0
  %2684 = vmatpush1.msra.mxu0 0.0
  %2685 = vmatprep.subr.mxu0 0.0
  %2686 = vmatpush1.msra.mxu0 0.0
  %2687 = vmatprep.subr.mxu0 0.0
  %2688 = vmatpush1.msra.mxu0 0.0
  %2689 = vmatprep.subr.mxu0 0.0
  %2690 = vmatpush1.msra.mxu0 0.0
  %2691 = vmatprep.subr.mxu0 0.0
  %2692 = vmatpush1.msra.mxu0 0.0
  %2693 = vmatprep.subr.mxu0 0.0
  %2694 = vmatpush1.msra.mxu0 0.0
  %2695 = vmatprep.subr.mxu0 0.0
  %2696 = vmatpush1.msra.mxu0 0.0
  %2697 = vmatprep.subr.mxu0 0.0
  %2698 = vmatpush1.msra.mxu0 0.0
  %2699 = vmatprep.subr.mxu0 0.0
  %2700 = vmatpush1.msra.mxu0 0.0
  %2701 = vmatprep.subr.mxu0 0.0
  %2702 = vmatpush1.msra.mxu0 0.0
  %2703 = vmatprep.subr.mxu0 0.0
  %2704 = vmatpush1.msra.mxu0 0.0
  %2705 = vmatprep.subr.mxu0 0.0
  %2706 = vmatpush1.msra.mxu0 0.0
  %2707 = vmatprep.subr.mxu0 0.0
  %2708 = vmatpush1.msra.mxu0 0.0
  %2709 = vmatprep.subr.mxu0 0.0
  %2710 = vmatpush1.msra.mxu0 0.0
  %2711 = vmatprep.subr.mxu0 0.0
  %2712 = vmatpush1.msra.mxu0 0.0
  %2713 = vmatprep.subr.mxu0 0.0
  %2714 = vmatpush1.msra.mxu0 0.0
  %2715 = vmatprep.mubr.f32.mxu0 0.0
  %2716 = vmatmul.mubr.f32.gmra.mrb[0].mxu0 %v2649
  %v2717 = vpop.f32.mrb[0].mxu0
  %v2718 = vadd.f32 0.0, %v2717
  %v2719 = vpop.f32.mrb[0].mxu0
  %2720 = vdwg.mxu0
  %v2721 = vadd.f32 %v2648, %v2718
  %v2722 = vxor.u32 %v2721, 2147483648
  %v2723 = vmul.f32 %v2722, 1.442695
  %v2724 = vpow.pop %v2723
  %v2725 = vadd.f32 %v2724, 1.0
  %v2726 = vrcp.pop %v2725
  %v2727 = vmul.f32 1.0, %v2726
  %v2728 = vtanh.pop %v2721
  %v2729 = vmul.f32 %v2727, %v2636
  %2731 = vrot.lane.b32.xlu0 %v2728, 64
  %v2732 = vpop.permute.xlu0 %2731
  %v2734 = vmul.f32 %v2727, %v2732
  %2736 = vrot.lane.b32.xlu0 %v2734, 32
  %v2737 = vpop.permute.xlu0 %2736
  %v2739 = vadd.f32 %v2729, %v2737
  %v2740 = vtanh.pop %v2739
  %2742 = vrot.lane.b32.xlu0 %v2740, 64
  %v2743 = vpop.permute.xlu0 %2742
  %v2745 = vmul.f32 %v2727, %v2743
  %2747 = vrot.lane.b32.xlu0 %v2745, 32
  %v2748 = vpop.permute.xlu0 %2747
  %2750 = vst.msk [vmem:[#allocation2 + $0xc] sm:$0x3] %vm377, %v2748
  %v2751 = vld [vmem:[#allocation4 + $0xe] sm:$0x3]
  %v2752 = vsel %vm274, %v2748, 0
  %2754 = vmatprep.subr.mxu0 0.0
  %2755 = vmatpush1.msra.mxu0 %v2028
  %2756 = vmatprep.subr.mxu0 0.0
  %2757 = vmatpush1.msra.mxu0 %v2029
  %2758 = vmatprep.subr.mxu0 0.0
  %2759 = vmatpush1.msra.mxu0 %v2030
  %2760 = vmatprep.subr.mxu0 0.0
  %2761 = vmatpush1.msra.mxu0 %v2031
  %2762 = vmatprep.subr.mxu0 0.0
  %2763 = vmatpush1.msra.mxu0 0.0
  %2764 = vmatprep.subr.mxu0 0.0
  %2765 = vmatpush1.msra.mxu0 0.0
  %2766 = vmatprep.subr.mxu0 0.0
  %2767 = vmatpush1.msra.mxu0 0.0
  %2768 = vmatprep.subr.mxu0 0.0
  %2769 = vmatpush1.msra.mxu0 0.0
  %2770 = vmatprep.subr.mxu0 0.0
  %2771 = vmatpush1.msra.mxu0 0.0
  %2772 = vmatprep.subr.mxu0 0.0
  %2773 = vmatpush1.msra.mxu0 0.0
  %2774 = vmatprep.subr.mxu0 0.0
  %2775 = vmatpush1.msra.mxu0 0.0
  %2776 = vmatprep.subr.mxu0 0.0
  %2777 = vmatpush1.msra.mxu0 0.0
  %2778 = vmatprep.subr.mxu0 0.0
  %2779 = vmatpush1.msra.mxu0 0.0
  %2780 = vmatprep.subr.mxu0 0.0
  %2781 = vmatpush1.msra.mxu0 0.0
  %2782 = vmatprep.subr.mxu0 0.0
  %2783 = vmatpush1.msra.mxu0 0.0
  %2784 = vmatprep.subr.mxu0 0.0
  %2785 = vmatpush1.msra.mxu0 0.0
  %2786 = vmatprep.subr.mxu0 0.0
  %2787 = vmatpush1.msra.mxu0 0.0
  %2788 = vmatprep.subr.mxu0 0.0
  %2789 = vmatpush1.msra.mxu0 0.0
  %2790 = vmatprep.subr.mxu0 0.0
  %2791 = vmatpush1.msra.mxu0 0.0
  %2792 = vmatprep.subr.mxu0 0.0
  %2793 = vmatpush1.msra.mxu0 0.0
  %2794 = vmatprep.subr.mxu0 0.0
  %2795 = vmatpush1.msra.mxu0 0.0
  %2796 = vmatprep.subr.mxu0 0.0
  %2797 = vmatpush1.msra.mxu0 0.0
  %2798 = vmatprep.subr.mxu0 0.0
  %2799 = vmatpush1.msra.mxu0 0.0
  %2800 = vmatprep.subr.mxu0 0.0
  %2801 = vmatpush1.msra.mxu0 0.0
  %2802 = vmatprep.subr.mxu0 0.0
  %2803 = vmatpush1.msra.mxu0 0.0
  %2804 = vmatprep.subr.mxu0 0.0
  %2805 = vmatpush1.msra.mxu0 0.0
  %2806 = vmatprep.subr.mxu0 0.0
  %2807 = vmatpush1.msra.mxu0 0.0
  %2808 = vmatprep.subr.mxu0 0.0
  %2809 = vmatpush1.msra.mxu0 0.0
  %2810 = vmatprep.subr.mxu0 0.0
  %2811 = vmatpush1.msra.mxu0 0.0
  %2812 = vmatprep.subr.mxu0 0.0
  %2813 = vmatpush1.msra.mxu0 0.0
  %2814 = vmatprep.subr.mxu0 0.0
  %2815 = vmatpush1.msra.mxu0 0.0
  %2816 = vmatprep.subr.mxu0 0.0
  %2817 = vmatpush1.msra.mxu0 0.0
  %2818 = vmatprep.mubr.f32.mxu0 0.0
  %2819 = vmatmul.mubr.f32.gmra.mrb[0].mxu0 %v2752
  %v2820 = vpop.f32.mrb[0].mxu0
  %v2821 = vadd.f32 0.0, %v2820
  %v2822 = vpop.f32.mrb[0].mxu0
  %2823 = vdwg.mxu0
  %v2824 = vadd.f32 %v2751, %v2821
  %v2825 = vxor.u32 %v2824, 2147483648
  %v2826 = vmul.f32 %v2825, 1.442695
  %v2827 = vpow.pop %v2826
  %v2828 = vadd.f32 %v2827, 1.0
  %v2829 = vrcp.pop %v2828
  %v2830 = vmul.f32 1.0, %v2829
  %v2831 = vtanh.pop %v2824
  %v2832 = vmul.f32 %v2830, %v2739
  %2834 = vrot.lane.b32.xlu0 %v2831, 64
  %v2835 = vpop.permute.xlu0 %2834
  %v2837 = vmul.f32 %v2830, %v2835
  %2839 = vrot.lane.b32.xlu0 %v2837, 32
  %v2840 = vpop.permute.xlu0 %2839
  %v2842 = vadd.f32 %v2832, %v2840
  %v2843 = vtanh.pop %v2842
  %2845 = vrot.lane.b32.xlu0 %v2843, 64
  %v2846 = vpop.permute.xlu0 %2845
  %v2848 = vmul.f32 %v2830, %v2846
  %2850 = vrot.lane.b32.xlu0 %v2848, 32
  %v2851 = vpop.permute.xlu0 %2850
  %2853 = vst.msk [vmem:[#allocation2 + $0xe] sm:$0x3] %vm377, %v2851
  %v2854 = vld [vmem:[#allocation4 + $0x10] sm:$0x3]
  %v2855 = vsel %vm274, %v2851, 0
  %2857 = vmatprep.subr.mxu0 0.0
  %2858 = vmatpush1.msra.mxu0 %v2028
  %2859 = vmatprep.subr.mxu0 0.0
  %2860 = vmatpush1.msra.mxu0 %v2029
  %2861 = vmatprep.subr.mxu0 0.0
  %2862 = vmatpush1.msra.mxu0 %v2030
  %2863 = vmatprep.subr.mxu0 0.0
  %2864 = vmatpush1.msra.mxu0 %v2031
  %2865 = vmatprep.subr.mxu0 0.0
  %2866 = vmatpush1.msra.mxu0 0.0
  %2867 = vmatprep.subr.mxu0 0.0
  %2868 = vmatpush1.msra.mxu0 0.0
  %2869 = vmatprep.subr.mxu0 0.0
  %2870 = vmatpush1.msra.mxu0 0.0
  %2871 = vmatprep.subr.mxu0 0.0
  %2872 = vmatpush1.msra.mxu0 0.0
  %2873 = vmatprep.subr.mxu0 0.0
  %2874 = vmatpush1.msra.mxu0 0.0
  %2875 = vmatprep.subr.mxu0 0.0
  %2876 = vmatpush1.msra.mxu0 0.0
  %2877 = vmatprep.subr.mxu0 0.0
  %2878 = vmatpush1.msra.mxu0 0.0
  %2879 = vmatprep.subr.mxu0 0.0
  %2880 = vmatpush1.msra.mxu0 0.0
  %2881 = vmatprep.subr.mxu0 0.0
  %2882 = vmatpush1.msra.mxu0 0.0
  %2883 = vmatprep.subr.mxu0 0.0
  %2884 = vmatpush1.msra.mxu0 0.0
  %2885 = vmatprep.subr.mxu0 0.0
  %2886 = vmatpush1.msra.mxu0 0.0
  %2887 = vmatprep.subr.mxu0 0.0
  %2888 = vmatpush1.msra.mxu0 0.0
  %2889 = vmatprep.subr.mxu0 0.0
  %2890 = vmatpush1.msra.mxu0 0.0
  %2891 = vmatprep.subr.mxu0 0.0
  %2892 = vmatpush1.msra.mxu0 0.0
  %2893 = vmatprep.subr.mxu0 0.0
  %2894 = vmatpush1.msra.mxu0 0.0
  %2895 = vmatprep.subr.mxu0 0.0
  %2896 = vmatpush1.msra.mxu0 0.0
  %2897 = vmatprep.subr.mxu0 0.0
  %2898 = vmatpush1.msra.mxu0 0.0
  %2899 = vmatprep.subr.mxu0 0.0
  %2900 = vmatpush1.msra.mxu0 0.0
  %2901 = vmatprep.subr.mxu0 0.0
  %2902 = vmatpush1.msra.mxu0 0.0
  %2903 = vmatprep.subr.mxu0 0.0
  %2904 = vmatpush1.msra.mxu0 0.0
  %2905 = vmatprep.subr.mxu0 0.0
  %2906 = vmatpush1.msra.mxu0 0.0
  %2907 = vmatprep.subr.mxu0 0.0
  %2908 = vmatpush1.msra.mxu0 0.0
  %2909 = vmatprep.subr.mxu0 0.0
  %2910 = vmatpush1.msra.mxu0 0.0
  %2911 = vmatprep.subr.mxu0 0.0
  %2912 = vmatpush1.msra.mxu0 0.0
  %2913 = vmatprep.subr.mxu0 0.0
  %2914 = vmatpush1.msra.mxu0 0.0
  %2915 = vmatprep.subr.mxu0 0.0
  %2916 = vmatpush1.msra.mxu0 0.0
  %2917 = vmatprep.subr.mxu0 0.0
  %2918 = vmatpush1.msra.mxu0 0.0
  %2919 = vmatprep.subr.mxu0 0.0
  %2920 = vmatpush1.msra.mxu0 0.0
  %2921 = vmatprep.mubr.f32.mxu0 0.0
  %2922 = vmatmul.mubr.f32.gmra.mrb[0].mxu0 %v2855
  %v2923 = vpop.f32.mrb[0].mxu0
  %v2924 = vadd.f32 0.0, %v2923
  %v2925 = vpop.f32.mrb[0].mxu0
  %2926 = vdwg.mxu0
  %v2927 = vadd.f32 %v2854, %v2924
  %v2928 = vxor.u32 %v2927, 2147483648
  %v2929 = vmul.f32 %v2928, 1.442695
  %v2930 = vpow.pop %v2929
  %v2931 = vadd.f32 %v2930, 1.0
  %v2932 = vrcp.pop %v2931
  %v2933 = vmul.f32 1.0, %v2932
  %v2934 = vtanh.pop %v2927
  %v2935 = vmul.f32 %v2933, %v2842
  %2937 = vrot.lane.b32.xlu0 %v2934, 64
  %v2938 = vpop.permute.xlu0 %2937
  %v2940 = vmul.f32 %v2933, %v2938
  %2942 = vrot.lane.b32.xlu0 %v2940, 32
  %v2943 = vpop.permute.xlu0 %2942
  %v2945 = vadd.f32 %v2935, %v2943
  %v2946 = vtanh.pop %v2945
  %2948 = vrot.lane.b32.xlu0 %v2946, 64
  %v2949 = vpop.permute.xlu0 %2948
  %v2951 = vmul.f32 %v2933, %v2949
  %2953 = vrot.lane.b32.xlu0 %v2951, 32
  %v2954 = vpop.permute.xlu0 %2953
  %2956 = vst.msk [vmem:[#allocation2 + $0x10] sm:$0x3] %vm377, %v2954
  %v2957 = vld [vmem:[#allocation4 + $0x12] sm:$0x3]
  %v2958 = vsel %vm274, %v2954, 0
  %2960 = vmatprep.subr.mxu0 0.0
  %2961 = vmatpush1.msra.mxu0 %v2028
  %2962 = vmatprep.subr.mxu0 0.0
  %2963 = vmatpush1.msra.mxu0 %v2029
  %2964 = vmatprep.subr.mxu0 0.0
  %2965 = vmatpush1.msra.mxu0 %v2030
  %2966 = vmatprep.subr.mxu0 0.0
  %2967 = vmatpush1.msra.mxu0 %v2031
  %2968 = vmatprep.subr.mxu0 0.0
  %2969 = vmatpush1.msra.mxu0 0.0
  %2970 = vmatprep.subr.mxu0 0.0
  %2971 = vmatpush1.msra.mxu0 0.0
  %2972 = vmatprep.subr.mxu0 0.0
  %2973 = vmatpush1.msra.mxu0 0.0
  %2974 = vmatprep.subr.mxu0 0.0
  %2975 = vmatpush1.msra.mxu0 0.0
  %2976 = vmatprep.subr.mxu0 0.0
  %2977 = vmatpush1.msra.mxu0 0.0
  %2978 = vmatprep.subr.mxu0 0.0
  %2979 = vmatpush1.msra.mxu0 0.0
  %2980 = vmatprep.subr.mxu0 0.0
  %2981 = vmatpush1.msra.mxu0 0.0
  %2982 = vmatprep.subr.mxu0 0.0
  %2983 = vmatpush1.msra.mxu0 0.0
  %2984 = vmatprep.subr.mxu0 0.0
  %2985 = vmatpush1.msra.mxu0 0.0
  %2986 = vmatprep.subr.mxu0 0.0
  %2987 = vmatpush1.msra.mxu0 0.0
  %2988 = vmatprep.subr.mxu0 0.0
  %2989 = vmatpush1.msra.mxu0 0.0
  %2990 = vmatprep.subr.mxu0 0.0
  %2991 = vmatpush1.msra.mxu0 0.0
  %2992 = vmatprep.subr.mxu0 0.0
  %2993 = vmatpush1.msra.mxu0 0.0
  %2994 = vmatprep.subr.mxu0 0.0
  %2995 = vmatpush1.msra.mxu0 0.0
  %2996 = vmatprep.subr.mxu0 0.0
  %2997 = vmatpush1.msra.mxu0 0.0
  %2998 = vmatprep.subr.mxu0 0.0
  %2999 = vmatpush1.msra.mxu0 0.0
  %3000 = vmatprep.subr.mxu0 0.0
  %3001 = vmatpush1.msra.mxu0 0.0
  %3002 = vmatprep.subr.mxu0 0.0
  %3003 = vmatpush1.msra.mxu0 0.0
  %3004 = vmatprep.subr.mxu0 0.0
  %3005 = vmatpush1.msra.mxu0 0.0
  %3006 = vmatprep.subr.mxu0 0.0
  %3007 = vmatpush1.msra.mxu0 0.0
  %3008 = vmatprep.subr.mxu0 0.0
  %3009 = vmatpush1.msra.mxu0 0.0
  %3010 = vmatprep.subr.mxu0 0.0
  %3011 = vmatpush1.msra.mxu0 0.0
  %3012 = vmatprep.subr.mxu0 0.0
  %3013 = vmatpush1.msra.mxu0 0.0
  %3014 = vmatprep.subr.mxu0 0.0
  %3015 = vmatpush1.msra.mxu0 0.0
  %3016 = vmatprep.subr.mxu0 0.0
  %3017 = vmatpush1.msra.mxu0 0.0
  %3018 = vmatprep.subr.mxu0 0.0
  %3019 = vmatpush1.msra.mxu0 0.0
  %3020 = vmatprep.subr.mxu0 0.0
  %3021 = vmatpush1.msra.mxu0 0.0
  %3022 = vmatprep.subr.mxu0 0.0
  %3023 = vmatpush1.msra.mxu0 0.0
  %3024 = vmatprep.mubr.f32.mxu0 0.0
  %3025 = vmatmul.mubr.f32.gmra.mrb[0].mxu0 %v2958
  %v3026 = vpop.f32.mrb[0].mxu0
  %v3027 = vadd.f32 0.0, %v3026
  %v3028 = vpop.f32.mrb[0].mxu0
  %3029 = vdwg.mxu0
  %v3030 = vadd.f32 %v2957, %v3027
  %v3031 = vxor.u32 %v3030, 2147483648
  %v3032 = vmul.f32 %v3031, 1.442695
  %v3033 = vpow.pop %v3032
  %v3034 = vadd.f32 %v3033, 1.0
  %v3035 = vrcp.pop %v3034
  %v3036 = vmul.f32 1.0, %v3035
  %v3037 = vtanh.pop %v3030
  %v3038 = vmul.f32 %v3036, %v2945
  %3040 = vrot.lane.b32.xlu0 %v3037, 64
  %v3041 = vpop.permute.xlu0 %3040
  %v3043 = vmul.f32 %v3036, %v3041
  %3045 = vrot.lane.b32.xlu0 %v3043, 32
  %v3046 = vpop.permute.xlu0 %3045
  %v3048 = vadd.f32 %v3038, %v3046
  %v3049 = vtanh.pop %v3048
  %3051 = vrot.lane.b32.xlu0 %v3049, 64
  %v3052 = vpop.permute.xlu0 %3051
  %v3054 = vmul.f32 %v3036, %v3052
  %3056 = vrot.lane.b32.xlu0 %v3054, 32
  %v3057 = vpop.permute.xlu0 %3056
  %3059 = vst.msk [vmem:[#allocation2 + $0x12] sm:$0x3] %vm377, %v3057
  %v3060 = vld [vmem:[#allocation3] sm:$0xff]
  %v3061 = vld [vmem:[#allocation3 + $0x8] sm:$0xf]
  %v3062 = vld [vmem:[#allocation2] sm:$0xff]
  %v3063 = vld [vmem:[#allocation2 + $0x8] sm:$0xff]
  %v3064 = vld [vmem:[#allocation2 + $0x10] sm:$0xf]
  %v3065 = vlaneseq
  %v3066 = vshrl.u32 %v3065, 7
  %v3067 = vadd.s32 %v3066, 8
  %vm3068 = vcmp.lt.s32.totalorder %v3066, 0
  %v3069 = vsub.s32 0, %v3066
  %v3070 = vsel %vm3068, %v3069, %v3066
  %v3071 = vshrl.u32 %v3070, 1
  %v3072 = vand.u32 %v3070, 1
  %v3073 = vsub.s32 0, %v3072
  %v3074 = vsel %vm3068, %v3073, %v3072
  %vm3075 = vcmp.lt.s32.totalorder %v3067, 0
  %v3076 = vsub.s32 0, %v3067
  %v3077 = vsel %vm3075, %v3076, %v3067
  %v3078 = vshrl.u32 %v3077, 1
  %v3079 = vand.u32 %v3077, 1
  %v3080 = vsub.s32 0, %v3079
  %v3081 = vsel %vm3075, %v3080, %v3079
  %vm3082 = vcmp.ne.s32.totalorder %v3074, 0
  %vm3083 = vcmp.ne.s32.totalorder %v3081, 0
  %vm3084 = vcmp.lt.s32.totalorder %v3074, 0
  %vm3085 = vcmp.lt.s32.totalorder %v3081, 0
  %vm3086 = vmand %vm3084, %vm3082
  %vm3087 = vmand %vm3085, %vm3083
  %v3088 = vadd.s32 %v3074, 2
  %v3089 = vadd.s32 %v3081, 2
  %v3090 = vsel %vm3086, %v3088, %v3074
  %v3091 = vsel %vm3087, %v3089, %v3081
  %v3092 = vlaneseq
  %v3093 = vand.u32 %v3092, 127
  %vm3094 = vcmp.lt.s32.totalorder %v3093, 0
  %v3095 = vsub.s32 0, %v3093
  %v3096 = vsel %vm3094, %v3095, %v3093
  %v3097 = vshrl.u32 %v3096, 1
  %v3098 = vand.u32 %v3096, 1
  %v3099 = vsub.s32 0, %v3098
  %v3100 = vsel %vm3094, %v3099, %v3098
  %vm3101 = vcmp.ne.s32.totalorder %v3100, 0
  %vm3102 = vcmp.lt.s32.totalorder %v3100, 0
  %vm3103 = vmand %vm3102, %vm3101
  %v3104 = vadd.s32 %v3100, 2
  %v3105 = vsel %vm3103, %v3104, %v3100
  %vm3106 = vcmp.eq.s32.totalorder %v3090, %v3105
  %vm3107 = vcmp.eq.s32.totalorder %v3091, %v3105
  %v3108 = vld [vmem:[%s11] sm:$0xff]
  %v3109 = vld [vmem:[%s11 + $0x8] sm:$0xff]
  %v3110 = vld [vmem:[%s11 + $0x10] sm:$0xff]
  %v3111 = vld [vmem:[%s11 + $0x18] sm:$0xff]
  %v3112 = vld [vmem:[%s12] sm:$0x1]
  %v3114 = vlaneseq
  %v3115 = vshrl.u32 %v3114, 7
  %v3116 = vsub.s32 0, %v3115
  %v3117 = vrot.slane %v3112, %v3116
  %v3120 = vsel %vm274, %v3060, 0
  %v3123 = vsel %vm274, %v3061, 0
  %3125 = vmatprep.subr.mxu0 0.0
  %3126 = vmatpush1.msra.mxu0 %v3108
  %3127 = vmatprep.subr.mxu0 0.0
  %3128 = vmatpush1.msra.mxu0 %v3109
  %3129 = vmatprep.subr.mxu0 0.0
  %3130 = vmatpush1.msra.mxu0 %v3110
  %3131 = vmatprep.subr.mxu0 0.0
  %3132 = vmatpush1.msra.mxu0 %v3111
  %3133 = vmatprep.subr.mxu0 0.0
  %3134 = vmatpush1.msra.mxu0 0.0
  %3135 = vmatprep.subr.mxu0 0.0
  %3136 = vmatpush1.msra.mxu0 0.0
  %3137 = vmatprep.subr.mxu0 0.0
  %3138 = vmatpush1.msra.mxu0 0.0
  %3139 = vmatprep.subr.mxu0 0.0
  %3140 = vmatpush1.msra.mxu0 0.0
  %3141 = vmatprep.subr.mxu0 0.0
  %3142 = vmatpush1.msra.mxu0 0.0
  %3143 = vmatprep.subr.mxu0 0.0
  %3144 = vmatpush1.msra.mxu0 0.0
  %3145 = vmatprep.subr.mxu0 0.0
  %3146 = vmatpush1.msra.mxu0 0.0
  %3147 = vmatprep.subr.mxu0 0.0
  %3148 = vmatpush1.msra.mxu0 0.0
  %3149 = vmatprep.subr.mxu0 0.0
  %3150 = vmatpush1.msra.mxu0 0.0
  %3151 = vmatprep.subr.mxu0 0.0
  %3152 = vmatpush1.msra.mxu0 0.0
  %3153 = vmatprep.subr.mxu0 0.0
  %3154 = vmatpush1.msra.mxu0 0.0
  %3155 = vmatprep.subr.mxu0 0.0
  %3156 = vmatpush1.msra.mxu0 0.0
  %3157 = vmatprep.subr.mxu0 0.0
  %3158 = vmatpush1.msra.mxu0 0.0
  %3159 = vmatprep.subr.mxu0 0.0
  %3160 = vmatpush1.msra.mxu0 0.0
  %3161 = vmatprep.subr.mxu0 0.0
  %3162 = vmatpush1.msra.mxu0 0.0
  %3163 = vmatprep.subr.mxu0 0.0
  %3164 = vmatpush1.msra.mxu0 0.0
  %3165 = vmatprep.subr.mxu0 0.0
  %3166 = vmatpush1.msra.mxu0 0.0
  %3167 = vmatprep.subr.mxu0 0.0
  %3168 = vmatpush1.msra.mxu0 0.0
  %3169 = vmatprep.subr.mxu0 0.0
  %3170 = vmatpush1.msra.mxu0 0.0
  %3171 = vmatprep.subr.mxu0 0.0
  %3172 = vmatpush1.msra.mxu0 0.0
  %3173 = vmatprep.subr.mxu0 0.0
  %3174 = vmatpush1.msra.mxu0 0.0
  %3175 = vmatprep.subr.mxu0 0.0
  %3176 = vmatpush1.msra.mxu0 0.0
  %3177 = vmatprep.subr.mxu0 0.0
  %3178 = vmatpush1.msra.mxu0 0.0
  %3179 = vmatprep.subr.mxu0 0.0
  %3180 = vmatpush1.msra.mxu0 0.0
  %3181 = vmatprep.subr.mxu0 0.0
  %3182 = vmatpush1.msra.mxu0 0.0
  %3183 = vmatprep.subr.mxu0 0.0
  %3184 = vmatpush1.msra.mxu0 0.0
  %3185 = vmatprep.subr.mxu0 0.0
  %3186 = vmatpush1.msra.mxu0 0.0
  %3187 = vmatprep.subr.mxu0 0.0
  %3188 = vmatpush1.msra.mxu0 0.0
  %3189 = vmatprep.mubr.f32.mxu0 0.0
  %3190 = vmatmul.mubr.f32.gmra.mrb[0].mxu0 %v3120
  %v3191 = vpop.f32.mrb[0].mxu0
  %v3192 = vadd.f32 %v3117, %v3191
  %v3193 = vpop.f32.mrb[0].mxu0
  %3194 = vmatprep.mubr.f32.mxu0 0.0
  %3195 = vmatmul.mubr.f32.gmra.mrb[0].mxu0 %v3123
  %v3196 = vpop.f32.mrb[0].mxu0
  %v3197 = vadd.f32 %v3117, %v3196
  %v3198 = vpop.f32.mrb[0].mxu0
  %3199 = vdwg.mxu0
  %v3200 = vld [vmem:[%s13] sm:$0xff]
  %v3201 = vld [vmem:[%s13 + $0x8] sm:$0xff]
  %v3202 = vld [vmem:[%s13 + $0x10] sm:$0xff]
  %v3203 = vld [vmem:[%s13 + $0x18] sm:$0xff]
  %v3204 = vld [vmem:[%s14] sm:$0x1]
  %v3206 = vlaneseq
  %v3207 = vshrl.u32 %v3206, 7
  %v3208 = vsub.s32 0, %v3207
  %v3209 = vrot.slane %v3204, %v3208
  %v3212 = vsel %vm274, %v3062, 0
  %v3215 = vsel %vm274, %v3063, 0
  %v3218 = vsel %vm274, %v3064, 0
  %3220 = vmatprep.subr.mxu0 0.0
  %3221 = vmatpush1.msra.mxu0 %v3200
  %3222 = vmatprep.subr.mxu0 0.0
  %3223 = vmatpush1.msra.mxu0 %v3201
  %3224 = vmatprep.subr.mxu0 0.0
  %3225 = vmatpush1.msra.mxu0 %v3202
  %3226 = vmatprep.subr.mxu0 0.0
  %3227 = vmatpush1.msra.mxu0 %v3203
  %3228 = vmatprep.subr.mxu0 0.0
  %3229 = vmatpush1.msra.mxu0 0.0
  %3230 = vmatprep.subr.mxu0 0.0
  %3231 = vmatpush1.msra.mxu0 0.0
  %3232 = vmatprep.subr.mxu0 0.0
  %3233 = vmatpush1.msra.mxu0 0.0
  %3234 = vmatprep.subr.mxu0 0.0
  %3235 = vmatpush1.msra.mxu0 0.0
  %3236 = vmatprep.subr.mxu0 0.0
  %3237 = vmatpush1.msra.mxu0 0.0
  %3238 = vmatprep.subr.mxu0 0.0
  %3239 = vmatpush1.msra.mxu0 0.0
  %3240 = vmatprep.subr.mxu0 0.0
  %3241 = vmatpush1.msra.mxu0 0.0
  %3242 = vmatprep.subr.mxu0 0.0
  %3243 = vmatpush1.msra.mxu0 0.0
  %3244 = vmatprep.subr.mxu0 0.0
  %3245 = vmatpush1.msra.mxu0 0.0
  %3246 = vmatprep.subr.mxu0 0.0
  %3247 = vmatpush1.msra.mxu0 0.0
  %3248 = vmatprep.subr.mxu0 0.0
  %3249 = vmatpush1.msra.mxu0 0.0
  %3250 = vmatprep.subr.mxu0 0.0
  %3251 = vmatpush1.msra.mxu0 0.0
  %3252 = vmatprep.subr.mxu0 0.0
  %3253 = vmatpush1.msra.mxu0 0.0
  %3254 = vmatprep.subr.mxu0 0.0
  %3255 = vmatpush1.msra.mxu0 0.0
  %3256 = vmatprep.subr.mxu0 0.0
  %3257 = vmatpush1.msra.mxu0 0.0
  %3258 = vmatprep.subr.mxu0 0.0
  %3259 = vmatpush1.msra.mxu0 0.0
  %3260 = vmatprep.subr.mxu0 0.0
  %3261 = vmatpush1.msra.mxu0 0.0
  %3262 = vmatprep.subr.mxu0 0.0
  %3263 = vmatpush1.msra.mxu0 0.0
  %3264 = vmatprep.subr.mxu0 0.0
  %3265 = vmatpush1.msra.mxu0 0.0
  %3266 = vmatprep.subr.mxu0 0.0
  %3267 = vmatpush1.msra.mxu0 0.0
  %3268 = vmatprep.subr.mxu0 0.0
  %3269 = vmatpush1.msra.mxu0 0.0
  %3270 = vmatprep.subr.mxu0 0.0
  %3271 = vmatpush1.msra.mxu0 0.0
  %3272 = vmatprep.subr.mxu0 0.0
  %3273 = vmatpush1.msra.mxu0 0.0
  %3274 = vmatprep.subr.mxu0 0.0
  %3275 = vmatpush1.msra.mxu0 0.0
  %3276 = vmatprep.subr.mxu0 0.0
  %3277 = vmatpush1.msra.mxu0 0.0
  %3278 = vmatprep.subr.mxu0 0.0
  %3279 = vmatpush1.msra.mxu0 0.0
  %3280 = vmatprep.subr.mxu0 0.0
  %3281 = vmatpush1.msra.mxu0 0.0
  %3282 = vmatprep.subr.mxu0 0.0
  %3283 = vmatpush1.msra.mxu0 0.0
  %3284 = vmatprep.mubr.f32.mxu0 0.0
  %3285 = vmatmul.mubr.f32.gmra.mrb[0].mxu0 %v3212
  %v3286 = vpop.f32.mrb[0].mxu0
  %v3287 = vadd.f32 %v3209, %v3286
  %v3288 = vpop.f32.mrb[0].mxu0
  %3289 = vmatprep.mubr.f32.mxu0 0.0
  %3290 = vmatmul.mubr.f32.gmra.mrb[0].mxu0 %v3215
  %v3291 = vpop.f32.mrb[0].mxu0
  %v3292 = vadd.f32 %v3209, %v3291
  %v3293 = vpop.f32.mrb[0].mxu0
  %3294 = vmatprep.mubr.f32.mxu0 0.0
  %3295 = vmatmul.mubr.f32.gmra.mrb[0].mxu0 %v3218
  %v3296 = vpop.f32.mrb[0].mxu0
  %v3297 = vadd.f32 %v3209, %v3296
  %v3298 = vpop.f32.mrb[0].mxu0
  %3299 = vdwg.mxu0
  %v3300 = vld [vmem:[%s15] sm:$0xff]
  %v3301 = vld [vmem:[%s15 + $0x8] sm:$0xff]
  %v3302 = vld [vmem:[%s15 + $0x10] sm:$0xff]
  %v3303 = vld [vmem:[%s15 + $0x18] sm:$0xff]
  %v3304 = vld [vmem:[%s16] sm:$0x1]
  %v3306 = vlaneseq
  %v3307 = vshrl.u32 %v3306, 7
  %v3308 = vsub.s32 0, %v3307
  %v3309 = vrot.slane %v3304, %v3308
  %3311 = vmatprep.subr.mxu0 0.0
  %3312 = vmatpush1.msra.mxu0 %v3300
  %3313 = vmatprep.subr.mxu0 0.0
  %3314 = vmatpush1.msra.mxu0 %v3301
  %3315 = vmatprep.subr.mxu0 0.0
  %3316 = vmatpush1.msra.mxu0 %v3302
  %3317 = vmatprep.subr.mxu0 0.0
  %3318 = vmatpush1.msra.mxu0 %v3303
  %3319 = vmatprep.subr.mxu0 0.0
  %3320 = vmatpush1.msra.mxu0 0.0
  %3321 = vmatprep.subr.mxu0 0.0
  %3322 = vmatpush1.msra.mxu0 0.0
  %3323 = vmatprep.subr.mxu0 0.0
  %3324 = vmatpush1.msra.mxu0 0.0
  %3325 = vmatprep.subr.mxu0 0.0
  %3326 = vmatpush1.msra.mxu0 0.0
  %3327 = vmatprep.subr.mxu0 0.0
  %3328 = vmatpush1.msra.mxu0 0.0
  %3329 = vmatprep.subr.mxu0 0.0
  %3330 = vmatpush1.msra.mxu0 0.0
  %3331 = vmatprep.subr.mxu0 0.0
  %3332 = vmatpush1.msra.mxu0 0.0
  %3333 = vmatprep.subr.mxu0 0.0
  %3334 = vmatpush1.msra.mxu0 0.0
  %3335 = vmatprep.subr.mxu0 0.0
  %3336 = vmatpush1.msra.mxu0 0.0
  %3337 = vmatprep.subr.mxu0 0.0
  %3338 = vmatpush1.msra.mxu0 0.0
  %3339 = vmatprep.subr.mxu0 0.0
  %3340 = vmatpush1.msra.mxu0 0.0
  %3341 = vmatprep.subr.mxu0 0.0
  %3342 = vmatpush1.msra.mxu0 0.0
  %3343 = vmatprep.subr.mxu0 0.0
  %3344 = vmatpush1.msra.mxu0 0.0
  %3345 = vmatprep.subr.mxu0 0.0
  %3346 = vmatpush1.msra.mxu0 0.0
  %3347 = vmatprep.subr.mxu0 0.0
  %3348 = vmatpush1.msra.mxu0 0.0
  %3349 = vmatprep.subr.mxu0 0.0
  %3350 = vmatpush1.msra.mxu0 0.0
  %3351 = vmatprep.subr.mxu0 0.0
  %3352 = vmatpush1.msra.mxu0 0.0
  %3353 = vmatprep.subr.mxu0 0.0
  %3354 = vmatpush1.msra.mxu0 0.0
  %3355 = vmatprep.subr.mxu0 0.0
  %3356 = vmatpush1.msra.mxu0 0.0
  %3357 = vmatprep.subr.mxu0 0.0
  %3358 = vmatpush1.msra.mxu0 0.0
  %3359 = vmatprep.subr.mxu0 0.0
  %3360 = vmatpush1.msra.mxu0 0.0
  %3361 = vmatprep.subr.mxu0 0.0
  %3362 = vmatpush1.msra.mxu0 0.0
  %3363 = vmatprep.subr.mxu0 0.0
  %3364 = vmatpush1.msra.mxu0 0.0
  %3365 = vmatprep.subr.mxu0 0.0
  %3366 = vmatpush1.msra.mxu0 0.0
  %3367 = vmatprep.subr.mxu0 0.0
  %3368 = vmatpush1.msra.mxu0 0.0
  %3369 = vmatprep.subr.mxu0 0.0
  %3370 = vmatpush1.msra.mxu0 0.0
  %3371 = vmatprep.subr.mxu0 0.0
  %3372 = vmatpush1.msra.mxu0 0.0
  %3373 = vmatprep.subr.mxu0 0.0
  %3374 = vmatpush1.msra.mxu0 0.0
  %3375 = vmatprep.mubr.f32.mxu0 0.0
  %3376 = vmatmul.mubr.f32.gmra.mrb[0].mxu0 %v3212
  %v3377 = vpop.f32.mrb[0].mxu0
  %v3378 = vadd.f32 %v3309, %v3377
  %v3379 = vpop.f32.mrb[0].mxu0
  %3380 = vmatprep.mubr.f32.mxu0 0.0
  %3381 = vmatmul.mubr.f32.gmra.mrb[0].mxu0 %v3215
  %v3382 = vpop.f32.mrb[0].mxu0
  %v3383 = vadd.f32 %v3309, %v3382
  %v3384 = vpop.f32.mrb[0].mxu0
  %3385 = vmatprep.mubr.f32.mxu0 0.0
  %3386 = vmatmul.mubr.f32.gmra.mrb[0].mxu0 %v3218
  %v3387 = vpop.f32.mrb[0].mxu0
  %v3388 = vadd.f32 %v3309, %v3387
  %v3389 = vpop.f32.mrb[0].mxu0
  %3390 = vdwg.mxu0
  %v3392 = vsel %vm79, %v3192, 0
  %v3395 = vsel %vm79, %v3197, 0
  %v3398 = vsel %vm79, %v3287, 0
  %v3401 = vsel %vm79, %v3292, 0
  %v3404 = vsel %vm79, %v3297, 0
  %3406 = vmatprep.subr.mxu0 0.0
  %3407 = vmatpush1.xpose.msra.mxu0 %v3398
  %3408 = vmatprep.subr.mxu0 0.0
  %3409 = vmatpush1.xpose.msra.mxu0 %v3401
  %3410 = vmatprep.subr.mxu0 0.0
  %3411 = vmatpush1.xpose.msra.mxu0 %v3404
  %3412 = vmatprep.subr.mxu0 0.0
  %3413 = vmatpush1.xpose.msra.mxu0 0.0
  %3414 = vmatprep.subr.mxu0 0.0
  %3415 = vmatpush1.xpose.msra.mxu0 0.0
  %3416 = vmatprep.subr.mxu0 0.0
  %3417 = vmatpush1.xpose.msra.mxu0 0.0
  %3418 = vmatprep.subr.mxu0 0.0
  %3419 = vmatpush1.xpose.msra.mxu0 0.0
  %3420 = vmatprep.subr.mxu0 0.0
  %3421 = vmatpush1.xpose.msra.mxu0 0.0
  %3422 = vmatprep.subr.mxu0 0.0
  %3423 = vmatpush1.xpose.msra.mxu0 0.0
  %3424 = vmatprep.subr.mxu0 0.0
  %3425 = vmatpush1.xpose.msra.mxu0 0.0
  %3426 = vmatprep.subr.mxu0 0.0
  %3427 = vmatpush1.xpose.msra.mxu0 0.0
  %3428 = vmatprep.subr.mxu0 0.0
  %3429 = vmatpush1.xpose.msra.mxu0 0.0
  %3430 = vmatprep.subr.mxu0 0.0
  %3431 = vmatpush1.xpose.msra.mxu0 0.0
  %3432 = vmatprep.subr.mxu0 0.0
  %3433 = vmatpush1.xpose.msra.mxu0 0.0
  %3434 = vmatprep.subr.mxu0 0.0
  %3435 = vmatpush1.xpose.msra.mxu0 0.0
  %3436 = vmatprep.subr.mxu0 0.0
  %3437 = vmatpush1.xpose.msra.mxu0 0.0
  %3438 = vmatprep.subr.mxu0 0.0
  %3439 = vmatpush1.xpose.msra.mxu0 0.0
  %3440 = vmatprep.subr.mxu0 0.0
  %3441 = vmatpush1.xpose.msra.mxu0 0.0
  %3442 = vmatprep.subr.mxu0 0.0
  %3443 = vmatpush1.xpose.msra.mxu0 0.0
  %3444 = vmatprep.subr.mxu0 0.0
  %3445 = vmatpush1.xpose.msra.mxu0 0.0
  %3446 = vmatprep.subr.mxu0 0.0
  %3447 = vmatpush1.xpose.msra.mxu0 0.0
  %3448 = vmatprep.subr.mxu0 0.0
  %3449 = vmatpush1.xpose.msra.mxu0 0.0
  %3450 = vmatprep.subr.mxu0 0.0
  %3451 = vmatpush1.xpose.msra.mxu0 0.0
  %3452 = vmatprep.subr.mxu0 0.0
  %3453 = vmatpush1.xpose.msra.mxu0 0.0
  %3454 = vmatprep.subr.mxu0 0.0
  %3455 = vmatpush1.xpose.msra.mxu0 0.0
  %3456 = vmatprep.subr.mxu0 0.0
  %3457 = vmatpush1.xpose.msra.mxu0 0.0
  %3458 = vmatprep.subr.mxu0 0.0
  %3459 = vmatpush1.xpose.msra.mxu0 0.0
  %3460 = vmatprep.subr.mxu0 0.0
  %3461 = vmatpush1.xpose.msra.mxu0 0.0
  %3462 = vmatprep.subr.mxu0 0.0
  %3463 = vmatpush1.xpose.msra.mxu0 0.0
  %3464 = vmatprep.subr.mxu0 0.0
  %3465 = vmatpush1.xpose.msra.mxu0 0.0
  %3466 = vmatprep.subr.mxu0 0.0
  %3467 = vmatpush1.xpose.msra.mxu0 0.0
  %3468 = vmatprep.subr.mxu0 0.0
  %3469 = vmatpush1.xpose.msra.mxu0 0.0
  %3470 = vmatprep.mubr.f32.mxu0 0.0
  %3471 = vmatmul.mubr.f32.gmra.mrb[0].mxu0 %v3392
  %v3472 = vpop.f32.mrb[0].mxu0
  %v3473 = vadd.f32 0.0, %v3472
  %v3474 = vpop.f32.mrb[0].mxu0
  %3475 = vmatprep.mubr.f32.mxu0 0.0
  %3476 = vmatmul.mubr.f32.gmra.mrb[0].mxu0 %v3395
  %v3477 = vpop.f32.mrb[0].mxu0
  %v3478 = vadd.f32 0.0, %v3477
  %v3479 = vpop.f32.mrb[0].mxu0
  %3480 = vdwg.mxu0
  %v3481 = vmul.f32 %v3473, 0.35355338
  %v3482 = vmul.f32 %v3478, 0.35355338
  %v3483 = vsel %vm3106, %v3481, -1e+30
  %v3484 = vsel %vm3107, %v3482, -1e+30
  %vm3485 = vcmask 162816
  %v3486 = vsel %vm3485, %v3483, -inf
  %3487 = vmax.xlane.f32.xlu0 %v3486
  %v3488 = vpop.xlane.xlu0 %3487
  %vm3489 = vcmask 158720
  %v3490 = vsel %vm3489, %v3484, -inf
  %3491 = vmax.xlane.f32.xlu0 %v3490
  %v3492 = vpop.xlane.xlu0 %3491
  %v3493 = vsub.f32 %v3483, %v3488
  %v3494 = vsub.f32 %v3484, %v3492
  %v3495 = vmul.f32 %v3493, 1.442695
  %v3496 = vpow.pop %v3495
  %v3497 = vmul.f32 %v3494, 1.442695
  %v3498 = vpow.pop %v3497
  %v3499 = vsel %vm3485, %v3496, 0.0
  %3500 = vadd.xlane.f32.xlu0 %v3499
  %v3501 = vpop.xlane.xlu0 %3500
  %v3502 = vsel %vm3489, %v3498, 0.0
  %3503 = vadd.xlane.f32.xlu0 %v3502
  %v3504 = vpop.xlane.xlu0 %3503
  %v3505 = vrcp.pop %v3501
  %v3506 = vrcp.pop %v3504
  %v3507 = vmul.f32 %v3496, %v3505
  %v3508 = vmul.f32 %v3498, %v3506
  %v3510 = vsel %vm3485, %v3507, 0
  %v3513 = vsel %vm3485, %v3508, 0
  %vm3515 = vcmask 1043456
  %v3517 = vsel %vm3515, %v3388, 0
  %3519 = vmatprep.subr.mxu0 0.0
  %3520 = vmatpush1.msra.mxu0 %v3378
  %3521 = vmatprep.subr.mxu0 0.0
  %3522 = vmatpush1.msra.mxu0 %v3383
  %3523 = vmatprep.subr.mxu0 0.0
  %3524 = vmatpush1.msra.mxu0 %v3517
  %3525 = vmatprep.subr.mxu0 0.0
  %3526 = vmatpush1.msra.mxu0 0.0
  %3527 = vmatprep.subr.mxu0 0.0
  %3528 = vmatpush1.msra.mxu0 0.0
  %3529 = vmatprep.subr.mxu0 0.0
  %3530 = vmatpush1.msra.mxu0 0.0
  %3531 = vmatprep.subr.mxu0 0.0
  %3532 = vmatpush1.msra.mxu0 0.0
  %3533 = vmatprep.subr.mxu0 0.0
  %3534 = vmatpush1.msra.mxu0 0.0
  %3535 = vmatprep.subr.mxu0 0.0
  %3536 = vmatpush1.msra.mxu0 0.0
  %3537 = vmatprep.subr.mxu0 0.0
  %3538 = vmatpush1.msra.mxu0 0.0
  %3539 = vmatprep.subr.mxu0 0.0
  %3540 = vmatpush1.msra.mxu0 0.0
  %3541 = vmatprep.subr.mxu0 0.0
  %3542 = vmatpush1.msra.mxu0 0.0
  %3543 = vmatprep.subr.mxu0 0.0
  %3544 = vmatpush1.msra.mxu0 0.0
  %3545 = vmatprep.subr.mxu0 0.0
  %3546 = vmatpush1.msra.mxu0 0.0
  %3547 = vmatprep.subr.mxu0 0.0
  %3548 = vmatpush1.msra.mxu0 0.0
  %3549 = vmatprep.subr.mxu0 0.0
  %3550 = vmatpush1.msra.mxu0 0.0
  %3551 = vmatprep.subr.mxu0 0.0
  %3552 = vmatpush1.msra.mxu0 0.0
  %3553 = vmatprep.subr.mxu0 0.0
  %3554 = vmatpush1.msra.mxu0 0.0
  %3555 = vmatprep.subr.mxu0 0.0
  %3556 = vmatpush1.msra.mxu0 0.0
  %3557 = vmatprep.subr.mxu0 0.0
  %3558 = vmatpush1.msra.mxu0 0.0
  %3559 = vmatprep.subr.mxu0 0.0
  %3560 = vmatpush1.msra.mxu0 0.0
  %3561 = vmatprep.subr.mxu0 0.0
  %3562 = vmatpush1.msra.mxu0 0.0
  %3563 = vmatprep.subr.mxu0 0.0
  %3564 = vmatpush1.msra.mxu0 0.0
  %3565 = vmatprep.subr.mxu0 0.0
  %3566 = vmatpush1.msra.mxu0 0.0
  %3567 = vmatprep.subr.mxu0 0.0
  %3568 = vmatpush1.msra.mxu0 0.0
  %3569 = vmatprep.subr.mxu0 0.0
  %3570 = vmatpush1.msra.mxu0 0.0
  %3571 = vmatprep.subr.mxu0 0.0
  %3572 = vmatpush1.msra.mxu0 0.0
  %3573 = vmatprep.subr.mxu0 0.0
  %3574 = vmatpush1.msra.mxu0 0.0
  %3575 = vmatprep.subr.mxu0 0.0
  %3576 = vmatpush1.msra.mxu0 0.0
  %3577 = vmatprep.subr.mxu0 0.0
  %3578 = vmatpush1.msra.mxu0 0.0
  %3579 = vmatprep.subr.mxu0 0.0
  %3580 = vmatpush1.msra.mxu0 0.0
  %3581 = vmatprep.subr.mxu0 0.0
  %3582 = vmatpush1.msra.mxu0 0.0
  %3583 = vmatprep.mubr.f32.mxu0 0.0
  %3584 = vmatmul.mubr.f32.gmra.mrb[0].mxu0 %v3510
  %v3585 = vpop.f32.mrb[0].mxu0
  %v3586 = vadd.f32 0.0, %v3585
  %v3587 = vpop.f32.mrb[0].mxu0
  %3588 = vmatprep.mubr.f32.mxu0 0.0
  %3589 = vmatmul.mubr.f32.gmra.mrb[0].mxu0 %v3513
  %v3590 = vpop.f32.mrb[0].mxu0
  %v3591 = vadd.f32 0.0, %v3590
  %v3592 = vpop.f32.mrb[0].mxu0
  %3593 = vdwg.mxu0
  %v3594 = vld [vmem:[%s17] sm:$0xff]
  %s3595 = scalar_lea.vmem %s11, 32
  %v3596 = vld [vmem:[%s3595] sm:$0xff]
  %v3597 = vld [vmem:[%s3595 + $0x8] sm:$0xff]
  %v3598 = vld [vmem:[%s3595 + $0x10] sm:$0xff]
  %v3599 = vld [vmem:[%s3595 + $0x18] sm:$0xff]
  %s3600 = scalar_lea.vmem %s12, 1
  %v3601 = vld [vmem:[%s3600] sm:$0x1]
  %v3603 = vlaneseq
  %v3604 = vshrl.u32 %v3603, 7
  %v3605 = vsub.s32 0, %v3604
  %v3606 = vrot.slane %v3601, %v3605
  %3608 = vmatprep.subr.mxu0 0.0
  %3609 = vmatpush1.msra.mxu0 %v3596
  %3610 = vmatprep.subr.mxu0 0.0
  %3611 = vmatpush1.msra.mxu0 %v3597
  %3612 = vmatprep.subr.mxu0 0.0
  %3613 = vmatpush1.msra.mxu0 %v3598
  %3614 = vmatprep.subr.mxu0 0.0
  %3615 = vmatpush1.msra.mxu0 %v3599
  %3616 = vmatprep.subr.mxu0 0.0
  %3617 = vmatpush1.msra.mxu0 0.0
  %3618 = vmatprep.subr.mxu0 0.0
  %3619 = vmatpush1.msra.mxu0 0.0
  %3620 = vmatprep.subr.mxu0 0.0
  %3621 = vmatpush1.msra.mxu0 0.0
  %3622 = vmatprep.subr.mxu0 0.0
  %3623 = vmatpush1.msra.mxu0 0.0
  %3624 = vmatprep.subr.mxu0 0.0
  %3625 = vmatpush1.msra.mxu0 0.0
  %3626 = vmatprep.subr.mxu0 0.0
  %3627 = vmatpush1.msra.mxu0 0.0
  %3628 = vmatprep.subr.mxu0 0.0
  %3629 = vmatpush1.msra.mxu0 0.0
  %3630 = vmatprep.subr.mxu0 0.0
  %3631 = vmatpush1.msra.mxu0 0.0
  %3632 = vmatprep.subr.mxu0 0.0
  %3633 = vmatpush1.msra.mxu0 0.0
  %3634 = vmatprep.subr.mxu0 0.0
  %3635 = vmatpush1.msra.mxu0 0.0
  %3636 = vmatprep.subr.mxu0 0.0
  %3637 = vmatpush1.msra.mxu0 0.0
  %3638 = vmatprep.subr.mxu0 0.0
  %3639 = vmatpush1.msra.mxu0 0.0
  %3640 = vmatprep.subr.mxu0 0.0
  %3641 = vmatpush1.msra.mxu0 0.0
  %3642 = vmatprep.subr.mxu0 0.0
  %3643 = vmatpush1.msra.mxu0 0.0
  %3644 = vmatprep.subr.mxu0 0.0
  %3645 = vmatpush1.msra.mxu0 0.0
  %3646 = vmatprep.subr.mxu0 0.0
  %3647 = vmatpush1.msra.mxu0 0.0
  %3648 = vmatprep.subr.mxu0 0.0
  %3649 = vmatpush1.msra.mxu0 0.0
  %3650 = vmatprep.subr.mxu0 0.0
  %3651 = vmatpush1.msra.mxu0 0.0
  %3652 = vmatprep.subr.mxu0 0.0
  %3653 = vmatpush1.msra.mxu0 0.0
  %3654 = vmatprep.subr.mxu0 0.0
  %3655 = vmatpush1.msra.mxu0 0.0
  %3656 = vmatprep.subr.mxu0 0.0
  %3657 = vmatpush1.msra.mxu0 0.0
  %3658 = vmatprep.subr.mxu0 0.0
  %3659 = vmatpush1.msra.mxu0 0.0
  %3660 = vmatprep.subr.mxu0 0.0
  %3661 = vmatpush1.msra.mxu0 0.0
  %3662 = vmatprep.subr.mxu0 0.0
  %3663 = vmatpush1.msra.mxu0 0.0
  %3664 = vmatprep.subr.mxu0 0.0
  %3665 = vmatpush1.msra.mxu0 0.0
  %3666 = vmatprep.subr.mxu0 0.0
  %3667 = vmatpush1.msra.mxu0 0.0
  %3668 = vmatprep.subr.mxu0 0.0
  %3669 = vmatpush1.msra.mxu0 0.0
  %3670 = vmatprep.subr.mxu0 0.0
  %3671 = vmatpush1.msra.mxu0 0.0
  %3672 = vmatprep.mubr.f32.mxu0 0.0
  %3673 = vmatmul.mubr.f32.gmra.mrb[0].mxu0 %v3120
  %v3674 = vpop.f32.mrb[0].mxu0
  %v3675 = vadd.f32 %v3606, %v3674
  %v3676 = vpop.f32.mrb[0].mxu0
  %3677 = vmatprep.mubr.f32.mxu0 0.0
  %3678 = vmatmul.mubr.f32.gmra.mrb[0].mxu0 %v3123
  %v3679 = vpop.f32.mrb[0].mxu0
  %v3680 = vadd.f32 %v3606, %v3679
  %v3681 = vpop.f32.mrb[0].mxu0
  %3682 = vdwg.mxu0
  %s3683 = scalar_lea.vmem %s13, 32
  %v3684 = vld [vmem:[%s3683] sm:$0xff]
  %v3685 = vld [vmem:[%s3683 + $0x8] sm:$0xff]
  %v3686 = vld [vmem:[%s3683 + $0x10] sm:$0xff]
  %v3687 = vld [vmem:[%s3683 + $0x18] sm:$0xff]
  %s3688 = scalar_lea.vmem %s14, 1
  %v3689 = vld [vmem:[%s3688] sm:$0x1]
  %v3691 = vlaneseq
  %v3692 = vshrl.u32 %v3691, 7
  %v3693 = vsub.s32 0, %v3692
  %v3694 = vrot.slane %v3689, %v3693
  %3696 = vmatprep.subr.mxu0 0.0
  %3697 = vmatpush1.msra.mxu0 %v3684
  %3698 = vmatprep.subr.mxu0 0.0
  %3699 = vmatpush1.msra.mxu0 %v3685
  %3700 = vmatprep.subr.mxu0 0.0
  %3701 = vmatpush1.msra.mxu0 %v3686
  %3702 = vmatprep.subr.mxu0 0.0
  %3703 = vmatpush1.msra.mxu0 %v3687
  %3704 = vmatprep.subr.mxu0 0.0
  %3705 = vmatpush1.msra.mxu0 0.0
  %3706 = vmatprep.subr.mxu0 0.0
  %3707 = vmatpush1.msra.mxu0 0.0
  %3708 = vmatprep.subr.mxu0 0.0
  %3709 = vmatpush1.msra.mxu0 0.0
  %3710 = vmatprep.subr.mxu0 0.0
  %3711 = vmatpush1.msra.mxu0 0.0
  %3712 = vmatprep.subr.mxu0 0.0
  %3713 = vmatpush1.msra.mxu0 0.0
  %3714 = vmatprep.subr.mxu0 0.0
  %3715 = vmatpush1.msra.mxu0 0.0
  %3716 = vmatprep.subr.mxu0 0.0
  %3717 = vmatpush1.msra.mxu0 0.0
  %3718 = vmatprep.subr.mxu0 0.0
  %3719 = vmatpush1.msra.mxu0 0.0
  %3720 = vmatprep.subr.mxu0 0.0
  %3721 = vmatpush1.msra.mxu0 0.0
  %3722 = vmatprep.subr.mxu0 0.0
  %3723 = vmatpush1.msra.mxu0 0.0
  %3724 = vmatprep.subr.mxu0 0.0
  %3725 = vmatpush1.msra.mxu0 0.0
  %3726 = vmatprep.subr.mxu0 0.0
  %3727 = vmatpush1.msra.mxu0 0.0
  %3728 = vmatprep.subr.mxu0 0.0
  %3729 = vmatpush1.msra.mxu0 0.0
  %3730 = vmatprep.subr.mxu0 0.0
  %3731 = vmatpush1.msra.mxu0 0.0
  %3732 = vmatprep.subr.mxu0 0.0
  %3733 = vmatpush1.msra.mxu0 0.0
  %3734 = vmatprep.subr.mxu0 0.0
  %3735 = vmatpush1.msra.mxu0 0.0
  %3736 = vmatprep.subr.mxu0 0.0
  %3737 = vmatpush1.msra.mxu0 0.0
  %3738 = vmatprep.subr.mxu0 0.0
  %3739 = vmatpush1.msra.mxu0 0.0
  %3740 = vmatprep.subr.mxu0 0.0
  %3741 = vmatpush1.msra.mxu0 0.0
  %3742 = vmatprep.subr.mxu0 0.0
  %3743 = vmatpush1.msra.mxu0 0.0
  %3744 = vmatprep.subr.mxu0 0.0
  %3745 = vmatpush1.msra.mxu0 0.0
  %3746 = vmatprep.subr.mxu0 0.0
  %3747 = vmatpush1.msra.mxu0 0.0
  %3748 = vmatprep.subr.mxu0 0.0
  %3749 = vmatpush1.msra.mxu0 0.0
  %3750 = vmatprep.subr.mxu0 0.0
  %3751 = vmatpush1.msra.mxu0 0.0
  %3752 = vmatprep.subr.mxu0 0.0
  %3753 = vmatpush1.msra.mxu0 0.0
  %3754 = vmatprep.subr.mxu0 0.0
  %3755 = vmatpush1.msra.mxu0 0.0
  %3756 = vmatprep.subr.mxu0 0.0
  %3757 = vmatpush1.msra.mxu0 0.0
  %3758 = vmatprep.subr.mxu0 0.0
  %3759 = vmatpush1.msra.mxu0 0.0
  %3760 = vmatprep.mubr.f32.mxu0 0.0
  %3761 = vmatmul.mubr.f32.gmra.mrb[0].mxu0 %v3212
  %v3762 = vpop.f32.mrb[0].mxu0
  %v3763 = vadd.f32 %v3694, %v3762
  %v3764 = vpop.f32.mrb[0].mxu0
  %3765 = vmatprep.mubr.f32.mxu0 0.0
  %3766 = vmatmul.mubr.f32.gmra.mrb[0].mxu0 %v3215
  %v3767 = vpop.f32.mrb[0].mxu0
  %v3768 = vadd.f32 %v3694, %v3767
  %v3769 = vpop.f32.mrb[0].mxu0
  %3770 = vmatprep.mubr.f32.mxu0 0.0
  %3771 = vmatmul.mubr.f32.gmra.mrb[0].mxu0 %v3218
  %v3772 = vpop.f32.mrb[0].mxu0
  %v3773 = vadd.f32 %v3694, %v3772
  %v3774 = vpop.f32.mrb[0].mxu0
  %3775 = vdwg.mxu0
  %s3776 = scalar_lea.vmem %s15, 32
  %v3777 = vld [vmem:[%s3776] sm:$0xff]
  %v3778 = vld [vmem:[%s3776 + $0x8] sm:$0xff]
  %v3779 = vld [vmem:[%s3776 + $0x10] sm:$0xff]
  %v3780 = vld [vmem:[%s3776 + $0x18] sm:$0xff]
  %s3781 = scalar_lea.vmem %s16, 1
  %v3782 = vld [vmem:[%s3781] sm:$0x1]
  %v3784 = vlaneseq
  %v3785 = vshrl.u32 %v3784, 7
  %v3786 = vsub.s32 0, %v3785
  %v3787 = vrot.slane %v3782, %v3786
  %3789 = vmatprep.subr.mxu0 0.0
  %3790 = vmatpush1.msra.mxu0 %v3777
  %3791 = vmatprep.subr.mxu0 0.0
  %3792 = vmatpush1.msra.mxu0 %v3778
  %3793 = vmatprep.subr.mxu0 0.0
  %3794 = vmatpush1.msra.mxu0 %v3779
  %3795 = vmatprep.subr.mxu0 0.0
  %3796 = vmatpush1.msra.mxu0 %v3780
  %3797 = vmatprep.subr.mxu0 0.0
  %3798 = vmatpush1.msra.mxu0 0.0
  %3799 = vmatprep.subr.mxu0 0.0
  %3800 = vmatpush1.msra.mxu0 0.0
  %3801 = vmatprep.subr.mxu0 0.0
  %3802 = vmatpush1.msra.mxu0 0.0
  %3803 = vmatprep.subr.mxu0 0.0
  %3804 = vmatpush1.msra.mxu0 0.0
  %3805 = vmatprep.subr.mxu0 0.0
  %3806 = vmatpush1.msra.mxu0 0.0
  %3807 = vmatprep.subr.mxu0 0.0
  %3808 = vmatpush1.msra.mxu0 0.0
  %3809 = vmatprep.subr.mxu0 0.0
  %3810 = vmatpush1.msra.mxu0 0.0
  %3811 = vmatprep.subr.mxu0 0.0
  %3812 = vmatpush1.msra.mxu0 0.0
  %3813 = vmatprep.subr.mxu0 0.0
  %3814 = vmatpush1.msra.mxu0 0.0
  %3815 = vmatprep.subr.mxu0 0.0
  %3816 = vmatpush1.msra.mxu0 0.0
  %3817 = vmatprep.subr.mxu0 0.0
  %3818 = vmatpush1.msra.mxu0 0.0
  %3819 = vmatprep.subr.mxu0 0.0
  %3820 = vmatpush1.msra.mxu0 0.0
  %3821 = vmatprep.subr.mxu0 0.0
  %3822 = vmatpush1.msra.mxu0 0.0
  %3823 = vmatprep.subr.mxu0 0.0
  %3824 = vmatpush1.msra.mxu0 0.0
  %3825 = vmatprep.subr.mxu0 0.0
  %3826 = vmatpush1.msra.mxu0 0.0
  %3827 = vmatprep.subr.mxu0 0.0
  %3828 = vmatpush1.msra.mxu0 0.0
  %3829 = vmatprep.subr.mxu0 0.0
  %3830 = vmatpush1.msra.mxu0 0.0
  %3831 = vmatprep.subr.mxu0 0.0
  %3832 = vmatpush1.msra.mxu0 0.0
  %3833 = vmatprep.subr.mxu0 0.0
  %3834 = vmatpush1.msra.mxu0 0.0
  %3835 = vmatprep.subr.mxu0 0.0
  %3836 = vmatpush1.msra.mxu0 0.0
  %3837 = vmatprep.subr.mxu0 0.0
  %3838 = vmatpush1.msra.mxu0 0.0
  %3839 = vmatprep.subr.mxu0 0.0
  %3840 = vmatpush1.msra.mxu0 0.0
  %3841 = vmatprep.subr.mxu0 0.0
  %3842 = vmatpush1.msra.mxu0 0.0
  %3843 = vmatprep.subr.mxu0 0.0
  %3844 = vmatpush1.msra.mxu0 0.0
  %3845 = vmatprep.subr.mxu0 0.0
  %3846 = vmatpush1.msra.mxu0 0.0
  %3847 = vmatprep.subr.mxu0 0.0
  %3848 = vmatpush1.msra.mxu0 0.0
  %3849 = vmatprep.subr.mxu0 0.0
  %3850 = vmatpush1.msra.mxu0 0.0
  %3851 = vmatprep.subr.mxu0 0.0
  %3852 = vmatpush1.msra.mxu0 0.0
  %3853 = vmatprep.mubr.f32.mxu0 0.0
  %3854 = vmatmul.mubr.f32.gmra.mrb[0].mxu0 %v3212
  %v3855 = vpop.f32.mrb[0].mxu0
  %v3856 = vadd.f32 %v3787, %v3855
  %v3857 = vpop.f32.mrb[0].mxu0
  %3858 = vmatprep.mubr.f32.mxu0 0.0
  %3859 = vmatmul.mubr.f32.gmra.mrb[0].mxu0 %v3215
  %v3860 = vpop.f32.mrb[0].mxu0
  %v3861 = vadd.f32 %v3787, %v3860
  %v3862 = vpop.f32.mrb[0].mxu0
  %3863 = vmatprep.mubr.f32.mxu0 0.0
  %3864 = vmatmul.mubr.f32.gmra.mrb[0].mxu0 %v3218
  %v3865 = vpop.f32.mrb[0].mxu0
  %v3866 = vadd.f32 %v3787, %v3865
  %v3867 = vpop.f32.mrb[0].mxu0
  %3868 = vdwg.mxu0
  %v3870 = vsel %vm79, %v3675, 0
  %v3873 = vsel %vm79, %v3680, 0
  %v3876 = vsel %vm79, %v3763, 0
  %v3879 = vsel %vm79, %v3768, 0
  %v3882 = vsel %vm79, %v3773, 0
  %3884 = vmatprep.subr.mxu0 0.0
  %3885 = vmatpush1.xpose.msra.mxu0 %v3876
  %3886 = vmatprep.subr.mxu0 0.0
  %3887 = vmatpush1.xpose.msra.mxu0 %v3879
  %3888 = vmatprep.subr.mxu0 0.0
  %3889 = vmatpush1.xpose.msra.mxu0 %v3882
  %3890 = vmatprep.subr.mxu0 0.0
  %3891 = vmatpush1.xpose.msra.mxu0 0.0
  %3892 = vmatprep.subr.mxu0 0.0
  %3893 = vmatpush1.xpose.msra.mxu0 0.0
  %3894 = vmatprep.subr.mxu0 0.0
  %3895 = vmatpush1.xpose.msra.mxu0 0.0
  %3896 = vmatprep.subr.mxu0 0.0
  %3897 = vmatpush1.xpose.msra.mxu0 0.0
  %3898 = vmatprep.subr.mxu0 0.0
  %3899 = vmatpush1.xpose.msra.mxu0 0.0
  %3900 = vmatprep.subr.mxu0 0.0
  %3901 = vmatpush1.xpose.msra.mxu0 0.0
  %3902 = vmatprep.subr.mxu0 0.0
  %3903 = vmatpush1.xpose.msra.mxu0 0.0
  %3904 = vmatprep.subr.mxu0 0.0
  %3905 = vmatpush1.xpose.msra.mxu0 0.0
  %3906 = vmatprep.subr.mxu0 0.0
  %3907 = vmatpush1.xpose.msra.mxu0 0.0
  %3908 = vmatprep.subr.mxu0 0.0
  %3909 = vmatpush1.xpose.msra.mxu0 0.0
  %3910 = vmatprep.subr.mxu0 0.0
  %3911 = vmatpush1.xpose.msra.mxu0 0.0
  %3912 = vmatprep.subr.mxu0 0.0
  %3913 = vmatpush1.xpose.msra.mxu0 0.0
  %3914 = vmatprep.subr.mxu0 0.0
  %3915 = vmatpush1.xpose.msra.mxu0 0.0
  %3916 = vmatprep.subr.mxu0 0.0
  %3917 = vmatpush1.xpose.msra.mxu0 0.0
  %3918 = vmatprep.subr.mxu0 0.0
  %3919 = vmatpush1.xpose.msra.mxu0 0.0
  %3920 = vmatprep.subr.mxu0 0.0
  %3921 = vmatpush1.xpose.msra.mxu0 0.0
  %3922 = vmatprep.subr.mxu0 0.0
  %3923 = vmatpush1.xpose.msra.mxu0 0.0
  %3924 = vmatprep.subr.mxu0 0.0
  %3925 = vmatpush1.xpose.msra.mxu0 0.0
  %3926 = vmatprep.subr.mxu0 0.0
  %3927 = vmatpush1.xpose.msra.mxu0 0.0
  %3928 = vmatprep.subr.mxu0 0.0
  %3929 = vmatpush1.xpose.msra.mxu0 0.0
  %3930 = vmatprep.subr.mxu0 0.0
  %3931 = vmatpush1.xpose.msra.mxu0 0.0
  %3932 = vmatprep.subr.mxu0 0.0
  %3933 = vmatpush1.xpose.msra.mxu0 0.0
  %3934 = vmatprep.subr.mxu0 0.0
  %3935 = vmatpush1.xpose.msra.mxu0 0.0
  %3936 = vmatprep.subr.mxu0 0.0
  %3937 = vmatpush1.xpose.msra.mxu0 0.0
  %3938 = vmatprep.subr.mxu0 0.0
  %3939 = vmatpush1.xpose.msra.mxu0 0.0
  %3940 = vmatprep.subr.mxu0 0.0
  %3941 = vmatpush1.xpose.msra.mxu0 0.0
  %3942 = vmatprep.subr.mxu0 0.0
  %3943 = vmatpush1.xpose.msra.mxu0 0.0
  %3944 = vmatprep.subr.mxu0 0.0
  %3945 = vmatpush1.xpose.msra.mxu0 0.0
  %3946 = vmatprep.subr.mxu0 0.0
  %3947 = vmatpush1.xpose.msra.mxu0 0.0
  %3948 = vmatprep.mubr.f32.mxu0 0.0
  %3949 = vmatmul.mubr.f32.gmra.mrb[0].mxu0 %v3870
  %v3950 = vpop.f32.mrb[0].mxu0
  %v3951 = vadd.f32 0.0, %v3950
  %v3952 = vpop.f32.mrb[0].mxu0
  %3953 = vmatprep.mubr.f32.mxu0 0.0
  %3954 = vmatmul.mubr.f32.gmra.mrb[0].mxu0 %v3873
  %v3955 = vpop.f32.mrb[0].mxu0
  %v3956 = vadd.f32 0.0, %v3955
  %v3957 = vpop.f32.mrb[0].mxu0
  %3958 = vdwg.mxu0
  %v3959 = vmul.f32 %v3951, 0.35355338
  %v3960 = vmul.f32 %v3956, 0.35355338
  %v3961 = vsel %vm3106, %v3959, -1e+30
  %v3962 = vsel %vm3107, %v3960, -1e+30
  %v3963 = vsel %vm3485, %v3961, -inf
  %3964 = vmax.xlane.f32.xlu0 %v3963
  %v3965 = vpop.xlane.xlu0 %3964
  %v3966 = vsel %vm3489, %v3962, -inf
  %3967 = vmax.xlane.f32.xlu0 %v3966
  %v3968 = vpop.xlane.xlu0 %3967
  %v3969 = vsub.f32 %v3961, %v3965
  %v3970 = vsub.f32 %v3962, %v3968
  %v3971 = vmul.f32 %v3969, 1.442695
  %v3972 = vpow.pop %v3971
  %v3973 = vmul.f32 %v3970, 1.442695
  %v3974 = vpow.pop %v3973
  %v3975 = vsel %vm3485, %v3972, 0.0
  %3976 = vadd.xlane.f32.xlu0 %v3975
  %v3977 = vpop.xlane.xlu0 %3976
  %v3978 = vsel %vm3489, %v3974, 0.0
  %3979 = vadd.xlane.f32.xlu0 %v3978
  %v3980 = vpop.xlane.xlu0 %3979
  %v3981 = vrcp.pop %v3977
  %v3982 = vrcp.pop %v3980
  %v3983 = vmul.f32 %v3972, %v3981
  %v3984 = vmul.f32 %v3974, %v3982
  %v3986 = vsel %vm3485, %v3983, 0
  %v3989 = vsel %vm3485, %v3984, 0
  %v3992 = vsel %vm3515, %v3866, 0
  %3994 = vmatprep.subr.mxu0 0.0
  %3995 = vmatpush1.msra.mxu0 %v3856
  %3996 = vmatprep.subr.mxu0 0.0
  %3997 = vmatpush1.msra.mxu0 %v3861
  %3998 = vmatprep.subr.mxu0 0.0
  %3999 = vmatpush1.msra.mxu0 %v3992
  %4000 = vmatprep.subr.mxu0 0.0
  %4001 = vmatpush1.msra.mxu0 0.0
  %4002 = vmatprep.subr.mxu0 0.0
  %4003 = vmatpush1.msra.mxu0 0.0
  %4004 = vmatprep.subr.mxu0 0.0
  %4005 = vmatpush1.msra.mxu0 0.0
  %4006 = vmatprep.subr.mxu0 0.0
  %4007 = vmatpush1.msra.mxu0 0.0
  %4008 = vmatprep.subr.mxu0 0.0
  %4009 = vmatpush1.msra.mxu0 0.0
  %4010 = vmatprep.subr.mxu0 0.0
  %4011 = vmatpush1.msra.mxu0 0.0
  %4012 = vmatprep.subr.mxu0 0.0
  %4013 = vmatpush1.msra.mxu0 0.0
  %4014 = vmatprep.subr.mxu0 0.0
  %4015 = vmatpush1.msra.mxu0 0.0
  %4016 = vmatprep.subr.mxu0 0.0
  %4017 = vmatpush1.msra.mxu0 0.0
  %4018 = vmatprep.subr.mxu0 0.0
  %4019 = vmatpush1.msra.mxu0 0.0
  %4020 = vmatprep.subr.mxu0 0.0
  %4021 = vmatpush1.msra.mxu0 0.0
  %4022 = vmatprep.subr.mxu0 0.0
  %4023 = vmatpush1.msra.mxu0 0.0
  %4024 = vmatprep.subr.mxu0 0.0
  %4025 = vmatpush1.msra.mxu0 0.0
  %4026 = vmatprep.subr.mxu0 0.0
  %4027 = vmatpush1.msra.mxu0 0.0
  %4028 = vmatprep.subr.mxu0 0.0
  %4029 = vmatpush1.msra.mxu0 0.0
  %4030 = vmatprep.subr.mxu0 0.0
  %4031 = vmatpush1.msra.mxu0 0.0
  %4032 = vmatprep.subr.mxu0 0.0
  %4033 = vmatpush1.msra.mxu0 0.0
  %4034 = vmatprep.subr.mxu0 0.0
  %4035 = vmatpush1.msra.mxu0 0.0
  %4036 = vmatprep.subr.mxu0 0.0
  %4037 = vmatpush1.msra.mxu0 0.0
  %4038 = vmatprep.subr.mxu0 0.0
  %4039 = vmatpush1.msra.mxu0 0.0
  %4040 = vmatprep.subr.mxu0 0.0
  %4041 = vmatpush1.msra.mxu0 0.0
  %4042 = vmatprep.subr.mxu0 0.0
  %4043 = vmatpush1.msra.mxu0 0.0
  %4044 = vmatprep.subr.mxu0 0.0
  %4045 = vmatpush1.msra.mxu0 0.0
  %4046 = vmatprep.subr.mxu0 0.0
  %4047 = vmatpush1.msra.mxu0 0.0
  %4048 = vmatprep.subr.mxu0 0.0
  %4049 = vmatpush1.msra.mxu0 0.0
  %4050 = vmatprep.subr.mxu0 0.0
  %4051 = vmatpush1.msra.mxu0 0.0
  %4052 = vmatprep.subr.mxu0 0.0
  %4053 = vmatpush1.msra.mxu0 0.0
  %4054 = vmatprep.subr.mxu0 0.0
  %4055 = vmatpush1.msra.mxu0 0.0
  %4056 = vmatprep.subr.mxu0 0.0
  %4057 = vmatpush1.msra.mxu0 0.0
  %4058 = vmatprep.mubr.f32.mxu0 0.0
  %4059 = vmatmul.mubr.f32.gmra.mrb[0].mxu0 %v3986
  %v4060 = vpop.f32.mrb[0].mxu0
  %v4061 = vadd.f32 0.0, %v4060
  %v4062 = vpop.f32.mrb[0].mxu0
  %4063 = vmatprep.mubr.f32.mxu0 0.0
  %4064 = vmatmul.mubr.f32.gmra.mrb[0].mxu0 %v3989
  %v4065 = vpop.f32.mrb[0].mxu0
  %v4066 = vadd.f32 0.0, %v4065
  %v4067 = vpop.f32.mrb[0].mxu0
  %4068 = vdwg.mxu0
  %s4069 = scalar_lea.vmem %s17, 8
  %v4070 = vld [vmem:[%s4069] sm:$0xff]
  %v4072 = vsel %vm79, %v4061, 0
  %v4075 = vsel %vm79, %v4066, 0
  %4077 = vmatprep.subr.mxu0 0.0
  %4078 = vmatpush1.msra.mxu0 %v4070
  %4079 = vmatprep.subr.mxu0 0.0
  %4080 = vmatpush1.msra.mxu0 0.0
  %4081 = vmatprep.subr.mxu0 0.0
  %4082 = vmatpush1.msra.mxu0 0.0
  %4083 = vmatprep.subr.mxu0 0.0
  %4084 = vmatpush1.msra.mxu0 0.0
  %4085 = vmatprep.subr.mxu0 0.0
  %4086 = vmatpush1.msra.mxu0 0.0
  %4087 = vmatprep.subr.mxu0 0.0
  %4088 = vmatpush1.msra.mxu0 0.0
  %4089 = vmatprep.subr.mxu0 0.0
  %4090 = vmatpush1.msra.mxu0 0.0
  %4091 = vmatprep.subr.mxu0 0.0
  %4092 = vmatpush1.msra.mxu0 0.0
  %4093 = vmatprep.subr.mxu0 0.0
  %4094 = vmatpush1.msra.mxu0 0.0
  %4095 = vmatprep.subr.mxu0 0.0
  %4096 = vmatpush1.msra.mxu0 0.0
  %4097 = vmatprep.subr.mxu0 0.0
  %4098 = vmatpush1.msra.mxu0 0.0
  %4099 = vmatprep.subr.mxu0 0.0
  %4100 = vmatpush1.msra.mxu0 0.0
  %4101 = vmatprep.subr.mxu0 0.0
  %4102 = vmatpush1.msra.mxu0 0.0
  %4103 = vmatprep.subr.mxu0 0.0
  %4104 = vmatpush1.msra.mxu0 0.0
  %4105 = vmatprep.subr.mxu0 0.0
  %4106 = vmatpush1.msra.mxu0 0.0
  %4107 = vmatprep.subr.mxu0 0.0
  %4108 = vmatpush1.msra.mxu0 0.0
  %4109 = vmatprep.subr.mxu0 0.0
  %4110 = vmatpush1.msra.mxu0 0.0
  %4111 = vmatprep.subr.mxu0 0.0
  %4112 = vmatpush1.msra.mxu0 0.0
  %4113 = vmatprep.subr.mxu0 0.0
  %4114 = vmatpush1.msra.mxu0 0.0
  %4115 = vmatprep.subr.mxu0 0.0
  %4116 = vmatpush1.msra.mxu0 0.0
  %4117 = vmatprep.subr.mxu0 0.0
  %4118 = vmatpush1.msra.mxu0 0.0
  %4119 = vmatprep.subr.mxu0 0.0
  %4120 = vmatpush1.msra.mxu0 0.0
  %4121 = vmatprep.subr.mxu0 0.0
  %4122 = vmatpush1.msra.mxu0 0.0
  %4123 = vmatprep.subr.mxu0 0.0
  %4124 = vmatpush1.msra.mxu0 0.0
  %4125 = vmatprep.subr.mxu0 0.0
  %4126 = vmatpush1.msra.mxu0 0.0
  %4127 = vmatprep.subr.mxu0 0.0
  %4128 = vmatpush1.msra.mxu0 0.0
  %4129 = vmatprep.subr.mxu0 0.0
  %4130 = vmatpush1.msra.mxu0 0.0
  %4131 = vmatprep.subr.mxu0 0.0
  %4132 = vmatpush1.msra.mxu0 0.0
  %4133 = vmatprep.subr.mxu0 0.0
  %4134 = vmatpush1.msra.mxu0 0.0
  %4135 = vmatprep.subr.mxu0 0.0
  %4136 = vmatpush1.msra.mxu0 0.0
  %4137 = vmatprep.subr.mxu0 0.0
  %4138 = vmatpush1.msra.mxu0 0.0
  %4139 = vmatprep.subr.mxu0 0.0
  %4140 = vmatpush1.msra.mxu0 0.0
  %4141 = vmatprep.mubr.f32.mxu0 0.0
  %4142 = vmatmul.mubr.f32.gmra.mrb[0].mxu0 %v4072
  %v4143 = vpop.f32.mrb[0].mxu0
  %v4144 = vadd.f32 0.0, %v4143
  %v4145 = vpop.f32.mrb[0].mxu0
  %4146 = vmatprep.mubr.f32.mxu0 0.0
  %4147 = vmatmul.mubr.f32.gmra.mrb[0].mxu0 %v4075
  %v4148 = vpop.f32.mrb[0].mxu0
  %v4149 = vadd.f32 0.0, %v4148
  %v4150 = vpop.f32.mrb[0].mxu0
  %4151 = vdwg.mxu0
  %v4153 = vsel %vm79, %v3586, 0
  %v4156 = vsel %vm79, %v3591, 0
  %4158 = vmatprep.subr.mxu0 0.0
  %4159 = vmatpush1.msra.mxu0 %v3594
  %4160 = vmatprep.subr.mxu0 0.0
  %4161 = vmatpush1.msra.mxu0 0.0
  %4162 = vmatprep.subr.mxu0 0.0
  %4163 = vmatpush1.msra.mxu0 0.0
  %4164 = vmatprep.subr.mxu0 0.0
  %4165 = vmatpush1.msra.mxu0 0.0
  %4166 = vmatprep.subr.mxu0 0.0
  %4167 = vmatpush1.msra.mxu0 0.0
  %4168 = vmatprep.subr.mxu0 0.0
  %4169 = vmatpush1.msra.mxu0 0.0
  %4170 = vmatprep.subr.mxu0 0.0
  %4171 = vmatpush1.msra.mxu0 0.0
  %4172 = vmatprep.subr.mxu0 0.0
  %4173 = vmatpush1.msra.mxu0 0.0
  %4174 = vmatprep.subr.mxu0 0.0
  %4175 = vmatpush1.msra.mxu0 0.0
  %4176 = vmatprep.subr.mxu0 0.0
  %4177 = vmatpush1.msra.mxu0 0.0
  %4178 = vmatprep.subr.mxu0 0.0
  %4179 = vmatpush1.msra.mxu0 0.0
  %4180 = vmatprep.subr.mxu0 0.0
  %4181 = vmatpush1.msra.mxu0 0.0
  %4182 = vmatprep.subr.mxu0 0.0
  %4183 = vmatpush1.msra.mxu0 0.0
  %4184 = vmatprep.subr.mxu0 0.0
  %4185 = vmatpush1.msra.mxu0 0.0
  %4186 = vmatprep.subr.mxu0 0.0
  %4187 = vmatpush1.msra.mxu0 0.0
  %4188 = vmatprep.subr.mxu0 0.0
  %4189 = vmatpush1.msra.mxu0 0.0
  %4190 = vmatprep.subr.mxu0 0.0
  %4191 = vmatpush1.msra.mxu0 0.0
  %4192 = vmatprep.subr.mxu0 0.0
  %4193 = vmatpush1.msra.mxu0 0.0
  %4194 = vmatprep.subr.mxu0 0.0
  %4195 = vmatpush1.msra.mxu0 0.0
  %4196 = vmatprep.subr.mxu0 0.0
  %4197 = vmatpush1.msra.mxu0 0.0
  %4198 = vmatprep.subr.mxu0 0.0
  %4199 = vmatpush1.msra.mxu0 0.0
  %4200 = vmatprep.subr.mxu0 0.0
  %4201 = vmatpush1.msra.mxu0 0.0
  %4202 = vmatprep.subr.mxu0 0.0
  %4203 = vmatpush1.msra.mxu0 0.0
  %4204 = vmatprep.subr.mxu0 0.0
  %4205 = vmatpush1.msra.mxu0 0.0
  %4206 = vmatprep.subr.mxu0 0.0
  %4207 = vmatpush1.msra.mxu0 0.0
  %4208 = vmatprep.subr.mxu0 0.0
  %4209 = vmatpush1.msra.mxu0 0.0
  %4210 = vmatprep.subr.mxu0 0.0
  %4211 = vmatpush1.msra.mxu0 0.0
  %4212 = vmatprep.subr.mxu0 0.0
  %4213 = vmatpush1.msra.mxu0 0.0
  %4214 = vmatprep.subr.mxu0 0.0
  %4215 = vmatpush1.msra.mxu0 0.0
  %4216 = vmatprep.subr.mxu0 0.0
  %4217 = vmatpush1.msra.mxu0 0.0
  %4218 = vmatprep.subr.mxu0 0.0
  %4219 = vmatpush1.msra.mxu0 0.0
  %4220 = vmatprep.subr.mxu0 0.0
  %4221 = vmatpush1.msra.mxu0 0.0
  %4222 = vmatprep.mubr.f32.mxu0 0.0
  %4223 = vmatmul.mubr.f32.gmra.mrb[0].mxu0 %v4153
  %v4224 = vpop.f32.mrb[0].mxu0
  %v4225 = vadd.f32 %v4144, %v4224
  %v4226 = vpop.f32.mrb[0].mxu0
  %4227 = vmatprep.mubr.f32.mxu0 0.0
  %4228 = vmatmul.mubr.f32.gmra.mrb[0].mxu0 %v4156
  %v4229 = vpop.f32.mrb[0].mxu0
  %v4230 = vadd.f32 %v4149, %v4229
  %v4231 = vpop.f32.mrb[0].mxu0
  %4232 = vdwg.mxu0
  %s4233 = scalar_lea.vmem %s11, 64
  %v4234 = vld [vmem:[%s4233] sm:$0xff]
  %v4235 = vld [vmem:[%s4233 + $0x8] sm:$0xff]
  %v4236 = vld [vmem:[%s4233 + $0x10] sm:$0xff]
  %v4237 = vld [vmem:[%s4233 + $0x18] sm:$0xff]
  %s4238 = scalar_lea.vmem %s12, 2
  %v4239 = vld [vmem:[%s4238] sm:$0x1]
  %v4241 = vlaneseq
  %v4242 = vshrl.u32 %v4241, 7
  %v4243 = vsub.s32 0, %v4242
  %v4244 = vrot.slane %v4239, %v4243
  %4246 = vmatprep.subr.mxu0 0.0
  %4247 = vmatpush1.msra.mxu0 %v4234
  %4248 = vmatprep.subr.mxu0 0.0
  %4249 = vmatpush1.msra.mxu0 %v4235
  %4250 = vmatprep.subr.mxu0 0.0
  %4251 = vmatpush1.msra.mxu0 %v4236
  %4252 = vmatprep.subr.mxu0 0.0
  %4253 = vmatpush1.msra.mxu0 %v4237
  %4254 = vmatprep.subr.mxu0 0.0
  %4255 = vmatpush1.msra.mxu0 0.0
  %4256 = vmatprep.subr.mxu0 0.0
  %4257 = vmatpush1.msra.mxu0 0.0
  %4258 = vmatprep.subr.mxu0 0.0
  %4259 = vmatpush1.msra.mxu0 0.0
  %4260 = vmatprep.subr.mxu0 0.0
  %4261 = vmatpush1.msra.mxu0 0.0
  %4262 = vmatprep.subr.mxu0 0.0
  %4263 = vmatpush1.msra.mxu0 0.0
  %4264 = vmatprep.subr.mxu0 0.0
  %4265 = vmatpush1.msra.mxu0 0.0
  %4266 = vmatprep.subr.mxu0 0.0
  %4267 = vmatpush1.msra.mxu0 0.0
  %4268 = vmatprep.subr.mxu0 0.0
  %4269 = vmatpush1.msra.mxu0 0.0
  %4270 = vmatprep.subr.mxu0 0.0
  %4271 = vmatpush1.msra.mxu0 0.0
  %4272 = vmatprep.subr.mxu0 0.0
  %4273 = vmatpush1.msra.mxu0 0.0
  %4274 = vmatprep.subr.mxu0 0.0
  %4275 = vmatpush1.msra.mxu0 0.0
  %4276 = vmatprep.subr.mxu0 0.0
  %4277 = vmatpush1.msra.mxu0 0.0
  %4278 = vmatprep.subr.mxu0 0.0
  %4279 = vmatpush1.msra.mxu0 0.0
  %4280 = vmatprep.subr.mxu0 0.0
  %4281 = vmatpush1.msra.mxu0 0.0
  %4282 = vmatprep.subr.mxu0 0.0
  %4283 = vmatpush1.msra.mxu0 0.0
  %4284 = vmatprep.subr.mxu0 0.0
  %4285 = vmatpush1.msra.mxu0 0.0
  %4286 = vmatprep.subr.mxu0 0.0
  %4287 = vmatpush1.msra.mxu0 0.0
  %4288 = vmatprep.subr.mxu0 0.0
  %4289 = vmatpush1.msra.mxu0 0.0
  %4290 = vmatprep.subr.mxu0 0.0
  %4291 = vmatpush1.msra.mxu0 0.0
  %4292 = vmatprep.subr.mxu0 0.0
  %4293 = vmatpush1.msra.mxu0 0.0
  %4294 = vmatprep.subr.mxu0 0.0
  %4295 = vmatpush1.msra.mxu0 0.0
  %4296 = vmatprep.subr.mxu0 0.0
  %4297 = vmatpush1.msra.mxu0 0.0
  %4298 = vmatprep.subr.mxu0 0.0
  %4299 = vmatpush1.msra.mxu0 0.0
  %4300 = vmatprep.subr.mxu0 0.0
  %4301 = vmatpush1.msra.mxu0 0.0
  %4302 = vmatprep.subr.mxu0 0.0
  %4303 = vmatpush1.msra.mxu0 0.0
  %4304 = vmatprep.subr.mxu0 0.0
  %4305 = vmatpush1.msra.mxu0 0.0
  %4306 = vmatprep.subr.mxu0 0.0
  %4307 = vmatpush1.msra.mxu0 0.0
  %4308 = vmatprep.subr.mxu0 0.0
  %4309 = vmatpush1.msra.mxu0 0.0
  %4310 = vmatprep.mubr.f32.mxu0 0.0
  %4311 = vmatmul.mubr.f32.gmra.mrb[0].mxu0 %v3120
  %v4312 = vpop.f32.mrb[0].mxu0
  %v4313 = vadd.f32 %v4244, %v4312
  %v4314 = vpop.f32.mrb[0].mxu0
  %4315 = vmatprep.mubr.f32.mxu0 0.0
  %4316 = vmatmul.mubr.f32.gmra.mrb[0].mxu0 %v3123
  %v4317 = vpop.f32.mrb[0].mxu0
  %v4318 = vadd.f32 %v4244, %v4317
  %v4319 = vpop.f32.mrb[0].mxu0
  %4320 = vdwg.mxu0
  %s4321 = scalar_lea.vmem %s13, 64
  %v4322 = vld [vmem:[%s4321] sm:$0xff]
  %v4323 = vld [vmem:[%s4321 + $0x8] sm:$0xff]
  %v4324 = vld [vmem:[%s4321 + $0x10] sm:$0xff]
  %v4325 = vld [vmem:[%s4321 + $0x18] sm:$0xff]
  %s4326 = scalar_lea.vmem %s14, 2
  %v4327 = vld [vmem:[%s4326] sm:$0x1]
  %v4329 = vlaneseq
  %v4330 = vshrl.u32 %v4329, 7
  %v4331 = vsub.s32 0, %v4330
  %v4332 = vrot.slane %v4327, %v4331
  %4334 = vmatprep.subr.mxu0 0.0
  %4335 = vmatpush1.msra.mxu0 %v4322
  %4336 = vmatprep.subr.mxu0 0.0
  %4337 = vmatpush1.msra.mxu0 %v4323
  %4338 = vmatprep.subr.mxu0 0.0
  %4339 = vmatpush1.msra.mxu0 %v4324
  %4340 = vmatprep.subr.mxu0 0.0
  %4341 = vmatpush1.msra.mxu0 %v4325
  %4342 = vmatprep.subr.mxu0 0.0
  %4343 = vmatpush1.msra.mxu0 0.0
  %4344 = vmatprep.subr.mxu0 0.0
  %4345 = vmatpush1.msra.mxu0 0.0
  %4346 = vmatprep.subr.mxu0 0.0
  %4347 = vmatpush1.msra.mxu0 0.0
  %4348 = vmatprep.subr.mxu0 0.0
  %4349 = vmatpush1.msra.mxu0 0.0
  %4350 = vmatprep.subr.mxu0 0.0
  %4351 = vmatpush1.msra.mxu0 0.0
  %4352 = vmatprep.subr.mxu0 0.0
  %4353 = vmatpush1.msra.mxu0 0.0
  %4354 = vmatprep.subr.mxu0 0.0
  %4355 = vmatpush1.msra.mxu0 0.0
  %4356 = vmatprep.subr.mxu0 0.0
  %4357 = vmatpush1.msra.mxu0 0.0
  %4358 = vmatprep.subr.mxu0 0.0
  %4359 = vmatpush1.msra.mxu0 0.0
  %4360 = vmatprep.subr.mxu0 0.0
  %4361 = vmatpush1.msra.mxu0 0.0
  %4362 = vmatprep.subr.mxu0 0.0
  %4363 = vmatpush1.msra.mxu0 0.0
  %4364 = vmatprep.subr.mxu0 0.0
  %4365 = vmatpush1.msra.mxu0 0.0
  %4366 = vmatprep.subr.mxu0 0.0
  %4367 = vmatpush1.msra.mxu0 0.0
  %4368 = vmatprep.subr.mxu0 0.0
  %4369 = vmatpush1.msra.mxu0 0.0
  %4370 = vmatprep.subr.mxu0 0.0
  %4371 = vmatpush1.msra.mxu0 0.0
  %4372 = vmatprep.subr.mxu0 0.0
  %4373 = vmatpush1.msra.mxu0 0.0
  %4374 = vmatprep.subr.mxu0 0.0
  %4375 = vmatpush1.msra.mxu0 0.0
  %4376 = vmatprep.subr.mxu0 0.0
  %4377 = vmatpush1.msra.mxu0 0.0
  %4378 = vmatprep.subr.mxu0 0.0
  %4379 = vmatpush1.msra.mxu0 0.0
  %4380 = vmatprep.subr.mxu0 0.0
  %4381 = vmatpush1.msra.mxu0 0.0
  %4382 = vmatprep.subr.mxu0 0.0
  %4383 = vmatpush1.msra.mxu0 0.0
  %4384 = vmatprep.subr.mxu0 0.0
  %4385 = vmatpush1.msra.mxu0 0.0
  %4386 = vmatprep.subr.mxu0 0.0
  %4387 = vmatpush1.msra.mxu0 0.0
  %4388 = vmatprep.subr.mxu0 0.0
  %4389 = vmatpush1.msra.mxu0 0.0
  %4390 = vmatprep.subr.mxu0 0.0
  %4391 = vmatpush1.msra.mxu0 0.0
  %4392 = vmatprep.subr.mxu0 0.0
  %4393 = vmatpush1.msra.mxu0 0.0
  %4394 = vmatprep.subr.mxu0 0.0
  %4395 = vmatpush1.msra.mxu0 0.0
  %4396 = vmatprep.subr.mxu0 0.0
  %4397 = vmatpush1.msra.mxu0 0.0
  %4398 = vmatprep.mubr.f32.mxu0 0.0
  %4399 = vmatmul.mubr.f32.gmra.mrb[0].mxu0 %v3212
  %v4400 = vpop.f32.mrb[0].mxu0
  %v4401 = vadd.f32 %v4332, %v4400
  %v4402 = vpop.f32.mrb[0].mxu0
  %4403 = vmatprep.mubr.f32.mxu0 0.0
  %4404 = vmatmul.mubr.f32.gmra.mrb[0].mxu0 %v3215
  %v4405 = vpop.f32.mrb[0].mxu0
  %v4406 = vadd.f32 %v4332, %v4405
  %v4407 = vpop.f32.mrb[0].mxu0
  %4408 = vmatprep.mubr.f32.mxu0 0.0
  %4409 = vmatmul.mubr.f32.gmra.mrb[0].mxu0 %v3218
  %v4410 = vpop.f32.mrb[0].mxu0
  %v4411 = vadd.f32 %v4332, %v4410
  %v4412 = vpop.f32.mrb[0].mxu0
  %4413 = vdwg.mxu0
  %s4414 = scalar_lea.vmem %s15, 64
  %v4415 = vld [vmem:[%s4414] sm:$0xff]
  %v4416 = vld [vmem:[%s4414 + $0x8] sm:$0xff]
  %v4417 = vld [vmem:[%s4414 + $0x10] sm:$0xff]
  %v4418 = vld [vmem:[%s4414 + $0x18] sm:$0xff]
  %s4419 = scalar_lea.vmem %s16, 2
  %v4420 = vld [vmem:[%s4419] sm:$0x1]
  %v4422 = vlaneseq
  %v4423 = vshrl.u32 %v4422, 7
  %v4424 = vsub.s32 0, %v4423
  %v4425 = vrot.slane %v4420, %v4424
  %4427 = vmatprep.subr.mxu0 0.0
  %4428 = vmatpush1.msra.mxu0 %v4415
  %4429 = vmatprep.subr.mxu0 0.0
  %4430 = vmatpush1.msra.mxu0 %v4416
  %4431 = vmatprep.subr.mxu0 0.0
  %4432 = vmatpush1.msra.mxu0 %v4417
  %4433 = vmatprep.subr.mxu0 0.0
  %4434 = vmatpush1.msra.mxu0 %v4418
  %4435 = vmatprep.subr.mxu0 0.0
  %4436 = vmatpush1.msra.mxu0 0.0
  %4437 = vmatprep.subr.mxu0 0.0
  %4438 = vmatpush1.msra.mxu0 0.0
  %4439 = vmatprep.subr.mxu0 0.0
  %4440 = vmatpush1.msra.mxu0 0.0
  %4441 = vmatprep.subr.mxu0 0.0
  %4442 = vmatpush1.msra.mxu0 0.0
  %4443 = vmatprep.subr.mxu0 0.0
  %4444 = vmatpush1.msra.mxu0 0.0
  %4445 = vmatprep.subr.mxu0 0.0
  %4446 = vmatpush1.msra.mxu0 0.0
  %4447 = vmatprep.subr.mxu0 0.0
  %4448 = vmatpush1.msra.mxu0 0.0
  %4449 = vmatprep.subr.mxu0 0.0
  %4450 = vmatpush1.msra.mxu0 0.0
  %4451 = vmatprep.subr.mxu0 0.0
  %4452 = vmatpush1.msra.mxu0 0.0
  %4453 = vmatprep.subr.mxu0 0.0
  %4454 = vmatpush1.msra.mxu0 0.0
  %4455 = vmatprep.subr.mxu0 0.0
  %4456 = vmatpush1.msra.mxu0 0.0
  %4457 = vmatprep.subr.mxu0 0.0
  %4458 = vmatpush1.msra.mxu0 0.0
  %4459 = vmatprep.subr.mxu0 0.0
  %4460 = vmatpush1.msra.mxu0 0.0
  %4461 = vmatprep.subr.mxu0 0.0
  %4462 = vmatpush1.msra.mxu0 0.0
  %4463 = vmatprep.subr.mxu0 0.0
  %4464 = vmatpush1.msra.mxu0 0.0
  %4465 = vmatprep.subr.mxu0 0.0
  %4466 = vmatpush1.msra.mxu0 0.0
  %4467 = vmatprep.subr.mxu0 0.0
  %4468 = vmatpush1.msra.mxu0 0.0
  %4469 = vmatprep.subr.mxu0 0.0
  %4470 = vmatpush1.msra.mxu0 0.0
  %4471 = vmatprep.subr.mxu0 0.0
  %4472 = vmatpush1.msra.mxu0 0.0
  %4473 = vmatprep.subr.mxu0 0.0
  %4474 = vmatpush1.msra.mxu0 0.0
  %4475 = vmatprep.subr.mxu0 0.0
  %4476 = vmatpush1.msra.mxu0 0.0
  %4477 = vmatprep.subr.mxu0 0.0
  %4478 = vmatpush1.msra.mxu0 0.0
  %4479 = vmatprep.subr.mxu0 0.0
  %4480 = vmatpush1.msra.mxu0 0.0
  %4481 = vmatprep.subr.mxu0 0.0
  %4482 = vmatpush1.msra.mxu0 0.0
  %4483 = vmatprep.subr.mxu0 0.0
  %4484 = vmatpush1.msra.mxu0 0.0
  %4485 = vmatprep.subr.mxu0 0.0
  %4486 = vmatpush1.msra.mxu0 0.0
  %4487 = vmatprep.subr.mxu0 0.0
  %4488 = vmatpush1.msra.mxu0 0.0
  %4489 = vmatprep.subr.mxu0 0.0
  %4490 = vmatpush1.msra.mxu0 0.0
  %4491 = vmatprep.mubr.f32.mxu0 0.0
  %4492 = vmatmul.mubr.f32.gmra.mrb[0].mxu0 %v3212
  %v4493 = vpop.f32.mrb[0].mxu0
  %v4494 = vadd.f32 %v4425, %v4493
  %v4495 = vpop.f32.mrb[0].mxu0
  %4496 = vmatprep.mubr.f32.mxu0 0.0
  %4497 = vmatmul.mubr.f32.gmra.mrb[0].mxu0 %v3215
  %v4498 = vpop.f32.mrb[0].mxu0
  %v4499 = vadd.f32 %v4425, %v4498
  %v4500 = vpop.f32.mrb[0].mxu0
  %4501 = vmatprep.mubr.f32.mxu0 0.0
  %4502 = vmatmul.mubr.f32.gmra.mrb[0].mxu0 %v3218
  %v4503 = vpop.f32.mrb[0].mxu0
  %v4504 = vadd.f32 %v4425, %v4503
  %v4505 = vpop.f32.mrb[0].mxu0
  %4506 = vdwg.mxu0
  %v4508 = vsel %vm79, %v4313, 0
  %v4511 = vsel %vm79, %v4318, 0
  %v4514 = vsel %vm79, %v4401, 0
  %v4517 = vsel %vm79, %v4406, 0
  %v4520 = vsel %vm79, %v4411, 0
  %4522 = vmatprep.subr.mxu0 0.0
  %4523 = vmatpush1.xpose.msra.mxu0 %v4514
  %4524 = vmatprep.subr.mxu0 0.0
  %4525 = vmatpush1.xpose.msra.mxu0 %v4517
  %4526 = vmatprep.subr.mxu0 0.0
  %4527 = vmatpush1.xpose.msra.mxu0 %v4520
  %4528 = vmatprep.subr.mxu0 0.0
  %4529 = vmatpush1.xpose.msra.mxu0 0.0
  %4530 = vmatprep.subr.mxu0 0.0
  %4531 = vmatpush1.xpose.msra.mxu0 0.0
  %4532 = vmatprep.subr.mxu0 0.0
  %4533 = vmatpush1.xpose.msra.mxu0 0.0
  %4534 = vmatprep.subr.mxu0 0.0
  %4535 = vmatpush1.xpose.msra.mxu0 0.0
  %4536 = vmatprep.subr.mxu0 0.0
  %4537 = vmatpush1.xpose.msra.mxu0 0.0
  %4538 = vmatprep.subr.mxu0 0.0
  %4539 = vmatpush1.xpose.msra.mxu0 0.0
  %4540 = vmatprep.subr.mxu0 0.0
  %4541 = vmatpush1.xpose.msra.mxu0 0.0
  %4542 = vmatprep.subr.mxu0 0.0
  %4543 = vmatpush1.xpose.msra.mxu0 0.0
  %4544 = vmatprep.subr.mxu0 0.0
  %4545 = vmatpush1.xpose.msra.mxu0 0.0
  %4546 = vmatprep.subr.mxu0 0.0
  %4547 = vmatpush1.xpose.msra.mxu0 0.0
  %4548 = vmatprep.subr.mxu0 0.0
  %4549 = vmatpush1.xpose.msra.mxu0 0.0
  %4550 = vmatprep.subr.mxu0 0.0
  %4551 = vmatpush1.xpose.msra.mxu0 0.0
  %4552 = vmatprep.subr.mxu0 0.0
  %4553 = vmatpush1.xpose.msra.mxu0 0.0
  %4554 = vmatprep.subr.mxu0 0.0
  %4555 = vmatpush1.xpose.msra.mxu0 0.0
  %4556 = vmatprep.subr.mxu0 0.0
  %4557 = vmatpush1.xpose.msra.mxu0 0.0
  %4558 = vmatprep.subr.mxu0 0.0
  %4559 = vmatpush1.xpose.msra.mxu0 0.0
  %4560 = vmatprep.subr.mxu0 0.0
  %4561 = vmatpush1.xpose.msra.mxu0 0.0
  %4562 = vmatprep.subr.mxu0 0.0
  %4563 = vmatpush1.xpose.msra.mxu0 0.0
  %4564 = vmatprep.subr.mxu0 0.0
  %4565 = vmatpush1.xpose.msra.mxu0 0.0
  %4566 = vmatprep.subr.mxu0 0.0
  %4567 = vmatpush1.xpose.msra.mxu0 0.0
  %4568 = vmatprep.subr.mxu0 0.0
  %4569 = vmatpush1.xpose.msra.mxu0 0.0
  %4570 = vmatprep.subr.mxu0 0.0
  %4571 = vmatpush1.xpose.msra.mxu0 0.0
  %4572 = vmatprep.subr.mxu0 0.0
  %4573 = vmatpush1.xpose.msra.mxu0 0.0
  %4574 = vmatprep.subr.mxu0 0.0
  %4575 = vmatpush1.xpose.msra.mxu0 0.0
  %4576 = vmatprep.subr.mxu0 0.0
  %4577 = vmatpush1.xpose.msra.mxu0 0.0
  %4578 = vmatprep.subr.mxu0 0.0
  %4579 = vmatpush1.xpose.msra.mxu0 0.0
  %4580 = vmatprep.subr.mxu0 0.0
  %4581 = vmatpush1.xpose.msra.mxu0 0.0
  %4582 = vmatprep.subr.mxu0 0.0
  %4583 = vmatpush1.xpose.msra.mxu0 0.0
  %4584 = vmatprep.subr.mxu0 0.0
  %4585 = vmatpush1.xpose.msra.mxu0 0.0
  %4586 = vmatprep.mubr.f32.mxu0 0.0
  %4587 = vmatmul.mubr.f32.gmra.mrb[0].mxu0 %v4508
  %v4588 = vpop.f32.mrb[0].mxu0
  %v4589 = vadd.f32 0.0, %v4588
  %v4590 = vpop.f32.mrb[0].mxu0
  %4591 = vmatprep.mubr.f32.mxu0 0.0
  %4592 = vmatmul.mubr.f32.gmra.mrb[0].mxu0 %v4511
  %v4593 = vpop.f32.mrb[0].mxu0
  %v4594 = vadd.f32 0.0, %v4593
  %v4595 = vpop.f32.mrb[0].mxu0
  %4596 = vdwg.mxu0
  %v4597 = vmul.f32 %v4589, 0.35355338
  %v4598 = vmul.f32 %v4594, 0.35355338
  %v4599 = vsel %vm3106, %v4597, -1e+30
  %v4600 = vsel %vm3107, %v4598, -1e+30
  %v4601 = vsel %vm3485, %v4599, -inf
  %4602 = vmax.xlane.f32.xlu0 %v4601
  %v4603 = vpop.xlane.xlu0 %4602
  %v4604 = vsel %vm3489, %v4600, -inf
  %4605 = vmax.xlane.f32.xlu0 %v4604
  %v4606 = vpop.xlane.xlu0 %4605
  %v4607 = vsub.f32 %v4599, %v4603
  %v4608 = vsub.f32 %v4600, %v4606
  %v4609 = vmul.f32 %v4607, 1.442695
  %v4610 = vpow.pop %v4609
  %v4611 = vmul.f32 %v4608, 1.442695
  %v4612 = vpow.pop %v4611
  %v4613 = vsel %vm3485, %v4610, 0.0
  %4614 = vadd.xlane.f32.xlu0 %v4613
  %v4615 = vpop.xlane.xlu0 %4614
  %v4616 = vsel %vm3489, %v4612, 0.0
  %4617 = vadd.xlane.f32.xlu0 %v4616
  %v4618 = vpop.xlane.xlu0 %4617
  %v4619 = vrcp.pop %v4615
  %v4620 = vrcp.pop %v4618
  %v4621 = vmul.f32 %v4610, %v4619
  %v4622 = vmul.f32 %v4612, %v4620
  %v4624 = vsel %vm3485, %v4621, 0
  %v4627 = vsel %vm3485, %v4622, 0
  %v4630 = vsel %vm3515, %v4504, 0
  %4632 = vmatprep.subr.mxu0 0.0
  %4633 = vmatpush1.msra.mxu0 %v4494
  %4634 = vmatprep.subr.mxu0 0.0
  %4635 = vmatpush1.msra.mxu0 %v4499
  %4636 = vmatprep.subr.mxu0 0.0
  %4637 = vmatpush1.msra.mxu0 %v4630
  %4638 = vmatprep.subr.mxu0 0.0
  %4639 = vmatpush1.msra.mxu0 0.0
  %4640 = vmatprep.subr.mxu0 0.0
  %4641 = vmatpush1.msra.mxu0 0.0
  %4642 = vmatprep.subr.mxu0 0.0
  %4643 = vmatpush1.msra.mxu0 0.0
  %4644 = vmatprep.subr.mxu0 0.0
  %4645 = vmatpush1.msra.mxu0 0.0
  %4646 = vmatprep.subr.mxu0 0.0
  %4647 = vmatpush1.msra.mxu0 0.0
  %4648 = vmatprep.subr.mxu0 0.0
  %4649 = vmatpush1.msra.mxu0 0.0
  %4650 = vmatprep.subr.mxu0 0.0
  %4651 = vmatpush1.msra.mxu0 0.0
  %4652 = vmatprep.subr.mxu0 0.0
  %4653 = vmatpush1.msra.mxu0 0.0
  %4654 = vmatprep.subr.mxu0 0.0
  %4655 = vmatpush1.msra.mxu0 0.0
  %4656 = vmatprep.subr.mxu0 0.0
  %4657 = vmatpush1.msra.mxu0 0.0
  %4658 = vmatprep.subr.mxu0 0.0
  %4659 = vmatpush1.msra.mxu0 0.0
  %4660 = vmatprep.subr.mxu0 0.0
  %4661 = vmatpush1.msra.mxu0 0.0
  %4662 = vmatprep.subr.mxu0 0.0
  %4663 = vmatpush1.msra.mxu0 0.0
  %4664 = vmatprep.subr.mxu0 0.0
  %4665 = vmatpush1.msra.mxu0 0.0
  %4666 = vmatprep.subr.mxu0 0.0
  %4667 = vmatpush1.msra.mxu0 0.0
  %4668 = vmatprep.subr.mxu0 0.0
  %4669 = vmatpush1.msra.mxu0 0.0
  %4670 = vmatprep.subr.mxu0 0.0
  %4671 = vmatpush1.msra.mxu0 0.0
  %4672 = vmatprep.subr.mxu0 0.0
  %4673 = vmatpush1.msra.mxu0 0.0
  %4674 = vmatprep.subr.mxu0 0.0
  %4675 = vmatpush1.msra.mxu0 0.0
  %4676 = vmatprep.subr.mxu0 0.0
  %4677 = vmatpush1.msra.mxu0 0.0
  %4678 = vmatprep.subr.mxu0 0.0
  %4679 = vmatpush1.msra.mxu0 0.0
  %4680 = vmatprep.subr.mxu0 0.0
  %4681 = vmatpush1.msra.mxu0 0.0
  %4682 = vmatprep.subr.mxu0 0.0
  %4683 = vmatpush1.msra.mxu0 0.0
  %4684 = vmatprep.subr.mxu0 0.0
  %4685 = vmatpush1.msra.mxu0 0.0
  %4686 = vmatprep.subr.mxu0 0.0
  %4687 = vmatpush1.msra.mxu0 0.0
  %4688 = vmatprep.subr.mxu0 0.0
  %4689 = vmatpush1.msra.mxu0 0.0
  %4690 = vmatprep.subr.mxu0 0.0
  %4691 = vmatpush1.msra.mxu0 0.0
  %4692 = vmatprep.subr.mxu0 0.0
  %4693 = vmatpush1.msra.mxu0 0.0
  %4694 = vmatprep.subr.mxu0 0.0
  %4695 = vmatpush1.msra.mxu0 0.0
  %4696 = vmatprep.mubr.f32.mxu0 0.0
  %4697 = vmatmul.mubr.f32.gmra.mrb[0].mxu0 %v4624
  %v4698 = vpop.f32.mrb[0].mxu0
  %v4699 = vadd.f32 0.0, %v4698
  %v4700 = vpop.f32.mrb[0].mxu0
  %4701 = vmatprep.mubr.f32.mxu0 0.0
  %4702 = vmatmul.mubr.f32.gmra.mrb[0].mxu0 %v4627
  %v4703 = vpop.f32.mrb[0].mxu0
  %v4704 = vadd.f32 0.0, %v4703
  %v4705 = vpop.f32.mrb[0].mxu0
  %4706 = vdwg.mxu0
  %s4707 = scalar_lea.vmem %s17, 16
  %v4708 = vld [vmem:[%s4707] sm:$0xff]
  %v4710 = vsel %vm79, %v4699, 0
  %v4713 = vsel %vm79, %v4704, 0
  %4715 = vmatprep.subr.mxu0 0.0
  %4716 = vmatpush1.msra.mxu0 %v4708
  %4717 = vmatprep.subr.mxu0 0.0
  %4718 = vmatpush1.msra.mxu0 0.0
  %4719 = vmatprep.subr.mxu0 0.0
  %4720 = vmatpush1.msra.mxu0 0.0
  %4721 = vmatprep.subr.mxu0 0.0
  %4722 = vmatpush1.msra.mxu0 0.0
  %4723 = vmatprep.subr.mxu0 0.0
  %4724 = vmatpush1.msra.mxu0 0.0
  %4725 = vmatprep.subr.mxu0 0.0
  %4726 = vmatpush1.msra.mxu0 0.0
  %4727 = vmatprep.subr.mxu0 0.0
  %4728 = vmatpush1.msra.mxu0 0.0
  %4729 = vmatprep.subr.mxu0 0.0
  %4730 = vmatpush1.msra.mxu0 0.0
  %4731 = vmatprep.subr.mxu0 0.0
  %4732 = vmatpush1.msra.mxu0 0.0
  %4733 = vmatprep.subr.mxu0 0.0
  %4734 = vmatpush1.msra.mxu0 0.0
  %4735 = vmatprep.subr.mxu0 0.0
  %4736 = vmatpush1.msra.mxu0 0.0
  %4737 = vmatprep.subr.mxu0 0.0
  %4738 = vmatpush1.msra.mxu0 0.0
  %4739 = vmatprep.subr.mxu0 0.0
  %4740 = vmatpush1.msra.mxu0 0.0
  %4741 = vmatprep.subr.mxu0 0.0
  %4742 = vmatpush1.msra.mxu0 0.0
  %4743 = vmatprep.subr.mxu0 0.0
  %4744 = vmatpush1.msra.mxu0 0.0
  %4745 = vmatprep.subr.mxu0 0.0
  %4746 = vmatpush1.msra.mxu0 0.0
  %4747 = vmatprep.subr.mxu0 0.0
  %4748 = vmatpush1.msra.mxu0 0.0
  %4749 = vmatprep.subr.mxu0 0.0
  %4750 = vmatpush1.msra.mxu0 0.0
  %4751 = vmatprep.subr.mxu0 0.0
  %4752 = vmatpush1.msra.mxu0 0.0
  %4753 = vmatprep.subr.mxu0 0.0
  %4754 = vmatpush1.msra.mxu0 0.0
  %4755 = vmatprep.subr.mxu0 0.0
  %4756 = vmatpush1.msra.mxu0 0.0
  %4757 = vmatprep.subr.mxu0 0.0
  %4758 = vmatpush1.msra.mxu0 0.0
  %4759 = vmatprep.subr.mxu0 0.0
  %4760 = vmatpush1.msra.mxu0 0.0
  %4761 = vmatprep.subr.mxu0 0.0
  %4762 = vmatpush1.msra.mxu0 0.0
  %4763 = vmatprep.subr.mxu0 0.0
  %4764 = vmatpush1.msra.mxu0 0.0
  %4765 = vmatprep.subr.mxu0 0.0
  %4766 = vmatpush1.msra.mxu0 0.0
  %4767 = vmatprep.subr.mxu0 0.0
  %4768 = vmatpush1.msra.mxu0 0.0
  %4769 = vmatprep.subr.mxu0 0.0
  %4770 = vmatpush1.msra.mxu0 0.0
  %4771 = vmatprep.subr.mxu0 0.0
  %4772 = vmatpush1.msra.mxu0 0.0
  %4773 = vmatprep.subr.mxu0 0.0
  %4774 = vmatpush1.msra.mxu0 0.0
  %4775 = vmatprep.subr.mxu0 0.0
  %4776 = vmatpush1.msra.mxu0 0.0
  %4777 = vmatprep.subr.mxu0 0.0
  %4778 = vmatpush1.msra.mxu0 0.0
  %4779 = vmatprep.mubr.f32.mxu0 0.0
  %4780 = vmatmul.mubr.f32.gmra.mrb[0].mxu0 %v4710
  %v4781 = vpop.f32.mrb[0].mxu0
  %v4782 = vadd.f32 0.0, %v4781
  %v4783 = vpop.f32.mrb[0].mxu0
  %4784 = vmatprep.mubr.f32.mxu0 0.0
  %4785 = vmatmul.mubr.f32.gmra.mrb[0].mxu0 %v4713
  %v4786 = vpop.f32.mrb[0].mxu0
  %v4787 = vadd.f32 0.0, %v4786
  %v4788 = vpop.f32.mrb[0].mxu0
  %4789 = vdwg.mxu0
  %v4790 = vadd.f32 %v4225, %v4782
  %v4791 = vadd.f32 %v4230, %v4787
  %s4792 = scalar_lea.vmem %s11, 96
  %v4793 = vld [vmem:[%s4792] sm:$0xff]
  %v4794 = vld [vmem:[%s4792 + $0x8] sm:$0xff]
  %v4795 = vld [vmem:[%s4792 + $0x10] sm:$0xff]
  %v4796 = vld [vmem:[%s4792 + $0x18] sm:$0xff]
  %s4797 = scalar_lea.vmem %s12, 3
  %v4798 = vld [vmem:[%s4797] sm:$0x1]
  %v4800 = vlaneseq
  %v4801 = vshrl.u32 %v4800, 7
  %v4802 = vsub.s32 0, %v4801
  %v4803 = vrot.slane %v4798, %v4802
  %4805 = vmatprep.subr.mxu0 0.0
  %4806 = vmatpush1.msra.mxu0 %v4793
  %4807 = vmatprep.subr.mxu0 0.0
  %4808 = vmatpush1.msra.mxu0 %v4794
  %4809 = vmatprep.subr.mxu0 0.0
  %4810 = vmatpush1.msra.mxu0 %v4795
  %4811 = vmatprep.subr.mxu0 0.0
  %4812 = vmatpush1.msra.mxu0 %v4796
  %4813 = vmatprep.subr.mxu0 0.0
  %4814 = vmatpush1.msra.mxu0 0.0
  %4815 = vmatprep.subr.mxu0 0.0
  %4816 = vmatpush1.msra.mxu0 0.0
  %4817 = vmatprep.subr.mxu0 0.0
  %4818 = vmatpush1.msra.mxu0 0.0
  %4819 = vmatprep.subr.mxu0 0.0
  %4820 = vmatpush1.msra.mxu0 0.0
  %4821 = vmatprep.subr.mxu0 0.0
  %4822 = vmatpush1.msra.mxu0 0.0
  %4823 = vmatprep.subr.mxu0 0.0
  %4824 = vmatpush1.msra.mxu0 0.0
  %4825 = vmatprep.subr.mxu0 0.0
  %4826 = vmatpush1.msra.mxu0 0.0
  %4827 = vmatprep.subr.mxu0 0.0
  %4828 = vmatpush1.msra.mxu0 0.0
  %4829 = vmatprep.subr.mxu0 0.0
  %4830 = vmatpush1.msra.mxu0 0.0
  %4831 = vmatprep.subr.mxu0 0.0
  %4832 = vmatpush1.msra.mxu0 0.0
  %4833 = vmatprep.subr.mxu0 0.0
  %4834 = vmatpush1.msra.mxu0 0.0
  %4835 = vmatprep.subr.mxu0 0.0
  %4836 = vmatpush1.msra.mxu0 0.0
  %4837 = vmatprep.subr.mxu0 0.0
  %4838 = vmatpush1.msra.mxu0 0.0
  %4839 = vmatprep.subr.mxu0 0.0
  %4840 = vmatpush1.msra.mxu0 0.0
  %4841 = vmatprep.subr.mxu0 0.0
  %4842 = vmatpush1.msra.mxu0 0.0
  %4843 = vmatprep.subr.mxu0 0.0
  %4844 = vmatpush1.msra.mxu0 0.0
  %4845 = vmatprep.subr.mxu0 0.0
  %4846 = vmatpush1.msra.mxu0 0.0
  %4847 = vmatprep.subr.mxu0 0.0
  %4848 = vmatpush1.msra.mxu0 0.0
  %4849 = vmatprep.subr.mxu0 0.0
  %4850 = vmatpush1.msra.mxu0 0.0
  %4851 = vmatprep.subr.mxu0 0.0
  %4852 = vmatpush1.msra.mxu0 0.0
  %4853 = vmatprep.subr.mxu0 0.0
  %4854 = vmatpush1.msra.mxu0 0.0
  %4855 = vmatprep.subr.mxu0 0.0
  %4856 = vmatpush1.msra.mxu0 0.0
  %4857 = vmatprep.subr.mxu0 0.0
  %4858 = vmatpush1.msra.mxu0 0.0
  %4859 = vmatprep.subr.mxu0 0.0
  %4860 = vmatpush1.msra.mxu0 0.0
  %4861 = vmatprep.subr.mxu0 0.0
  %4862 = vmatpush1.msra.mxu0 0.0
  %4863 = vmatprep.subr.mxu0 0.0
  %4864 = vmatpush1.msra.mxu0 0.0
  %4865 = vmatprep.subr.mxu0 0.0
  %4866 = vmatpush1.msra.mxu0 0.0
  %4867 = vmatprep.subr.mxu0 0.0
  %4868 = vmatpush1.msra.mxu0 0.0
  %4869 = vmatprep.mubr.f32.mxu0 0.0
  %4870 = vmatmul.mubr.f32.gmra.mrb[0].mxu0 %v3120
  %v4871 = vpop.f32.mrb[0].mxu0
  %v4872 = vadd.f32 %v4803, %v4871
  %v4873 = vpop.f32.mrb[0].mxu0
  %4874 = vmatprep.mubr.f32.mxu0 0.0
  %4875 = vmatmul.mubr.f32.gmra.mrb[0].mxu0 %v3123
  %v4876 = vpop.f32.mrb[0].mxu0
  %v4877 = vadd.f32 %v4803, %v4876
  %v4878 = vpop.f32.mrb[0].mxu0
  %4879 = vdwg.mxu0
  %s4880 = scalar_lea.vmem %s13, 96
  %v4881 = vld [vmem:[%s4880] sm:$0xff]
  %v4882 = vld [vmem:[%s4880 + $0x8] sm:$0xff]
  %v4883 = vld [vmem:[%s4880 + $0x10] sm:$0xff]
  %v4884 = vld [vmem:[%s4880 + $0x18] sm:$0xff]
  %s4885 = scalar_lea.vmem %s14, 3
  %v4886 = vld [vmem:[%s4885] sm:$0x1]
  %v4888 = vlaneseq
  %v4889 = vshrl.u32 %v4888, 7
  %v4890 = vsub.s32 0, %v4889
  %v4891 = vrot.slane %v4886, %v4890
  %4893 = vmatprep.subr.mxu0 0.0
  %4894 = vmatpush1.msra.mxu0 %v4881
  %4895 = vmatprep.subr.mxu0 0.0
  %4896 = vmatpush1.msra.mxu0 %v4882
  %4897 = vmatprep.subr.mxu0 0.0
  %4898 = vmatpush1.msra.mxu0 %v4883
  %4899 = vmatprep.subr.mxu0 0.0
  %4900 = vmatpush1.msra.mxu0 %v4884
  %4901 = vmatprep.subr.mxu0 0.0
  %4902 = vmatpush1.msra.mxu0 0.0
  %4903 = vmatprep.subr.mxu0 0.0
  %4904 = vmatpush1.msra.mxu0 0.0
  %4905 = vmatprep.subr.mxu0 0.0
  %4906 = vmatpush1.msra.mxu0 0.0
  %4907 = vmatprep.subr.mxu0 0.0
  %4908 = vmatpush1.msra.mxu0 0.0
  %4909 = vmatprep.subr.mxu0 0.0
  %4910 = vmatpush1.msra.mxu0 0.0
  %4911 = vmatprep.subr.mxu0 0.0
  %4912 = vmatpush1.msra.mxu0 0.0
  %4913 = vmatprep.subr.mxu0 0.0
  %4914 = vmatpush1.msra.mxu0 0.0
  %4915 = vmatprep.subr.mxu0 0.0
  %4916 = vmatpush1.msra.mxu0 0.0
  %4917 = vmatprep.subr.mxu0 0.0
  %4918 = vmatpush1.msra.mxu0 0.0
  %4919 = vmatprep.subr.mxu0 0.0
  %4920 = vmatpush1.msra.mxu0 0.0
  %4921 = vmatprep.subr.mxu0 0.0
  %4922 = vmatpush1.msra.mxu0 0.0
  %4923 = vmatprep.subr.mxu0 0.0
  %4924 = vmatpush1.msra.mxu0 0.0
  %4925 = vmatprep.subr.mxu0 0.0
  %4926 = vmatpush1.msra.mxu0 0.0
  %4927 = vmatprep.subr.mxu0 0.0
  %4928 = vmatpush1.msra.mxu0 0.0
  %4929 = vmatprep.subr.mxu0 0.0
  %4930 = vmatpush1.msra.mxu0 0.0
  %4931 = vmatprep.subr.mxu0 0.0
  %4932 = vmatpush1.msra.mxu0 0.0
  %4933 = vmatprep.subr.mxu0 0.0
  %4934 = vmatpush1.msra.mxu0 0.0
  %4935 = vmatprep.subr.mxu0 0.0
  %4936 = vmatpush1.msra.mxu0 0.0
  %4937 = vmatprep.subr.mxu0 0.0
  %4938 = vmatpush1.msra.mxu0 0.0
  %4939 = vmatprep.subr.mxu0 0.0
  %4940 = vmatpush1.msra.mxu0 0.0
  %4941 = vmatprep.subr.mxu0 0.0
  %4942 = vmatpush1.msra.mxu0 0.0
  %4943 = vmatprep.subr.mxu0 0.0
  %4944 = vmatpush1.msra.mxu0 0.0
  %4945 = vmatprep.subr.mxu0 0.0
  %4946 = vmatpush1.msra.mxu0 0.0
  %4947 = vmatprep.subr.mxu0 0.0
  %4948 = vmatpush1.msra.mxu0 0.0
  %4949 = vmatprep.subr.mxu0 0.0
  %4950 = vmatpush1.msra.mxu0 0.0
  %4951 = vmatprep.subr.mxu0 0.0
  %4952 = vmatpush1.msra.mxu0 0.0
  %4953 = vmatprep.subr.mxu0 0.0
  %4954 = vmatpush1.msra.mxu0 0.0
  %4955 = vmatprep.subr.mxu0 0.0
  %4956 = vmatpush1.msra.mxu0 0.0
  %4957 = vmatprep.mubr.f32.mxu0 0.0
  %4958 = vmatmul.mubr.f32.gmra.mrb[0].mxu0 %v3212
  %v4959 = vpop.f32.mrb[0].mxu0
  %v4960 = vadd.f32 %v4891, %v4959
  %v4961 = vpop.f32.mrb[0].mxu0
  %4962 = vmatprep.mubr.f32.mxu0 0.0
  %4963 = vmatmul.mubr.f32.gmra.mrb[0].mxu0 %v3215
  %v4964 = vpop.f32.mrb[0].mxu0
  %v4965 = vadd.f32 %v4891, %v4964
  %v4966 = vpop.f32.mrb[0].mxu0
  %4967 = vmatprep.mubr.f32.mxu0 0.0
  %4968 = vmatmul.mubr.f32.gmra.mrb[0].mxu0 %v3218
  %v4969 = vpop.f32.mrb[0].mxu0
  %v4970 = vadd.f32 %v4891, %v4969
  %v4971 = vpop.f32.mrb[0].mxu0
  %4972 = vdwg.mxu0
  %s4973 = scalar_lea.vmem %s15, 96
  %v4974 = vld [vmem:[%s4973] sm:$0xff]
  %v4975 = vld [vmem:[%s4973 + $0x8] sm:$0xff]
  %v4976 = vld [vmem:[%s4973 + $0x10] sm:$0xff]
  %v4977 = vld [vmem:[%s4973 + $0x18] sm:$0xff]
  %s4978 = scalar_lea.vmem %s16, 3
  %v4979 = vld [vmem:[%s4978] sm:$0x1]
  %v4981 = vlaneseq
  %v4982 = vshrl.u32 %v4981, 7
  %v4983 = vsub.s32 0, %v4982
  %v4984 = vrot.slane %v4979, %v4983
  %4986 = vmatprep.subr.mxu0 0.0
  %4987 = vmatpush1.msra.mxu0 %v4974
  %4988 = vmatprep.subr.mxu0 0.0
  %4989 = vmatpush1.msra.mxu0 %v4975
  %4990 = vmatprep.subr.mxu0 0.0
  %4991 = vmatpush1.msra.mxu0 %v4976
  %4992 = vmatprep.subr.mxu0 0.0
  %4993 = vmatpush1.msra.mxu0 %v4977
  %4994 = vmatprep.subr.mxu0 0.0
  %4995 = vmatpush1.msra.mxu0 0.0
  %4996 = vmatprep.subr.mxu0 0.0
  %4997 = vmatpush1.msra.mxu0 0.0
  %4998 = vmatprep.subr.mxu0 0.0
  %4999 = vmatpush1.msra.mxu0 0.0
  %5000 = vmatprep.subr.mxu0 0.0
  %5001 = vmatpush1.msra.mxu0 0.0
  %5002 = vmatprep.subr.mxu0 0.0
  %5003 = vmatpush1.msra.mxu0 0.0
  %5004 = vmatprep.subr.mxu0 0.0
  %5005 = vmatpush1.msra.mxu0 0.0
  %5006 = vmatprep.subr.mxu0 0.0
  %5007 = vmatpush1.msra.mxu0 0.0
  %5008 = vmatprep.subr.mxu0 0.0
  %5009 = vmatpush1.msra.mxu0 0.0
  %5010 = vmatprep.subr.mxu0 0.0
  %5011 = vmatpush1.msra.mxu0 0.0
  %5012 = vmatprep.subr.mxu0 0.0
  %5013 = vmatpush1.msra.mxu0 0.0
  %5014 = vmatprep.subr.mxu0 0.0
  %5015 = vmatpush1.msra.mxu0 0.0
  %5016 = vmatprep.subr.mxu0 0.0
  %5017 = vmatpush1.msra.mxu0 0.0
  %5018 = vmatprep.subr.mxu0 0.0
  %5019 = vmatpush1.msra.mxu0 0.0
  %5020 = vmatprep.subr.mxu0 0.0
  %5021 = vmatpush1.msra.mxu0 0.0
  %5022 = vmatprep.subr.mxu0 0.0
  %5023 = vmatpush1.msra.mxu0 0.0
  %5024 = vmatprep.subr.mxu0 0.0
  %5025 = vmatpush1.msra.mxu0 0.0
  %5026 = vmatprep.subr.mxu0 0.0
  %5027 = vmatpush1.msra.mxu0 0.0
  %5028 = vmatprep.subr.mxu0 0.0
  %5029 = vmatpush1.msra.mxu0 0.0
  %5030 = vmatprep.subr.mxu0 0.0
  %5031 = vmatpush1.msra.mxu0 0.0
  %5032 = vmatprep.subr.mxu0 0.0
  %5033 = vmatpush1.msra.mxu0 0.0
  %5034 = vmatprep.subr.mxu0 0.0
  %5035 = vmatpush1.msra.mxu0 0.0
  %5036 = vmatprep.subr.mxu0 0.0
  %5037 = vmatpush1.msra.mxu0 0.0
  %5038 = vmatprep.subr.mxu0 0.0
  %5039 = vmatpush1.msra.mxu0 0.0
  %5040 = vmatprep.subr.mxu0 0.0
  %5041 = vmatpush1.msra.mxu0 0.0
  %5042 = vmatprep.subr.mxu0 0.0
  %5043 = vmatpush1.msra.mxu0 0.0
  %5044 = vmatprep.subr.mxu0 0.0
  %5045 = vmatpush1.msra.mxu0 0.0
  %5046 = vmatprep.subr.mxu0 0.0
  %5047 = vmatpush1.msra.mxu0 0.0
  %5048 = vmatprep.subr.mxu0 0.0
  %5049 = vmatpush1.msra.mxu0 0.0
  %5050 = vmatprep.mubr.f32.mxu0 0.0
  %5051 = vmatmul.mubr.f32.gmra.mrb[0].mxu0 %v3212
  %v5052 = vpop.f32.mrb[0].mxu0
  %v5053 = vadd.f32 %v4984, %v5052
  %v5054 = vpop.f32.mrb[0].mxu0
  %5055 = vmatprep.mubr.f32.mxu0 0.0
  %5056 = vmatmul.mubr.f32.gmra.mrb[0].mxu0 %v3215
  %v5057 = vpop.f32.mrb[0].mxu0
  %v5058 = vadd.f32 %v4984, %v5057
  %v5059 = vpop.f32.mrb[0].mxu0
  %5060 = vmatprep.mubr.f32.mxu0 0.0
  %5061 = vmatmul.mubr.f32.gmra.mrb[0].mxu0 %v3218
  %v5062 = vpop.f32.mrb[0].mxu0
  %v5063 = vadd.f32 %v4984, %v5062
  %v5064 = vpop.f32.mrb[0].mxu0
  %5065 = vdwg.mxu0
  %v5067 = vsel %vm79, %v4872, 0
  %v5070 = vsel %vm79, %v4877, 0
  %v5073 = vsel %vm79, %v4960, 0
  %v5076 = vsel %vm79, %v4965, 0
  %v5079 = vsel %vm79, %v4970, 0
  %5081 = vmatprep.subr.mxu0 0.0
  %5082 = vmatpush1.xpose.msra.mxu0 %v5073
  %5083 = vmatprep.subr.mxu0 0.0
  %5084 = vmatpush1.xpose.msra.mxu0 %v5076
  %5085 = vmatprep.subr.mxu0 0.0
  %5086 = vmatpush1.xpose.msra.mxu0 %v5079
  %5087 = vmatprep.subr.mxu0 0.0
  %5088 = vmatpush1.xpose.msra.mxu0 0.0
  %5089 = vmatprep.subr.mxu0 0.0
  %5090 = vmatpush1.xpose.msra.mxu0 0.0
  %5091 = vmatprep.subr.mxu0 0.0
  %5092 = vmatpush1.xpose.msra.mxu0 0.0
  %5093 = vmatprep.subr.mxu0 0.0
  %5094 = vmatpush1.xpose.msra.mxu0 0.0
  %5095 = vmatprep.subr.mxu0 0.0
  %5096 = vmatpush1.xpose.msra.mxu0 0.0
  %5097 = vmatprep.subr.mxu0 0.0
  %5098 = vmatpush1.xpose.msra.mxu0 0.0
  %5099 = vmatprep.subr.mxu0 0.0
  %5100 = vmatpush1.xpose.msra.mxu0 0.0
  %5101 = vmatprep.subr.mxu0 0.0
  %5102 = vmatpush1.xpose.msra.mxu0 0.0
  %5103 = vmatprep.subr.mxu0 0.0
  %5104 = vmatpush1.xpose.msra.mxu0 0.0
  %5105 = vmatprep.subr.mxu0 0.0
  %5106 = vmatpush1.xpose.msra.mxu0 0.0
  %5107 = vmatprep.subr.mxu0 0.0
  %5108 = vmatpush1.xpose.msra.mxu0 0.0
  %5109 = vmatprep.subr.mxu0 0.0
  %5110 = vmatpush1.xpose.msra.mxu0 0.0
  %5111 = vmatprep.subr.mxu0 0.0
  %5112 = vmatpush1.xpose.msra.mxu0 0.0
  %5113 = vmatprep.subr.mxu0 0.0
  %5114 = vmatpush1.xpose.msra.mxu0 0.0
  %5115 = vmatprep.subr.mxu0 0.0
  %5116 = vmatpush1.xpose.msra.mxu0 0.0
  %5117 = vmatprep.subr.mxu0 0.0
  %5118 = vmatpush1.xpose.msra.mxu0 0.0
  %5119 = vmatprep.subr.mxu0 0.0
  %5120 = vmatpush1.xpose.msra.mxu0 0.0
  %5121 = vmatprep.subr.mxu0 0.0
  %5122 = vmatpush1.xpose.msra.mxu0 0.0
  %5123 = vmatprep.subr.mxu0 0.0
  %5124 = vmatpush1.xpose.msra.mxu0 0.0
  %5125 = vmatprep.subr.mxu0 0.0
  %5126 = vmatpush1.xpose.msra.mxu0 0.0
  %5127 = vmatprep.subr.mxu0 0.0
  %5128 = vmatpush1.xpose.msra.mxu0 0.0
  %5129 = vmatprep.subr.mxu0 0.0
  %5130 = vmatpush1.xpose.msra.mxu0 0.0
  %5131 = vmatprep.subr.mxu0 0.0
  %5132 = vmatpush1.xpose.msra.mxu0 0.0
  %5133 = vmatprep.subr.mxu0 0.0
  %5134 = vmatpush1.xpose.msra.mxu0 0.0
  %5135 = vmatprep.subr.mxu0 0.0
  %5136 = vmatpush1.xpose.msra.mxu0 0.0
  %5137 = vmatprep.subr.mxu0 0.0
  %5138 = vmatpush1.xpose.msra.mxu0 0.0
  %5139 = vmatprep.subr.mxu0 0.0
  %5140 = vmatpush1.xpose.msra.mxu0 0.0
  %5141 = vmatprep.subr.mxu0 0.0
  %5142 = vmatpush1.xpose.msra.mxu0 0.0
  %5143 = vmatprep.subr.mxu0 0.0
  %5144 = vmatpush1.xpose.msra.mxu0 0.0
  %5145 = vmatprep.mubr.f32.mxu0 0.0
  %5146 = vmatmul.mubr.f32.gmra.mrb[0].mxu0 %v5067
  %v5147 = vpop.f32.mrb[0].mxu0
  %v5148 = vadd.f32 0.0, %v5147
  %v5149 = vpop.f32.mrb[0].mxu0
  %5150 = vmatprep.mubr.f32.mxu0 0.0
  %5151 = vmatmul.mubr.f32.gmra.mrb[0].mxu0 %v5070
  %v5152 = vpop.f32.mrb[0].mxu0
  %v5153 = vadd.f32 0.0, %v5152
  %v5154 = vpop.f32.mrb[0].mxu0
  %5155 = vdwg.mxu0
  %v5156 = vmul.f32 %v5148, 0.35355338
  %v5157 = vmul.f32 %v5153, 0.35355338
  %v5158 = vsel %vm3106, %v5156, -1e+30
  %v5159 = vsel %vm3107, %v5157, -1e+30
  %v5160 = vsel %vm3485, %v5158, -inf
  %5161 = vmax.xlane.f32.xlu0 %v5160
  %v5162 = vpop.xlane.xlu0 %5161
  %v5163 = vsel %vm3489, %v5159, -inf
  %5164 = vmax.xlane.f32.xlu0 %v5163
  %v5165 = vpop.xlane.xlu0 %5164
  %v5166 = vsub.f32 %v5158, %v5162
  %v5167 = vsub.f32 %v5159, %v5165
  %v5168 = vmul.f32 %v5166, 1.442695
  %v5169 = vpow.pop %v5168
  %v5170 = vmul.f32 %v5167, 1.442695
  %v5171 = vpow.pop %v5170
  %v5172 = vsel %vm3485, %v5169, 0.0
  %5173 = vadd.xlane.f32.xlu0 %v5172
  %v5174 = vpop.xlane.xlu0 %5173
  %v5175 = vsel %vm3489, %v5171, 0.0
  %5176 = vadd.xlane.f32.xlu0 %v5175
  %v5177 = vpop.xlane.xlu0 %5176
  %v5178 = vrcp.pop %v5174
  %v5179 = vrcp.pop %v5177
  %v5180 = vmul.f32 %v5169, %v5178
  %v5181 = vmul.f32 %v5171, %v5179
  %v5183 = vsel %vm3485, %v5180, 0
  %v5186 = vsel %vm3485, %v5181, 0
  %v5189 = vsel %vm3515, %v5063, 0
  %5191 = vmatprep.subr.mxu0 0.0
  %5192 = vmatpush1.msra.mxu0 %v5053
  %5193 = vmatprep.subr.mxu0 0.0
  %5194 = vmatpush1.msra.mxu0 %v5058
  %5195 = vmatprep.subr.mxu0 0.0
  %5196 = vmatpush1.msra.mxu0 %v5189
  %5197 = vmatprep.subr.mxu0 0.0
  %5198 = vmatpush1.msra.mxu0 0.0
  %5199 = vmatprep.subr.mxu0 0.0
  %5200 = vmatpush1.msra.mxu0 0.0
  %5201 = vmatprep.subr.mxu0 0.0
  %5202 = vmatpush1.msra.mxu0 0.0
  %5203 = vmatprep.subr.mxu0 0.0
  %5204 = vmatpush1.msra.mxu0 0.0
  %5205 = vmatprep.subr.mxu0 0.0
  %5206 = vmatpush1.msra.mxu0 0.0
  %5207 = vmatprep.subr.mxu0 0.0
  %5208 = vmatpush1.msra.mxu0 0.0
  %5209 = vmatprep.subr.mxu0 0.0
  %5210 = vmatpush1.msra.mxu0 0.0
  %5211 = vmatprep.subr.mxu0 0.0
  %5212 = vmatpush1.msra.mxu0 0.0
  %5213 = vmatprep.subr.mxu0 0.0
  %5214 = vmatpush1.msra.mxu0 0.0
  %5215 = vmatprep.subr.mxu0 0.0
  %5216 = vmatpush1.msra.mxu0 0.0
  %5217 = vmatprep.subr.mxu0 0.0
  %5218 = vmatpush1.msra.mxu0 0.0
  %5219 = vmatprep.subr.mxu0 0.0
  %5220 = vmatpush1.msra.mxu0 0.0
  %5221 = vmatprep.subr.mxu0 0.0
  %5222 = vmatpush1.msra.mxu0 0.0
  %5223 = vmatprep.subr.mxu0 0.0
  %5224 = vmatpush1.msra.mxu0 0.0
  %5225 = vmatprep.subr.mxu0 0.0
  %5226 = vmatpush1.msra.mxu0 0.0
  %5227 = vmatprep.subr.mxu0 0.0
  %5228 = vmatpush1.msra.mxu0 0.0
  %5229 = vmatprep.subr.mxu0 0.0
  %5230 = vmatpush1.msra.mxu0 0.0
  %5231 = vmatprep.subr.mxu0 0.0
  %5232 = vmatpush1.msra.mxu0 0.0
  %5233 = vmatprep.subr.mxu0 0.0
  %5234 = vmatpush1.msra.mxu0 0.0
  %5235 = vmatprep.subr.mxu0 0.0
  %5236 = vmatpush1.msra.mxu0 0.0
  %5237 = vmatprep.subr.mxu0 0.0
  %5238 = vmatpush1.msra.mxu0 0.0
  %5239 = vmatprep.subr.mxu0 0.0
  %5240 = vmatpush1.msra.mxu0 0.0
  %5241 = vmatprep.subr.mxu0 0.0
  %5242 = vmatpush1.msra.mxu0 0.0
  %5243 = vmatprep.subr.mxu0 0.0
  %5244 = vmatpush1.msra.mxu0 0.0
  %5245 = vmatprep.subr.mxu0 0.0
  %5246 = vmatpush1.msra.mxu0 0.0
  %5247 = vmatprep.subr.mxu0 0.0
  %5248 = vmatpush1.msra.mxu0 0.0
  %5249 = vmatprep.subr.mxu0 0.0
  %5250 = vmatpush1.msra.mxu0 0.0
  %5251 = vmatprep.subr.mxu0 0.0
  %5252 = vmatpush1.msra.mxu0 0.0
  %5253 = vmatprep.subr.mxu0 0.0
  %5254 = vmatpush1.msra.mxu0 0.0
  %5255 = vmatprep.mubr.f32.mxu0 0.0
  %5256 = vmatmul.mubr.f32.gmra.mrb[0].mxu0 %v5183
  %v5257 = vpop.f32.mrb[0].mxu0
  %v5258 = vadd.f32 0.0, %v5257
  %v5259 = vpop.f32.mrb[0].mxu0
  %5260 = vmatprep.mubr.f32.mxu0 0.0
  %5261 = vmatmul.mubr.f32.gmra.mrb[0].mxu0 %v5186
  %v5262 = vpop.f32.mrb[0].mxu0
  %v5263 = vadd.f32 0.0, %v5262
  %v5264 = vpop.f32.mrb[0].mxu0
  %5265 = vdwg.mxu0
  %s5266 = scalar_lea.vmem %s17, 24
  %v5267 = vld [vmem:[%s5266] sm:$0xff]
  %v5269 = vsel %vm79, %v5258, 0
  %v5272 = vsel %vm79, %v5263, 0
  %5274 = vmatprep.subr.mxu0 0.0
  %5275 = vmatpush1.msra.mxu0 %v5267
  %5276 = vmatprep.subr.mxu0 0.0
  %5277 = vmatpush1.msra.mxu0 0.0
  %5278 = vmatprep.subr.mxu0 0.0
  %5279 = vmatpush1.msra.mxu0 0.0
  %5280 = vmatprep.subr.mxu0 0.0
  %5281 = vmatpush1.msra.mxu0 0.0
  %5282 = vmatprep.subr.mxu0 0.0
  %5283 = vmatpush1.msra.mxu0 0.0
  %5284 = vmatprep.subr.mxu0 0.0
  %5285 = vmatpush1.msra.mxu0 0.0
  %5286 = vmatprep.subr.mxu0 0.0
  %5287 = vmatpush1.msra.mxu0 0.0
  %5288 = vmatprep.subr.mxu0 0.0
  %5289 = vmatpush1.msra.mxu0 0.0
  %5290 = vmatprep.subr.mxu0 0.0
  %5291 = vmatpush1.msra.mxu0 0.0
  %5292 = vmatprep.subr.mxu0 0.0
  %5293 = vmatpush1.msra.mxu0 0.0
  %5294 = vmatprep.subr.mxu0 0.0
  %5295 = vmatpush1.msra.mxu0 0.0
  %5296 = vmatprep.subr.mxu0 0.0
  %5297 = vmatpush1.msra.mxu0 0.0
  %5298 = vmatprep.subr.mxu0 0.0
  %5299 = vmatpush1.msra.mxu0 0.0
  %5300 = vmatprep.subr.mxu0 0.0
  %5301 = vmatpush1.msra.mxu0 0.0
  %5302 = vmatprep.subr.mxu0 0.0
  %5303 = vmatpush1.msra.mxu0 0.0
  %5304 = vmatprep.subr.mxu0 0.0
  %5305 = vmatpush1.msra.mxu0 0.0
  %5306 = vmatprep.subr.mxu0 0.0
  %5307 = vmatpush1.msra.mxu0 0.0
  %5308 = vmatprep.subr.mxu0 0.0
  %5309 = vmatpush1.msra.mxu0 0.0
  %5310 = vmatprep.subr.mxu0 0.0
  %5311 = vmatpush1.msra.mxu0 0.0
  %5312 = vmatprep.subr.mxu0 0.0
  %5313 = vmatpush1.msra.mxu0 0.0
  %5314 = vmatprep.subr.mxu0 0.0
  %5315 = vmatpush1.msra.mxu0 0.0
  %5316 = vmatprep.subr.mxu0 0.0
  %5317 = vmatpush1.msra.mxu0 0.0
  %5318 = vmatprep.subr.mxu0 0.0
  %5319 = vmatpush1.msra.mxu0 0.0
  %5320 = vmatprep.subr.mxu0 0.0
  %5321 = vmatpush1.msra.mxu0 0.0
  %5322 = vmatprep.subr.mxu0 0.0
  %5323 = vmatpush1.msra.mxu0 0.0
  %5324 = vmatprep.subr.mxu0 0.0
  %5325 = vmatpush1.msra.mxu0 0.0
  %5326 = vmatprep.subr.mxu0 0.0
  %5327 = vmatpush1.msra.mxu0 0.0
  %5328 = vmatprep.subr.mxu0 0.0
  %5329 = vmatpush1.msra.mxu0 0.0
  %5330 = vmatprep.subr.mxu0 0.0
  %5331 = vmatpush1.msra.mxu0 0.0
  %5332 = vmatprep.subr.mxu0 0.0
  %5333 = vmatpush1.msra.mxu0 0.0
  %5334 = vmatprep.subr.mxu0 0.0
  %5335 = vmatpush1.msra.mxu0 0.0
  %5336 = vmatprep.subr.mxu0 0.0
  %5337 = vmatpush1.msra.mxu0 0.0
  %5338 = vmatprep.mubr.f32.mxu0 0.0
  %5339 = vmatmul.mubr.f32.gmra.mrb[0].mxu0 %v5269
  %v5340 = vpop.f32.mrb[0].mxu0
  %v5341 = vadd.f32 0.0, %v5340
  %v5342 = vpop.f32.mrb[0].mxu0
  %5343 = vmatprep.mubr.f32.mxu0 0.0
  %5344 = vmatmul.mubr.f32.gmra.mrb[0].mxu0 %v5272
  %v5345 = vpop.f32.mrb[0].mxu0
  %v5346 = vadd.f32 0.0, %v5345
  %v5347 = vpop.f32.mrb[0].mxu0
  %5348 = vdwg.mxu0
  %v5349 = vadd.f32 %v4790, %v5341
  %v5350 = vadd.f32 %v4791, %v5346
  %v5351 = vld [vmem:[%s18] sm:$0x1]
  %v5353 = vlaneseq
  %v5354 = vshrl.u32 %v5353, 7
  %v5355 = vsub.s32 0, %v5354
  %v5356 = vrot.slane %v5351, %v5355
  %v5358 = vadd.f32 %v5349, %v5356
  %v5359 = vadd.f32 %v5350, %v5356
  %v5360 = vld [vmem:[%s19] sm:$0xff]
  %v5361 = vld [vmem:[%s19 + $0x8] sm:$0xff]
  %v5362 = vld [vmem:[%s19 + $0x10] sm:$0xff]
  %v5363 = vld [vmem:[%s19 + $0x18] sm:$0xff]
  %v5364 = vld [vmem:[%s20] sm:$0x1]
  %v5366 = vlaneseq
  %v5367 = vshrl.u32 %v5366, 7
  %v5368 = vsub.s32 0, %v5367
  %v5369 = vrot.slane %v5364, %v5368
  %v5372 = vsel %vm274, %v5358, 0
  %v5375 = vsel %vm274, %v5359, 0
  %5377 = vmatprep.subr.mxu0 0.0
  %5378 = vmatpush1.msra.mxu0 %v5360
  %5379 = vmatprep.subr.mxu0 0.0
  %5380 = vmatpush1.msra.mxu0 %v5361
  %5381 = vmatprep.subr.mxu0 0.0
  %5382 = vmatpush1.msra.mxu0 %v5362
  %5383 = vmatprep.subr.mxu0 0.0
  %5384 = vmatpush1.msra.mxu0 %v5363
  %5385 = vmatprep.subr.mxu0 0.0
  %5386 = vmatpush1.msra.mxu0 0.0
  %5387 = vmatprep.subr.mxu0 0.0
  %5388 = vmatpush1.msra.mxu0 0.0
  %5389 = vmatprep.subr.mxu0 0.0
  %5390 = vmatpush1.msra.mxu0 0.0
  %5391 = vmatprep.subr.mxu0 0.0
  %5392 = vmatpush1.msra.mxu0 0.0
  %5393 = vmatprep.subr.mxu0 0.0
  %5394 = vmatpush1.msra.mxu0 0.0
  %5395 = vmatprep.subr.mxu0 0.0
  %5396 = vmatpush1.msra.mxu0 0.0
  %5397 = vmatprep.subr.mxu0 0.0
  %5398 = vmatpush1.msra.mxu0 0.0
  %5399 = vmatprep.subr.mxu0 0.0
  %5400 = vmatpush1.msra.mxu0 0.0
  %5401 = vmatprep.subr.mxu0 0.0
  %5402 = vmatpush1.msra.mxu0 0.0
  %5403 = vmatprep.subr.mxu0 0.0
  %5404 = vmatpush1.msra.mxu0 0.0
  %5405 = vmatprep.subr.mxu0 0.0
  %5406 = vmatpush1.msra.mxu0 0.0
  %5407 = vmatprep.subr.mxu0 0.0
  %5408 = vmatpush1.msra.mxu0 0.0
  %5409 = vmatprep.subr.mxu0 0.0
  %5410 = vmatpush1.msra.mxu0 0.0
  %5411 = vmatprep.subr.mxu0 0.0
  %5412 = vmatpush1.msra.mxu0 0.0
  %5413 = vmatprep.subr.mxu0 0.0
  %5414 = vmatpush1.msra.mxu0 0.0
  %5415 = vmatprep.subr.mxu0 0.0
  %5416 = vmatpush1.msra.mxu0 0.0
  %5417 = vmatprep.subr.mxu0 0.0
  %5418 = vmatpush1.msra.mxu0 0.0
  %5419 = vmatprep.subr.mxu0 0.0
  %5420 = vmatpush1.msra.mxu0 0.0
  %5421 = vmatprep.subr.mxu0 0.0
  %5422 = vmatpush1.msra.mxu0 0.0
  %5423 = vmatprep.subr.mxu0 0.0
  %5424 = vmatpush1.msra.mxu0 0.0
  %5425 = vmatprep.subr.mxu0 0.0
  %5426 = vmatpush1.msra.mxu0 0.0
  %5427 = vmatprep.subr.mxu0 0.0
  %5428 = vmatpush1.msra.mxu0 0.0
  %5429 = vmatprep.subr.mxu0 0.0
  %5430 = vmatpush1.msra.mxu0 0.0
  %5431 = vmatprep.subr.mxu0 0.0
  %5432 = vmatpush1.msra.mxu0 0.0
  %5433 = vmatprep.subr.mxu0 0.0
  %5434 = vmatpush1.msra.mxu0 0.0
  %5435 = vmatprep.subr.mxu0 0.0
  %5436 = vmatpush1.msra.mxu0 0.0
  %5437 = vmatprep.subr.mxu0 0.0
  %5438 = vmatpush1.msra.mxu0 0.0
  %5439 = vmatprep.subr.mxu0 0.0
  %5440 = vmatpush1.msra.mxu0 0.0
  %5441 = vmatprep.mubr.f32.mxu0 0.0
  %5442 = vmatmul.mubr.f32.gmra.mrb[0].mxu0 %v5372
  %v5443 = vpop.f32.mrb[0].mxu0
  %v5444 = vadd.f32 %v5369, %v5443
  %v5445 = vpop.f32.mrb[0].mxu0
  %5446 = vmatprep.mubr.f32.mxu0 0.0
  %5447 = vmatmul.mubr.f32.gmra.mrb[0].mxu0 %v5375
  %v5448 = vpop.f32.mrb[0].mxu0
  %v5449 = vadd.f32 %v5369, %v5448
  %v5450 = vpop.f32.mrb[0].mxu0
  %5451 = vdwg.mxu0
  %vm5452 = vcmask 31744
  %5453 = vst.msk [vmem:[%s21] sm:$0xff] %vm5452, %v5444
  %vm5454 = vcmask 27648
  %5455 = vst.msk [vmem:[%s21 + $0x8] sm:$0xf] %vm5454, %v5449
  // Predicated region
  $region86: #{attention_lstm_forward.1} parent=0 // pred_check
    _
  $region87: #{attention_lstm_forward.1} parent=0 // pred_check_branch
    %5457 = sbr.rel (0) target = $region89
  $region88: #{attention_lstm_forward.1} parent=0 // pred_region
    _
  $region89: #{attention_lstm_forward.1} parent=0 // pred_fallthru
    _
  // Predicated region
  $region90: #{attention_lstm_forward.1} parent=0 // pred_check
    _
  $region91: #{attention_lstm_forward.1} parent=0 // pred_check_branch
    %5459 = sbr.rel (0) target = $region93
  $region92: #{attention_lstm_forward.1} parent=0 // pred_region
    _
  $region93: #{attention_lstm_forward.1} parent=0 // pred_fallthru
    _

</llo_original>
